<compile_context>
chip_gen: v5e
topology: v5e:2x2
jax: 0.10.0
libtpu: 0.0.40
codegen_flags: <defaults>
</compile_context>

<pallas_src>
import functools

import jax
import jax.numpy as jnp
from jax.experimental import pallas as pl
from jax.experimental.pallas import tpu as pltpu


# ----------------------------- helpers ------------------------------------- #

_VMEM_BUDGET = 24 * 1024 * 1024     # working-set budget for tile planning
_VMEM_LIMIT = 28 * 1024 * 1024      # scoped-VMEM limit (safe on v5e/v6e/v7x)


def _round_up(x, m):
    return (x + m - 1) // m * m


def _agg_plan(n_pad, f_out_p, out_itemsize):
    """Pick (tm, tk, h_resident) for the aggregation kernel under the budget."""
    h_res_bytes = 2 * n_pad * f_out_p * 2          # resident H (count 2x, safe)
    for h_res in (True, False):
        for tm in (2048, 1024, 512):
            if n_pad % tm:
                continue
            for tk in (1024, 512):
                if n_pad % tk:
                    continue
                use = (2 * tm * tk * 2                      # bf16 A tiles, dbl-buf
                       + 2 * tm * f_out_p * out_itemsize    # output tiles, dbl-buf
                       + tm * f_out_p * 4                   # f32 accumulator
                       + 2 * f_out_p * 4)                   # bias
                use += h_res_bytes if h_res else 2 * tk * f_out_p * 2
                if use <= _VMEM_BUDGET:
                    return tm, tk, h_res
    return 512, 512, False


def _xw_plan(n_pad, f_in_p, f_out_p):
    for tm in (1024, 512, 256, 128):
        if n_pad % tm:
            continue
        use = 2 * tm * f_in_p * 2 + 2 * f_in_p * f_out_p * 2 + 2 * tm * f_out_p * 2
        if use <= _VMEM_BUDGET:
            return tm
    return 128


def _tile_kmap(a_pad, tm, tk):
    """Remapped k-block index per (row-tile, k-tile).

    kmap[i, k] == k        -> tile (i, k) has nonzeros; fetch & accumulate it.
    kmap[i, k] == kmap[i, k-1] (tile all-zero) -> A/H DMA is a revisit (skipped)
                              and the matmul is pl.when-skipped in the kernel.
    """
    nr, nk = a_pad.shape[0] // tm, a_pad.shape[1] // tk
    tiles = a_pad.reshape(nr, tm, nk, tk)
    nz = jnp.any(tiles != 0, axis=(1, 3))                       # [nr, nk] bool
    ks = jnp.arange(nk, dtype=jnp.int32)[None, :]
    marked = jnp.where(nz, ks, jnp.int32(-1))
    kmap = jax.lax.cummax(marked, axis=1)
    return jnp.maximum(kmap, 0).astype(jnp.int32)


# ----------------------- kernel 1: H = X @ W -------------------------------- #

def xw_kernel(x_ref, w_ref, o_ref):
    o_ref[...] = jnp.dot(
        x_ref[...], w_ref[...], preferred_element_type=jnp.float32
    ).astype(o_ref.dtype)


def xw_matmul(x_pad, w_pad, *, tm):
    """x_pad: [Np, Fin_p] bf16, w_pad: [Fin_p, Fout_p] bf16 -> H [Np, Fout_p] bf16."""
    n_pad, f_in_p = x_pad.shape
    f_out_p = w_pad.shape[1]
    flops = 2 * n_pad * f_in_p * f_out_p
    bytes_accessed = (x_pad.size + w_pad.size + n_pad * f_out_p) * 2
    return pl.pallas_call(
        xw_kernel,
        out_shape=jax.ShapeDtypeStruct((n_pad, f_out_p), jnp.bfloat16),
        grid_spec=pltpu.PrefetchScalarGridSpec(
            num_scalar_prefetch=0,
            grid=(n_pad // tm,),
            in_specs=[
                pl.BlockSpec((tm, f_in_p), lambda i: (i, 0)),
                pl.BlockSpec((f_in_p, f_out_p), lambda i: (0, 0)),   # W resident
            ],
            out_specs=pl.BlockSpec((tm, f_out_p), lambda i: (i, 0)),
        ),
        compiler_params=pltpu.CompilerParams(
            dimension_semantics=("parallel",),
            vmem_limit_bytes=_VMEM_LIMIT,
        ),
        cost_estimate=pl.CostEstimate(
            flops=flops, transcendentals=0, bytes_accessed=bytes_accessed
        ),
    )(x_pad, w_pad)


# ------------------ kernel 2: out = A @ H + b (+ ReLU) ---------------------- #

def agg_kernel(kmap_ref, a_ref, h_ref, b_ref, o_ref, acc_ref,
               *, tk, h_resident, apply_relu):
    i = pl.program_id(0)
    k = pl.program_id(1)

    @pl.when(k == 0)
    def _():
        acc_ref[...] = jnp.zeros_like(acc_ref)

    # Skip the matmul entirely for all-zero A tiles (their DMA was also skipped
    # because the remapped block index repeats the previous one).
    @pl.when(kmap_ref[i, k] == k)
    def _():
        if h_resident:
            start = pl.multiple_of(k * tk, tk)
            h_blk = h_ref[pl.ds(start, tk), :]
        else:
            h_blk = h_ref[...]
        acc_ref[...] += jnp.dot(
            a_ref[...], h_blk, preferred_element_type=jnp.float32
        )

    @pl.when(k == pl.num_programs(1) - 1)
    def _():
        z = acc_ref[...] + b_ref[...]          # bias added exactly once (finalize)
        if apply_relu:
            z = jnp.maximum(z, 0.0)
        o_ref[...] = z.astype(o_ref.dtype)


def agg_matmul(kmap, a_pad, h, b_pad, *, tm, tk, h_resident, apply_relu, out_dtype):
    """kmap: [Np/tm, Np/tk] i32 (scalar-prefetched), a_pad: [Np, Np] bf16,
    h: [Np, Fout_p] bf16, b_pad: [1, Fout_p] f32."""
    n_pad = a_pad.shape[0]
    f_out_p = h.shape[1]
    kernel = functools.partial(
        agg_kernel, tk=tk, h_resident=h_resident, apply_relu=apply_relu
    )

    if h_resident:
        # H DMA'd once, stays resident across the whole grid.
        h_spec = pl.BlockSpec((n_pad, f_out_p), lambda i, k, km: (0, 0))
        h_bytes = n_pad * f_out_p * 2
    else:
        # Tiled fallback for graphs whose H does not fit VMEM; the remapped
        # index still skips DMAs of H tiles paired with all-zero A tiles.
        h_spec = pl.BlockSpec((tk, f_out_p), lambda i, k, km: (km[i, k], 0))
        h_bytes = (n_pad // tm) * n_pad * f_out_p * 2

    out_itemsize = jnp.dtype(out_dtype).itemsize
    flops = 2 * n_pad * n_pad * f_out_p
    bytes_accessed = a_pad.size * 2 + h_bytes + n_pad * f_out_p * out_itemsize

    return pl.pallas_call(
        kernel,
        out_shape=jax.ShapeDtypeStruct((n_pad, f_out_p), out_dtype),
        grid_spec=pltpu.PrefetchScalarGridSpec(
            num_scalar_prefetch=1,
            grid=(n_pad // tm, n_pad // tk),             # reduction axis last
            in_specs=[
                pl.BlockSpec((tm, tk), lambda i, k, km: (i, km[i, k])),
                h_spec,
                pl.BlockSpec((1, f_out_p), lambda i, k, km: (0, 0)),
            ],
            out_specs=pl.BlockSpec((tm, f_out_p), lambda i, k, km: (i, 0)),
            scratch_shapes=[pltpu.VMEM((tm, f_out_p), jnp.float32)],
        ),
        compiler_params=pltpu.CompilerParams(
            dimension_semantics=("parallel", "arbitrary"),
            vmem_limit_bytes=_VMEM_LIMIT,
        ),
        cost_estimate=pl.CostEstimate(
            flops=flops, transcendentals=0, bytes_accessed=bytes_accessed
        ),
    )(kmap, a_pad, h, b_pad)


# --------------------------- plain-JAX glue --------------------------------- #

def gcn_norm_dense_padded(edge_index, edge_weight, num_nodes, n_pad):
    """PyG gcn_norm (add self loops + D^-1/2 (A+I) D^-1/2), densified into a
    padded [n_pad, n_pad] f32 buffer (padding rows/cols stay zero)."""
    src = edge_index[0]
    dst = edge_index[1]
    loop = jnp.arange(num_nodes, dtype=src.dtype)
    src = jnp.concatenate([src, loop])
    dst = jnp.concatenate([dst, loop])
    w = jnp.concatenate(
        [edge_weight.astype(jnp.float32), jnp.ones((num_nodes,), jnp.float32)]
    )
    deg = jnp.zeros((num_nodes,), jnp.float32).at[dst].add(w)
    dinv = jnp.where(deg > 0, jax.lax.rsqrt(deg), 0.0)
    norm = dinv[src] * w * dinv[dst]
    # message from src (j) aggregated at dst (i):  A[i, j] = norm(e)
    return jnp.zeros((n_pad, n_pad), jnp.float32).at[dst, src].add(norm)


def prepare_graph(edge_index, edge_weight, num_nodes, params):
    """One-time, cacheable graph prep (GCNConv cached=True semantics):
    normalized dense adjacency (bf16, padded) + block-sparse tile index map +
    static tiling plan."""
    n_pad = _round_up(max(num_nodes, 1), 512)
    a_pad = gcn_norm_dense_padded(
        edge_index, edge_weight, num_nodes, n_pad
    ).astype(jnp.bfloat16)
    f_out_p_max = max(_round_up(w.shape[1], 128) for w, _ in params)
    tm, tk, h_res = _agg_plan(n_pad, f_out_p_max, 4)   # itemsize 4 = worst case
    kmap = _tile_kmap(a_pad, tm, tk)
    plan = (num_nodes, n_pad, tm, tk, h_res)
    return a_pad, kmap, plan


def gcn_forward(x, a_pad, kmap, params, *, plan):
    """Mirrors the PyTorch GCN.forward control flow: ReLU + dropout are applied
    before every conv except the first AND except the final conv (the last conv
    consumes the un-activated output of the second-to-last conv).  Dropout is
    eval-mode identity."""
    n, n_pad, tm, tk, h_resident = plan
    f_in0 = x.shape[1]
    f_in_p0 = _round_up(f_in0, 128)
    xp = (
        jnp.zeros((n_pad, f_in_p0), jnp.bfloat16)
        .at[:n, :f_in0]
        .set(x.astype(jnp.bfloat16))
    )

    n_layers_total = len(params)
    out = None
    for idx, (w, b) in enumerate(params):
        f_in, f_out = w.shape
        f_in_p = _round_up(f_in, 128)
        f_out_p = _round_up(f_out, 128)
        w_pad = (
            jnp.zeros((f_in_p, f_out_p), jnp.bfloat16)
            .at[:f_in, :f_out]
            .set(w.astype(jnp.bfloat16))
        )
        b_pad = (
            jnp.zeros((1, f_out_p), jnp.float32)
            .at[0, :f_out]
            .set(b.astype(jnp.float32))
        )

        is_last = idx == n_layers_total - 1
        # Only outputs of layers 0 .. L-3 are activated (matches the reference).
        apply_relu = idx < n_layers_total - 2
        out_dtype = jnp.float32 if is_last else jnp.bfloat16

        h = xw_matmul(xp, w_pad, tm=_xw_plan(n_pad, f_in_p, f_out_p))
        out = agg_matmul(
            kmap, a_pad, h, b_pad,
            tm=tm, tk=tk, h_resident=h_resident,
            apply_relu=apply_relu, out_dtype=out_dtype,
        )
        # Hidden layers emit bf16 directly; feed next layer without an extra cast.
        xp = out

    f_out_last = params[-1][0].shape[1]
    return out[:n, :f_out_last]


def gcn_reference(x, edge_index, edge_weight, params):
    """Pure-JAX f32 reference with identical forward semantics."""
    n = x.shape[0]
    a = gcn_norm_dense_padded(edge_index, edge_weight, n, n)
    h = x
    total = len(params)
    for idx, (w, b) in enumerate(params):
        h = a @ (h @ w) + b[None, :]
        if idx < total - 2:
            h = jnp.maximum(h, 0.0)
    return h


def init_params(key, in_feats, n_hidden, n_classes, n_layers):
    dims = [in_feats] + [n_hidden] * n_layers + [n_classes]
    params = []
    for i in range(len(dims) - 1):
        key, kw = jax.random.split(key)
        f_in, f_out = dims[i], dims[i + 1]
        scale = 1.0 / jnp.sqrt(jnp.float32(f_in))
        w = jax.random.uniform(kw, (f_in, f_out), jnp.float32, -scale, scale)
        b = jnp.zeros((f_out,), jnp.float32)
        params.append((w, b))
    return params


if __name__ == "__main__":
    key = jax.random.PRNGKey(0)

    # Small synthetic graph; edges confined to the first 400 nodes so several
    # adjacency tiles are all-zero and the block-sparse skip path is exercised.
    num_nodes = 1100
    num_edges = 2500
    in_feats, n_hidden, n_classes, n_layers = 96, 64, 7, 2

    k_x, k_src, k_dst, k_w, k_p = jax.random.split(key, 5)
    x = jax.random.normal(k_x, (num_nodes, in_feats), jnp.float32)
    src = jax.random.randint(k_src, (num_edges,), 0, 400, jnp.int32)
    dst = jax.random.randint(k_dst, (num_edges,), 0, 400, jnp.int32)
    edge_index = jnp.stack([src, dst], axis=0)
    edge_weight = jax.random.uniform(k_w, (num_edges,), jnp.float32, 0.5, 1.5)

    params = init_params(k_p, in_feats, n_hidden, n_classes, n_layers)

    # Graph prep hoisted out of the per-forward path (cached=True semantics).
    a_pad, kmap, plan = prepare_graph(edge_index, edge_weight, num_nodes, params)

    fwd = jax.jit(functools.partial(gcn_forward, plan=plan))
    out = jax.block_until_ready(fwd(x, a_pad, kmap, params))
    assert out.shape == (num_nodes, n_classes)

    ref = jax.block_until_ready(gcn_reference(x, edge_index, edge_weight, params))
    rel_err = jnp.max(jnp.abs(out - ref)) / (jnp.max(jnp.abs(ref)) + 1e-6)
    assert bool(rel_err < 5e-2), f"rel_err={float(rel_err)}"

    print("KERNEL_OK")
</pallas_src>

<mosaic_0001>
module attributes {stable_mosaic.version = 11 : i64} {
  func.func @xw_kernel(%arg0: i32, %arg1: memref<512x128xbf16, #tpu.memory_space<vmem>>, %arg2: memref<128x128xbf16, #tpu.memory_space<vmem>>, %arg3: memref<512x128xbf16, #tpu.memory_space<vmem>>) attributes {dimension_semantics = [#tpu.dimension_semantics<parallel>], iteration_bounds = array<i64: 3>, scalar_prefetch = 0 : i64, scratch_operands = 0 : i64, tpu.core_type = #tpu.core_type<tc>, window_params = [{transform_indices = @transform_0, window_bounds = array<i64: 512, 128>}, {pipeline_mode = #tpu.pipeline_mode<synchronous>, transform_indices = @transform_1, window_bounds = array<i64: 128, 128>}, {transform_indices = @transform_2, window_bounds = array<i64: 512, 128>}]} {
    %c0 = arith.constant 0 : index
    %c0_0 = arith.constant 0 : index
    %0 = vector.load %arg1[%c0, %c0_0] : memref<512x128xbf16, #tpu.memory_space<vmem>>, vector<512x128xbf16>
    %c0_1 = arith.constant 0 : index
    %c0_2 = arith.constant 0 : index
    %1 = vector.load %arg2[%c0_1, %c0_2] : memref<128x128xbf16, #tpu.memory_space<vmem>>, vector<128x128xbf16>
    %cst = arith.constant dense<0.000000e+00> : vector<512x128xf32>
    %2 = tpu.matmul %0, %1, %cst {dimension_numbers = #tpu.dot_dimension_numbers<[1], [0], [0], [1], [0, 0, 1, 1], [], []>} : vector<512x128xbf16>, vector<128x128xbf16>, vector<512x128xf32> -> vector<512x128xf32>
    %3 = arith.truncf %2 : vector<512x128xf32> to vector<512x128xbf16>
    %c0_3 = arith.constant 0 : index
    %c0_4 = arith.constant 0 : index
    %4 = vector.load %arg3[%c0_3, %c0_4] : memref<512x128xbf16, #tpu.memory_space<vmem>>, vector<512x128xbf16>
    tpu.vector_store %arg3[%c0_3, %c0_4], %3 {strides = array<i32>} : memref<512x128xbf16, #tpu.memory_space<vmem>>, vector<512x128xbf16>,
    return
  }
  func.func @transform_0(%arg0: i32) -> (i32, i32) {
    %c0_i32 = arith.constant 0 : i32
    %c0_i32_0 = arith.constant 0 : i32
    return %arg0, %c0_i32 : i32, i32
  }
  func.func @transform_1(%arg0: i32) -> (i32, i32) {
    %c0_i32 = arith.constant 0 : i32
    %c0_i32_0 = arith.constant 0 : i32
    %c0_i32_1 = arith.constant 0 : i32
    return %c0_i32, %c0_i32_0 : i32, i32
  }
  func.func @transform_2(%arg0: i32) -> (i32, i32) {
    %c0_i32 = arith.constant 0 : i32
    %c0_i32_0 = arith.constant 0 : i32
    return %arg0, %c0_i32 : i32, i32
  }
}

module attributes {stable_mosaic.version = 11 : i64} {
  func.func @agg_kernel(%arg0: i32, %arg1: i32, %arg2: memref<3x3xi32, #tpu.memory_space<smem>>, %arg3: memref<512x512xbf16, #tpu.memory_space<vmem>>, %arg4: memref<1536x128xbf16, #tpu.memory_space<vmem>>, %arg5: memref<1x128xf32, #tpu.memory_space<vmem>>, %arg6: memref<512x128xbf16, #tpu.memory_space<vmem>>, %arg7: memref<512x128xf32, #tpu.memory_space<vmem>>) attributes {dimension_semantics = [#tpu.dimension_semantics<parallel>, #tpu.dimension_semantics<arbitrary>], iteration_bounds = array<i64: 3, 3>, scalar_prefetch = 1 : i64, scratch_operands = 1 : i64, tpu.core_type = #tpu.core_type<tc>, window_params = [{transform_indices = @transform_0, window_bounds = array<i64: 512, 512>}, {pipeline_mode = #tpu.pipeline_mode<synchronous>, transform_indices = @transform_1, window_bounds = array<i64: 1536, 128>}, {pipeline_mode = #tpu.pipeline_mode<synchronous>, transform_indices = @transform_2, window_bounds = array<i64: 1, 128>}, {transform_indices = @transform_3, window_bounds = array<i64: 512, 128>}]} {
    %c0_i32 = arith.constant 0 : i32
    %0 = arith.cmpi eq, %arg1, %c0_i32 : i32
    %1 = arith.extui %0 : i1 to i32
    %c0_i32_0 = arith.constant 0 : i32
    %2 = arith.cmpi ne, %1, %c0_i32_0 : i32
    scf.if %2 {
      %cst = arith.constant 0.000000e+00 : f32
      %12 = vector.broadcast %cst : f32 to vector<512x128xf32>
      %c0 = arith.constant 0 : index
      %c0_3 = arith.constant 0 : index
      %13 = vector.load %arg7[%c0, %c0_3] : memref<512x128xf32, #tpu.memory_space<vmem>>, vector<512x128xf32>
      tpu.vector_store %arg7[%c0, %c0_3], %12 {strides = array<i32>} : memref<512x128xf32, #tpu.memory_space<vmem>>, vector<512x128xf32>,
    } else {
    }
    %3 = arith.index_cast %arg0 : i32 to index
    %4 = arith.index_cast %arg1 : i32 to index
    %5 = memref.load %arg2[%3, %4] : memref<3x3xi32, #tpu.memory_space<smem>>
    %6 = arith.cmpi eq, %5, %arg1 : i32
    %7 = arith.extui %6 : i1 to i32
    %c0_i32_1 = arith.constant 0 : i32
    %8 = arith.cmpi ne, %7, %c0_i32_1 : i32
    scf.if %8 {
      %c512_i32 = arith.constant 512 : i32
      %12 = arith.muli %arg1, %c512_i32 : i32
      %13 = tpu.assume_multiple %12, 512 : i32
      %14 = arith.index_cast %13 : i32 to index
      %c0 = arith.constant 0 : index
      %15 = vector.load %arg4[%14, %c0] : memref<1536x128xbf16, #tpu.memory_space<vmem>>, vector<512x128xbf16>
      %c0_3 = arith.constant 0 : index
      %c0_4 = arith.constant 0 : index
      %16 = vector.load %arg7[%c0_3, %c0_4] : memref<512x128xf32, #tpu.memory_space<vmem>>, vector<512x128xf32>
      %c0_5 = arith.constant 0 : index
      %c0_6 = arith.constant 0 : index
      %17 = vector.load %arg3[%c0_5, %c0_6] : memref<512x512xbf16, #tpu.memory_space<vmem>>, vector<512x512xbf16>
      %cst = arith.constant dense<0.000000e+00> : vector<512x128xf32>
      %18 = tpu.matmul %17, %15, %cst {dimension_numbers = #tpu.dot_dimension_numbers<[1], [0], [0], [1], [0, 0, 1, 1], [], []>} : vector<512x512xbf16>, vector<512x128xbf16>, vector<512x128xf32> -> vector<512x128xf32>
      %19 = arith.addf %16, %18 : vector<512x128xf32>
      %c0_7 = arith.constant 0 : index
      %c0_8 = arith.constant 0 : index
      %20 = vector.load %arg7[%c0_7, %c0_8] : memref<512x128xf32, #tpu.memory_space<vmem>>, vector<512x128xf32>
      tpu.vector_store %arg7[%c0_7, %c0_8], %19 {strides = array<i32>} : memref<512x128xf32, #tpu.memory_space<vmem>>, vector<512x128xf32>,
    } else {
    }
    %c2_i32 = arith.constant 2 : i32
    %9 = arith.cmpi eq, %arg1, %c2_i32 : i32
    %10 = arith.extui %9 : i1 to i32
    %c0_i32_2 = arith.constant 0 : i32
    %11 = arith.cmpi ne, %10, %c0_i32_2 : i32
    scf.if %11 {
      %c0 = arith.constant 0 : index
      %c0_3 = arith.constant 0 : index
      %12 = vector.load %arg7[%c0, %c0_3] : memref<512x128xf32, #tpu.memory_space<vmem>>, vector<512x128xf32>
      %c0_4 = arith.constant 0 : index
      %c0_5 = arith.constant 0 : index
      %13 = vector.load %arg5[%c0_4, %c0_5] : memref<1x128xf32, #tpu.memory_space<vmem>>, vector<1x128xf32>
      %14 = vector.broadcast %13 : vector<1x128xf32> to vector<512x128xf32>
      %15 = arith.addf %12, %14 : vector<512x128xf32>
      %cst = arith.constant 0.000000e+00 : f32
      %16 = vector.broadcast %cst : f32 to vector<512x128xf32>
      %17 = arith.maximumf %15, %16 : vector<512x128xf32>
      %18 = arith.truncf %17 : vector<512x128xf32> to vector<512x128xbf16>
      %c0_6 = arith.constant 0 : index
      %c0_7 = arith.constant 0 : index
      %19 = vector.load %arg6[%c0_6, %c0_7] : memref<512x128xbf16, #tpu.memory_space<vmem>>, vector<512x128xbf16>
      tpu.vector_store %arg6[%c0_6, %c0_7], %18 {strides = array<i32>} : memref<512x128xbf16, #tpu.memory_space<vmem>>, vector<512x128xbf16>,
    } else {
    }
    return
  }
  func.func @transform_0(%arg0: i32, %arg1: i32, %arg2: memref<3x3xi32, #tpu.memory_space<smem>>) -> (i32, i32) {
    %0 = arith.index_cast %arg0 : i32 to index
    %1 = arith.index_cast %arg1 : i32 to index
    %2 = memref.load %arg2[%0, %1] : memref<3x3xi32, #tpu.memory_space<smem>>
    %c0_i32 = arith.constant 0 : i32
    return %arg0, %2 : i32, i32
  }
  func.func @transform_1(%arg0: i32, %arg1: i32, %arg2: memref<3x3xi32, #tpu.memory_space<smem>>) -> (i32, i32) {
    %c0_i32 = arith.constant 0 : i32
    %c0_i32_0 = arith.constant 0 : i32
    %c0_i32_1 = arith.constant 0 : i32
    return %c0_i32, %c0_i32_0 : i32, i32
  }
  func.func @transform_2(%arg0: i32, %arg1: i32, %arg2: memref<3x3xi32, #tpu.memory_space<smem>>) -> (i32, i32) {
    %c0_i32 = arith.constant 0 : i32
    %c0_i32_0 = arith.constant 0 : i32
    %c0_i32_1 = arith.constant 0 : i32
    return %c0_i32, %c0_i32_0 : i32, i32
  }
  func.func @transform_3(%arg0: i32, %arg1: i32, %arg2: memref<3x3xi32, #tpu.memory_space<smem>>) -> (i32, i32) {
    %c0_i32 = arith.constant 0 : i32
    %c0_i32_0 = arith.constant 0 : i32
    return %arg0, %c0_i32 : i32, i32
  }
}

module attributes {stable_mosaic.version = 11 : i64} {
  func.func @agg_kernel(%arg0: i32, %arg1: i32, %arg2: memref<3x3xi32, #tpu.memory_space<smem>>, %arg3: memref<512x512xbf16, #tpu.memory_space<vmem>>, %arg4: memref<1536x128xbf16, #tpu.memory_space<vmem>>, %arg5: memref<1x128xf32, #tpu.memory_space<vmem>>, %arg6: memref<512x128xf32, #tpu.memory_space<vmem>>, %arg7: memref<512x128xf32, #tpu.memory_space<vmem>>) attributes {dimension_semantics = [#tpu.dimension_semantics<parallel>, #tpu.dimension_semantics<arbitrary>], iteration_bounds = array<i64: 3, 3>, scalar_prefetch = 1 : i64, scratch_operands = 1 : i64, tpu.core_type = #tpu.core_type<tc>, window_params = [{transform_indices = @transform_0, window_bounds = array<i64: 512, 512>}, {pipeline_mode = #tpu.pipeline_mode<synchronous>, transform_indices = @transform_1, window_bounds = array<i64: 1536, 128>}, {pipeline_mode = #tpu.pipeline_mode<synchronous>, transform_indices = @transform_2, window_bounds = array<i64: 1, 128>}, {transform_indices = @transform_3, window_bounds = array<i64: 512, 128>}]} {
    %c0_i32 = arith.constant 0 : i32
    %0 = arith.cmpi eq, %arg1, %c0_i32 : i32
    %1 = arith.extui %0 : i1 to i32
    %c0_i32_0 = arith.constant 0 : i32
    %2 = arith.cmpi ne, %1, %c0_i32_0 : i32
    scf.if %2 {
      %cst = arith.constant 0.000000e+00 : f32
      %12 = vector.broadcast %cst : f32 to vector<512x128xf32>
      %c0 = arith.constant 0 : index
      %c0_3 = arith.constant 0 : index
      %13 = vector.load %arg7[%c0, %c0_3] : memref<512x128xf32, #tpu.memory_space<vmem>>, vector<512x128xf32>
      tpu.vector_store %arg7[%c0, %c0_3], %12 {strides = array<i32>} : memref<512x128xf32, #tpu.memory_space<vmem>>, vector<512x128xf32>,
    } else {
    }
    %3 = arith.index_cast %arg0 : i32 to index
    %4 = arith.index_cast %arg1 : i32 to index
    %5 = memref.load %arg2[%3, %4] : memref<3x3xi32, #tpu.memory_space<smem>>
    %6 = arith.cmpi eq, %5, %arg1 : i32
    %7 = arith.extui %6 : i1 to i32
    %c0_i32_1 = arith.constant 0 : i32
    %8 = arith.cmpi ne, %7, %c0_i32_1 : i32
    scf.if %8 {
      %c512_i32 = arith.constant 512 : i32
      %12 = arith.muli %arg1, %c512_i32 : i32
      %13 = tpu.assume_multiple %12, 512 : i32
      %14 = arith.index_cast %13 : i32 to index
      %c0 = arith.constant 0 : index
      %15 = vector.load %arg4[%14, %c0] : memref<1536x128xbf16, #tpu.memory_space<vmem>>, vector<512x128xbf16>
      %c0_3 = arith.constant 0 : index
      %c0_4 = arith.constant 0 : index
      %16 = vector.load %arg7[%c0_3, %c0_4] : memref<512x128xf32, #tpu.memory_space<vmem>>, vector<512x128xf32>
      %c0_5 = arith.constant 0 : index
      %c0_6 = arith.constant 0 : index
      %17 = vector.load %arg3[%c0_5, %c0_6] : memref<512x512xbf16, #tpu.memory_space<vmem>>, vector<512x512xbf16>
      %cst = arith.constant dense<0.000000e+00> : vector<512x128xf32>
      %18 = tpu.matmul %17, %15, %cst {dimension_numbers = #tpu.dot_dimension_numbers<[1], [0], [0], [1], [0, 0, 1, 1], [], []>} : vector<512x512xbf16>, vector<512x128xbf16>, vector<512x128xf32> -> vector<512x128xf32>
      %19 = arith.addf %16, %18 : vector<512x128xf32>
      %c0_7 = arith.constant 0 : index
      %c0_8 = arith.constant 0 : index
      %20 = vector.load %arg7[%c0_7, %c0_8] : memref<512x128xf32, #tpu.memory_space<vmem>>, vector<512x128xf32>
      tpu.vector_store %arg7[%c0_7, %c0_8], %19 {strides = array<i32>} : memref<512x128xf32, #tpu.memory_space<vmem>>, vector<512x128xf32>,
    } else {
    }
    %c2_i32 = arith.constant 2 : i32
    %9 = arith.cmpi eq, %arg1, %c2_i32 : i32
    %10 = arith.extui %9 : i1 to i32
    %c0_i32_2 = arith.constant 0 : i32
    %11 = arith.cmpi ne, %10, %c0_i32_2 : i32
    scf.if %11 {
      %c0 = arith.constant 0 : index
      %c0_3 = arith.constant 0 : index
      %12 = vector.load %arg7[%c0, %c0_3] : memref<512x128xf32, #tpu.memory_space<vmem>>, vector<512x128xf32>
      %c0_4 = arith.constant 0 : index
      %c0_5 = arith.constant 0 : index
      %13 = vector.load %arg5[%c0_4, %c0_5] : memref<1x128xf32, #tpu.memory_space<vmem>>, vector<1x128xf32>
      %14 = vector.broadcast %13 : vector<1x128xf32> to vector<512x128xf32>
      %15 = arith.addf %12, %14 : vector<512x128xf32>
      %c0_6 = arith.constant 0 : index
      %c0_7 = arith.constant 0 : index
      %16 = vector.load %arg6[%c0_6, %c0_7] : memref<512x128xf32, #tpu.memory_space<vmem>>, vector<512x128xf32>
      tpu.vector_store %arg6[%c0_6, %c0_7], %15 {strides = array<i32>} : memref<512x128xf32, #tpu.memory_space<vmem>>, vector<512x128xf32>,
    } else {
    }
    return
  }
  func.func @transform_0(%arg0: i32, %arg1: i32, %arg2: memref<3x3xi32, #tpu.memory_space<smem>>) -> (i32, i32) {
    %0 = arith.index_cast %arg0 : i32 to index
    %1 = arith.index_cast %arg1 : i32 to index
    %2 = memref.load %arg2[%0, %1] : memref<3x3xi32, #tpu.memory_space<smem>>
    %c0_i32 = arith.constant 0 : i32
    return %arg0, %2 : i32, i32
  }
  func.func @transform_1(%arg0: i32, %arg1: i32, %arg2: memref<3x3xi32, #tpu.memory_space<smem>>) -> (i32, i32) {
    %c0_i32 = arith.constant 0 : i32
    %c0_i32_0 = arith.constant 0 : i32
    %c0_i32_1 = arith.constant 0 : i32
    return %c0_i32, %c0_i32_0 : i32, i32
  }
  func.func @transform_2(%arg0: i32, %arg1: i32, %arg2: memref<3x3xi32, #tpu.memory_space<smem>>) -> (i32, i32) {
    %c0_i32 = arith.constant 0 : i32
    %c0_i32_0 = arith.constant 0 : i32
    %c0_i32_1 = arith.constant 0 : i32
    return %c0_i32, %c0_i32_0 : i32, i32
  }
  func.func @transform_3(%arg0: i32, %arg1: i32, %arg2: memref<3x3xi32, #tpu.memory_space<smem>>) -> (i32, i32) {
    %c0_i32 = arith.constant 0 : i32
    %c0_i32_0 = arith.constant 0 : i32
    return %arg0, %c0_i32 : i32, i32
  }
}

module attributes {stable_mosaic.version = 11 : i64} {
  func.func @agg_kernel(%arg0: i32, %arg1: i32, %arg2: memref<3x3xi32, #tpu.memory_space<smem>>, %arg3: memref<512x512xbf16, #tpu.memory_space<vmem>>, %arg4: memref<1536x128xbf16, #tpu.memory_space<vmem>>, %arg5: memref<1x128xf32, #tpu.memory_space<vmem>>, %arg6: memref<512x128xbf16, #tpu.memory_space<vmem>>, %arg7: memref<512x128xf32, #tpu.memory_space<vmem>>) attributes {dimension_semantics = [#tpu.dimension_semantics<parallel>, #tpu.dimension_semantics<arbitrary>], iteration_bounds = array<i64: 3, 3>, scalar_prefetch = 1 : i64, scratch_operands = 1 : i64, tpu.core_type = #tpu.core_type<tc>, window_params = [{transform_indices = @transform_0, window_bounds = array<i64: 512, 512>}, {pipeline_mode = #tpu.pipeline_mode<synchronous>, transform_indices = @transform_1, window_bounds = array<i64: 1536, 128>}, {pipeline_mode = #tpu.pipeline_mode<synchronous>, transform_indices = @transform_2, window_bounds = array<i64: 1, 128>}, {transform_indices = @transform_3, window_bounds = array<i64: 512, 128>}]} {
    %c0_i32 = arith.constant 0 : i32
    %0 = arith.cmpi eq, %arg1, %c0_i32 : i32
    %1 = arith.extui %0 : i1 to i32
    %c0_i32_0 = arith.constant 0 : i32
    %2 = arith.cmpi ne, %1, %c0_i32_0 : i32
    scf.if %2 {
      %cst = arith.constant 0.000000e+00 : f32
      %12 = vector.broadcast %cst : f32 to vector<512x128xf32>
      %c0 = arith.constant 0 : index
      %c0_3 = arith.constant 0 : index
      %13 = vector.load %arg7[%c0, %c0_3] : memref<512x128xf32, #tpu.memory_space<vmem>>, vector<512x128xf32>
      tpu.vector_store %arg7[%c0, %c0_3], %12 {strides = array<i32>} : memref<512x128xf32, #tpu.memory_space<vmem>>, vector<512x128xf32>,
    } else {
    }
    %3 = arith.index_cast %arg0 : i32 to index
    %4 = arith.index_cast %arg1 : i32 to index
    %5 = memref.load %arg2[%3, %4] : memref<3x3xi32, #tpu.memory_space<smem>>
    %6 = arith.cmpi eq, %5, %arg1 : i32
    %7 = arith.extui %6 : i1 to i32
    %c0_i32_1 = arith.constant 0 : i32
    %8 = arith.cmpi ne, %7, %c0_i32_1 : i32
    scf.if %8 {
      %c512_i32 = arith.constant 512 : i32
      %12 = arith.muli %arg1, %c512_i32 : i32
      %13 = tpu.assume_multiple %12, 512 : i32
      %14 = arith.index_cast %13 : i32 to index
      %c0 = arith.constant 0 : index
      %15 = vector.load %arg4[%14, %c0] : memref<1536x128xbf16, #tpu.memory_space<vmem>>, vector<512x128xbf16>
      %c0_3 = arith.constant 0 : index
      %c0_4 = arith.constant 0 : index
      %16 = vector.load %arg7[%c0_3, %c0_4] : memref<512x128xf32, #tpu.memory_space<vmem>>, vector<512x128xf32>
      %c0_5 = arith.constant 0 : index
      %c0_6 = arith.constant 0 : index
      %17 = vector.load %arg3[%c0_5, %c0_6] : memref<512x512xbf16, #tpu.memory_space<vmem>>, vector<512x512xbf16>
      %cst = arith.constant dense<0.000000e+00> : vector<512x128xf32>
      %18 = tpu.matmul %17, %15, %cst {dimension_numbers = #tpu.dot_dimension_numbers<[1], [0], [0], [1], [0, 0, 1, 1], [], []>} : vector<512x512xbf16>, vector<512x128xbf16>, vector<512x128xf32> -> vector<512x128xf32>
      %19 = arith.addf %16, %18 : vector<512x128xf32>
      %c0_7 = arith.constant 0 : index
      %c0_8 = arith.constant 0 : index
      %20 = vector.load %arg7[%c0_7, %c0_8] : memref<512x128xf32, #tpu.memory_space<vmem>>, vector<512x128xf32>
      tpu.vector_store %arg7[%c0_7, %c0_8], %19 {strides = array<i32>} : memref<512x128xf32, #tpu.memory_space<vmem>>, vector<512x128xf32>,
    } else {
    }
    %c2_i32 = arith.constant 2 : i32
    %9 = arith.cmpi eq, %arg1, %c2_i32 : i32
    %10 = arith.extui %9 : i1 to i32
    %c0_i32_2 = arith.constant 0 : i32
    %11 = arith.cmpi ne, %10, %c0_i32_2 : i32
    scf.if %11 {
      %c0 = arith.constant 0 : index
      %c0_3 = arith.constant 0 : index
      %12 = vector.load %arg7[%c0, %c0_3] : memref<512x128xf32, #tpu.memory_space<vmem>>, vector<512x128xf32>
      %c0_4 = arith.constant 0 : index
      %c0_5 = arith.constant 0 : index
      %13 = vector.load %arg5[%c0_4, %c0_5] : memref<1x128xf32, #tpu.memory_space<vmem>>, vector<1x128xf32>
      %14 = vector.broadcast %13 : vector<1x128xf32> to vector<512x128xf32>
      %15 = arith.addf %12, %14 : vector<512x128xf32>
      %16 = arith.truncf %15 : vector<512x128xf32> to vector<512x128xbf16>
      %c0_6 = arith.constant 0 : index
      %c0_7 = arith.constant 0 : index
      %17 = vector.load %arg6[%c0_6, %c0_7] : memref<512x128xbf16, #tpu.memory_space<vmem>>, vector<512x128xbf16>
      tpu.vector_store %arg6[%c0_6, %c0_7], %16 {strides = array<i32>} : memref<512x128xbf16, #tpu.memory_space<vmem>>, vector<512x128xbf16>,
    } else {
    }
    return
  }
  func.func @transform_0(%arg0: i32, %arg1: i32, %arg2: memref<3x3xi32, #tpu.memory_space<smem>>) -> (i32, i32) {
    %0 = arith.index_cast %arg0 : i32 to index
    %1 = arith.index_cast %arg1 : i32 to index
    %2 = memref.load %arg2[%0, %1] : memref<3x3xi32, #tpu.memory_space<smem>>
    %c0_i32 = arith.constant 0 : i32
    return %arg0, %2 : i32, i32
  }
  func.func @transform_1(%arg0: i32, %arg1: i32, %arg2: memref<3x3xi32, #tpu.memory_space<smem>>) -> (i32, i32) {
    %c0_i32 = arith.constant 0 : i32
    %c0_i32_0 = arith.constant 0 : i32
    %c0_i32_1 = arith.constant 0 : i32
    return %c0_i32, %c0_i32_0 : i32, i32
  }
  func.func @transform_2(%arg0: i32, %arg1: i32, %arg2: memref<3x3xi32, #tpu.memory_space<smem>>) -> (i32, i32) {
    %c0_i32 = arith.constant 0 : i32
    %c0_i32_0 = arith.constant 0 : i32
    %c0_i32_1 = arith.constant 0 : i32
    return %c0_i32, %c0_i32_0 : i32, i32
  }
  func.func @transform_3(%arg0: i32, %arg1: i32, %arg2: memref<3x3xi32, #tpu.memory_space<smem>>) -> (i32, i32) {
    %c0_i32 = arith.constant 0 : i32
    %c0_i32_0 = arith.constant 0 : i32
    return %arg0, %c0_i32 : i32, i32
  }
}

</mosaic_0001>

<llo_original>
// kernel: gcn_forward.6
$region0: #{gcn_forward.6}
  #allocation0 [shape = 'u32[]', space=smem, size = 0x4, offset = 0x4, fixed_abs, tag = 'smem constant byte address 0x4 - core index']
  #allocation1 [shape = 'u32[72,128]{1,0:T(1,128)}', space=vmem, size = 0x9000, scoped, tag = 'internal scratch']
  %s0 = inlined_call_operand.vmem [shape: bf16[1536,128], index: 0, kind: input, shape index: {}]
  %s1 = inlined_call_operand.vmem [shape: bf16[128,128], index: 1, kind: input, shape index: {}]
  %s2 = inlined_call_operand.vmem [shape: bf16[1536,128], index: 2, kind: output, shape index: {}]
  %s3 = sld [smem:[#allocation0]]
  $region41: #{gcn_forward.6} parent=0
    _
  %s5 = ssub.s32 1, %s3
  %s6 = scalar_select 0, %s5, %s3
  loop: start=0, step=1, limit=5
  $region2: #{gcn_forward.6} parent=0 // loop_pre_header
    _
  $region3: #{gcn_forward.6} parent=0 // loop_header
    %s8 = sphi 0, %s12
    %p9 = scmp.ge.s32.totalorder %s8, 5
    %s18 = sphi 0, %s20
    %s21 = sphi 0, %s18
    %s22 = sphi 0, %s21
    %s38 = sphi 0, %s22
    %s42 = sphi 0, %s42
    %s44 = sphi 0, %s42
    %s45 = sphi 0, %s44
    %s59 = sphi 0, %s45
    %s65 = sphi 0, %s67
    %s68 = sphi 0, %s65
    %s69 = sphi 0, %s68
    %s85 = sphi 0, %s69
  $region4: #{gcn_forward.6} parent=0 // loop_header_branch
    %11 = sbr.rel (%p9) target = $region8
  $region5: #{gcn_forward.6} parent=0 // loop_body
    %s13 = ssub.s32 %s8, 1
    %s14 = ssub.s32 %s8, 2
    %s15 = sadd.s32 %s8, 1
    %s16 = ssub.s32 %s8, %s15
    %p17 = scmp.eq.s32.totalorder %s16, 0
    %s19 = sadd.s32 %s18, 1
    %s20 = scalar_select %p17, %s18, %s19
    %p23 = pneg %p17
    %p24 = scmp.eq.s32.totalorder %s8, 2
    %p25 = por %p23, %p24
    %p26 = scmp.ne.s32.totalorder %s18, %s21
    %p27 = scmp.eq.s32.totalorder %s8, 0
    %p28 = por %p26, %p27
    %p29 = scmp.ne.s32.totalorder %s18, %s21
    %p30 = scmp.eq.s32.totalorder %s13, 2
    %p31 = por %p29, %p30
    %p32 = scmp.ne.s32.totalorder %s21, %s22
    %p33 = scmp.eq.s32.totalorder %s13, 0
    %p34 = por %p32, %p33
    %p35 = scmp.ne.s32.totalorder %s21, %s22
    %p36 = scmp.eq.s32.totalorder %s14, 2
    %p37 = por %p35, %p36
    %p39 = scmp.ne.s32.totalorder %s22, %s38
    %p40 = scmp.eq.s32.totalorder %s14, 0
    %p41 = por %p39, %p40
    %s43 = sadd.s32 %s42, 1
    %p46 = scmp.eq.s32.totalorder %s8, 2
    %p47 = scmp.ne.s32.totalorder %s42, %s44
    %p48 = scmp.eq.s32.totalorder %s8, 0
    %p49 = por %p47, %p48
    %p50 = scmp.ne.s32.totalorder %s42, %s44
    %p51 = scmp.eq.s32.totalorder %s13, 2
    %p52 = por %p50, %p51
    %p53 = scmp.ne.s32.totalorder %s44, %s45
    %p54 = scmp.eq.s32.totalorder %s13, 0
    %p55 = por %p53, %p54
    %p56 = scmp.ne.s32.totalorder %s44, %s45
    %p57 = scmp.eq.s32.totalorder %s14, 2
    %p58 = por %p56, %p57
    %p60 = scmp.ne.s32.totalorder %s45, %s59
    %p61 = scmp.eq.s32.totalorder %s14, 0
    %p62 = por %p60, %p61
    %s63 = ssub.s32 %s8, %s15
    %p64 = scmp.eq.s32.totalorder %s63, 0
    %s66 = sadd.s32 %s65, 1
    %s67 = scalar_select %p64, %s65, %s66
    %p70 = pneg %p64
    %p71 = scmp.eq.s32.totalorder %s8, 2
    %p72 = por %p70, %p71
    %p73 = scmp.ne.s32.totalorder %s65, %s68
    %p74 = scmp.eq.s32.totalorder %s8, 0
    %p75 = por %p73, %p74
    %p76 = scmp.ne.s32.totalorder %s65, %s68
    %p77 = scmp.eq.s32.totalorder %s13, 2
    %p78 = por %p76, %p77
    %p79 = scmp.ne.s32.totalorder %s68, %s69
    %p80 = scmp.eq.s32.totalorder %s13, 0
    %p81 = por %p79, %p80
    %p82 = scmp.ne.s32.totalorder %s68, %s69
    %p83 = scmp.eq.s32.totalorder %s14, 2
    %p84 = por %p82, %p83
    %p86 = scmp.ne.s32.totalorder %s69, %s85
    %p87 = scmp.eq.s32.totalorder %s14, 0
    %p88 = por %p86, %p87
    %p89 = scmp.le.s32.totalorder 1, %s8
    %p90 = scmp.lt.s32.totalorder %s8, 4
    %p91 = pnand %p89, %p90
    %p92 = pneg %p91
    // Predicated region
    $region9: #{gcn_forward.6} parent=5 // pred_check
      _
    $region10: #{gcn_forward.6} parent=5 // pred_check_branch
      %94 = sbr.rel (%p91) target = $region12
    $region11: #{gcn_forward.6} parent=5 // pred_region
      %s95 = ssub.s32 %s8, 1
      // Predicated region
      $region13: #{gcn_forward.6} parent=11 // pred_check
        %p96 = pneg %p55
      $region14: #{gcn_forward.6} parent=11 // pred_check_branch
        %98 = sbr.rel (%p96) target = $region16
      $region15: #{gcn_forward.6} parent=11 // pred_region
        _
      $region16: #{gcn_forward.6} parent=11 // pred_fallthru
        _
    $region12: #{gcn_forward.6} parent=5 // pred_fallthru
      _
    %p99 = scmp.lt.s32.totalorder %s8, 3
    // Predicated region
    $region17: #{gcn_forward.6} parent=5 // pred_check
      %p100 = pneg %p99
    $region18: #{gcn_forward.6} parent=5 // pred_check_branch
      %102 = sbr.rel (%p100) target = $region20
    $region19: #{gcn_forward.6} parent=5 // pred_region
      // Predicated region
      $region21: #{gcn_forward.6} parent=19 // pred_check
        %p103 = pneg %p28
      $region22: #{gcn_forward.6} parent=19 // pred_check_branch
        %105 = sbr.rel (%p103) target = $region24
      $region23: #{gcn_forward.6} parent=19 // pred_region
        %s106 = smul.u32 64, %s8
        %p107 = scmp.lt.s32.totalorder %s106, 191
        %s108 = scalar_select %p107, %s106, 191
        %s109 = smul.addr %s108, 4
        %s110 = scalar_lea.vmem %s0, %s109
        %s111 = smul.u32 64, %s8
      $region24: #{gcn_forward.6} parent=19 // pred_fallthru
        _
    $region20: #{gcn_forward.6} parent=5 // pred_fallthru
      _
    %p112 = scmp.le.s32.totalorder 1, %s8
    %p113 = scmp.lt.s32.totalorder %s8, 4
    %p114 = pnand %p112, %p113
    %p115 = pneg %p114
    // Predicated region
    $region25: #{gcn_forward.6} parent=5 // pred_check
      _
    $region26: #{gcn_forward.6} parent=5 // pred_check_branch
      %117 = sbr.rel (%p114) target = $region28
    $region27: #{gcn_forward.6} parent=5 // pred_region
      %s118 = ssub.s32 %s8, 1
      %s119 = smul.u32 64, %s13
      %p120 = scmp.lt.s32.totalorder %s119, 191
      %s121 = scalar_select %p120, %s119, 191
      %s122 = smul.addr %s121, 4
      %s123 = scalar_lea.vmem %s0, %s122
      %p124 = pneg %p34
      %p125 = pneg %p31
      %p126 = pneg %p55
      %p127 = pneg %p52
      %p128 = pneg %p81
      %p129 = pneg %p78
      %s130 = smul.u32 64, %s13
      %p131 = scmp.lt.s32.totalorder %s130, 191
      %s132 = scalar_select %p131, %s130, 191
      %s133 = smul.addr %s132, 4
      %s134 = scalar_lea.vmem %s2, %s133
      %s135 = smul.u32 64, %s13
      %p136 = scmp.lt.s32.totalorder %s135, 191
      %s137 = scalar_select %p136, %s135, 191
      %s138 = smul.addr %s137, 4
      %s139 = scalar_lea.vmem %s0, %s138
      %s140 = smul.u32 64, %s13
      %s141 = smul.u32 64, %s13
      %p142 = scmp.lt.s32.totalorder %s141, 191
      %s143 = scalar_select %p142, %s141, 191
      %s144 = smul.addr %s143, 4
      %s145 = scalar_lea.vmem %s2, %s144
      %s146 = smul.u32 64, %s13
      %v147 = vld [vmem:[%s139] sm:$0xf]
      %v148 = vld [vmem:[%s139 + $0x4] sm:$0xf]
      %v149 = vld [vmem:[%s139 + $0x8] sm:$0xf]
      %v150 = vld [vmem:[%s139 + $0xc] sm:$0xf]
      %v151 = vld [vmem:[%s139 + $0x10] sm:$0xf]
      %v152 = vld [vmem:[%s139 + $0x14] sm:$0xf]
      %v153 = vld [vmem:[%s139 + $0x18] sm:$0xf]
      %v154 = vld [vmem:[%s139 + $0x1c] sm:$0xf]
      %v155 = vld [vmem:[%s139 + $0x20] sm:$0xf]
      %v156 = vld [vmem:[%s139 + $0x24] sm:$0xf]
      %v157 = vld [vmem:[%s139 + $0x28] sm:$0xf]
      %v158 = vld [vmem:[%s139 + $0x2c] sm:$0xf]
      %v159 = vld [vmem:[%s139 + $0x30] sm:$0xf]
      %v160 = vld [vmem:[%s139 + $0x34] sm:$0xf]
      %v161 = vld [vmem:[%s139 + $0x38] sm:$0xf]
      %v162 = vld [vmem:[%s139 + $0x3c] sm:$0xf]
      %v163 = vld [vmem:[%s139 + $0x40] sm:$0xf]
      %v164 = vld [vmem:[%s139 + $0x44] sm:$0xf]
      %v165 = vld [vmem:[%s139 + $0x48] sm:$0xf]
      %v166 = vld [vmem:[%s139 + $0x4c] sm:$0xf]
      %v167 = vld [vmem:[%s139 + $0x50] sm:$0xf]
      %v168 = vld [vmem:[%s139 + $0x54] sm:$0xf]
      %v169 = vld [vmem:[%s139 + $0x58] sm:$0xf]
      %v170 = vld [vmem:[%s139 + $0x5c] sm:$0xf]
      %v171 = vld [vmem:[%s139 + $0x60] sm:$0xf]
      %v172 = vld [vmem:[%s139 + $0x64] sm:$0xf]
      %v173 = vld [vmem:[%s139 + $0x68] sm:$0xf]
      %v174 = vld [vmem:[%s139 + $0x6c] sm:$0xf]
      %v175 = vld [vmem:[%s139 + $0x70] sm:$0xf]
      %v176 = vld [vmem:[%s139 + $0x74] sm:$0xf]
      %v177 = vld [vmem:[%s139 + $0x78] sm:$0xf]
      %v178 = vld [vmem:[%s139 + $0x7c] sm:$0xf]
      %v179 = vld [vmem:[%s139 + $0x80] sm:$0xf]
      %v180 = vld [vmem:[%s139 + $0x84] sm:$0xf]
      %v181 = vld [vmem:[%s139 + $0x88] sm:$0xf]
      %v182 = vld [vmem:[%s139 + $0x8c] sm:$0xf]
      %v183 = vld [vmem:[%s139 + $0x90] sm:$0xf]
      %v184 = vld [vmem:[%s139 + $0x94] sm:$0xf]
      %v185 = vld [vmem:[%s139 + $0x98] sm:$0xf]
      %v186 = vld [vmem:[%s139 + $0x9c] sm:$0xf]
      %v187 = vld [vmem:[%s139 + $0xa0] sm:$0xf]
      %v188 = vld [vmem:[%s139 + $0xa4] sm:$0xf]
      %v189 = vld [vmem:[%s139 + $0xa8] sm:$0xf]
      %v190 = vld [vmem:[%s139 + $0xac] sm:$0xf]
      %v191 = vld [vmem:[%s139 + $0xb0] sm:$0xf]
      %v192 = vld [vmem:[%s139 + $0xb4] sm:$0xf]
      %v193 = vld [vmem:[%s139 + $0xb8] sm:$0xf]
      %v194 = vld [vmem:[%s139 + $0xbc] sm:$0xf]
      %v195 = vld [vmem:[%s139 + $0xc0] sm:$0xf]
      %v196 = vld [vmem:[%s139 + $0xc4] sm:$0xf]
      %v197 = vld [vmem:[%s139 + $0xc8] sm:$0xf]
      %v198 = vld [vmem:[%s139 + $0xcc] sm:$0xf]
      %v199 = vld [vmem:[%s139 + $0xd0] sm:$0xf]
      %v200 = vld [vmem:[%s139 + $0xd4] sm:$0xf]
      %v201 = vld [vmem:[%s139 + $0xd8] sm:$0xf]
      %v202 = vld [vmem:[%s139 + $0xdc] sm:$0xf]
      %v203 = vld [vmem:[%s139 + $0xe0] sm:$0xf]
      %v204 = vld [vmem:[%s139 + $0xe4] sm:$0xf]
      %v205 = vld [vmem:[%s139 + $0xe8] sm:$0xf]
      %v206 = vld [vmem:[%s139 + $0xec] sm:$0xf]
      %v207 = vld [vmem:[%s139 + $0xf0] sm:$0xf]
      %v208 = vld [vmem:[%s139 + $0xf4] sm:$0xf]
      %v209 = vld [vmem:[%s139 + $0xf8] sm:$0xf]
      %v210 = vld [vmem:[%s139 + $0xfc] sm:$0xf]
      %v211 = vld [vmem:[%s1] sm:$0xf]
      %v212 = vld [vmem:[%s1 + $0x4] sm:$0xf]
      %v213 = vld [vmem:[%s1 + $0x8] sm:$0xf]
      %v214 = vld [vmem:[%s1 + $0xc] sm:$0xf]
      %v215 = vld [vmem:[%s1 + $0x10] sm:$0xf]
      %v216 = vld [vmem:[%s1 + $0x14] sm:$0xf]
      %v217 = vld [vmem:[%s1 + $0x18] sm:$0xf]
      %v218 = vld [vmem:[%s1 + $0x1c] sm:$0xf]
      %v219 = vld [vmem:[%s1 + $0x20] sm:$0xf]
      %v220 = vld [vmem:[%s1 + $0x24] sm:$0xf]
      %v221 = vld [vmem:[%s1 + $0x28] sm:$0xf]
      %v222 = vld [vmem:[%s1 + $0x2c] sm:$0xf]
      %v223 = vld [vmem:[%s1 + $0x30] sm:$0xf]
      %v224 = vld [vmem:[%s1 + $0x34] sm:$0xf]
      %v225 = vld [vmem:[%s1 + $0x38] sm:$0xf]
      %v226 = vld [vmem:[%s1 + $0x3c] sm:$0xf]
      %v291 = vunpack.c.l.b16 %v147
      %v292 = vunpack.c.l.b16 %v148
      %v293 = vunpack.c.l.b16 %v149
      %v294 = vunpack.c.l.b16 %v150
      %v295 = vunpack.c.l.b16 %v151
      %v296 = vunpack.c.l.b16 %v152
      %v297 = vunpack.c.l.b16 %v153
      %v298 = vunpack.c.l.b16 %v154
      %v299 = vunpack.c.l.b16 %v155
      %v300 = vunpack.c.l.b16 %v156
      %v301 = vunpack.c.l.b16 %v157
      %v302 = vunpack.c.l.b16 %v158
      %v303 = vunpack.c.l.b16 %v159
      %v304 = vunpack.c.l.b16 %v160
      %v305 = vunpack.c.l.b16 %v161
      %v306 = vunpack.c.l.b16 %v162
      %v307 = vunpack.c.l.b16 %v163
      %v308 = vunpack.c.l.b16 %v164
      %v309 = vunpack.c.l.b16 %v165
      %v310 = vunpack.c.l.b16 %v166
      %v311 = vunpack.c.l.b16 %v167
      %v312 = vunpack.c.l.b16 %v168
      %v313 = vunpack.c.l.b16 %v169
      %v314 = vunpack.c.l.b16 %v170
      %v315 = vunpack.c.l.b16 %v171
      %v316 = vunpack.c.l.b16 %v172
      %v317 = vunpack.c.l.b16 %v173
      %v318 = vunpack.c.l.b16 %v174
      %v319 = vunpack.c.l.b16 %v175
      %v320 = vunpack.c.l.b16 %v176
      %v321 = vunpack.c.l.b16 %v177
      %v322 = vunpack.c.l.b16 %v178
      %v323 = vunpack.c.l.b16 %v179
      %v324 = vunpack.c.l.b16 %v180
      %v325 = vunpack.c.l.b16 %v181
      %v326 = vunpack.c.l.b16 %v182
      %v327 = vunpack.c.l.b16 %v183
      %v328 = vunpack.c.l.b16 %v184
      %v329 = vunpack.c.l.b16 %v185
      %v330 = vunpack.c.l.b16 %v186
      %v331 = vunpack.c.l.b16 %v187
      %v332 = vunpack.c.l.b16 %v188
      %v333 = vunpack.c.l.b16 %v189
      %v334 = vunpack.c.l.b16 %v190
      %v335 = vunpack.c.l.b16 %v191
      %v336 = vunpack.c.l.b16 %v192
      %v337 = vunpack.c.l.b16 %v193
      %v338 = vunpack.c.l.b16 %v194
      %v339 = vunpack.c.l.b16 %v195
      %v340 = vunpack.c.l.b16 %v196
      %v341 = vunpack.c.l.b16 %v197
      %v342 = vunpack.c.l.b16 %v198
      %v343 = vunpack.c.l.b16 %v199
      %v344 = vunpack.c.l.b16 %v200
      %v345 = vunpack.c.l.b16 %v201
      %v346 = vunpack.c.l.b16 %v202
      %v347 = vunpack.c.l.b16 %v203
      %v348 = vunpack.c.l.b16 %v204
      %v349 = vunpack.c.l.b16 %v205
      %v350 = vunpack.c.l.b16 %v206
      %v351 = vunpack.c.l.b16 %v207
      %v352 = vunpack.c.l.b16 %v208
      %v353 = vunpack.c.l.b16 %v209
      %v354 = vunpack.c.l.b16 %v210
      %v355 = vpack.c.b16 %v292, %v291
      %v356 = vpack.c.b16 %v294, %v293
      %v357 = vpack.c.b16 %v296, %v295
      %v358 = vpack.c.b16 %v298, %v297
      %v359 = vpack.c.b16 %v300, %v299
      %v360 = vpack.c.b16 %v302, %v301
      %v361 = vpack.c.b16 %v304, %v303
      %v362 = vpack.c.b16 %v306, %v305
      %v363 = vpack.c.b16 %v308, %v307
      %v364 = vpack.c.b16 %v310, %v309
      %v365 = vpack.c.b16 %v312, %v311
      %v366 = vpack.c.b16 %v314, %v313
      %v367 = vpack.c.b16 %v316, %v315
      %v368 = vpack.c.b16 %v318, %v317
      %v369 = vpack.c.b16 %v320, %v319
      %v370 = vpack.c.b16 %v322, %v321
      %v371 = vpack.c.b16 %v324, %v323
      %v372 = vpack.c.b16 %v326, %v325
      %v373 = vpack.c.b16 %v328, %v327
      %v374 = vpack.c.b16 %v330, %v329
      %v375 = vpack.c.b16 %v332, %v331
      %v376 = vpack.c.b16 %v334, %v333
      %v377 = vpack.c.b16 %v336, %v335
      %v378 = vpack.c.b16 %v338, %v337
      %v379 = vpack.c.b16 %v340, %v339
      %v380 = vpack.c.b16 %v342, %v341
      %v381 = vpack.c.b16 %v344, %v343
      %v382 = vpack.c.b16 %v346, %v345
      %v383 = vpack.c.b16 %v348, %v347
      %v384 = vpack.c.b16 %v350, %v349
      %v385 = vpack.c.b16 %v352, %v351
      %v386 = vpack.c.b16 %v354, %v353
      %v435 = vunpack.c.l.b16 %v211
      %v436 = vunpack.c.l.b16 %v212
      %v437 = vunpack.c.l.b16 %v213
      %v438 = vunpack.c.l.b16 %v214
      %v439 = vunpack.c.l.b16 %v215
      %v440 = vunpack.c.l.b16 %v216
      %v441 = vunpack.c.l.b16 %v217
      %v442 = vunpack.c.l.b16 %v218
      %v443 = vunpack.c.l.b16 %v219
      %v444 = vunpack.c.l.b16 %v220
      %v445 = vunpack.c.l.b16 %v221
      %v446 = vunpack.c.l.b16 %v222
      %v447 = vunpack.c.l.b16 %v223
      %v448 = vunpack.c.l.b16 %v224
      %v449 = vunpack.c.l.b16 %v225
      %v450 = vunpack.c.l.b16 %v226
      %v451 = vpack.c.b16 %v436, %v435
      %v452 = vpack.c.b16 %v438, %v437
      %v453 = vpack.c.b16 %v440, %v439
      %v454 = vpack.c.b16 %v442, %v441
      %v455 = vpack.c.b16 %v444, %v443
      %v456 = vpack.c.b16 %v446, %v445
      %v457 = vpack.c.b16 %v448, %v447
      %v458 = vpack.c.b16 %v450, %v449
      %467 = vmatpush.bf16.msra.mxu0 %v458
      %468 = vmatpush.bf16.msra.mxu0 %v457
      %469 = vmatpush.bf16.msra.mxu0 %v456
      %470 = vmatpush.bf16.msra.mxu0 %v455
      %471 = vmatpush.bf16.msra.mxu0 %v454
      %472 = vmatpush.bf16.msra.mxu0 %v453
      %473 = vmatpush.bf16.msra.mxu0 %v452
      %474 = vmatpush.bf16.msra.mxu0 %v451
      %475 = vmatmul.bf16.gmra.mxu0 %v355
      %v476 = vpop.f32.mrf.mxu0
      %v477 = vadd.f32 0.0, %v476
      %v478 = vpop.f32.mrf.mxu0
      %v479 = vadd.f32 0.0, %v478
      %480 = vmatmul.bf16.gmra.mxu0 %v356
      %v481 = vpop.f32.mrf.mxu0
      %v482 = vadd.f32 0.0, %v481
      %v483 = vpop.f32.mrf.mxu0
      %v484 = vadd.f32 0.0, %v483
      %485 = vmatmul.bf16.gmra.mxu0 %v357
      %v486 = vpop.f32.mrf.mxu0
      %v487 = vadd.f32 0.0, %v486
      %v488 = vpop.f32.mrf.mxu0
      %v489 = vadd.f32 0.0, %v488
      %490 = vmatmul.bf16.gmra.mxu0 %v358
      %v491 = vpop.f32.mrf.mxu0
      %v492 = vadd.f32 0.0, %v491
      %v493 = vpop.f32.mrf.mxu0
      %v494 = vadd.f32 0.0, %v493
      %495 = vmatmul.bf16.gmra.mxu0 %v359
      %v496 = vpop.f32.mrf.mxu0
      %v497 = vadd.f32 0.0, %v496
      %v498 = vpop.f32.mrf.mxu0
      %v499 = vadd.f32 0.0, %v498
      %500 = vmatmul.bf16.gmra.mxu0 %v360
      %v501 = vpop.f32.mrf.mxu0
      %v502 = vadd.f32 0.0, %v501
      %v503 = vpop.f32.mrf.mxu0
      %v504 = vadd.f32 0.0, %v503
      %505 = vmatmul.bf16.gmra.mxu0 %v361
      %v506 = vpop.f32.mrf.mxu0
      %v507 = vadd.f32 0.0, %v506
      %v508 = vpop.f32.mrf.mxu0
      %v509 = vadd.f32 0.0, %v508
      %510 = vmatmul.bf16.gmra.mxu0 %v362
      %v511 = vpop.f32.mrf.mxu0
      %v512 = vadd.f32 0.0, %v511
      %v513 = vpop.f32.mrf.mxu0
      %v514 = vadd.f32 0.0, %v513
      %515 = vmatmul.bf16.gmra.mxu0 %v363
      %v516 = vpop.f32.mrf.mxu0
      %v517 = vadd.f32 0.0, %v516
      %v518 = vpop.f32.mrf.mxu0
      %v519 = vadd.f32 0.0, %v518
      %520 = vmatmul.bf16.gmra.mxu0 %v364
      %v521 = vpop.f32.mrf.mxu0
      %v522 = vadd.f32 0.0, %v521
      %v523 = vpop.f32.mrf.mxu0
      %v524 = vadd.f32 0.0, %v523
      %525 = vmatmul.bf16.gmra.mxu0 %v365
      %v526 = vpop.f32.mrf.mxu0
      %v527 = vadd.f32 0.0, %v526
      %v528 = vpop.f32.mrf.mxu0
      %v529 = vadd.f32 0.0, %v528
      %530 = vmatmul.bf16.gmra.mxu0 %v366
      %v531 = vpop.f32.mrf.mxu0
      %v532 = vadd.f32 0.0, %v531
      %v533 = vpop.f32.mrf.mxu0
      %v534 = vadd.f32 0.0, %v533
      %535 = vmatmul.bf16.gmra.mxu0 %v367
      %v536 = vpop.f32.mrf.mxu0
      %v537 = vadd.f32 0.0, %v536
      %v538 = vpop.f32.mrf.mxu0
      %v539 = vadd.f32 0.0, %v538
      %540 = vmatmul.bf16.gmra.mxu0 %v368
      %v541 = vpop.f32.mrf.mxu0
      %v542 = vadd.f32 0.0, %v541
      %v543 = vpop.f32.mrf.mxu0
      %v544 = vadd.f32 0.0, %v543
      %545 = vmatmul.bf16.gmra.mxu0 %v369
      %v546 = vpop.f32.mrf.mxu0
      %v547 = vadd.f32 0.0, %v546
      %v548 = vpop.f32.mrf.mxu0
      %v549 = vadd.f32 0.0, %v548
      %550 = vmatmul.bf16.gmra.mxu0 %v370
      %v551 = vpop.f32.mrf.mxu0
      %v552 = vadd.f32 0.0, %v551
      %v553 = vpop.f32.mrf.mxu0
      %v554 = vadd.f32 0.0, %v553
      %555 = vmatmul.bf16.gmra.mxu0 %v371
      %v556 = vpop.f32.mrf.mxu0
      %v557 = vadd.f32 0.0, %v556
      %v558 = vpop.f32.mrf.mxu0
      %v559 = vadd.f32 0.0, %v558
      %560 = vmatmul.bf16.gmra.mxu0 %v372
      %v561 = vpop.f32.mrf.mxu0
      %v562 = vadd.f32 0.0, %v561
      %v563 = vpop.f32.mrf.mxu0
      %v564 = vadd.f32 0.0, %v563
      %565 = vmatmul.bf16.gmra.mxu0 %v373
      %v566 = vpop.f32.mrf.mxu0
      %v567 = vadd.f32 0.0, %v566
      %v568 = vpop.f32.mrf.mxu0
      %v569 = vadd.f32 0.0, %v568
      %570 = vmatmul.bf16.gmra.mxu0 %v374
      %v571 = vpop.f32.mrf.mxu0
      %v572 = vadd.f32 0.0, %v571
      %v573 = vpop.f32.mrf.mxu0
      %v574 = vadd.f32 0.0, %v573
      %575 = vmatmul.bf16.gmra.mxu0 %v375
      %v576 = vpop.f32.mrf.mxu0
      %v577 = vadd.f32 0.0, %v576
      %v578 = vpop.f32.mrf.mxu0
      %v579 = vadd.f32 0.0, %v578
      %580 = vmatmul.bf16.gmra.mxu0 %v376
      %v581 = vpop.f32.mrf.mxu0
      %v582 = vadd.f32 0.0, %v581
      %v583 = vpop.f32.mrf.mxu0
      %v584 = vadd.f32 0.0, %v583
      %585 = vmatmul.bf16.gmra.mxu0 %v377
      %v586 = vpop.f32.mrf.mxu0
      %v587 = vadd.f32 0.0, %v586
      %v588 = vpop.f32.mrf.mxu0
      %v589 = vadd.f32 0.0, %v588
      %590 = vmatmul.bf16.gmra.mxu0 %v378
      %v591 = vpop.f32.mrf.mxu0
      %v592 = vadd.f32 0.0, %v591
      %v593 = vpop.f32.mrf.mxu0
      %v594 = vadd.f32 0.0, %v593
      %595 = vmatmul.bf16.gmra.mxu0 %v379
      %v596 = vpop.f32.mrf.mxu0
      %v597 = vadd.f32 0.0, %v596
      %v598 = vpop.f32.mrf.mxu0
      %v599 = vadd.f32 0.0, %v598
      %600 = vmatmul.bf16.gmra.mxu0 %v380
      %v601 = vpop.f32.mrf.mxu0
      %v602 = vadd.f32 0.0, %v601
      %v603 = vpop.f32.mrf.mxu0
      %v604 = vadd.f32 0.0, %v603
      %605 = vmatmul.bf16.gmra.mxu0 %v381
      %v606 = vpop.f32.mrf.mxu0
      %v607 = vadd.f32 0.0, %v606
      %v608 = vpop.f32.mrf.mxu0
      %v609 = vadd.f32 0.0, %v608
      %610 = vmatmul.bf16.gmra.mxu0 %v382
      %v611 = vpop.f32.mrf.mxu0
      %v612 = vadd.f32 0.0, %v611
      %v613 = vpop.f32.mrf.mxu0
      %v614 = vadd.f32 0.0, %v613
      %615 = vmatmul.bf16.gmra.mxu0 %v383
      %v616 = vpop.f32.mrf.mxu0
      %v617 = vadd.f32 0.0, %v616
      %v618 = vpop.f32.mrf.mxu0
      %v619 = vadd.f32 0.0, %v618
      %620 = vmatmul.bf16.gmra.mxu0 %v384
      %v621 = vpop.f32.mrf.mxu0
      %v622 = vadd.f32 0.0, %v621
      %v623 = vpop.f32.mrf.mxu0
      %v624 = vadd.f32 0.0, %v623
      %625 = vmatmul.bf16.gmra.mxu0 %v385
      %v626 = vpop.f32.mrf.mxu0
      %v627 = vadd.f32 0.0, %v626
      %v628 = vpop.f32.mrf.mxu0
      %v629 = vadd.f32 0.0, %v628
      %630 = vmatmul.bf16.gmra.mxu0 %v386
      %v631 = vpop.f32.mrf.mxu0
      %v632 = vadd.f32 0.0, %v631
      %v633 = vpop.f32.mrf.mxu0
      %v634 = vadd.f32 0.0, %v633
      %635 = vdwg.mxu0
      %v636 = vpack.c.bf16 %v477, %v477
      %v637 = vpack.c.bf16 %v479, %v479
      %v638 = vpack.c.bf16 %v482, %v482
      %v639 = vpack.c.bf16 %v484, %v484
      %v640 = vpack.c.bf16 %v487, %v487
      %v641 = vpack.c.bf16 %v489, %v489
      %v642 = vpack.c.bf16 %v492, %v492
      %v643 = vpack.c.bf16 %v494, %v494
      %v644 = vpack.c.bf16 %v497, %v497
      %v645 = vpack.c.bf16 %v499, %v499
      %v646 = vpack.c.bf16 %v502, %v502
      %v647 = vpack.c.bf16 %v504, %v504
      %v648 = vpack.c.bf16 %v507, %v507
      %v649 = vpack.c.bf16 %v509, %v509
      %v650 = vpack.c.bf16 %v512, %v512
      %v651 = vpack.c.bf16 %v514, %v514
      %v652 = vpack.c.bf16 %v517, %v517
      %v653 = vpack.c.bf16 %v519, %v519
      %v654 = vpack.c.bf16 %v522, %v522
      %v655 = vpack.c.bf16 %v524, %v524
      %v656 = vpack.c.bf16 %v527, %v527
      %v657 = vpack.c.bf16 %v529, %v529
      %v658 = vpack.c.bf16 %v532, %v532
      %v659 = vpack.c.bf16 %v534, %v534
      %v660 = vpack.c.bf16 %v537, %v537
      %v661 = vpack.c.bf16 %v539, %v539
      %v662 = vpack.c.bf16 %v542, %v542
      %v663 = vpack.c.bf16 %v544, %v544
      %v664 = vpack.c.bf16 %v547, %v547
      %v665 = vpack.c.bf16 %v549, %v549
      %v666 = vpack.c.bf16 %v552, %v552
      %v667 = vpack.c.bf16 %v554, %v554
      %v668 = vpack.c.bf16 %v557, %v557
      %v669 = vpack.c.bf16 %v559, %v559
      %v670 = vpack.c.bf16 %v562, %v562
      %v671 = vpack.c.bf16 %v564, %v564
      %v672 = vpack.c.bf16 %v567, %v567
      %v673 = vpack.c.bf16 %v569, %v569
      %v674 = vpack.c.bf16 %v572, %v572
      %v675 = vpack.c.bf16 %v574, %v574
      %v676 = vpack.c.bf16 %v577, %v577
      %v677 = vpack.c.bf16 %v579, %v579
      %v678 = vpack.c.bf16 %v582, %v582
      %v679 = vpack.c.bf16 %v584, %v584
      %v680 = vpack.c.bf16 %v587, %v587
      %v681 = vpack.c.bf16 %v589, %v589
      %v682 = vpack.c.bf16 %v592, %v592
      %v683 = vpack.c.bf16 %v594, %v594
      %v684 = vpack.c.bf16 %v597, %v597
      %v685 = vpack.c.bf16 %v599, %v599
      %v686 = vpack.c.bf16 %v602, %v602
      %v687 = vpack.c.bf16 %v604, %v604
      %v688 = vpack.c.bf16 %v607, %v607
      %v689 = vpack.c.bf16 %v609, %v609
      %v690 = vpack.c.bf16 %v612, %v612
      %v691 = vpack.c.bf16 %v614, %v614
      %v692 = vpack.c.bf16 %v617, %v617
      %v693 = vpack.c.bf16 %v619, %v619
      %v694 = vpack.c.bf16 %v622, %v622
      %v695 = vpack.c.bf16 %v624, %v624
      %v696 = vpack.c.bf16 %v627, %v627
      %v697 = vpack.c.bf16 %v629, %v629
      %v698 = vpack.c.bf16 %v632, %v632
      %v699 = vpack.c.bf16 %v634, %v634
      %700 = vst [vmem:[%s145] sm:$0xf] %v636
      %701 = vst [vmem:[%s145 + $0x4] sm:$0xf] %v637
      %702 = vst [vmem:[%s145 + $0x8] sm:$0xf] %v638
      %703 = vst [vmem:[%s145 + $0xc] sm:$0xf] %v639
      %704 = vst [vmem:[%s145 + $0x10] sm:$0xf] %v640
      %705 = vst [vmem:[%s145 + $0x14] sm:$0xf] %v641
      %706 = vst [vmem:[%s145 + $0x18] sm:$0xf] %v642
      %707 = vst [vmem:[%s145 + $0x1c] sm:$0xf] %v643
      %708 = vst [vmem:[%s145 + $0x20] sm:$0xf] %v644
      %709 = vst [vmem:[%s145 + $0x24] sm:$0xf] %v645
      %710 = vst [vmem:[%s145 + $0x28] sm:$0xf] %v646
      %711 = vst [vmem:[%s145 + $0x2c] sm:$0xf] %v647
      %712 = vst [vmem:[%s145 + $0x30] sm:$0xf] %v648
      %713 = vst [vmem:[%s145 + $0x34] sm:$0xf] %v649
      %714 = vst [vmem:[%s145 + $0x38] sm:$0xf] %v650
      %715 = vst [vmem:[%s145 + $0x3c] sm:$0xf] %v651
      %716 = vst [vmem:[%s145 + $0x40] sm:$0xf] %v652
      %717 = vst [vmem:[%s145 + $0x44] sm:$0xf] %v653
      %718 = vst [vmem:[%s145 + $0x48] sm:$0xf] %v654
      %719 = vst [vmem:[%s145 + $0x4c] sm:$0xf] %v655
      %720 = vst [vmem:[%s145 + $0x50] sm:$0xf] %v656
      %721 = vst [vmem:[%s145 + $0x54] sm:$0xf] %v657
      %722 = vst [vmem:[%s145 + $0x58] sm:$0xf] %v658
      %723 = vst [vmem:[%s145 + $0x5c] sm:$0xf] %v659
      %724 = vst [vmem:[%s145 + $0x60] sm:$0xf] %v660
      %725 = vst [vmem:[%s145 + $0x64] sm:$0xf] %v661
      %726 = vst [vmem:[%s145 + $0x68] sm:$0xf] %v662
      %727 = vst [vmem:[%s145 + $0x6c] sm:$0xf] %v663
      %728 = vst [vmem:[%s145 + $0x70] sm:$0xf] %v664
      %729 = vst [vmem:[%s145 + $0x74] sm:$0xf] %v665
      %730 = vst [vmem:[%s145 + $0x78] sm:$0xf] %v666
      %731 = vst [vmem:[%s145 + $0x7c] sm:$0xf] %v667
      %732 = vst [vmem:[%s145 + $0x80] sm:$0xf] %v668
      %733 = vst [vmem:[%s145 + $0x84] sm:$0xf] %v669
      %734 = vst [vmem:[%s145 + $0x88] sm:$0xf] %v670
      %735 = vst [vmem:[%s145 + $0x8c] sm:$0xf] %v671
      %736 = vst [vmem:[%s145 + $0x90] sm:$0xf] %v672
      %737 = vst [vmem:[%s145 + $0x94] sm:$0xf] %v673
      %738 = vst [vmem:[%s145 + $0x98] sm:$0xf] %v674
      %739 = vst [vmem:[%s145 + $0x9c] sm:$0xf] %v675
      %740 = vst [vmem:[%s145 + $0xa0] sm:$0xf] %v676
      %741 = vst [vmem:[%s145 + $0xa4] sm:$0xf] %v677
      %742 = vst [vmem:[%s145 + $0xa8] sm:$0xf] %v678
      %743 = vst [vmem:[%s145 + $0xac] sm:$0xf] %v679
      %744 = vst [vmem:[%s145 + $0xb0] sm:$0xf] %v680
      %745 = vst [vmem:[%s145 + $0xb4] sm:$0xf] %v681
      %746 = vst [vmem:[%s145 + $0xb8] sm:$0xf] %v682
      %747 = vst [vmem:[%s145 + $0xbc] sm:$0xf] %v683
      %748 = vst [vmem:[%s145 + $0xc0] sm:$0xf] %v684
      %749 = vst [vmem:[%s145 + $0xc4] sm:$0xf] %v685
      %750 = vst [vmem:[%s145 + $0xc8] sm:$0xf] %v686
      %751 = vst [vmem:[%s145 + $0xcc] sm:$0xf] %v687
      %752 = vst [vmem:[%s145 + $0xd0] sm:$0xf] %v688
      %753 = vst [vmem:[%s145 + $0xd4] sm:$0xf] %v689
      %754 = vst [vmem:[%s145 + $0xd8] sm:$0xf] %v690
      %755 = vst [vmem:[%s145 + $0xdc] sm:$0xf] %v691
      %756 = vst [vmem:[%s145 + $0xe0] sm:$0xf] %v692
      %757 = vst [vmem:[%s145 + $0xe4] sm:$0xf] %v693
      %758 = vst [vmem:[%s145 + $0xe8] sm:$0xf] %v694
      %759 = vst [vmem:[%s145 + $0xec] sm:$0xf] %v695
      %760 = vst [vmem:[%s145 + $0xf0] sm:$0xf] %v696
      %761 = vst [vmem:[%s145 + $0xf4] sm:$0xf] %v697
      %762 = vst [vmem:[%s145 + $0xf8] sm:$0xf] %v698
      %763 = vst [vmem:[%s145 + $0xfc] sm:$0xf] %v699
      %s764 = smul.u32 64, %s13
      %p765 = scmp.lt.s32.totalorder %s764, 191
      %s766 = scalar_select %p765, %s764, 191
      %s767 = smul.addr %s766, 4
      %s768 = scalar_lea.vmem %s2, %s767
      // Predicated region
      $region29: #{gcn_forward.6} parent=27 // pred_check
        %p769 = pneg %p78
      $region30: #{gcn_forward.6} parent=27 // pred_check_branch
        %771 = sbr.rel (%p769) target = $region32
      $region31: #{gcn_forward.6} parent=27 // pred_region
        %s772 = smul.u32 64, %s13
      $region32: #{gcn_forward.6} parent=27 // pred_fallthru
        _
    $region28: #{gcn_forward.6} parent=5 // pred_fallthru
      _
    %p773 = scmp.le.s32.totalorder 2, %s8
    // Predicated region
    $region33: #{gcn_forward.6} parent=5 // pred_check
      %p774 = pneg %p773
    $region34: #{gcn_forward.6} parent=5 // pred_check_branch
      %776 = sbr.rel (%p774) target = $region36
    $region35: #{gcn_forward.6} parent=5 // pred_region
      %s777 = ssub.s32 %s8, 2
      // Predicated region
      $region37: #{gcn_forward.6} parent=35 // pred_check
        %p778 = pneg %p84
      $region38: #{gcn_forward.6} parent=35 // pred_check_branch
        %780 = sbr.rel (%p778) target = $region40
      $region39: #{gcn_forward.6} parent=35 // pred_region
        %s781 = smul.u32 64, %s14
        %p782 = scmp.lt.s32.totalorder %s781, 191
        %s783 = scalar_select %p782, %s781, 191
        %s784 = smul.addr %s783, 4
        %s785 = scalar_lea.vmem %s2, %s784
      $region40: #{gcn_forward.6} parent=35 // pred_fallthru
        _
    $region36: #{gcn_forward.6} parent=5 // pred_fallthru
      _
  $region6: #{gcn_forward.6} parent=0 // loop_footer
    %s12 = sadd.s32 1, %s8
  $region7: #{gcn_forward.6} parent=0 // loop_footer_branch
    %7 = sbr.rel target = $region3
  $region8: #{gcn_forward.6} parent=0 // loop_exit
    _

// kernel: gcn_forward.11
$region0: #{gcn_forward.11}
  #allocation0 [shape = 'u32[]', space=smem, size = 0x4, offset = 0x4, fixed_abs, tag = 'smem constant byte address 0x4 - core index']
  #allocation1 [shape = 'u32[72,128]{1,0:T(1,128)}', space=vmem, size = 0x9000, scoped, tag = 'internal scratch']
  #allocation2 [shape = 'f32[512,128]{1,0:T(8,128)}', space=vmem, size = 0x40000, scoped, tag = 'scratch operand']
  #allocation3 [shape = 's32[1]{0}', space=sflag, size = 0x4, scoped, tag = 'scoped memory for gcn_forward.11']
  #allocation4 [shape = 'u8[2048]{0}', space=smem, size = 0x800, scoped, tag = 'prefetched SMEM operand 0']
  %s0 = inlined_call_operand.vmem [shape: s32[3,3], index: 0, kind: input, shape index: {}]
  %s1 = inlined_call_operand.vmem [shape: bf16[1536,1536], index: 1, kind: input, shape index: {}]
  %s2 = inlined_call_operand.vmem [shape: bf16[1536,128], index: 2, kind: input, shape index: {}]
  %s3 = inlined_call_operand.vmem [shape: f32[1,128], index: 3, kind: input, shape index: {}]
  %s4 = inlined_call_operand.vmem [shape: f32[1536,128], index: 4, kind: output, shape index: {}]
  %s5 = sld [smem:[#allocation0]]
  $region80: #{gcn_forward.11} parent=0
    _
  %s7 = ssub.s32 1, %s5
  %s8 = scalar_select 0, %s7, %s5
  %s10 = sshll.u32 %s0, 4
  %s11 = int_to_ptr.vmem [resolvable:$true] %s10
  %13 = dma.vmem_to_smem %s11, 64, [#allocation4], [#allocation3]
  %15 = dma.done [#allocation3], 64
  %16 = sfence
  $region1: #{gcn_forward.11} parent=0
    #allocation5 [shape = 'u8[1048576]{0}', space=vmem, size = 0x100000, scoped, tag = 'input window, operand 1']
    loop: start=0, step=1, limit=11
    $region2: #{gcn_forward.11} parent=1 // loop_pre_header
      _
    $region3: #{gcn_forward.11} parent=1 // loop_header
      %s18 = sphi 0, %s22
      %p19 = scmp.ge.s32.totalorder %s18, 11
      %s25 = sphi 0, %s37
      %s26 = sphi 0, %s33
      %s27 = sphi 0, %s25
      %s28 = sphi 0, %s26
      %s29 = sphi 0, %s27
      %s30 = sphi 0, %s28
      %s58 = sphi 0, %s60
      %s61 = sphi 0, %s58
      %s62 = sphi 0, %s61
      %s78 = sphi 0, %s62
      %s82 = sphi 0, %s82
      %s84 = sphi 0, %s82
      %s85 = sphi 0, %s84
      %s99 = sphi 0, %s85
      %s103 = sphi 0, %s103
      %s105 = sphi 0, %s103
      %s106 = sphi 0, %s105
      %s120 = sphi 0, %s106
      %s126 = sphi 0, %s128
      %s129 = sphi 0, %s126
      %s130 = sphi 0, %s129
      %s146 = sphi 0, %s130
    $region4: #{gcn_forward.11} parent=1 // loop_header_branch
      %21 = sbr.rel (%p19) target = $region8
    $region5: #{gcn_forward.11} parent=1 // loop_body
      %s23 = ssub.s32 %s18, 1
      %s24 = ssub.s32 %s18, 2
      %s31 = sadd.s32 1, %s26
      %p32 = scmp.ge.s32.totalorder %s31, 3
      %s33 = scalar_select %p32, 0, %s31
      %s34 = sadd.s32 1, %s25
      %s35 = scalar_select %p32, %s34, %s25
      %p36 = scmp.ge.s32.totalorder %s35, 3
      %s37 = scalar_select %p36, 0, %s35
      %s38 = sshra.s32 %s26, 7
      %s39 = sand.u32 %s26, 127
      %s40 = sadd.s32 %s38, %s25
      %s41 = smul.u32 %s40, 128
      %s42 = sshra.s32 %s26, 7
      %s43 = sand.u32 %s26, 127
      %s44 = sadd.s32 %s41, %s43
      %s45 = sld [smem:[#allocation4 + %s44]]
      %s46 = sshra.s32 %s33, 7
      %s47 = sand.u32 %s33, 127
      %s48 = sadd.s32 %s46, %s37
      %s49 = smul.u32 %s48, 128
      %s50 = sshra.s32 %s33, 7
      %s51 = sand.u32 %s33, 127
      %s52 = sadd.s32 %s49, %s51
      %s53 = sld [smem:[#allocation4 + %s52]]
      %s54 = ssub.s32 %s25, %s37
      %s55 = ssub.s32 %s45, %s53
      %s56 = sor.u32 %s54, %s55
      %p57 = scmp.eq.s32.totalorder %s56, 0
      %s59 = sadd.s32 %s58, 1
      %s60 = scalar_select %p57, %s58, %s59
      %p63 = pneg %p57
      %p64 = scmp.eq.s32.totalorder %s18, 8
      %p65 = por %p63, %p64
      %p66 = scmp.ne.s32.totalorder %s58, %s61
      %p67 = scmp.eq.s32.totalorder %s18, 0
      %p68 = por %p66, %p67
      %p69 = scmp.ne.s32.totalorder %s58, %s61
      %p70 = scmp.eq.s32.totalorder %s23, 8
      %p71 = por %p69, %p70
      %p72 = scmp.ne.s32.totalorder %s61, %s62
      %p73 = scmp.eq.s32.totalorder %s23, 0
      %p74 = por %p72, %p73
      %p75 = scmp.ne.s32.totalorder %s61, %s62
      %p76 = scmp.eq.s32.totalorder %s24, 8
      %p77 = por %p75, %p76
      %p79 = scmp.ne.s32.totalorder %s62, %s78
      %p80 = scmp.eq.s32.totalorder %s24, 0
      %p81 = por %p79, %p80
      %s83 = sadd.s32 %s82, 1
      %p86 = scmp.eq.s32.totalorder %s18, 8
      %p87 = scmp.ne.s32.totalorder %s82, %s84
      %p88 = scmp.eq.s32.totalorder %s18, 0
      %p89 = por %p87, %p88
      %p90 = scmp.ne.s32.totalorder %s82, %s84
      %p91 = scmp.eq.s32.totalorder %s23, 8
      %p92 = por %p90, %p91
      %p93 = scmp.ne.s32.totalorder %s84, %s85
      %p94 = scmp.eq.s32.totalorder %s23, 0
      %p95 = por %p93, %p94
      %p96 = scmp.ne.s32.totalorder %s84, %s85
      %p97 = scmp.eq.s32.totalorder %s24, 8
      %p98 = por %p96, %p97
      %p100 = scmp.ne.s32.totalorder %s85, %s99
      %p101 = scmp.eq.s32.totalorder %s24, 0
      %p102 = por %p100, %p101
      %s104 = sadd.s32 %s103, 1
      %p107 = scmp.eq.s32.totalorder %s18, 8
      %p108 = scmp.ne.s32.totalorder %s103, %s105
      %p109 = scmp.eq.s32.totalorder %s18, 0
      %p110 = por %p108, %p109
      %p111 = scmp.ne.s32.totalorder %s103, %s105
      %p112 = scmp.eq.s32.totalorder %s23, 8
      %p113 = por %p111, %p112
      %p114 = scmp.ne.s32.totalorder %s105, %s106
      %p115 = scmp.eq.s32.totalorder %s23, 0
      %p116 = por %p114, %p115
      %p117 = scmp.ne.s32.totalorder %s105, %s106
      %p118 = scmp.eq.s32.totalorder %s24, 8
      %p119 = por %p117, %p118
      %p121 = scmp.ne.s32.totalorder %s106, %s120
      %p122 = scmp.eq.s32.totalorder %s24, 0
      %p123 = por %p121, %p122
      %s124 = ssub.s32 %s25, %s37
      %p125 = scmp.eq.s32.totalorder %s124, 0
      %s127 = sadd.s32 %s126, 1
      %s128 = scalar_select %p125, %s126, %s127
      %p131 = pneg %p125
      %p132 = scmp.eq.s32.totalorder %s18, 8
      %p133 = por %p131, %p132
      %p134 = scmp.ne.s32.totalorder %s126, %s129
      %p135 = scmp.eq.s32.totalorder %s18, 0
      %p136 = por %p134, %p135
      %p137 = scmp.ne.s32.totalorder %s126, %s129
      %p138 = scmp.eq.s32.totalorder %s23, 8
      %p139 = por %p137, %p138
      %p140 = scmp.ne.s32.totalorder %s129, %s130
      %p141 = scmp.eq.s32.totalorder %s23, 0
      %p142 = por %p140, %p141
      %p143 = scmp.ne.s32.totalorder %s129, %s130
      %p144 = scmp.eq.s32.totalorder %s24, 8
      %p145 = por %p143, %p144
      %p147 = scmp.ne.s32.totalorder %s130, %s146
      %p148 = scmp.eq.s32.totalorder %s24, 0
      %p149 = por %p147, %p148
      %p150 = scmp.le.s32.totalorder 1, %s18
      %p151 = scmp.lt.s32.totalorder %s18, 10
      %p152 = pnand %p150, %p151
      %p153 = pneg %p152
      // Predicated region
      $region9: #{gcn_forward.11} parent=5 // pred_check
        _
      $region10: #{gcn_forward.11} parent=5 // pred_check_branch
        %155 = sbr.rel (%p152) target = $region12
      $region11: #{gcn_forward.11} parent=5 // pred_region
        %s156 = ssub.s32 %s18, 1
        // Predicated region
        $region13: #{gcn_forward.11} parent=11 // pred_check
          %p157 = pneg %p95
        $region14: #{gcn_forward.11} parent=11 // pred_check_branch
          %159 = sbr.rel (%p157) target = $region16
        $region15: #{gcn_forward.11} parent=11 // pred_region
          _
        $region16: #{gcn_forward.11} parent=11 // pred_fallthru
          _
        // Predicated region
        $region17: #{gcn_forward.11} parent=11 // pred_check
          %p160 = pneg %p116
        $region18: #{gcn_forward.11} parent=11 // pred_check_branch
          %162 = sbr.rel (%p160) target = $region20
        $region19: #{gcn_forward.11} parent=11 // pred_region
          _
        $region20: #{gcn_forward.11} parent=11 // pred_fallthru
          _
      $region12: #{gcn_forward.11} parent=5 // pred_fallthru
        _
      %p163 = scmp.lt.s32.totalorder %s18, 9
      // Predicated region
      $region21: #{gcn_forward.11} parent=5 // pred_check
        %p164 = pneg %p163
      $region22: #{gcn_forward.11} parent=5 // pred_check_branch
        %166 = sbr.rel (%p164) target = $region24
      $region23: #{gcn_forward.11} parent=5 // pred_region
        // Predicated region
        $region25: #{gcn_forward.11} parent=23 // pred_check
          %p167 = pneg %p68
        $region26: #{gcn_forward.11} parent=23 // pred_check_branch
          %169 = sbr.rel (%p167) target = $region28
        $region27: #{gcn_forward.11} parent=23 // pred_region
          %s170 = sand.u32 %s58, 1
          %s171 = sand.u32 %s58, 1
          %s172 = smul.addr %s171, 1024
          %s173 = scalar_lea.vmem [#allocation5], %s172
          %s174 = sshra.s32 %s26, 7
          %s175 = sand.u32 %s26, 127
          %s176 = sadd.s32 %s174, %s25
          %s177 = smul.u32 %s176, 128
          %s178 = sshra.s32 %s26, 7
          %s179 = sand.u32 %s26, 127
          %s180 = sadd.s32 %s177, %s179
          %s181 = sld [smem:[#allocation4 + %s180]]
          %s182 = smul.u32 64, %s25
          %s183 = smul.u32 4, %s181
          %s184 = smul.addr %s182, 12
          %s185 = sadd.s32 %s183, %s184
          %s186 = smul.addr %s185, 4
          %s187 = scalar_lea.vmem %s1, %s186
          // Predicated region
          $region29: #{gcn_forward.11} parent=27 // pred_check
            _
          $region30: #{gcn_forward.11} parent=27 // pred_check_branch
            %189 = sbr.rel (0) target = $region32
          $region31: #{gcn_forward.11} parent=27 // pred_region
            // Predicated region
            $region33: #{gcn_forward.11} parent=31 // pred_check
              _
            $region34: #{gcn_forward.11} parent=31 // pred_check_branch
              %191 = sbr.rel (0) target = $region36
            $region35: #{gcn_forward.11} parent=31 // pred_region
              loop: start=0, step=1, limit=1
              $region37: #{gcn_forward.11} parent=35 // loop_pre_header
                _
              $region38: #{gcn_forward.11} parent=35 // loop_header
                %s193 = sphi 0, %s197
                %p194 = scmp.ge.s32.totalorder %s193, 1
                %s198 = sphi %s187, %s187
                %s199 = sphi %s173, %s173
              $region39: #{gcn_forward.11} parent=35 // loop_header_branch
                %196 = sbr.rel (%p194) target = $region43
              $region40: #{gcn_forward.11} parent=35 // loop_body
                %v200 = vld [vmem:[%s198] sm:$0xff]
                %201 = vst [vmem:[%s199] sm:$0xff] %v200
                %v202 = vld [vmem:[%s198 + $0x8] sm:$0xff]
                %203 = vst [vmem:[%s199 + $0x8] sm:$0xff] %v202
                %v204 = vld [vmem:[%s198 + $0x30] sm:$0xff]
                %205 = vst [vmem:[%s199 + $0x10] sm:$0xff] %v204
                %v206 = vld [vmem:[%s198 + $0x38] sm:$0xff]
                %207 = vst [vmem:[%s199 + $0x18] sm:$0xff] %v206
                %v208 = vld [vmem:[%s198 + $0x60] sm:$0xff]
                %209 = vst [vmem:[%s199 + $0x20] sm:$0xff] %v208
                %v210 = vld [vmem:[%s198 + $0x68] sm:$0xff]
                %211 = vst [vmem:[%s199 + $0x28] sm:$0xff] %v210
                %v212 = vld [vmem:[%s198 + $0x90] sm:$0xff]
                %213 = vst [vmem:[%s199 + $0x30] sm:$0xff] %v212
                %v214 = vld [vmem:[%s198 + $0x98] sm:$0xff]
                %215 = vst [vmem:[%s199 + $0x38] sm:$0xff] %v214
                %v216 = vld [vmem:[%s198 + $0xc0] sm:$0xff]
                %217 = vst [vmem:[%s199 + $0x40] sm:$0xff] %v216
                %v218 = vld [vmem:[%s198 + $0xc8] sm:$0xff]
                %219 = vst [vmem:[%s199 + $0x48] sm:$0xff] %v218
                %v220 = vld [vmem:[%s198 + $0xf0] sm:$0xff]
                %221 = vst [vmem:[%s199 + $0x50] sm:$0xff] %v220
                %v222 = vld [vmem:[%s198 + $0xf8] sm:$0xff]
                %223 = vst [vmem:[%s199 + $0x58] sm:$0xff] %v222
                %v224 = vld [vmem:[%s198 + $0x120] sm:$0xff]
                %225 = vst [vmem:[%s199 + $0x60] sm:$0xff] %v224
                %v226 = vld [vmem:[%s198 + $0x128] sm:$0xff]
                %227 = vst [vmem:[%s199 + $0x68] sm:$0xff] %v226
                %v228 = vld [vmem:[%s198 + $0x150] sm:$0xff]
                %229 = vst [vmem:[%s199 + $0x70] sm:$0xff] %v228
                %v230 = vld [vmem:[%s198 + $0x158] sm:$0xff]
                %231 = vst [vmem:[%s199 + $0x78] sm:$0xff] %v230
                %v232 = vld [vmem:[%s198 + $0x180] sm:$0xff]
                %233 = vst [vmem:[%s199 + $0x80] sm:$0xff] %v232
                %v234 = vld [vmem:[%s198 + $0x188] sm:$0xff]
                %235 = vst [vmem:[%s199 + $0x88] sm:$0xff] %v234
                %v236 = vld [vmem:[%s198 + $0x1b0] sm:$0xff]
                %237 = vst [vmem:[%s199 + $0x90] sm:$0xff] %v236
                %v238 = vld [vmem:[%s198 + $0x1b8] sm:$0xff]
                %239 = vst [vmem:[%s199 + $0x98] sm:$0xff] %v238
                %v240 = vld [vmem:[%s198 + $0x1e0] sm:$0xff]
                %241 = vst [vmem:[%s199 + $0xa0] sm:$0xff] %v240
                %v242 = vld [vmem:[%s198 + $0x1e8] sm:$0xff]
                %243 = vst [vmem:[%s199 + $0xa8] sm:$0xff] %v242
                %v244 = vld [vmem:[%s198 + $0x210] sm:$0xff]
                %245 = vst [vmem:[%s199 + $0xb0] sm:$0xff] %v244
                %v246 = vld [vmem:[%s198 + $0x218] sm:$0xff]
                %247 = vst [vmem:[%s199 + $0xb8] sm:$0xff] %v246
                %v248 = vld [vmem:[%s198 + $0x240] sm:$0xff]
                %249 = vst [vmem:[%s199 + $0xc0] sm:$0xff] %v248
                %v250 = vld [vmem:[%s198 + $0x248] sm:$0xff]
                %251 = vst [vmem:[%s199 + $0xc8] sm:$0xff] %v250
                %v252 = vld [vmem:[%s198 + $0x270] sm:$0xff]
                %253 = vst [vmem:[%s199 + $0xd0] sm:$0xff] %v252
                %v254 = vld [vmem:[%s198 + $0x278] sm:$0xff]
                %255 = vst [vmem:[%s199 + $0xd8] sm:$0xff] %v254
                %v256 = vld [vmem:[%s198 + $0x2a0] sm:$0xff]
                %257 = vst [vmem:[%s199 + $0xe0] sm:$0xff] %v256
                %v258 = vld [vmem:[%s198 + $0x2a8] sm:$0xff]
                %259 = vst [vmem:[%s199 + $0xe8] sm:$0xff] %v258
                %v260 = vld [vmem:[%s198 + $0x2d0] sm:$0xff]
                %261 = vst [vmem:[%s199 + $0xf0] sm:$0xff] %v260
                %v262 = vld [vmem:[%s198 + $0x2d8] sm:$0xff]
                %263 = vst [vmem:[%s199 + $0xf8] sm:$0xff] %v262
                %v264 = vld [vmem:[%s198 + $0x300] sm:$0xff]
                %265 = vst [vmem:[%s199 + $0x100] sm:$0xff] %v264
                %v266 = vld [vmem:[%s198 + $0x308] sm:$0xff]
                %267 = vst [vmem:[%s199 + $0x108] sm:$0xff] %v266
                %v268 = vld [vmem:[%s198 + $0x330] sm:$0xff]
                %269 = vst [vmem:[%s199 + $0x110] sm:$0xff] %v268
                %v270 = vld [vmem:[%s198 + $0x338] sm:$0xff]
                %271 = vst [vmem:[%s199 + $0x118] sm:$0xff] %v270
                %v272 = vld [vmem:[%s198 + $0x360] sm:$0xff]
                %273 = vst [vmem:[%s199 + $0x120] sm:$0xff] %v272
                %v274 = vld [vmem:[%s198 + $0x368] sm:$0xff]
                %275 = vst [vmem:[%s199 + $0x128] sm:$0xff] %v274
                %v276 = vld [vmem:[%s198 + $0x390] sm:$0xff]
                %277 = vst [vmem:[%s199 + $0x130] sm:$0xff] %v276
                %v278 = vld [vmem:[%s198 + $0x398] sm:$0xff]
                %279 = vst [vmem:[%s199 + $0x138] sm:$0xff] %v278
                %v280 = vld [vmem:[%s198 + $0x3c0] sm:$0xff]
                %281 = vst [vmem:[%s199 + $0x140] sm:$0xff] %v280
                %v282 = vld [vmem:[%s198 + $0x3c8] sm:$0xff]
                %283 = vst [vmem:[%s199 + $0x148] sm:$0xff] %v282
                %v284 = vld [vmem:[%s198 + $0x3f0] sm:$0xff]
                %285 = vst [vmem:[%s199 + $0x150] sm:$0xff] %v284
                %v286 = vld [vmem:[%s198 + $0x3f8] sm:$0xff]
                %287 = vst [vmem:[%s199 + $0x158] sm:$0xff] %v286
                %v288 = vld [vmem:[%s198 + $0x420] sm:$0xff]
                %289 = vst [vmem:[%s199 + $0x160] sm:$0xff] %v288
                %v290 = vld [vmem:[%s198 + $0x428] sm:$0xff]
                %291 = vst [vmem:[%s199 + $0x168] sm:$0xff] %v290
                %v292 = vld [vmem:[%s198 + $0x450] sm:$0xff]
                %293 = vst [vmem:[%s199 + $0x170] sm:$0xff] %v292
                %v294 = vld [vmem:[%s198 + $0x458] sm:$0xff]
                %295 = vst [vmem:[%s199 + $0x178] sm:$0xff] %v294
                %v296 = vld [vmem:[%s198 + $0x480] sm:$0xff]
                %297 = vst [vmem:[%s199 + $0x180] sm:$0xff] %v296
                %v298 = vld [vmem:[%s198 + $0x488] sm:$0xff]
                %299 = vst [vmem:[%s199 + $0x188] sm:$0xff] %v298
                %v300 = vld [vmem:[%s198 + $0x4b0] sm:$0xff]
                %301 = vst [vmem:[%s199 + $0x190] sm:$0xff] %v300
                %v302 = vld [vmem:[%s198 + $0x4b8] sm:$0xff]
                %303 = vst [vmem:[%s199 + $0x198] sm:$0xff] %v302
                %v304 = vld [vmem:[%s198 + $0x4e0] sm:$0xff]
                %305 = vst [vmem:[%s199 + $0x1a0] sm:$0xff] %v304
                %v306 = vld [vmem:[%s198 + $0x4e8] sm:$0xff]
                %307 = vst [vmem:[%s199 + $0x1a8] sm:$0xff] %v306
                %v308 = vld [vmem:[%s198 + $0x510] sm:$0xff]
                %309 = vst [vmem:[%s199 + $0x1b0] sm:$0xff] %v308
                %v310 = vld [vmem:[%s198 + $0x518] sm:$0xff]
                %311 = vst [vmem:[%s199 + $0x1b8] sm:$0xff] %v310
                %v312 = vld [vmem:[%s198 + $0x540] sm:$0xff]
                %313 = vst [vmem:[%s199 + $0x1c0] sm:$0xff] %v312
                %v314 = vld [vmem:[%s198 + $0x548] sm:$0xff]
                %315 = vst [vmem:[%s199 + $0x1c8] sm:$0xff] %v314
                %v316 = vld [vmem:[%s198 + $0x570] sm:$0xff]
                %317 = vst [vmem:[%s199 + $0x1d0] sm:$0xff] %v316
                %v318 = vld [vmem:[%s198 + $0x578] sm:$0xff]
                %319 = vst [vmem:[%s199 + $0x1d8] sm:$0xff] %v318
                %v320 = vld [vmem:[%s198 + $0x5a0] sm:$0xff]
                %321 = vst [vmem:[%s199 + $0x1e0] sm:$0xff] %v320
                %v322 = vld [vmem:[%s198 + $0x5a8] sm:$0xff]
                %323 = vst [vmem:[%s199 + $0x1e8] sm:$0xff] %v322
                %v324 = vld [vmem:[%s198 + $0x5d0] sm:$0xff]
                %325 = vst [vmem:[%s199 + $0x1f0] sm:$0xff] %v324
                %v326 = vld [vmem:[%s198 + $0x5d8] sm:$0xff]
                %327 = vst [vmem:[%s199 + $0x1f8] sm:$0xff] %v326
                %v328 = vld [vmem:[%s198 + $0x600] sm:$0xff]
                %329 = vst [vmem:[%s199 + $0x200] sm:$0xff] %v328
                %v330 = vld [vmem:[%s198 + $0x608] sm:$0xff]
                %331 = vst [vmem:[%s199 + $0x208] sm:$0xff] %v330
                %v332 = vld [vmem:[%s198 + $0x630] sm:$0xff]
                %333 = vst [vmem:[%s199 + $0x210] sm:$0xff] %v332
                %v334 = vld [vmem:[%s198 + $0x638] sm:$0xff]
                %335 = vst [vmem:[%s199 + $0x218] sm:$0xff] %v334
                %v336 = vld [vmem:[%s198 + $0x660] sm:$0xff]
                %337 = vst [vmem:[%s199 + $0x220] sm:$0xff] %v336
                %v338 = vld [vmem:[%s198 + $0x668] sm:$0xff]
                %339 = vst [vmem:[%s199 + $0x228] sm:$0xff] %v338
                %v340 = vld [vmem:[%s198 + $0x690] sm:$0xff]
                %341 = vst [vmem:[%s199 + $0x230] sm:$0xff] %v340
                %v342 = vld [vmem:[%s198 + $0x698] sm:$0xff]
                %343 = vst [vmem:[%s199 + $0x238] sm:$0xff] %v342
                %v344 = vld [vmem:[%s198 + $0x6c0] sm:$0xff]
                %345 = vst [vmem:[%s199 + $0x240] sm:$0xff] %v344
                %v346 = vld [vmem:[%s198 + $0x6c8] sm:$0xff]
                %347 = vst [vmem:[%s199 + $0x248] sm:$0xff] %v346
                %v348 = vld [vmem:[%s198 + $0x6f0] sm:$0xff]
                %349 = vst [vmem:[%s199 + $0x250] sm:$0xff] %v348
                %v350 = vld [vmem:[%s198 + $0x6f8] sm:$0xff]
                %351 = vst [vmem:[%s199 + $0x258] sm:$0xff] %v350
                %v352 = vld [vmem:[%s198 + $0x720] sm:$0xff]
                %353 = vst [vmem:[%s199 + $0x260] sm:$0xff] %v352
                %v354 = vld [vmem:[%s198 + $0x728] sm:$0xff]
                %355 = vst [vmem:[%s199 + $0x268] sm:$0xff] %v354
                %v356 = vld [vmem:[%s198 + $0x750] sm:$0xff]
                %357 = vst [vmem:[%s199 + $0x270] sm:$0xff] %v356
                %v358 = vld [vmem:[%s198 + $0x758] sm:$0xff]
                %359 = vst [vmem:[%s199 + $0x278] sm:$0xff] %v358
                %v360 = vld [vmem:[%s198 + $0x780] sm:$0xff]
                %361 = vst [vmem:[%s199 + $0x280] sm:$0xff] %v360
                %v362 = vld [vmem:[%s198 + $0x788] sm:$0xff]
                %363 = vst [vmem:[%s199 + $0x288] sm:$0xff] %v362
                %v364 = vld [vmem:[%s198 + $0x7b0] sm:$0xff]
                %365 = vst [vmem:[%s199 + $0x290] sm:$0xff] %v364
                %v366 = vld [vmem:[%s198 + $0x7b8] sm:$0xff]
                %367 = vst [vmem:[%s199 + $0x298] sm:$0xff] %v366
                %v368 = vld [vmem:[%s198 + $0x7e0] sm:$0xff]
                %369 = vst [vmem:[%s199 + $0x2a0] sm:$0xff] %v368
                %v370 = vld [vmem:[%s198 + $0x7e8] sm:$0xff]
                %371 = vst [vmem:[%s199 + $0x2a8] sm:$0xff] %v370
                %v372 = vld [vmem:[%s198 + $0x810] sm:$0xff]
                %373 = vst [vmem:[%s199 + $0x2b0] sm:$0xff] %v372
                %v374 = vld [vmem:[%s198 + $0x818] sm:$0xff]
                %375 = vst [vmem:[%s199 + $0x2b8] sm:$0xff] %v374
                %v376 = vld [vmem:[%s198 + $0x840] sm:$0xff]
                %377 = vst [vmem:[%s199 + $0x2c0] sm:$0xff] %v376
                %v378 = vld [vmem:[%s198 + $0x848] sm:$0xff]
                %379 = vst [vmem:[%s199 + $0x2c8] sm:$0xff] %v378
                %v380 = vld [vmem:[%s198 + $0x870] sm:$0xff]
                %381 = vst [vmem:[%s199 + $0x2d0] sm:$0xff] %v380
                %v382 = vld [vmem:[%s198 + $0x878] sm:$0xff]
                %383 = vst [vmem:[%s199 + $0x2d8] sm:$0xff] %v382
                %v384 = vld [vmem:[%s198 + $0x8a0] sm:$0xff]
                %385 = vst [vmem:[%s199 + $0x2e0] sm:$0xff] %v384
                %v386 = vld [vmem:[%s198 + $0x8a8] sm:$0xff]
                %387 = vst [vmem:[%s199 + $0x2e8] sm:$0xff] %v386
                %v388 = vld [vmem:[%s198 + $0x8d0] sm:$0xff]
                %389 = vst [vmem:[%s199 + $0x2f0] sm:$0xff] %v388
                %v390 = vld [vmem:[%s198 + $0x8d8] sm:$0xff]
                %391 = vst [vmem:[%s199 + $0x2f8] sm:$0xff] %v390
                %v392 = vld [vmem:[%s198 + $0x900] sm:$0xff]
                %393 = vst [vmem:[%s199 + $0x300] sm:$0xff] %v392
                %v394 = vld [vmem:[%s198 + $0x908] sm:$0xff]
                %395 = vst [vmem:[%s199 + $0x308] sm:$0xff] %v394
                %v396 = vld [vmem:[%s198 + $0x930] sm:$0xff]
                %397 = vst [vmem:[%s199 + $0x310] sm:$0xff] %v396
                %v398 = vld [vmem:[%s198 + $0x938] sm:$0xff]
                %399 = vst [vmem:[%s199 + $0x318] sm:$0xff] %v398
                %v400 = vld [vmem:[%s198 + $0x960] sm:$0xff]
                %401 = vst [vmem:[%s199 + $0x320] sm:$0xff] %v400
                %v402 = vld [vmem:[%s198 + $0x968] sm:$0xff]
                %403 = vst [vmem:[%s199 + $0x328] sm:$0xff] %v402
                %v404 = vld [vmem:[%s198 + $0x990] sm:$0xff]
                %405 = vst [vmem:[%s199 + $0x330] sm:$0xff] %v404
                %v406 = vld [vmem:[%s198 + $0x998] sm:$0xff]
                %407 = vst [vmem:[%s199 + $0x338] sm:$0xff] %v406
                %v408 = vld [vmem:[%s198 + $0x9c0] sm:$0xff]
                %409 = vst [vmem:[%s199 + $0x340] sm:$0xff] %v408
                %v410 = vld [vmem:[%s198 + $0x9c8] sm:$0xff]
                %411 = vst [vmem:[%s199 + $0x348] sm:$0xff] %v410
                %v412 = vld [vmem:[%s198 + $0x9f0] sm:$0xff]
                %413 = vst [vmem:[%s199 + $0x350] sm:$0xff] %v412
                %v414 = vld [vmem:[%s198 + $0x9f8] sm:$0xff]
                %415 = vst [vmem:[%s199 + $0x358] sm:$0xff] %v414
                %v416 = vld [vmem:[%s198 + $0xa20] sm:$0xff]
                %417 = vst [vmem:[%s199 + $0x360] sm:$0xff] %v416
                %v418 = vld [vmem:[%s198 + $0xa28] sm:$0xff]
                %419 = vst [vmem:[%s199 + $0x368] sm:$0xff] %v418
                %v420 = vld [vmem:[%s198 + $0xa50] sm:$0xff]
                %421 = vst [vmem:[%s199 + $0x370] sm:$0xff] %v420
                %v422 = vld [vmem:[%s198 + $0xa58] sm:$0xff]
                %423 = vst [vmem:[%s199 + $0x378] sm:$0xff] %v422
                %v424 = vld [vmem:[%s198 + $0xa80] sm:$0xff]
                %425 = vst [vmem:[%s199 + $0x380] sm:$0xff] %v424
                %v426 = vld [vmem:[%s198 + $0xa88] sm:$0xff]
                %427 = vst [vmem:[%s199 + $0x388] sm:$0xff] %v426
                %v428 = vld [vmem:[%s198 + $0xab0] sm:$0xff]
                %429 = vst [vmem:[%s199 + $0x390] sm:$0xff] %v428
                %v430 = vld [vmem:[%s198 + $0xab8] sm:$0xff]
                %431 = vst [vmem:[%s199 + $0x398] sm:$0xff] %v430
                %v432 = vld [vmem:[%s198 + $0xae0] sm:$0xff]
                %433 = vst [vmem:[%s199 + $0x3a0] sm:$0xff] %v432
                %v434 = vld [vmem:[%s198 + $0xae8] sm:$0xff]
                %435 = vst [vmem:[%s199 + $0x3a8] sm:$0xff] %v434
                %v436 = vld [vmem:[%s198 + $0xb10] sm:$0xff]
                %437 = vst [vmem:[%s199 + $0x3b0] sm:$0xff] %v436
                %v438 = vld [vmem:[%s198 + $0xb18] sm:$0xff]
                %439 = vst [vmem:[%s199 + $0x3b8] sm:$0xff] %v438
                %v440 = vld [vmem:[%s198 + $0xb40] sm:$0xff]
                %441 = vst [vmem:[%s199 + $0x3c0] sm:$0xff] %v440
                %v442 = vld [vmem:[%s198 + $0xb48] sm:$0xff]
                %443 = vst [vmem:[%s199 + $0x3c8] sm:$0xff] %v442
                %v444 = vld [vmem:[%s198 + $0xb70] sm:$0xff]
                %445 = vst [vmem:[%s199 + $0x3d0] sm:$0xff] %v444
                %v446 = vld [vmem:[%s198 + $0xb78] sm:$0xff]
                %447 = vst [vmem:[%s199 + $0x3d8] sm:$0xff] %v446
                %v448 = vld [vmem:[%s198 + $0xba0] sm:$0xff]
                %449 = vst [vmem:[%s199 + $0x3e0] sm:$0xff] %v448
                %v450 = vld [vmem:[%s198 + $0xba8] sm:$0xff]
                %451 = vst [vmem:[%s199 + $0x3e8] sm:$0xff] %v450
                %v452 = vld [vmem:[%s198 + $0xbd0] sm:$0xff]
                %453 = vst [vmem:[%s199 + $0x3f0] sm:$0xff] %v452
                %v454 = vld [vmem:[%s198 + $0xbd8] sm:$0xff]
                %455 = vst [vmem:[%s199 + $0x3f8] sm:$0xff] %v454
              $region41: #{gcn_forward.11} parent=35 // loop_footer
                %s197 = sadd.s32 1, %s193
              $region42: #{gcn_forward.11} parent=35 // loop_footer_branch
                %192 = sbr.rel target = $region38
              $region43: #{gcn_forward.11} parent=35 // loop_exit
                _
            $region36: #{gcn_forward.11} parent=31 // pred_fallthru
              _
            // Predicated region
            $region44: #{gcn_forward.11} parent=31 // pred_check
              _
            $region45: #{gcn_forward.11} parent=31 // pred_check_branch
              %457 = sbr.rel target = $region47
            $region46: #{gcn_forward.11} parent=31 // pred_region
              _
            $region47: #{gcn_forward.11} parent=31 // pred_fallthru
              _
          $region32: #{gcn_forward.11} parent=27 // pred_fallthru
            _
          %458 = vnop
        $region28: #{gcn_forward.11} parent=23 // pred_fallthru
          _
      $region24: #{gcn_forward.11} parent=5 // pred_fallthru
        _
      %p459 = scmp.le.s32.totalorder 1, %s18
      %p460 = scmp.lt.s32.totalorder %s18, 10
      %p461 = pnand %p459, %p460
      %p462 = pneg %p461
      // Predicated region
      $region48: #{gcn_forward.11} parent=5 // pred_check
        _
      $region49: #{gcn_forward.11} parent=5 // pred_check_branch
        %464 = sbr.rel (%p461) target = $region51
      $region50: #{gcn_forward.11} parent=5 // pred_region
        %s465 = ssub.s32 %s18, 1
        %s466 = sand.u32 %s61, 1
        %s467 = sand.u32 %s61, 1
        %s468 = smul.addr %s467, 1024
        %s469 = scalar_lea.vmem [#allocation5], %s468
        // Predicated region
        $region52: #{gcn_forward.11} parent=50 // pred_check
          %p470 = pneg %p74
        $region53: #{gcn_forward.11} parent=50 // pred_check_branch
          %472 = sbr.rel (%p470) target = $region55
        $region54: #{gcn_forward.11} parent=50 // pred_region
          _
        $region55: #{gcn_forward.11} parent=50 // pred_fallthru
          _
        %s473 = sand.u32 %s61, 1
        %s474 = sand.u32 %s61, 1
        %s475 = smul.addr %s474, 1024
        %s476 = scalar_lea.vmem [#allocation5], %s475
        %p477 = pneg %p74
        %p478 = pneg %p71
        %p479 = pneg %p95
        %p480 = pneg %p92
        %p481 = pneg %p116
        %p482 = pneg %p113
        %p483 = pneg %p142
        %p484 = pneg %p139
        %s485 = smul.u32 64, %s27
        %p486 = scmp.lt.s32.totalorder %s485, 191
        %s487 = scalar_select %p486, %s485, 191
        %s488 = smul.addr %s487, 8
        %s489 = scalar_lea.vmem %s4, %s488
        %s490 = sshra.s32 %s28, 7
        %s491 = sand.u32 %s28, 127
        %s492 = sadd.s32 %s490, %s27
        %s493 = smul.u32 %s492, 128
        %s494 = sshra.s32 %s28, 7
        %s495 = sand.u32 %s28, 127
        %s496 = sadd.s32 %s493, %s495
        %s497 = sld [smem:[#allocation4 + %s496]]
        %s498 = smul.u32 64, %s27
        %s499 = smul.u32 4, %s497
        %s500 = smul.u32 64, %s27
        %p501 = scmp.lt.s32.totalorder %s500, 191
        %s502 = scalar_select %p501, %s500, 191
        %s503 = smul.addr %s502, 8
        %s504 = scalar_lea.vmem %s4, %s503
        %s505 = smul.u32 64, %s27
        %p506 = scmp.eq.s32.totalorder %s28, 0
        // Predicated region
        $region56: #{gcn_forward.11} parent=50 // pred_check
          %p507 = pneg %p506
        $region57: #{gcn_forward.11} parent=50 // pred_check_branch
          %509 = sbr.rel (%p507) target = $region59
        $region58: #{gcn_forward.11} parent=50 // pred_region
          %510 = vst [vmem:[#allocation2] sm:$0xff] 0.0
          %511 = vst [vmem:[#allocation2 + $0x8] sm:$0xff] 0.0
          %512 = vst [vmem:[#allocation2 + $0x10] sm:$0xff] 0.0
          %513 = vst [vmem:[#allocation2 + $0x18] sm:$0xff] 0.0
          %514 = vst [vmem:[#allocation2 + $0x20] sm:$0xff] 0.0
          %515 = vst [vmem:[#allocation2 + $0x28] sm:$0xff] 0.0
          %516 = vst [vmem:[#allocation2 + $0x30] sm:$0xff] 0.0
          %517 = vst [vmem:[#allocation2 + $0x38] sm:$0xff] 0.0
          %518 = vst [vmem:[#allocation2 + $0x40] sm:$0xff] 0.0
          %519 = vst [vmem:[#allocation2 + $0x48] sm:$0xff] 0.0
          %520 = vst [vmem:[#allocation2 + $0x50] sm:$0xff] 0.0
          %521 = vst [vmem:[#allocation2 + $0x58] sm:$0xff] 0.0
          %522 = vst [vmem:[#allocation2 + $0x60] sm:$0xff] 0.0
          %523 = vst [vmem:[#allocation2 + $0x68] sm:$0xff] 0.0
          %524 = vst [vmem:[#allocation2 + $0x70] sm:$0xff] 0.0
          %525 = vst [vmem:[#allocation2 + $0x78] sm:$0xff] 0.0
          %526 = vst [vmem:[#allocation2 + $0x80] sm:$0xff] 0.0
          %527 = vst [vmem:[#allocation2 + $0x88] sm:$0xff] 0.0
          %528 = vst [vmem:[#allocation2 + $0x90] sm:$0xff] 0.0
          %529 = vst [vmem:[#allocation2 + $0x98] sm:$0xff] 0.0
          %530 = vst [vmem:[#allocation2 + $0xa0] sm:$0xff] 0.0
          %531 = vst [vmem:[#allocation2 + $0xa8] sm:$0xff] 0.0
          %532 = vst [vmem:[#allocation2 + $0xb0] sm:$0xff] 0.0
          %533 = vst [vmem:[#allocation2 + $0xb8] sm:$0xff] 0.0
          %534 = vst [vmem:[#allocation2 + $0xc0] sm:$0xff] 0.0
          %535 = vst [vmem:[#allocation2 + $0xc8] sm:$0xff] 0.0
          %536 = vst [vmem:[#allocation2 + $0xd0] sm:$0xff] 0.0
          %537 = vst [vmem:[#allocation2 + $0xd8] sm:$0xff] 0.0
          %538 = vst [vmem:[#allocation2 + $0xe0] sm:$0xff] 0.0
          %539 = vst [vmem:[#allocation2 + $0xe8] sm:$0xff] 0.0
          %540 = vst [vmem:[#allocation2 + $0xf0] sm:$0xff] 0.0
          %541 = vst [vmem:[#allocation2 + $0xf8] sm:$0xff] 0.0
          %542 = vst [vmem:[#allocation2 + $0x100] sm:$0xff] 0.0
          %543 = vst [vmem:[#allocation2 + $0x108] sm:$0xff] 0.0
          %544 = vst [vmem:[#allocation2 + $0x110] sm:$0xff] 0.0
          %545 = vst [vmem:[#allocation2 + $0x118] sm:$0xff] 0.0
          %546 = vst [vmem:[#allocation2 + $0x120] sm:$0xff] 0.0
          %547 = vst [vmem:[#allocation2 + $0x128] sm:$0xff] 0.0
          %548 = vst [vmem:[#allocation2 + $0x130] sm:$0xff] 0.0
          %549 = vst [vmem:[#allocation2 + $0x138] sm:$0xff] 0.0
          %550 = vst [vmem:[#allocation2 + $0x140] sm:$0xff] 0.0
          %551 = vst [vmem:[#allocation2 + $0x148] sm:$0xff] 0.0
          %552 = vst [vmem:[#allocation2 + $0x150] sm:$0xff] 0.0
          %553 = vst [vmem:[#allocation2 + $0x158] sm:$0xff] 0.0
          %554 = vst [vmem:[#allocation2 + $0x160] sm:$0xff] 0.0
          %555 = vst [vmem:[#allocation2 + $0x168] sm:$0xff] 0.0
          %556 = vst [vmem:[#allocation2 + $0x170] sm:$0xff] 0.0
          %557 = vst [vmem:[#allocation2 + $0x178] sm:$0xff] 0.0
          %558 = vst [vmem:[#allocation2 + $0x180] sm:$0xff] 0.0
          %559 = vst [vmem:[#allocation2 + $0x188] sm:$0xff] 0.0
          %560 = vst [vmem:[#allocation2 + $0x190] sm:$0xff] 0.0
          %561 = vst [vmem:[#allocation2 + $0x198] sm:$0xff] 0.0
          %562 = vst [vmem:[#allocation2 + $0x1a0] sm:$0xff] 0.0
          %563 = vst [vmem:[#allocation2 + $0x1a8] sm:$0xff] 0.0
          %564 = vst [vmem:[#allocation2 + $0x1b0] sm:$0xff] 0.0
          %565 = vst [vmem:[#allocation2 + $0x1b8] sm:$0xff] 0.0
          %566 = vst [vmem:[#allocation2 + $0x1c0] sm:$0xff] 0.0
          %567 = vst [vmem:[#allocation2 + $0x1c8] sm:$0xff] 0.0
          %568 = vst [vmem:[#allocation2 + $0x1d0] sm:$0xff] 0.0
          %569 = vst [vmem:[#allocation2 + $0x1d8] sm:$0xff] 0.0
          %570 = vst [vmem:[#allocation2 + $0x1e0] sm:$0xff] 0.0
          %571 = vst [vmem:[#allocation2 + $0x1e8] sm:$0xff] 0.0
          %572 = vst [vmem:[#allocation2 + $0x1f0] sm:$0xff] 0.0
          %573 = vst [vmem:[#allocation2 + $0x1f8] sm:$0xff] 0.0
        $region59: #{gcn_forward.11} parent=50 // pred_fallthru
          _
        %s574 = sshra.s32 %s28, 7
        %s575 = sand.u32 %s28, 127
        %s576 = sadd.s32 %s574, %s27
        %s577 = smul.u32 %s576, 128
        %s578 = sshra.s32 %s28, 7
        %s579 = sand.u32 %s28, 127
        %s580 = sadd.s32 %s577, %s579
        %s581 = sld [smem:[#allocation4 + %s580]]
        %p582 = scmp.eq.s32.totalorder %s581, %s28
        // Predicated region
        $region60: #{gcn_forward.11} parent=50 // pred_check
          %p583 = pneg %p582
        $region61: #{gcn_forward.11} parent=50 // pred_check_branch
          %585 = sbr.rel (%p583) target = $region63
        $region62: #{gcn_forward.11} parent=50 // pred_region
          %s586 = smul.u32 %s28, 512
          %s587 = sshra.s32 %s586, 3
          %s588 = sand.u32 %s586, 7
          %s589 = smul.addr %s587, 4
          %s590 = scalar_lea.vmem %s2, %s589
          %v591 = vld [vmem:[%s590] sm:$0xf]
          %v592 = vld [vmem:[%s590 + $0x4] sm:$0xf]
          %v593 = vld [vmem:[%s590 + $0x8] sm:$0xf]
          %v594 = vld [vmem:[%s590 + $0xc] sm:$0xf]
          %v595 = vld [vmem:[%s590 + $0x10] sm:$0xf]
          %v596 = vld [vmem:[%s590 + $0x14] sm:$0xf]
          %v597 = vld [vmem:[%s590 + $0x18] sm:$0xf]
          %v598 = vld [vmem:[%s590 + $0x1c] sm:$0xf]
          %v599 = vld [vmem:[%s590 + $0x20] sm:$0xf]
          %v600 = vld [vmem:[%s590 + $0x24] sm:$0xf]
          %v601 = vld [vmem:[%s590 + $0x28] sm:$0xf]
          %v602 = vld [vmem:[%s590 + $0x2c] sm:$0xf]
          %v603 = vld [vmem:[%s590 + $0x30] sm:$0xf]
          %v604 = vld [vmem:[%s590 + $0x34] sm:$0xf]
          %v605 = vld [vmem:[%s590 + $0x38] sm:$0xf]
          %v606 = vld [vmem:[%s590 + $0x3c] sm:$0xf]
          %v607 = vld [vmem:[%s590 + $0x40] sm:$0xf]
          %v608 = vld [vmem:[%s590 + $0x44] sm:$0xf]
          %v609 = vld [vmem:[%s590 + $0x48] sm:$0xf]
          %v610 = vld [vmem:[%s590 + $0x4c] sm:$0xf]
          %v611 = vld [vmem:[%s590 + $0x50] sm:$0xf]
          %v612 = vld [vmem:[%s590 + $0x54] sm:$0xf]
          %v613 = vld [vmem:[%s590 + $0x58] sm:$0xf]
          %v614 = vld [vmem:[%s590 + $0x5c] sm:$0xf]
          %v615 = vld [vmem:[%s590 + $0x60] sm:$0xf]
          %v616 = vld [vmem:[%s590 + $0x64] sm:$0xf]
          %v617 = vld [vmem:[%s590 + $0x68] sm:$0xf]
          %v618 = vld [vmem:[%s590 + $0x6c] sm:$0xf]
          %v619 = vld [vmem:[%s590 + $0x70] sm:$0xf]
          %v620 = vld [vmem:[%s590 + $0x74] sm:$0xf]
          %v621 = vld [vmem:[%s590 + $0x78] sm:$0xf]
          %v622 = vld [vmem:[%s590 + $0x7c] sm:$0xf]
          %v623 = vld [vmem:[%s590 + $0x80] sm:$0xf]
          %v624 = vld [vmem:[%s590 + $0x84] sm:$0xf]
          %v625 = vld [vmem:[%s590 + $0x88] sm:$0xf]
          %v626 = vld [vmem:[%s590 + $0x8c] sm:$0xf]
          %v627 = vld [vmem:[%s590 + $0x90] sm:$0xf]
          %v628 = vld [vmem:[%s590 + $0x94] sm:$0xf]
          %v629 = vld [vmem:[%s590 + $0x98] sm:$0xf]
          %v630 = vld [vmem:[%s590 + $0x9c] sm:$0xf]
          %v631 = vld [vmem:[%s590 + $0xa0] sm:$0xf]
          %v632 = vld [vmem:[%s590 + $0xa4] sm:$0xf]
          %v633 = vld [vmem:[%s590 + $0xa8] sm:$0xf]
          %v634 = vld [vmem:[%s590 + $0xac] sm:$0xf]
          %v635 = vld [vmem:[%s590 + $0xb0] sm:$0xf]
          %v636 = vld [vmem:[%s590 + $0xb4] sm:$0xf]
          %v637 = vld [vmem:[%s590 + $0xb8] sm:$0xf]
          %v638 = vld [vmem:[%s590 + $0xbc] sm:$0xf]
          %v639 = vld [vmem:[%s590 + $0xc0] sm:$0xf]
          %v640 = vld [vmem:[%s590 + $0xc4] sm:$0xf]
          %v641 = vld [vmem:[%s590 + $0xc8] sm:$0xf]
          %v642 = vld [vmem:[%s590 + $0xcc] sm:$0xf]
          %v643 = vld [vmem:[%s590 + $0xd0] sm:$0xf]
          %v644 = vld [vmem:[%s590 + $0xd4] sm:$0xf]
          %v645 = vld [vmem:[%s590 + $0xd8] sm:$0xf]
          %v646 = vld [vmem:[%s590 + $0xdc] sm:$0xf]
          %v647 = vld [vmem:[%s590 + $0xe0] sm:$0xf]
          %v648 = vld [vmem:[%s590 + $0xe4] sm:$0xf]
          %v649 = vld [vmem:[%s590 + $0xe8] sm:$0xf]
          %v650 = vld [vmem:[%s590 + $0xec] sm:$0xf]
          %v651 = vld [vmem:[%s590 + $0xf0] sm:$0xf]
          %v652 = vld [vmem:[%s590 + $0xf4] sm:$0xf]
          %v653 = vld [vmem:[%s590 + $0xf8] sm:$0xf]
          %v654 = vld [vmem:[%s590 + $0xfc] sm:$0xf]
          %v655 = vld [vmem:[#allocation2] sm:$0xff]
          %v656 = vld [vmem:[#allocation2 + $0x8] sm:$0xff]
          %v657 = vld [vmem:[#allocation2 + $0x10] sm:$0xff]
          %v658 = vld [vmem:[#allocation2 + $0x18] sm:$0xff]
          %v659 = vld [vmem:[#allocation2 + $0x20] sm:$0xff]
          %v660 = vld [vmem:[#allocation2 + $0x28] sm:$0xff]
          %v661 = vld [vmem:[#allocation2 + $0x30] sm:$0xff]
          %v662 = vld [vmem:[#allocation2 + $0x38] sm:$0xff]
          %v663 = vld [vmem:[#allocation2 + $0x40] sm:$0xff]
          %v664 = vld [vmem:[#allocation2 + $0x48] sm:$0xff]
          %v665 = vld [vmem:[#allocation2 + $0x50] sm:$0xff]
          %v666 = vld [vmem:[#allocation2 + $0x58] sm:$0xff]
          %v667 = vld [vmem:[#allocation2 + $0x60] sm:$0xff]
          %v668 = vld [vmem:[#allocation2 + $0x68] sm:$0xff]
          %v669 = vld [vmem:[#allocation2 + $0x70] sm:$0xff]
          %v670 = vld [vmem:[#allocation2 + $0x78] sm:$0xff]
          %v671 = vld [vmem:[#allocation2 + $0x80] sm:$0xff]
          %v672 = vld [vmem:[#allocation2 + $0x88] sm:$0xff]
          %v673 = vld [vmem:[#allocation2 + $0x90] sm:$0xff]
          %v674 = vld [vmem:[#allocation2 + $0x98] sm:$0xff]
          %v675 = vld [vmem:[#allocation2 + $0xa0] sm:$0xff]
          %v676 = vld [vmem:[#allocation2 + $0xa8] sm:$0xff]
          %v677 = vld [vmem:[#allocation2 + $0xb0] sm:$0xff]
          %v678 = vld [vmem:[#allocation2 + $0xb8] sm:$0xff]
          %v679 = vld [vmem:[#allocation2 + $0xc0] sm:$0xff]
          %v680 = vld [vmem:[#allocation2 + $0xc8] sm:$0xff]
          %v681 = vld [vmem:[#allocation2 + $0xd0] sm:$0xff]
          %v682 = vld [vmem:[#allocation2 + $0xd8] sm:$0xff]
          %v683 = vld [vmem:[#allocation2 + $0xe0] sm:$0xff]
          %v684 = vld [vmem:[#allocation2 + $0xe8] sm:$0xff]
          %v685 = vld [vmem:[#allocation2 + $0xf0] sm:$0xff]
          %v686 = vld [vmem:[#allocation2 + $0xf8] sm:$0xff]
          %v687 = vld [vmem:[#allocation2 + $0x100] sm:$0xff]
          %v688 = vld [vmem:[#allocation2 + $0x108] sm:$0xff]
          %v689 = vld [vmem:[#allocation2 + $0x110] sm:$0xff]
          %v690 = vld [vmem:[#allocation2 + $0x118] sm:$0xff]
          %v691 = vld [vmem:[#allocation2 + $0x120] sm:$0xff]
          %v692 = vld [vmem:[#allocation2 + $0x128] sm:$0xff]
          %v693 = vld [vmem:[#allocation2 + $0x130] sm:$0xff]
          %v694 = vld [vmem:[#allocation2 + $0x138] sm:$0xff]
          %v695 = vld [vmem:[#allocation2 + $0x140] sm:$0xff]
          %v696 = vld [vmem:[#allocation2 + $0x148] sm:$0xff]
          %v697 = vld [vmem:[#allocation2 + $0x150] sm:$0xff]
          %v698 = vld [vmem:[#allocation2 + $0x158] sm:$0xff]
          %v699 = vld [vmem:[#allocation2 + $0x160] sm:$0xff]
          %v700 = vld [vmem:[#allocation2 + $0x168] sm:$0xff]
          %v701 = vld [vmem:[#allocation2 + $0x170] sm:$0xff]
          %v702 = vld [vmem:[#allocation2 + $0x178] sm:$0xff]
          %v703 = vld [vmem:[#allocation2 + $0x180] sm:$0xff]
          %v704 = vld [vmem:[#allocation2 + $0x188] sm:$0xff]
          %v705 = vld [vmem:[#allocation2 + $0x190] sm:$0xff]
          %v706 = vld [vmem:[#allocation2 + $0x198] sm:$0xff]
          %v707 = vld [vmem:[#allocation2 + $0x1a0] sm:$0xff]
          %v708 = vld [vmem:[#allocation2 + $0x1a8] sm:$0xff]
          %v709 = vld [vmem:[#allocation2 + $0x1b0] sm:$0xff]
          %v710 = vld [vmem:[#allocation2 + $0x1b8] sm:$0xff]
          %v711 = vld [vmem:[#allocation2 + $0x1c0] sm:$0xff]
          %v712 = vld [vmem:[#allocation2 + $0x1c8] sm:$0xff]
          %v713 = vld [vmem:[#allocation2 + $0x1d0] sm:$0xff]
          %v714 = vld [vmem:[#allocation2 + $0x1d8] sm:$0xff]
          %v715 = vld [vmem:[#allocation2 + $0x1e0] sm:$0xff]
          %v716 = vld [vmem:[#allocation2 + $0x1e8] sm:$0xff]
          %v717 = vld [vmem:[#allocation2 + $0x1f0] sm:$0xff]
          %v718 = vld [vmem:[#allocation2 + $0x1f8] sm:$0xff]
          %v719 = vld [vmem:[%s469] sm:$0xff]
          %v720 = vld [vmem:[%s469 + $0x8] sm:$0xff]
          %v721 = vld [vmem:[%s469 + $0x10] sm:$0xff]
          %v722 = vld [vmem:[%s469 + $0x18] sm:$0xff]
          %v723 = vld [vmem:[%s469 + $0x20] sm:$0xff]
          %v724 = vld [vmem:[%s469 + $0x28] sm:$0xff]
          %v725 = vld [vmem:[%s469 + $0x30] sm:$0xff]
          %v726 = vld [vmem:[%s469 + $0x38] sm:$0xff]
          %v727 = vld [vmem:[%s469 + $0x40] sm:$0xff]
          %v728 = vld [vmem:[%s469 + $0x48] sm:$0xff]
          %v729 = vld [vmem:[%s469 + $0x50] sm:$0xff]
          %v730 = vld [vmem:[%s469 + $0x58] sm:$0xff]
          %v731 = vld [vmem:[%s469 + $0x60] sm:$0xff]
          %v732 = vld [vmem:[%s469 + $0x68] sm:$0xff]
          %v733 = vld [vmem:[%s469 + $0x70] sm:$0xff]
          %v734 = vld [vmem:[%s469 + $0x78] sm:$0xff]
          %v735 = vld [vmem:[%s469 + $0x80] sm:$0xff]
          %v736 = vld [vmem:[%s469 + $0x88] sm:$0xff]
          %v737 = vld [vmem:[%s469 + $0x90] sm:$0xff]
          %v738 = vld [vmem:[%s469 + $0x98] sm:$0xff]
          %v739 = vld [vmem:[%s469 + $0xa0] sm:$0xff]
          %v740 = vld [vmem:[%s469 + $0xa8] sm:$0xff]
          %v741 = vld [vmem:[%s469 + $0xb0] sm:$0xff]
          %v742 = vld [vmem:[%s469 + $0xb8] sm:$0xff]
          %v743 = vld [vmem:[%s469 + $0xc0] sm:$0xff]
          %v744 = vld [vmem:[%s469 + $0xc8] sm:$0xff]
          %v745 = vld [vmem:[%s469 + $0xd0] sm:$0xff]
          %v746 = vld [vmem:[%s469 + $0xd8] sm:$0xff]
          %v747 = vld [vmem:[%s469 + $0xe0] sm:$0xff]
          %v748 = vld [vmem:[%s469 + $0xe8] sm:$0xff]
          %v749 = vld [vmem:[%s469 + $0xf0] sm:$0xff]
          %v750 = vld [vmem:[%s469 + $0xf8] sm:$0xff]
          %v751 = vld [vmem:[%s469 + $0x100] sm:$0xff]
          %v752 = vld [vmem:[%s469 + $0x108] sm:$0xff]
          %v753 = vld [vmem:[%s469 + $0x110] sm:$0xff]
          %v754 = vld [vmem:[%s469 + $0x118] sm:$0xff]
          %v755 = vld [vmem:[%s469 + $0x120] sm:$0xff]
          %v756 = vld [vmem:[%s469 + $0x128] sm:$0xff]
          %v757 = vld [vmem:[%s469 + $0x130] sm:$0xff]
          %v758 = vld [vmem:[%s469 + $0x138] sm:$0xff]
          %v759 = vld [vmem:[%s469 + $0x140] sm:$0xff]
          %v760 = vld [vmem:[%s469 + $0x148] sm:$0xff]
          %v761 = vld [vmem:[%s469 + $0x150] sm:$0xff]
          %v762 = vld [vmem:[%s469 + $0x158] sm:$0xff]
          %v763 = vld [vmem:[%s469 + $0x160] sm:$0xff]
          %v764 = vld [vmem:[%s469 + $0x168] sm:$0xff]
          %v765 = vld [vmem:[%s469 + $0x170] sm:$0xff]
          %v766 = vld [vmem:[%s469 + $0x178] sm:$0xff]
          %v767 = vld [vmem:[%s469 + $0x180] sm:$0xff]
          %v768 = vld [vmem:[%s469 + $0x188] sm:$0xff]
          %v769 = vld [vmem:[%s469 + $0x190] sm:$0xff]
          %v770 = vld [vmem:[%s469 + $0x198] sm:$0xff]
          %v771 = vld [vmem:[%s469 + $0x1a0] sm:$0xff]
          %v772 = vld [vmem:[%s469 + $0x1a8] sm:$0xff]
          %v773 = vld [vmem:[%s469 + $0x1b0] sm:$0xff]
          %v774 = vld [vmem:[%s469 + $0x1b8] sm:$0xff]
          %v775 = vld [vmem:[%s469 + $0x1c0] sm:$0xff]
          %v776 = vld [vmem:[%s469 + $0x1c8] sm:$0xff]
          %v777 = vld [vmem:[%s469 + $0x1d0] sm:$0xff]
          %v778 = vld [vmem:[%s469 + $0x1d8] sm:$0xff]
          %v779 = vld [vmem:[%s469 + $0x1e0] sm:$0xff]
          %v780 = vld [vmem:[%s469 + $0x1e8] sm:$0xff]
          %v781 = vld [vmem:[%s469 + $0x1f0] sm:$0xff]
          %v782 = vld [vmem:[%s469 + $0x1f8] sm:$0xff]
          %v783 = vld [vmem:[%s469 + $0x200] sm:$0xff]
          %v784 = vld [vmem:[%s469 + $0x208] sm:$0xff]
          %v785 = vld [vmem:[%s469 + $0x210] sm:$0xff]
          %v786 = vld [vmem:[%s469 + $0x218] sm:$0xff]
          %v787 = vld [vmem:[%s469 + $0x220] sm:$0xff]
          %v788 = vld [vmem:[%s469 + $0x228] sm:$0xff]
          %v789 = vld [vmem:[%s469 + $0x230] sm:$0xff]
          %v790 = vld [vmem:[%s469 + $0x238] sm:$0xff]
          %v791 = vld [vmem:[%s469 + $0x240] sm:$0xff]
          %v792 = vld [vmem:[%s469 + $0x248] sm:$0xff]
          %v793 = vld [vmem:[%s469 + $0x250] sm:$0xff]
          %v794 = vld [vmem:[%s469 + $0x258] sm:$0xff]
          %v795 = vld [vmem:[%s469 + $0x260] sm:$0xff]
          %v796 = vld [vmem:[%s469 + $0x268] sm:$0xff]
          %v797 = vld [vmem:[%s469 + $0x270] sm:$0xff]
          %v798 = vld [vmem:[%s469 + $0x278] sm:$0xff]
          %v799 = vld [vmem:[%s469 + $0x280] sm:$0xff]
          %v800 = vld [vmem:[%s469 + $0x288] sm:$0xff]
          %v801 = vld [vmem:[%s469 + $0x290] sm:$0xff]
          %v802 = vld [vmem:[%s469 + $0x298] sm:$0xff]
          %v803 = vld [vmem:[%s469 + $0x2a0] sm:$0xff]
          %v804 = vld [vmem:[%s469 + $0x2a8] sm:$0xff]
          %v805 = vld [vmem:[%s469 + $0x2b0] sm:$0xff]
          %v806 = vld [vmem:[%s469 + $0x2b8] sm:$0xff]
          %v807 = vld [vmem:[%s469 + $0x2c0] sm:$0xff]
          %v808 = vld [vmem:[%s469 + $0x2c8] sm:$0xff]
          %v809 = vld [vmem:[%s469 + $0x2d0] sm:$0xff]
          %v810 = vld [vmem:[%s469 + $0x2d8] sm:$0xff]
          %v811 = vld [vmem:[%s469 + $0x2e0] sm:$0xff]
          %v812 = vld [vmem:[%s469 + $0x2e8] sm:$0xff]
          %v813 = vld [vmem:[%s469 + $0x2f0] sm:$0xff]
          %v814 = vld [vmem:[%s469 + $0x2f8] sm:$0xff]
          %v815 = vld [vmem:[%s469 + $0x300] sm:$0xff]
          %v816 = vld [vmem:[%s469 + $0x308] sm:$0xff]
          %v817 = vld [vmem:[%s469 + $0x310] sm:$0xff]
          %v818 = vld [vmem:[%s469 + $0x318] sm:$0xff]
          %v819 = vld [vmem:[%s469 + $0x320] sm:$0xff]
          %v820 = vld [vmem:[%s469 + $0x328] sm:$0xff]
          %v821 = vld [vmem:[%s469 + $0x330] sm:$0xff]
          %v822 = vld [vmem:[%s469 + $0x338] sm:$0xff]
          %v823 = vld [vmem:[%s469 + $0x340] sm:$0xff]
          %v824 = vld [vmem:[%s469 + $0x348] sm:$0xff]
          %v825 = vld [vmem:[%s469 + $0x350] sm:$0xff]
          %v826 = vld [vmem:[%s469 + $0x358] sm:$0xff]
          %v827 = vld [vmem:[%s469 + $0x360] sm:$0xff]
          %v828 = vld [vmem:[%s469 + $0x368] sm:$0xff]
          %v829 = vld [vmem:[%s469 + $0x370] sm:$0xff]
          %v830 = vld [vmem:[%s469 + $0x378] sm:$0xff]
          %v831 = vld [vmem:[%s469 + $0x380] sm:$0xff]
          %v832 = vld [vmem:[%s469 + $0x388] sm:$0xff]
          %v833 = vld [vmem:[%s469 + $0x390] sm:$0xff]
          %v834 = vld [vmem:[%s469 + $0x398] sm:$0xff]
          %v835 = vld [vmem:[%s469 + $0x3a0] sm:$0xff]
          %v836 = vld [vmem:[%s469 + $0x3a8] sm:$0xff]
          %v837 = vld [vmem:[%s469 + $0x3b0] sm:$0xff]
          %v838 = vld [vmem:[%s469 + $0x3b8] sm:$0xff]
          %v839 = vld [vmem:[%s469 + $0x3c0] sm:$0xff]
          %v840 = vld [vmem:[%s469 + $0x3c8] sm:$0xff]
          %v841 = vld [vmem:[%s469 + $0x3d0] sm:$0xff]
          %v842 = vld [vmem:[%s469 + $0x3d8] sm:$0xff]
          %v843 = vld [vmem:[%s469 + $0x3e0] sm:$0xff]
          %v844 = vld [vmem:[%s469 + $0x3e8] sm:$0xff]
          %v845 = vld [vmem:[%s469 + $0x3f0] sm:$0xff]
          %v846 = vld [vmem:[%s469 + $0x3f8] sm:$0xff]
          %v975 = vunpack.c.l.b16 %v719
          %v976 = vunpack.c.h.b16 %v719
          %v977 = vunpack.c.l.b16 %v720
          %v978 = vunpack.c.h.b16 %v720
          %v979 = vunpack.c.l.b16 %v721
          %v980 = vunpack.c.h.b16 %v721
          %v981 = vunpack.c.l.b16 %v722
          %v982 = vunpack.c.h.b16 %v722
          %v983 = vunpack.c.l.b16 %v723
          %v984 = vunpack.c.h.b16 %v723
          %v985 = vunpack.c.l.b16 %v724
          %v986 = vunpack.c.h.b16 %v724
          %v987 = vunpack.c.l.b16 %v725
          %v988 = vunpack.c.h.b16 %v725
          %v989 = vunpack.c.l.b16 %v726
          %v990 = vunpack.c.h.b16 %v726
          %v991 = vunpack.c.l.b16 %v727
          %v992 = vunpack.c.h.b16 %v727
          %v993 = vunpack.c.l.b16 %v728
          %v994 = vunpack.c.h.b16 %v728
          %v995 = vunpack.c.l.b16 %v729
          %v996 = vunpack.c.h.b16 %v729
          %v997 = vunpack.c.l.b16 %v730
          %v998 = vunpack.c.h.b16 %v730
          %v999 = vunpack.c.l.b16 %v731
          %v1000 = vunpack.c.h.b16 %v731
          %v1001 = vunpack.c.l.b16 %v732
          %v1002 = vunpack.c.h.b16 %v732
          %v1003 = vunpack.c.l.b16 %v733
          %v1004 = vunpack.c.h.b16 %v733
          %v1005 = vunpack.c.l.b16 %v734
          %v1006 = vunpack.c.h.b16 %v734
          %v1007 = vunpack.c.l.b16 %v735
          %v1008 = vunpack.c.h.b16 %v735
          %v1009 = vunpack.c.l.b16 %v736
          %v1010 = vunpack.c.h.b16 %v736
          %v1011 = vunpack.c.l.b16 %v737
          %v1012 = vunpack.c.h.b16 %v737
          %v1013 = vunpack.c.l.b16 %v738
          %v1014 = vunpack.c.h.b16 %v738
          %v1015 = vunpack.c.l.b16 %v739
          %v1016 = vunpack.c.h.b16 %v739
          %v1017 = vunpack.c.l.b16 %v740
          %v1018 = vunpack.c.h.b16 %v740
          %v1019 = vunpack.c.l.b16 %v741
          %v1020 = vunpack.c.h.b16 %v741
          %v1021 = vunpack.c.l.b16 %v742
          %v1022 = vunpack.c.h.b16 %v742
          %v1023 = vunpack.c.l.b16 %v743
          %v1024 = vunpack.c.h.b16 %v743
          %v1025 = vunpack.c.l.b16 %v744
          %v1026 = vunpack.c.h.b16 %v744
          %v1027 = vunpack.c.l.b16 %v745
          %v1028 = vunpack.c.h.b16 %v745
          %v1029 = vunpack.c.l.b16 %v746
          %v1030 = vunpack.c.h.b16 %v746
          %v1031 = vunpack.c.l.b16 %v747
          %v1032 = vunpack.c.h.b16 %v747
          %v1033 = vunpack.c.l.b16 %v748
          %v1034 = vunpack.c.h.b16 %v748
          %v1035 = vunpack.c.l.b16 %v749
          %v1036 = vunpack.c.h.b16 %v749
          %v1037 = vunpack.c.l.b16 %v750
          %v1038 = vunpack.c.h.b16 %v750
          %v1039 = vunpack.c.l.b16 %v751
          %v1040 = vunpack.c.h.b16 %v751
          %v1041 = vunpack.c.l.b16 %v752
          %v1042 = vunpack.c.h.b16 %v752
          %v1043 = vunpack.c.l.b16 %v753
          %v1044 = vunpack.c.h.b16 %v753
          %v1045 = vunpack.c.l.b16 %v754
          %v1046 = vunpack.c.h.b16 %v754
          %v1047 = vunpack.c.l.b16 %v755
          %v1048 = vunpack.c.h.b16 %v755
          %v1049 = vunpack.c.l.b16 %v756
          %v1050 = vunpack.c.h.b16 %v756
          %v1051 = vunpack.c.l.b16 %v757
          %v1052 = vunpack.c.h.b16 %v757
          %v1053 = vunpack.c.l.b16 %v758
          %v1054 = vunpack.c.h.b16 %v758
          %v1055 = vunpack.c.l.b16 %v759
          %v1056 = vunpack.c.h.b16 %v759
          %v1057 = vunpack.c.l.b16 %v760
          %v1058 = vunpack.c.h.b16 %v760
          %v1059 = vunpack.c.l.b16 %v761
          %v1060 = vunpack.c.h.b16 %v761
          %v1061 = vunpack.c.l.b16 %v762
          %v1062 = vunpack.c.h.b16 %v762
          %v1063 = vunpack.c.l.b16 %v763
          %v1064 = vunpack.c.h.b16 %v763
          %v1065 = vunpack.c.l.b16 %v764
          %v1066 = vunpack.c.h.b16 %v764
          %v1067 = vunpack.c.l.b16 %v765
          %v1068 = vunpack.c.h.b16 %v765
          %v1069 = vunpack.c.l.b16 %v766
          %v1070 = vunpack.c.h.b16 %v766
          %v1071 = vunpack.c.l.b16 %v767
          %v1072 = vunpack.c.h.b16 %v767
          %v1073 = vunpack.c.l.b16 %v768
          %v1074 = vunpack.c.h.b16 %v768
          %v1075 = vunpack.c.l.b16 %v769
          %v1076 = vunpack.c.h.b16 %v769
          %v1077 = vunpack.c.l.b16 %v770
          %v1078 = vunpack.c.h.b16 %v770
          %v1079 = vunpack.c.l.b16 %v771
          %v1080 = vunpack.c.h.b16 %v771
          %v1081 = vunpack.c.l.b16 %v772
          %v1082 = vunpack.c.h.b16 %v772
          %v1083 = vunpack.c.l.b16 %v773
          %v1084 = vunpack.c.h.b16 %v773
          %v1085 = vunpack.c.l.b16 %v774
          %v1086 = vunpack.c.h.b16 %v774
          %v1087 = vunpack.c.l.b16 %v775
          %v1088 = vunpack.c.h.b16 %v775
          %v1089 = vunpack.c.l.b16 %v776
          %v1090 = vunpack.c.h.b16 %v776
          %v1091 = vunpack.c.l.b16 %v777
          %v1092 = vunpack.c.h.b16 %v777
          %v1093 = vunpack.c.l.b16 %v778
          %v1094 = vunpack.c.h.b16 %v778
          %v1095 = vunpack.c.l.b16 %v779
          %v1096 = vunpack.c.h.b16 %v779
          %v1097 = vunpack.c.l.b16 %v780
          %v1098 = vunpack.c.h.b16 %v780
          %v1099 = vunpack.c.l.b16 %v781
          %v1100 = vunpack.c.h.b16 %v781
          %v1101 = vunpack.c.l.b16 %v782
          %v1102 = vunpack.c.h.b16 %v782
          %v1103 = vunpack.c.l.b16 %v783
          %v1104 = vunpack.c.h.b16 %v783
          %v1105 = vunpack.c.l.b16 %v784
          %v1106 = vunpack.c.h.b16 %v784
          %v1107 = vunpack.c.l.b16 %v785
          %v1108 = vunpack.c.h.b16 %v785
          %v1109 = vunpack.c.l.b16 %v786
          %v1110 = vunpack.c.h.b16 %v786
          %v1111 = vunpack.c.l.b16 %v787
          %v1112 = vunpack.c.h.b16 %v787
          %v1113 = vunpack.c.l.b16 %v788
          %v1114 = vunpack.c.h.b16 %v788
          %v1115 = vunpack.c.l.b16 %v789
          %v1116 = vunpack.c.h.b16 %v789
          %v1117 = vunpack.c.l.b16 %v790
          %v1118 = vunpack.c.h.b16 %v790
          %v1119 = vunpack.c.l.b16 %v791
          %v1120 = vunpack.c.h.b16 %v791
          %v1121 = vunpack.c.l.b16 %v792
          %v1122 = vunpack.c.h.b16 %v792
          %v1123 = vunpack.c.l.b16 %v793
          %v1124 = vunpack.c.h.b16 %v793
          %v1125 = vunpack.c.l.b16 %v794
          %v1126 = vunpack.c.h.b16 %v794
          %v1127 = vunpack.c.l.b16 %v795
          %v1128 = vunpack.c.h.b16 %v795
          %v1129 = vunpack.c.l.b16 %v796
          %v1130 = vunpack.c.h.b16 %v796
          %v1131 = vunpack.c.l.b16 %v797
          %v1132 = vunpack.c.h.b16 %v797
          %v1133 = vunpack.c.l.b16 %v798
          %v1134 = vunpack.c.h.b16 %v798
          %v1135 = vunpack.c.l.b16 %v799
          %v1136 = vunpack.c.h.b16 %v799
          %v1137 = vunpack.c.l.b16 %v800
          %v1138 = vunpack.c.h.b16 %v800
          %v1139 = vunpack.c.l.b16 %v801
          %v1140 = vunpack.c.h.b16 %v801
          %v1141 = vunpack.c.l.b16 %v802
          %v1142 = vunpack.c.h.b16 %v802
          %v1143 = vunpack.c.l.b16 %v803
          %v1144 = vunpack.c.h.b16 %v803
          %v1145 = vunpack.c.l.b16 %v804
          %v1146 = vunpack.c.h.b16 %v804
          %v1147 = vunpack.c.l.b16 %v805
          %v1148 = vunpack.c.h.b16 %v805
          %v1149 = vunpack.c.l.b16 %v806
          %v1150 = vunpack.c.h.b16 %v806
          %v1151 = vunpack.c.l.b16 %v807
          %v1152 = vunpack.c.h.b16 %v807
          %v1153 = vunpack.c.l.b16 %v808
          %v1154 = vunpack.c.h.b16 %v808
          %v1155 = vunpack.c.l.b16 %v809
          %v1156 = vunpack.c.h.b16 %v809
          %v1157 = vunpack.c.l.b16 %v810
          %v1158 = vunpack.c.h.b16 %v810
          %v1159 = vunpack.c.l.b16 %v811
          %v1160 = vunpack.c.h.b16 %v811
          %v1161 = vunpack.c.l.b16 %v812
          %v1162 = vunpack.c.h.b16 %v812
          %v1163 = vunpack.c.l.b16 %v813
          %v1164 = vunpack.c.h.b16 %v813
          %v1165 = vunpack.c.l.b16 %v814
          %v1166 = vunpack.c.h.b16 %v814
          %v1167 = vunpack.c.l.b16 %v815
          %v1168 = vunpack.c.h.b16 %v815
          %v1169 = vunpack.c.l.b16 %v816
          %v1170 = vunpack.c.h.b16 %v816
          %v1171 = vunpack.c.l.b16 %v817
          %v1172 = vunpack.c.h.b16 %v817
          %v1173 = vunpack.c.l.b16 %v818
          %v1174 = vunpack.c.h.b16 %v818
          %v1175 = vunpack.c.l.b16 %v819
          %v1176 = vunpack.c.h.b16 %v819
          %v1177 = vunpack.c.l.b16 %v820
          %v1178 = vunpack.c.h.b16 %v820
          %v1179 = vunpack.c.l.b16 %v821
          %v1180 = vunpack.c.h.b16 %v821
          %v1181 = vunpack.c.l.b16 %v822
          %v1182 = vunpack.c.h.b16 %v822
          %v1183 = vunpack.c.l.b16 %v823
          %v1184 = vunpack.c.h.b16 %v823
          %v1185 = vunpack.c.l.b16 %v824
          %v1186 = vunpack.c.h.b16 %v824
          %v1187 = vunpack.c.l.b16 %v825
          %v1188 = vunpack.c.h.b16 %v825
          %v1189 = vunpack.c.l.b16 %v826
          %v1190 = vunpack.c.h.b16 %v826
          %v1191 = vunpack.c.l.b16 %v827
          %v1192 = vunpack.c.h.b16 %v827
          %v1193 = vunpack.c.l.b16 %v828
          %v1194 = vunpack.c.h.b16 %v828
          %v1195 = vunpack.c.l.b16 %v829
          %v1196 = vunpack.c.h.b16 %v829
          %v1197 = vunpack.c.l.b16 %v830
          %v1198 = vunpack.c.h.b16 %v830
          %v1199 = vunpack.c.l.b16 %v831
          %v1200 = vunpack.c.h.b16 %v831
          %v1201 = vunpack.c.l.b16 %v832
          %v1202 = vunpack.c.h.b16 %v832
          %v1203 = vunpack.c.l.b16 %v833
          %v1204 = vunpack.c.h.b16 %v833
          %v1205 = vunpack.c.l.b16 %v834
          %v1206 = vunpack.c.h.b16 %v834
          %v1207 = vunpack.c.l.b16 %v835
          %v1208 = vunpack.c.h.b16 %v835
          %v1209 = vunpack.c.l.b16 %v836
          %v1210 = vunpack.c.h.b16 %v836
          %v1211 = vunpack.c.l.b16 %v837
          %v1212 = vunpack.c.h.b16 %v837
          %v1213 = vunpack.c.l.b16 %v838
          %v1214 = vunpack.c.h.b16 %v838
          %v1215 = vunpack.c.l.b16 %v839
          %v1216 = vunpack.c.h.b16 %v839
          %v1217 = vunpack.c.l.b16 %v840
          %v1218 = vunpack.c.h.b16 %v840
          %v1219 = vunpack.c.l.b16 %v841
          %v1220 = vunpack.c.h.b16 %v841
          %v1221 = vunpack.c.l.b16 %v842
          %v1222 = vunpack.c.h.b16 %v842
          %v1223 = vunpack.c.l.b16 %v843
          %v1224 = vunpack.c.h.b16 %v843
          %v1225 = vunpack.c.l.b16 %v844
          %v1226 = vunpack.c.h.b16 %v844
          %v1227 = vunpack.c.l.b16 %v845
          %v1228 = vunpack.c.h.b16 %v845
          %v1229 = vunpack.c.l.b16 %v846
          %v1230 = vunpack.c.h.b16 %v846
          %v1231 = vpack.c.b16 %v979, %v975
          %v1232 = vpack.c.b16 %v980, %v976
          %v1233 = vpack.c.b16 %v981, %v977
          %v1234 = vpack.c.b16 %v982, %v978
          %v1235 = vpack.c.b16 %v987, %v983
          %v1236 = vpack.c.b16 %v988, %v984
          %v1237 = vpack.c.b16 %v989, %v985
          %v1238 = vpack.c.b16 %v990, %v986
          %v1239 = vpack.c.b16 %v995, %v991
          %v1240 = vpack.c.b16 %v996, %v992
          %v1241 = vpack.c.b16 %v997, %v993
          %v1242 = vpack.c.b16 %v998, %v994
          %v1243 = vpack.c.b16 %v1003, %v999
          %v1244 = vpack.c.b16 %v1004, %v1000
          %v1245 = vpack.c.b16 %v1005, %v1001
          %v1246 = vpack.c.b16 %v1006, %v1002
          %v1247 = vpack.c.b16 %v1011, %v1007
          %v1248 = vpack.c.b16 %v1012, %v1008
          %v1249 = vpack.c.b16 %v1013, %v1009
          %v1250 = vpack.c.b16 %v1014, %v1010
          %v1251 = vpack.c.b16 %v1019, %v1015
          %v1252 = vpack.c.b16 %v1020, %v1016
          %v1253 = vpack.c.b16 %v1021, %v1017
          %v1254 = vpack.c.b16 %v1022, %v1018
          %v1255 = vpack.c.b16 %v1027, %v1023
          %v1256 = vpack.c.b16 %v1028, %v1024
          %v1257 = vpack.c.b16 %v1029, %v1025
          %v1258 = vpack.c.b16 %v1030, %v1026
          %v1259 = vpack.c.b16 %v1035, %v1031
          %v1260 = vpack.c.b16 %v1036, %v1032
          %v1261 = vpack.c.b16 %v1037, %v1033
          %v1262 = vpack.c.b16 %v1038, %v1034
          %v1263 = vpack.c.b16 %v1043, %v1039
          %v1264 = vpack.c.b16 %v1044, %v1040
          %v1265 = vpack.c.b16 %v1045, %v1041
          %v1266 = vpack.c.b16 %v1046, %v1042
          %v1267 = vpack.c.b16 %v1051, %v1047
          %v1268 = vpack.c.b16 %v1052, %v1048
          %v1269 = vpack.c.b16 %v1053, %v1049
          %v1270 = vpack.c.b16 %v1054, %v1050
          %v1271 = vpack.c.b16 %v1059, %v1055
          %v1272 = vpack.c.b16 %v1060, %v1056
          %v1273 = vpack.c.b16 %v1061, %v1057
          %v1274 = vpack.c.b16 %v1062, %v1058
          %v1275 = vpack.c.b16 %v1067, %v1063
          %v1276 = vpack.c.b16 %v1068, %v1064
          %v1277 = vpack.c.b16 %v1069, %v1065
          %v1278 = vpack.c.b16 %v1070, %v1066
          %v1279 = vpack.c.b16 %v1075, %v1071
          %v1280 = vpack.c.b16 %v1076, %v1072
          %v1281 = vpack.c.b16 %v1077, %v1073
          %v1282 = vpack.c.b16 %v1078, %v1074
          %v1283 = vpack.c.b16 %v1083, %v1079
          %v1284 = vpack.c.b16 %v1084, %v1080
          %v1285 = vpack.c.b16 %v1085, %v1081
          %v1286 = vpack.c.b16 %v1086, %v1082
          %v1287 = vpack.c.b16 %v1091, %v1087
          %v1288 = vpack.c.b16 %v1092, %v1088
          %v1289 = vpack.c.b16 %v1093, %v1089
          %v1290 = vpack.c.b16 %v1094, %v1090
          %v1291 = vpack.c.b16 %v1099, %v1095
          %v1292 = vpack.c.b16 %v1100, %v1096
          %v1293 = vpack.c.b16 %v1101, %v1097
          %v1294 = vpack.c.b16 %v1102, %v1098
          %v1295 = vpack.c.b16 %v1107, %v1103
          %v1296 = vpack.c.b16 %v1108, %v1104
          %v1297 = vpack.c.b16 %v1109, %v1105
          %v1298 = vpack.c.b16 %v1110, %v1106
          %v1299 = vpack.c.b16 %v1115, %v1111
          %v1300 = vpack.c.b16 %v1116, %v1112
          %v1301 = vpack.c.b16 %v1117, %v1113
          %v1302 = vpack.c.b16 %v1118, %v1114
          %v1303 = vpack.c.b16 %v1123, %v1119
          %v1304 = vpack.c.b16 %v1124, %v1120
          %v1305 = vpack.c.b16 %v1125, %v1121
          %v1306 = vpack.c.b16 %v1126, %v1122
          %v1307 = vpack.c.b16 %v1131, %v1127
          %v1308 = vpack.c.b16 %v1132, %v1128
          %v1309 = vpack.c.b16 %v1133, %v1129
          %v1310 = vpack.c.b16 %v1134, %v1130
          %v1311 = vpack.c.b16 %v1139, %v1135
          %v1312 = vpack.c.b16 %v1140, %v1136
          %v1313 = vpack.c.b16 %v1141, %v1137
          %v1314 = vpack.c.b16 %v1142, %v1138
          %v1315 = vpack.c.b16 %v1147, %v1143
          %v1316 = vpack.c.b16 %v1148, %v1144
          %v1317 = vpack.c.b16 %v1149, %v1145
          %v1318 = vpack.c.b16 %v1150, %v1146
          %v1319 = vpack.c.b16 %v1155, %v1151
          %v1320 = vpack.c.b16 %v1156, %v1152
          %v1321 = vpack.c.b16 %v1157, %v1153
          %v1322 = vpack.c.b16 %v1158, %v1154
          %v1323 = vpack.c.b16 %v1163, %v1159
          %v1324 = vpack.c.b16 %v1164, %v1160
          %v1325 = vpack.c.b16 %v1165, %v1161
          %v1326 = vpack.c.b16 %v1166, %v1162
          %v1327 = vpack.c.b16 %v1171, %v1167
          %v1328 = vpack.c.b16 %v1172, %v1168
          %v1329 = vpack.c.b16 %v1173, %v1169
          %v1330 = vpack.c.b16 %v1174, %v1170
          %v1331 = vpack.c.b16 %v1179, %v1175
          %v1332 = vpack.c.b16 %v1180, %v1176
          %v1333 = vpack.c.b16 %v1181, %v1177
          %v1334 = vpack.c.b16 %v1182, %v1178
          %v1335 = vpack.c.b16 %v1187, %v1183
          %v1336 = vpack.c.b16 %v1188, %v1184
          %v1337 = vpack.c.b16 %v1189, %v1185
          %v1338 = vpack.c.b16 %v1190, %v1186
          %v1339 = vpack.c.b16 %v1195, %v1191
          %v1340 = vpack.c.b16 %v1196, %v1192
          %v1341 = vpack.c.b16 %v1197, %v1193
          %v1342 = vpack.c.b16 %v1198, %v1194
          %v1343 = vpack.c.b16 %v1203, %v1199
          %v1344 = vpack.c.b16 %v1204, %v1200
          %v1345 = vpack.c.b16 %v1205, %v1201
          %v1346 = vpack.c.b16 %v1206, %v1202
          %v1347 = vpack.c.b16 %v1211, %v1207
          %v1348 = vpack.c.b16 %v1212, %v1208
          %v1349 = vpack.c.b16 %v1213, %v1209
          %v1350 = vpack.c.b16 %v1214, %v1210
          %v1351 = vpack.c.b16 %v1219, %v1215
          %v1352 = vpack.c.b16 %v1220, %v1216
          %v1353 = vpack.c.b16 %v1221, %v1217
          %v1354 = vpack.c.b16 %v1222, %v1218
          %v1355 = vpack.c.b16 %v1227, %v1223
          %v1356 = vpack.c.b16 %v1228, %v1224
          %v1357 = vpack.c.b16 %v1229, %v1225
          %v1358 = vpack.c.b16 %v1230, %v1226
          %v1551 = vunpack.c.l.b16 %v591
          %v1552 = vunpack.c.l.b16 %v592
          %v1553 = vunpack.c.l.b16 %v593
          %v1554 = vunpack.c.l.b16 %v594
          %v1555 = vunpack.c.l.b16 %v595
          %v1556 = vunpack.c.l.b16 %v596
          %v1557 = vunpack.c.l.b16 %v597
          %v1558 = vunpack.c.l.b16 %v598
          %v1559 = vunpack.c.l.b16 %v599
          %v1560 = vunpack.c.l.b16 %v600
          %v1561 = vunpack.c.l.b16 %v601
          %v1562 = vunpack.c.l.b16 %v602
          %v1563 = vunpack.c.l.b16 %v603
          %v1564 = vunpack.c.l.b16 %v604
          %v1565 = vunpack.c.l.b16 %v605
          %v1566 = vunpack.c.l.b16 %v606
          %v1567 = vunpack.c.l.b16 %v607
          %v1568 = vunpack.c.l.b16 %v608
          %v1569 = vunpack.c.l.b16 %v609
          %v1570 = vunpack.c.l.b16 %v610
          %v1571 = vunpack.c.l.b16 %v611
          %v1572 = vunpack.c.l.b16 %v612
          %v1573 = vunpack.c.l.b16 %v613
          %v1574 = vunpack.c.l.b16 %v614
          %v1575 = vunpack.c.l.b16 %v615
          %v1576 = vunpack.c.l.b16 %v616
          %v1577 = vunpack.c.l.b16 %v617
          %v1578 = vunpack.c.l.b16 %v618
          %v1579 = vunpack.c.l.b16 %v619
          %v1580 = vunpack.c.l.b16 %v620
          %v1581 = vunpack.c.l.b16 %v621
          %v1582 = vunpack.c.l.b16 %v622
          %v1583 = vunpack.c.l.b16 %v623
          %v1584 = vunpack.c.l.b16 %v624
          %v1585 = vunpack.c.l.b16 %v625
          %v1586 = vunpack.c.l.b16 %v626
          %v1587 = vunpack.c.l.b16 %v627
          %v1588 = vunpack.c.l.b16 %v628
          %v1589 = vunpack.c.l.b16 %v629
          %v1590 = vunpack.c.l.b16 %v630
          %v1591 = vunpack.c.l.b16 %v631
          %v1592 = vunpack.c.l.b16 %v632
          %v1593 = vunpack.c.l.b16 %v633
          %v1594 = vunpack.c.l.b16 %v634
          %v1595 = vunpack.c.l.b16 %v635
          %v1596 = vunpack.c.l.b16 %v636
          %v1597 = vunpack.c.l.b16 %v637
          %v1598 = vunpack.c.l.b16 %v638
          %v1599 = vunpack.c.l.b16 %v639
          %v1600 = vunpack.c.l.b16 %v640
          %v1601 = vunpack.c.l.b16 %v641
          %v1602 = vunpack.c.l.b16 %v642
          %v1603 = vunpack.c.l.b16 %v643
          %v1604 = vunpack.c.l.b16 %v644
          %v1605 = vunpack.c.l.b16 %v645
          %v1606 = vunpack.c.l.b16 %v646
          %v1607 = vunpack.c.l.b16 %v647
          %v1608 = vunpack.c.l.b16 %v648
          %v1609 = vunpack.c.l.b16 %v649
          %v1610 = vunpack.c.l.b16 %v650
          %v1611 = vunpack.c.l.b16 %v651
          %v1612 = vunpack.c.l.b16 %v652
          %v1613 = vunpack.c.l.b16 %v653
          %v1614 = vunpack.c.l.b16 %v654
          %v1615 = vpack.c.b16 %v1552, %v1551
          %v1616 = vpack.c.b16 %v1554, %v1553
          %v1617 = vpack.c.b16 %v1556, %v1555
          %v1618 = vpack.c.b16 %v1558, %v1557
          %v1619 = vpack.c.b16 %v1560, %v1559
          %v1620 = vpack.c.b16 %v1562, %v1561
          %v1621 = vpack.c.b16 %v1564, %v1563
          %v1622 = vpack.c.b16 %v1566, %v1565
          %v1623 = vpack.c.b16 %v1568, %v1567
          %v1624 = vpack.c.b16 %v1570, %v1569
          %v1625 = vpack.c.b16 %v1572, %v1571
          %v1626 = vpack.c.b16 %v1574, %v1573
          %v1627 = vpack.c.b16 %v1576, %v1575
          %v1628 = vpack.c.b16 %v1578, %v1577
          %v1629 = vpack.c.b16 %v1580, %v1579
          %v1630 = vpack.c.b16 %v1582, %v1581
          %v1631 = vpack.c.b16 %v1584, %v1583
          %v1632 = vpack.c.b16 %v1586, %v1585
          %v1633 = vpack.c.b16 %v1588, %v1587
          %v1634 = vpack.c.b16 %v1590, %v1589
          %v1635 = vpack.c.b16 %v1592, %v1591
          %v1636 = vpack.c.b16 %v1594, %v1593
          %v1637 = vpack.c.b16 %v1596, %v1595
          %v1638 = vpack.c.b16 %v1598, %v1597
          %v1639 = vpack.c.b16 %v1600, %v1599
          %v1640 = vpack.c.b16 %v1602, %v1601
          %v1641 = vpack.c.b16 %v1604, %v1603
          %v1642 = vpack.c.b16 %v1606, %v1605
          %v1643 = vpack.c.b16 %v1608, %v1607
          %v1644 = vpack.c.b16 %v1610, %v1609
          %v1645 = vpack.c.b16 %v1612, %v1611
          %v1646 = vpack.c.b16 %v1614, %v1613
          %1679 = vmatpush.bf16.msra.mxu0 %v1622
          %1680 = vmatpush.bf16.msra.mxu0 %v1621
          %1681 = vmatpush.bf16.msra.mxu0 %v1620
          %1682 = vmatpush.bf16.msra.mxu0 %v1619
          %1683 = vmatpush.bf16.msra.mxu0 %v1618
          %1684 = vmatpush.bf16.msra.mxu0 %v1617
          %1685 = vmatpush.bf16.msra.mxu0 %v1616
          %1686 = vmatpush.bf16.msra.mxu0 %v1615
          %1687 = vmatmul.bf16.gmra.mxu0 %v1231
          %v1688 = vpop.f32.mrf.mxu0
          %v1689 = vadd.f32 0.0, %v1688
          %v1690 = vpop.f32.mrf.mxu0
          %v1691 = vadd.f32 0.0, %v1690
          %1692 = vmatmul.bf16.gmra.mxu0 %v1235
          %v1693 = vpop.f32.mrf.mxu0
          %v1694 = vadd.f32 0.0, %v1693
          %v1695 = vpop.f32.mrf.mxu0
          %v1696 = vadd.f32 0.0, %v1695
          %1697 = vmatmul.bf16.gmra.mxu0 %v1239
          %v1698 = vpop.f32.mrf.mxu0
          %v1699 = vadd.f32 0.0, %v1698
          %v1700 = vpop.f32.mrf.mxu0
          %v1701 = vadd.f32 0.0, %v1700
          %1702 = vmatmul.bf16.gmra.mxu0 %v1243
          %v1703 = vpop.f32.mrf.mxu0
          %v1704 = vadd.f32 0.0, %v1703
          %v1705 = vpop.f32.mrf.mxu0
          %v1706 = vadd.f32 0.0, %v1705
          %1707 = vmatmul.bf16.gmra.mxu0 %v1247
          %v1708 = vpop.f32.mrf.mxu0
          %v1709 = vadd.f32 0.0, %v1708
          %v1710 = vpop.f32.mrf.mxu0
          %v1711 = vadd.f32 0.0, %v1710
          %1712 = vmatmul.bf16.gmra.mxu0 %v1251
          %v1713 = vpop.f32.mrf.mxu0
          %v1714 = vadd.f32 0.0, %v1713
          %v1715 = vpop.f32.mrf.mxu0
          %v1716 = vadd.f32 0.0, %v1715
          %1717 = vmatmul.bf16.gmra.mxu0 %v1255
          %v1718 = vpop.f32.mrf.mxu0
          %v1719 = vadd.f32 0.0, %v1718
          %v1720 = vpop.f32.mrf.mxu0
          %v1721 = vadd.f32 0.0, %v1720
          %1722 = vmatmul.bf16.gmra.mxu0 %v1259
          %v1723 = vpop.f32.mrf.mxu0
          %v1724 = vadd.f32 0.0, %v1723
          %v1725 = vpop.f32.mrf.mxu0
          %v1726 = vadd.f32 0.0, %v1725
          %1727 = vmatmul.bf16.gmra.mxu0 %v1263
          %v1728 = vpop.f32.mrf.mxu0
          %v1729 = vadd.f32 0.0, %v1728
          %v1730 = vpop.f32.mrf.mxu0
          %v1731 = vadd.f32 0.0, %v1730
          %1732 = vmatmul.bf16.gmra.mxu0 %v1267
          %v1733 = vpop.f32.mrf.mxu0
          %v1734 = vadd.f32 0.0, %v1733
          %v1735 = vpop.f32.mrf.mxu0
          %v1736 = vadd.f32 0.0, %v1735
          %1737 = vmatmul.bf16.gmra.mxu0 %v1271
          %v1738 = vpop.f32.mrf.mxu0
          %v1739 = vadd.f32 0.0, %v1738
          %v1740 = vpop.f32.mrf.mxu0
          %v1741 = vadd.f32 0.0, %v1740
          %1742 = vmatmul.bf16.gmra.mxu0 %v1275
          %v1743 = vpop.f32.mrf.mxu0
          %v1744 = vadd.f32 0.0, %v1743
          %v1745 = vpop.f32.mrf.mxu0
          %v1746 = vadd.f32 0.0, %v1745
          %1747 = vmatmul.bf16.gmra.mxu0 %v1279
          %v1748 = vpop.f32.mrf.mxu0
          %v1749 = vadd.f32 0.0, %v1748
          %v1750 = vpop.f32.mrf.mxu0
          %v1751 = vadd.f32 0.0, %v1750
          %1752 = vmatmul.bf16.gmra.mxu0 %v1283
          %v1753 = vpop.f32.mrf.mxu0
          %v1754 = vadd.f32 0.0, %v1753
          %v1755 = vpop.f32.mrf.mxu0
          %v1756 = vadd.f32 0.0, %v1755
          %1757 = vmatmul.bf16.gmra.mxu0 %v1287
          %v1758 = vpop.f32.mrf.mxu0
          %v1759 = vadd.f32 0.0, %v1758
          %v1760 = vpop.f32.mrf.mxu0
          %v1761 = vadd.f32 0.0, %v1760
          %1762 = vmatmul.bf16.gmra.mxu0 %v1291
          %v1763 = vpop.f32.mrf.mxu0
          %v1764 = vadd.f32 0.0, %v1763
          %v1765 = vpop.f32.mrf.mxu0
          %v1766 = vadd.f32 0.0, %v1765
          %1767 = vmatmul.bf16.gmra.mxu0 %v1295
          %v1768 = vpop.f32.mrf.mxu0
          %v1769 = vadd.f32 0.0, %v1768
          %v1770 = vpop.f32.mrf.mxu0
          %v1771 = vadd.f32 0.0, %v1770
          %1772 = vmatmul.bf16.gmra.mxu0 %v1299
          %v1773 = vpop.f32.mrf.mxu0
          %v1774 = vadd.f32 0.0, %v1773
          %v1775 = vpop.f32.mrf.mxu0
          %v1776 = vadd.f32 0.0, %v1775
          %1777 = vmatmul.bf16.gmra.mxu0 %v1303
          %v1778 = vpop.f32.mrf.mxu0
          %v1779 = vadd.f32 0.0, %v1778
          %v1780 = vpop.f32.mrf.mxu0
          %v1781 = vadd.f32 0.0, %v1780
          %1782 = vmatmul.bf16.gmra.mxu0 %v1307
          %v1783 = vpop.f32.mrf.mxu0
          %v1784 = vadd.f32 0.0, %v1783
          %v1785 = vpop.f32.mrf.mxu0
          %v1786 = vadd.f32 0.0, %v1785
          %1787 = vmatmul.bf16.gmra.mxu0 %v1311
          %v1788 = vpop.f32.mrf.mxu0
          %v1789 = vadd.f32 0.0, %v1788
          %v1790 = vpop.f32.mrf.mxu0
          %v1791 = vadd.f32 0.0, %v1790
          %1792 = vmatmul.bf16.gmra.mxu0 %v1315
          %v1793 = vpop.f32.mrf.mxu0
          %v1794 = vadd.f32 0.0, %v1793
          %v1795 = vpop.f32.mrf.mxu0
          %v1796 = vadd.f32 0.0, %v1795
          %1797 = vmatmul.bf16.gmra.mxu0 %v1319
          %v1798 = vpop.f32.mrf.mxu0
          %v1799 = vadd.f32 0.0, %v1798
          %v1800 = vpop.f32.mrf.mxu0
          %v1801 = vadd.f32 0.0, %v1800
          %1802 = vmatmul.bf16.gmra.mxu0 %v1323
          %v1803 = vpop.f32.mrf.mxu0
          %v1804 = vadd.f32 0.0, %v1803
          %v1805 = vpop.f32.mrf.mxu0
          %v1806 = vadd.f32 0.0, %v1805
          %1807 = vmatmul.bf16.gmra.mxu0 %v1327
          %v1808 = vpop.f32.mrf.mxu0
          %v1809 = vadd.f32 0.0, %v1808
          %v1810 = vpop.f32.mrf.mxu0
          %v1811 = vadd.f32 0.0, %v1810
          %1812 = vmatmul.bf16.gmra.mxu0 %v1331
          %v1813 = vpop.f32.mrf.mxu0
          %v1814 = vadd.f32 0.0, %v1813
          %v1815 = vpop.f32.mrf.mxu0
          %v1816 = vadd.f32 0.0, %v1815
          %1817 = vmatmul.bf16.gmra.mxu0 %v1335
          %v1818 = vpop.f32.mrf.mxu0
          %v1819 = vadd.f32 0.0, %v1818
          %v1820 = vpop.f32.mrf.mxu0
          %v1821 = vadd.f32 0.0, %v1820
          %1822 = vmatmul.bf16.gmra.mxu0 %v1339
          %v1823 = vpop.f32.mrf.mxu0
          %v1824 = vadd.f32 0.0, %v1823
          %v1825 = vpop.f32.mrf.mxu0
          %v1826 = vadd.f32 0.0, %v1825
          %1827 = vmatmul.bf16.gmra.mxu0 %v1343
          %v1828 = vpop.f32.mrf.mxu0
          %v1829 = vadd.f32 0.0, %v1828
          %v1830 = vpop.f32.mrf.mxu0
          %v1831 = vadd.f32 0.0, %v1830
          %1832 = vmatmul.bf16.gmra.mxu0 %v1347
          %v1833 = vpop.f32.mrf.mxu0
          %v1834 = vadd.f32 0.0, %v1833
          %v1835 = vpop.f32.mrf.mxu0
          %v1836 = vadd.f32 0.0, %v1835
          %1837 = vmatmul.bf16.gmra.mxu0 %v1351
          %v1838 = vpop.f32.mrf.mxu0
          %v1839 = vadd.f32 0.0, %v1838
          %v1840 = vpop.f32.mrf.mxu0
          %v1841 = vadd.f32 0.0, %v1840
          %1842 = vmatmul.bf16.gmra.mxu0 %v1355
          %v1843 = vpop.f32.mrf.mxu0
          %v1844 = vadd.f32 0.0, %v1843
          %v1845 = vpop.f32.mrf.mxu0
          %v1846 = vadd.f32 0.0, %v1845
          %1847 = vdwg.mxu0
          %1848 = vmatpush.bf16.msra.mxu0 %v1630
          %1849 = vmatpush.bf16.msra.mxu0 %v1629
          %1850 = vmatpush.bf16.msra.mxu0 %v1628
          %1851 = vmatpush.bf16.msra.mxu0 %v1627
          %1852 = vmatpush.bf16.msra.mxu0 %v1626
          %1853 = vmatpush.bf16.msra.mxu0 %v1625
          %1854 = vmatpush.bf16.msra.mxu0 %v1624
          %1855 = vmatpush.bf16.msra.mxu0 %v1623
          %1856 = vmatmul.bf16.gmra.mxu0 %v1232
          %v1857 = vpop.f32.mrf.mxu0
          %v1858 = vadd.f32 %v1689, %v1857
          %v1859 = vpop.f32.mrf.mxu0
          %v1860 = vadd.f32 %v1691, %v1859
          %1861 = vmatmul.bf16.gmra.mxu0 %v1236
          %v1862 = vpop.f32.mrf.mxu0
          %v1863 = vadd.f32 %v1694, %v1862
          %v1864 = vpop.f32.mrf.mxu0
          %v1865 = vadd.f32 %v1696, %v1864
          %1866 = vmatmul.bf16.gmra.mxu0 %v1240
          %v1867 = vpop.f32.mrf.mxu0
          %v1868 = vadd.f32 %v1699, %v1867
          %v1869 = vpop.f32.mrf.mxu0
          %v1870 = vadd.f32 %v1701, %v1869
          %1871 = vmatmul.bf16.gmra.mxu0 %v1244
          %v1872 = vpop.f32.mrf.mxu0
          %v1873 = vadd.f32 %v1704, %v1872
          %v1874 = vpop.f32.mrf.mxu0
          %v1875 = vadd.f32 %v1706, %v1874
          %1876 = vmatmul.bf16.gmra.mxu0 %v1248
          %v1877 = vpop.f32.mrf.mxu0
          %v1878 = vadd.f32 %v1709, %v1877
          %v1879 = vpop.f32.mrf.mxu0
          %v1880 = vadd.f32 %v1711, %v1879
          %1881 = vmatmul.bf16.gmra.mxu0 %v1252
          %v1882 = vpop.f32.mrf.mxu0
          %v1883 = vadd.f32 %v1714, %v1882
          %v1884 = vpop.f32.mrf.mxu0
          %v1885 = vadd.f32 %v1716, %v1884
          %1886 = vmatmul.bf16.gmra.mxu0 %v1256
          %v1887 = vpop.f32.mrf.mxu0
          %v1888 = vadd.f32 %v1719, %v1887
          %v1889 = vpop.f32.mrf.mxu0
          %v1890 = vadd.f32 %v1721, %v1889
          %1891 = vmatmul.bf16.gmra.mxu0 %v1260
          %v1892 = vpop.f32.mrf.mxu0
          %v1893 = vadd.f32 %v1724, %v1892
          %v1894 = vpop.f32.mrf.mxu0
          %v1895 = vadd.f32 %v1726, %v1894
          %1896 = vmatmul.bf16.gmra.mxu0 %v1264
          %v1897 = vpop.f32.mrf.mxu0
          %v1898 = vadd.f32 %v1729, %v1897
          %v1899 = vpop.f32.mrf.mxu0
          %v1900 = vadd.f32 %v1731, %v1899
          %1901 = vmatmul.bf16.gmra.mxu0 %v1268
          %v1902 = vpop.f32.mrf.mxu0
          %v1903 = vadd.f32 %v1734, %v1902
          %v1904 = vpop.f32.mrf.mxu0
          %v1905 = vadd.f32 %v1736, %v1904
          %1906 = vmatmul.bf16.gmra.mxu0 %v1272
          %v1907 = vpop.f32.mrf.mxu0
          %v1908 = vadd.f32 %v1739, %v1907
          %v1909 = vpop.f32.mrf.mxu0
          %v1910 = vadd.f32 %v1741, %v1909
          %1911 = vmatmul.bf16.gmra.mxu0 %v1276
          %v1912 = vpop.f32.mrf.mxu0
          %v1913 = vadd.f32 %v1744, %v1912
          %v1914 = vpop.f32.mrf.mxu0
          %v1915 = vadd.f32 %v1746, %v1914
          %1916 = vmatmul.bf16.gmra.mxu0 %v1280
          %v1917 = vpop.f32.mrf.mxu0
          %v1918 = vadd.f32 %v1749, %v1917
          %v1919 = vpop.f32.mrf.mxu0
          %v1920 = vadd.f32 %v1751, %v1919
          %1921 = vmatmul.bf16.gmra.mxu0 %v1284
          %v1922 = vpop.f32.mrf.mxu0
          %v1923 = vadd.f32 %v1754, %v1922
          %v1924 = vpop.f32.mrf.mxu0
          %v1925 = vadd.f32 %v1756, %v1924
          %1926 = vmatmul.bf16.gmra.mxu0 %v1288
          %v1927 = vpop.f32.mrf.mxu0
          %v1928 = vadd.f32 %v1759, %v1927
          %v1929 = vpop.f32.mrf.mxu0
          %v1930 = vadd.f32 %v1761, %v1929
          %1931 = vmatmul.bf16.gmra.mxu0 %v1292
          %v1932 = vpop.f32.mrf.mxu0
          %v1933 = vadd.f32 %v1764, %v1932
          %v1934 = vpop.f32.mrf.mxu0
          %v1935 = vadd.f32 %v1766, %v1934
          %1936 = vmatmul.bf16.gmra.mxu0 %v1296
          %v1937 = vpop.f32.mrf.mxu0
          %v1938 = vadd.f32 %v1769, %v1937
          %v1939 = vpop.f32.mrf.mxu0
          %v1940 = vadd.f32 %v1771, %v1939
          %1941 = vmatmul.bf16.gmra.mxu0 %v1300
          %v1942 = vpop.f32.mrf.mxu0
          %v1943 = vadd.f32 %v1774, %v1942
          %v1944 = vpop.f32.mrf.mxu0
          %v1945 = vadd.f32 %v1776, %v1944
          %1946 = vmatmul.bf16.gmra.mxu0 %v1304
          %v1947 = vpop.f32.mrf.mxu0
          %v1948 = vadd.f32 %v1779, %v1947
          %v1949 = vpop.f32.mrf.mxu0
          %v1950 = vadd.f32 %v1781, %v1949
          %1951 = vmatmul.bf16.gmra.mxu0 %v1308
          %v1952 = vpop.f32.mrf.mxu0
          %v1953 = vadd.f32 %v1784, %v1952
          %v1954 = vpop.f32.mrf.mxu0
          %v1955 = vadd.f32 %v1786, %v1954
          %1956 = vmatmul.bf16.gmra.mxu0 %v1312
          %v1957 = vpop.f32.mrf.mxu0
          %v1958 = vadd.f32 %v1789, %v1957
          %v1959 = vpop.f32.mrf.mxu0
          %v1960 = vadd.f32 %v1791, %v1959
          %1961 = vmatmul.bf16.gmra.mxu0 %v1316
          %v1962 = vpop.f32.mrf.mxu0
          %v1963 = vadd.f32 %v1794, %v1962
          %v1964 = vpop.f32.mrf.mxu0
          %v1965 = vadd.f32 %v1796, %v1964
          %1966 = vmatmul.bf16.gmra.mxu0 %v1320
          %v1967 = vpop.f32.mrf.mxu0
          %v1968 = vadd.f32 %v1799, %v1967
          %v1969 = vpop.f32.mrf.mxu0
          %v1970 = vadd.f32 %v1801, %v1969
          %1971 = vmatmul.bf16.gmra.mxu0 %v1324
          %v1972 = vpop.f32.mrf.mxu0
          %v1973 = vadd.f32 %v1804, %v1972
          %v1974 = vpop.f32.mrf.mxu0
          %v1975 = vadd.f32 %v1806, %v1974
          %1976 = vmatmul.bf16.gmra.mxu0 %v1328
          %v1977 = vpop.f32.mrf.mxu0
          %v1978 = vadd.f32 %v1809, %v1977
          %v1979 = vpop.f32.mrf.mxu0
          %v1980 = vadd.f32 %v1811, %v1979
          %1981 = vmatmul.bf16.gmra.mxu0 %v1332
          %v1982 = vpop.f32.mrf.mxu0
          %v1983 = vadd.f32 %v1814, %v1982
          %v1984 = vpop.f32.mrf.mxu0
          %v1985 = vadd.f32 %v1816, %v1984
          %1986 = vmatmul.bf16.gmra.mxu0 %v1336
          %v1987 = vpop.f32.mrf.mxu0
          %v1988 = vadd.f32 %v1819, %v1987
          %v1989 = vpop.f32.mrf.mxu0
          %v1990 = vadd.f32 %v1821, %v1989
          %1991 = vmatmul.bf16.gmra.mxu0 %v1340
          %v1992 = vpop.f32.mrf.mxu0
          %v1993 = vadd.f32 %v1824, %v1992
          %v1994 = vpop.f32.mrf.mxu0
          %v1995 = vadd.f32 %v1826, %v1994
          %1996 = vmatmul.bf16.gmra.mxu0 %v1344
          %v1997 = vpop.f32.mrf.mxu0
          %v1998 = vadd.f32 %v1829, %v1997
          %v1999 = vpop.f32.mrf.mxu0
          %v2000 = vadd.f32 %v1831, %v1999
          %2001 = vmatmul.bf16.gmra.mxu0 %v1348
          %v2002 = vpop.f32.mrf.mxu0
          %v2003 = vadd.f32 %v1834, %v2002
          %v2004 = vpop.f32.mrf.mxu0
          %v2005 = vadd.f32 %v1836, %v2004
          %2006 = vmatmul.bf16.gmra.mxu0 %v1352
          %v2007 = vpop.f32.mrf.mxu0
          %v2008 = vadd.f32 %v1839, %v2007
          %v2009 = vpop.f32.mrf.mxu0
          %v2010 = vadd.f32 %v1841, %v2009
          %2011 = vmatmul.bf16.gmra.mxu0 %v1356
          %v2012 = vpop.f32.mrf.mxu0
          %v2013 = vadd.f32 %v1844, %v2012
          %v2014 = vpop.f32.mrf.mxu0
          %v2015 = vadd.f32 %v1846, %v2014
          %2016 = vdwg.mxu0
          %2017 = vmatpush.bf16.msra.mxu0 %v1638
          %2018 = vmatpush.bf16.msra.mxu0 %v1637
          %2019 = vmatpush.bf16.msra.mxu0 %v1636
          %2020 = vmatpush.bf16.msra.mxu0 %v1635
          %2021 = vmatpush.bf16.msra.mxu0 %v1634
          %2022 = vmatpush.bf16.msra.mxu0 %v1633
          %2023 = vmatpush.bf16.msra.mxu0 %v1632
          %2024 = vmatpush.bf16.msra.mxu0 %v1631
          %2025 = vmatmul.bf16.gmra.mxu0 %v1233
          %v2026 = vpop.f32.mrf.mxu0
          %v2027 = vadd.f32 %v1858, %v2026
          %v2028 = vpop.f32.mrf.mxu0
          %v2029 = vadd.f32 %v1860, %v2028
          %2030 = vmatmul.bf16.gmra.mxu0 %v1237
          %v2031 = vpop.f32.mrf.mxu0
          %v2032 = vadd.f32 %v1863, %v2031
          %v2033 = vpop.f32.mrf.mxu0
          %v2034 = vadd.f32 %v1865, %v2033
          %2035 = vmatmul.bf16.gmra.mxu0 %v1241
          %v2036 = vpop.f32.mrf.mxu0
          %v2037 = vadd.f32 %v1868, %v2036
          %v2038 = vpop.f32.mrf.mxu0
          %v2039 = vadd.f32 %v1870, %v2038
          %2040 = vmatmul.bf16.gmra.mxu0 %v1245
          %v2041 = vpop.f32.mrf.mxu0
          %v2042 = vadd.f32 %v1873, %v2041
          %v2043 = vpop.f32.mrf.mxu0
          %v2044 = vadd.f32 %v1875, %v2043
          %2045 = vmatmul.bf16.gmra.mxu0 %v1249
          %v2046 = vpop.f32.mrf.mxu0
          %v2047 = vadd.f32 %v1878, %v2046
          %v2048 = vpop.f32.mrf.mxu0
          %v2049 = vadd.f32 %v1880, %v2048
          %2050 = vmatmul.bf16.gmra.mxu0 %v1253
          %v2051 = vpop.f32.mrf.mxu0
          %v2052 = vadd.f32 %v1883, %v2051
          %v2053 = vpop.f32.mrf.mxu0
          %v2054 = vadd.f32 %v1885, %v2053
          %2055 = vmatmul.bf16.gmra.mxu0 %v1257
          %v2056 = vpop.f32.mrf.mxu0
          %v2057 = vadd.f32 %v1888, %v2056
          %v2058 = vpop.f32.mrf.mxu0
          %v2059 = vadd.f32 %v1890, %v2058
          %2060 = vmatmul.bf16.gmra.mxu0 %v1261
          %v2061 = vpop.f32.mrf.mxu0
          %v2062 = vadd.f32 %v1893, %v2061
          %v2063 = vpop.f32.mrf.mxu0
          %v2064 = vadd.f32 %v1895, %v2063
          %2065 = vmatmul.bf16.gmra.mxu0 %v1265
          %v2066 = vpop.f32.mrf.mxu0
          %v2067 = vadd.f32 %v1898, %v2066
          %v2068 = vpop.f32.mrf.mxu0
          %v2069 = vadd.f32 %v1900, %v2068
          %2070 = vmatmul.bf16.gmra.mxu0 %v1269
          %v2071 = vpop.f32.mrf.mxu0
          %v2072 = vadd.f32 %v1903, %v2071
          %v2073 = vpop.f32.mrf.mxu0
          %v2074 = vadd.f32 %v1905, %v2073
          %2075 = vmatmul.bf16.gmra.mxu0 %v1273
          %v2076 = vpop.f32.mrf.mxu0
          %v2077 = vadd.f32 %v1908, %v2076
          %v2078 = vpop.f32.mrf.mxu0
          %v2079 = vadd.f32 %v1910, %v2078
          %2080 = vmatmul.bf16.gmra.mxu0 %v1277
          %v2081 = vpop.f32.mrf.mxu0
          %v2082 = vadd.f32 %v1913, %v2081
          %v2083 = vpop.f32.mrf.mxu0
          %v2084 = vadd.f32 %v1915, %v2083
          %2085 = vmatmul.bf16.gmra.mxu0 %v1281
          %v2086 = vpop.f32.mrf.mxu0
          %v2087 = vadd.f32 %v1918, %v2086
          %v2088 = vpop.f32.mrf.mxu0
          %v2089 = vadd.f32 %v1920, %v2088
          %2090 = vmatmul.bf16.gmra.mxu0 %v1285
          %v2091 = vpop.f32.mrf.mxu0
          %v2092 = vadd.f32 %v1923, %v2091
          %v2093 = vpop.f32.mrf.mxu0
          %v2094 = vadd.f32 %v1925, %v2093
          %2095 = vmatmul.bf16.gmra.mxu0 %v1289
          %v2096 = vpop.f32.mrf.mxu0
          %v2097 = vadd.f32 %v1928, %v2096
          %v2098 = vpop.f32.mrf.mxu0
          %v2099 = vadd.f32 %v1930, %v2098
          %2100 = vmatmul.bf16.gmra.mxu0 %v1293
          %v2101 = vpop.f32.mrf.mxu0
          %v2102 = vadd.f32 %v1933, %v2101
          %v2103 = vpop.f32.mrf.mxu0
          %v2104 = vadd.f32 %v1935, %v2103
          %2105 = vmatmul.bf16.gmra.mxu0 %v1297
          %v2106 = vpop.f32.mrf.mxu0
          %v2107 = vadd.f32 %v1938, %v2106
          %v2108 = vpop.f32.mrf.mxu0
          %v2109 = vadd.f32 %v1940, %v2108
          %2110 = vmatmul.bf16.gmra.mxu0 %v1301
          %v2111 = vpop.f32.mrf.mxu0
          %v2112 = vadd.f32 %v1943, %v2111
          %v2113 = vpop.f32.mrf.mxu0
          %v2114 = vadd.f32 %v1945, %v2113
          %2115 = vmatmul.bf16.gmra.mxu0 %v1305
          %v2116 = vpop.f32.mrf.mxu0
          %v2117 = vadd.f32 %v1948, %v2116
          %v2118 = vpop.f32.mrf.mxu0
          %v2119 = vadd.f32 %v1950, %v2118
          %2120 = vmatmul.bf16.gmra.mxu0 %v1309
          %v2121 = vpop.f32.mrf.mxu0
          %v2122 = vadd.f32 %v1953, %v2121
          %v2123 = vpop.f32.mrf.mxu0
          %v2124 = vadd.f32 %v1955, %v2123
          %2125 = vmatmul.bf16.gmra.mxu0 %v1313
          %v2126 = vpop.f32.mrf.mxu0
          %v2127 = vadd.f32 %v1958, %v2126
          %v2128 = vpop.f32.mrf.mxu0
          %v2129 = vadd.f32 %v1960, %v2128
          %2130 = vmatmul.bf16.gmra.mxu0 %v1317
          %v2131 = vpop.f32.mrf.mxu0
          %v2132 = vadd.f32 %v1963, %v2131
          %v2133 = vpop.f32.mrf.mxu0
          %v2134 = vadd.f32 %v1965, %v2133
          %2135 = vmatmul.bf16.gmra.mxu0 %v1321
          %v2136 = vpop.f32.mrf.mxu0
          %v2137 = vadd.f32 %v1968, %v2136
          %v2138 = vpop.f32.mrf.mxu0
          %v2139 = vadd.f32 %v1970, %v2138
          %2140 = vmatmul.bf16.gmra.mxu0 %v1325
          %v2141 = vpop.f32.mrf.mxu0
          %v2142 = vadd.f32 %v1973, %v2141
          %v2143 = vpop.f32.mrf.mxu0
          %v2144 = vadd.f32 %v1975, %v2143
          %2145 = vmatmul.bf16.gmra.mxu0 %v1329
          %v2146 = vpop.f32.mrf.mxu0
          %v2147 = vadd.f32 %v1978, %v2146
          %v2148 = vpop.f32.mrf.mxu0
          %v2149 = vadd.f32 %v1980, %v2148
          %2150 = vmatmul.bf16.gmra.mxu0 %v1333
          %v2151 = vpop.f32.mrf.mxu0
          %v2152 = vadd.f32 %v1983, %v2151
          %v2153 = vpop.f32.mrf.mxu0
          %v2154 = vadd.f32 %v1985, %v2153
          %2155 = vmatmul.bf16.gmra.mxu0 %v1337
          %v2156 = vpop.f32.mrf.mxu0
          %v2157 = vadd.f32 %v1988, %v2156
          %v2158 = vpop.f32.mrf.mxu0
          %v2159 = vadd.f32 %v1990, %v2158
          %2160 = vmatmul.bf16.gmra.mxu0 %v1341
          %v2161 = vpop.f32.mrf.mxu0
          %v2162 = vadd.f32 %v1993, %v2161
          %v2163 = vpop.f32.mrf.mxu0
          %v2164 = vadd.f32 %v1995, %v2163
          %2165 = vmatmul.bf16.gmra.mxu0 %v1345
          %v2166 = vpop.f32.mrf.mxu0
          %v2167 = vadd.f32 %v1998, %v2166
          %v2168 = vpop.f32.mrf.mxu0
          %v2169 = vadd.f32 %v2000, %v2168
          %2170 = vmatmul.bf16.gmra.mxu0 %v1349
          %v2171 = vpop.f32.mrf.mxu0
          %v2172 = vadd.f32 %v2003, %v2171
          %v2173 = vpop.f32.mrf.mxu0
          %v2174 = vadd.f32 %v2005, %v2173
          %2175 = vmatmul.bf16.gmra.mxu0 %v1353
          %v2176 = vpop.f32.mrf.mxu0
          %v2177 = vadd.f32 %v2008, %v2176
          %v2178 = vpop.f32.mrf.mxu0
          %v2179 = vadd.f32 %v2010, %v2178
          %2180 = vmatmul.bf16.gmra.mxu0 %v1357
          %v2181 = vpop.f32.mrf.mxu0
          %v2182 = vadd.f32 %v2013, %v2181
          %v2183 = vpop.f32.mrf.mxu0
          %v2184 = vadd.f32 %v2015, %v2183
          %2185 = vdwg.mxu0
          %2186 = vmatpush.bf16.msra.mxu0 %v1646
          %2187 = vmatpush.bf16.msra.mxu0 %v1645
          %2188 = vmatpush.bf16.msra.mxu0 %v1644
          %2189 = vmatpush.bf16.msra.mxu0 %v1643
          %2190 = vmatpush.bf16.msra.mxu0 %v1642
          %2191 = vmatpush.bf16.msra.mxu0 %v1641
          %2192 = vmatpush.bf16.msra.mxu0 %v1640
          %2193 = vmatpush.bf16.msra.mxu0 %v1639
          %2194 = vmatmul.bf16.gmra.mxu0 %v1234
          %v2195 = vpop.f32.mrf.mxu0
          %v2196 = vadd.f32 %v2027, %v2195
          %v2197 = vpop.f32.mrf.mxu0
          %v2198 = vadd.f32 %v2029, %v2197
          %2199 = vmatmul.bf16.gmra.mxu0 %v1238
          %v2200 = vpop.f32.mrf.mxu0
          %v2201 = vadd.f32 %v2032, %v2200
          %v2202 = vpop.f32.mrf.mxu0
          %v2203 = vadd.f32 %v2034, %v2202
          %2204 = vmatmul.bf16.gmra.mxu0 %v1242
          %v2205 = vpop.f32.mrf.mxu0
          %v2206 = vadd.f32 %v2037, %v2205
          %v2207 = vpop.f32.mrf.mxu0
          %v2208 = vadd.f32 %v2039, %v2207
          %2209 = vmatmul.bf16.gmra.mxu0 %v1246
          %v2210 = vpop.f32.mrf.mxu0
          %v2211 = vadd.f32 %v2042, %v2210
          %v2212 = vpop.f32.mrf.mxu0
          %v2213 = vadd.f32 %v2044, %v2212
          %2214 = vmatmul.bf16.gmra.mxu0 %v1250
          %v2215 = vpop.f32.mrf.mxu0
          %v2216 = vadd.f32 %v2047, %v2215
          %v2217 = vpop.f32.mrf.mxu0
          %v2218 = vadd.f32 %v2049, %v2217
          %2219 = vmatmul.bf16.gmra.mxu0 %v1254
          %v2220 = vpop.f32.mrf.mxu0
          %v2221 = vadd.f32 %v2052, %v2220
          %v2222 = vpop.f32.mrf.mxu0
          %v2223 = vadd.f32 %v2054, %v2222
          %2224 = vmatmul.bf16.gmra.mxu0 %v1258
          %v2225 = vpop.f32.mrf.mxu0
          %v2226 = vadd.f32 %v2057, %v2225
          %v2227 = vpop.f32.mrf.mxu0
          %v2228 = vadd.f32 %v2059, %v2227
          %2229 = vmatmul.bf16.gmra.mxu0 %v1262
          %v2230 = vpop.f32.mrf.mxu0
          %v2231 = vadd.f32 %v2062, %v2230
          %v2232 = vpop.f32.mrf.mxu0
          %v2233 = vadd.f32 %v2064, %v2232
          %2234 = vmatmul.bf16.gmra.mxu0 %v1266
          %v2235 = vpop.f32.mrf.mxu0
          %v2236 = vadd.f32 %v2067, %v2235
          %v2237 = vpop.f32.mrf.mxu0
          %v2238 = vadd.f32 %v2069, %v2237
          %2239 = vmatmul.bf16.gmra.mxu0 %v1270
          %v2240 = vpop.f32.mrf.mxu0
          %v2241 = vadd.f32 %v2072, %v2240
          %v2242 = vpop.f32.mrf.mxu0
          %v2243 = vadd.f32 %v2074, %v2242
          %2244 = vmatmul.bf16.gmra.mxu0 %v1274
          %v2245 = vpop.f32.mrf.mxu0
          %v2246 = vadd.f32 %v2077, %v2245
          %v2247 = vpop.f32.mrf.mxu0
          %v2248 = vadd.f32 %v2079, %v2247
          %2249 = vmatmul.bf16.gmra.mxu0 %v1278
          %v2250 = vpop.f32.mrf.mxu0
          %v2251 = vadd.f32 %v2082, %v2250
          %v2252 = vpop.f32.mrf.mxu0
          %v2253 = vadd.f32 %v2084, %v2252
          %2254 = vmatmul.bf16.gmra.mxu0 %v1282
          %v2255 = vpop.f32.mrf.mxu0
          %v2256 = vadd.f32 %v2087, %v2255
          %v2257 = vpop.f32.mrf.mxu0
          %v2258 = vadd.f32 %v2089, %v2257
          %2259 = vmatmul.bf16.gmra.mxu0 %v1286
          %v2260 = vpop.f32.mrf.mxu0
          %v2261 = vadd.f32 %v2092, %v2260
          %v2262 = vpop.f32.mrf.mxu0
          %v2263 = vadd.f32 %v2094, %v2262
          %2264 = vmatmul.bf16.gmra.mxu0 %v1290
          %v2265 = vpop.f32.mrf.mxu0
          %v2266 = vadd.f32 %v2097, %v2265
          %v2267 = vpop.f32.mrf.mxu0
          %v2268 = vadd.f32 %v2099, %v2267
          %2269 = vmatmul.bf16.gmra.mxu0 %v1294
          %v2270 = vpop.f32.mrf.mxu0
          %v2271 = vadd.f32 %v2102, %v2270
          %v2272 = vpop.f32.mrf.mxu0
          %v2273 = vadd.f32 %v2104, %v2272
          %2274 = vmatmul.bf16.gmra.mxu0 %v1298
          %v2275 = vpop.f32.mrf.mxu0
          %v2276 = vadd.f32 %v2107, %v2275
          %v2277 = vpop.f32.mrf.mxu0
          %v2278 = vadd.f32 %v2109, %v2277
          %2279 = vmatmul.bf16.gmra.mxu0 %v1302
          %v2280 = vpop.f32.mrf.mxu0
          %v2281 = vadd.f32 %v2112, %v2280
          %v2282 = vpop.f32.mrf.mxu0
          %v2283 = vadd.f32 %v2114, %v2282
          %2284 = vmatmul.bf16.gmra.mxu0 %v1306
          %v2285 = vpop.f32.mrf.mxu0
          %v2286 = vadd.f32 %v2117, %v2285
          %v2287 = vpop.f32.mrf.mxu0
          %v2288 = vadd.f32 %v2119, %v2287
          %2289 = vmatmul.bf16.gmra.mxu0 %v1310
          %v2290 = vpop.f32.mrf.mxu0
          %v2291 = vadd.f32 %v2122, %v2290
          %v2292 = vpop.f32.mrf.mxu0
          %v2293 = vadd.f32 %v2124, %v2292
          %2294 = vmatmul.bf16.gmra.mxu0 %v1314
          %v2295 = vpop.f32.mrf.mxu0
          %v2296 = vadd.f32 %v2127, %v2295
          %v2297 = vpop.f32.mrf.mxu0
          %v2298 = vadd.f32 %v2129, %v2297
          %2299 = vmatmul.bf16.gmra.mxu0 %v1318
          %v2300 = vpop.f32.mrf.mxu0
          %v2301 = vadd.f32 %v2132, %v2300
          %v2302 = vpop.f32.mrf.mxu0
          %v2303 = vadd.f32 %v2134, %v2302
          %2304 = vmatmul.bf16.gmra.mxu0 %v1322
          %v2305 = vpop.f32.mrf.mxu0
          %v2306 = vadd.f32 %v2137, %v2305
          %v2307 = vpop.f32.mrf.mxu0
          %v2308 = vadd.f32 %v2139, %v2307
          %2309 = vmatmul.bf16.gmra.mxu0 %v1326
          %v2310 = vpop.f32.mrf.mxu0
          %v2311 = vadd.f32 %v2142, %v2310
          %v2312 = vpop.f32.mrf.mxu0
          %v2313 = vadd.f32 %v2144, %v2312
          %2314 = vmatmul.bf16.gmra.mxu0 %v1330
          %v2315 = vpop.f32.mrf.mxu0
          %v2316 = vadd.f32 %v2147, %v2315
          %v2317 = vpop.f32.mrf.mxu0
          %v2318 = vadd.f32 %v2149, %v2317
          %2319 = vmatmul.bf16.gmra.mxu0 %v1334
          %v2320 = vpop.f32.mrf.mxu0
          %v2321 = vadd.f32 %v2152, %v2320
          %v2322 = vpop.f32.mrf.mxu0
          %v2323 = vadd.f32 %v2154, %v2322
          %2324 = vmatmul.bf16.gmra.mxu0 %v1338
          %v2325 = vpop.f32.mrf.mxu0
          %v2326 = vadd.f32 %v2157, %v2325
          %v2327 = vpop.f32.mrf.mxu0
          %v2328 = vadd.f32 %v2159, %v2327
          %2329 = vmatmul.bf16.gmra.mxu0 %v1342
          %v2330 = vpop.f32.mrf.mxu0
          %v2331 = vadd.f32 %v2162, %v2330
          %v2332 = vpop.f32.mrf.mxu0
          %v2333 = vadd.f32 %v2164, %v2332
          %2334 = vmatmul.bf16.gmra.mxu0 %v1346
          %v2335 = vpop.f32.mrf.mxu0
          %v2336 = vadd.f32 %v2167, %v2335
          %v2337 = vpop.f32.mrf.mxu0
          %v2338 = vadd.f32 %v2169, %v2337
          %2339 = vmatmul.bf16.gmra.mxu0 %v1350
          %v2340 = vpop.f32.mrf.mxu0
          %v2341 = vadd.f32 %v2172, %v2340
          %v2342 = vpop.f32.mrf.mxu0
          %v2343 = vadd.f32 %v2174, %v2342
          %2344 = vmatmul.bf16.gmra.mxu0 %v1354
          %v2345 = vpop.f32.mrf.mxu0
          %v2346 = vadd.f32 %v2177, %v2345
          %v2347 = vpop.f32.mrf.mxu0
          %v2348 = vadd.f32 %v2179, %v2347
          %2349 = vmatmul.bf16.gmra.mxu0 %v1358
          %v2350 = vpop.f32.mrf.mxu0
          %v2351 = vadd.f32 %v2182, %v2350
          %v2352 = vpop.f32.mrf.mxu0
          %v2353 = vadd.f32 %v2184, %v2352
          %2354 = vdwg.mxu0
          %v2355 = vadd.f32 %v655, %v2196
          %v2356 = vadd.f32 %v656, %v2198
          %v2357 = vadd.f32 %v657, %v2201
          %v2358 = vadd.f32 %v658, %v2203
          %v2359 = vadd.f32 %v659, %v2206
          %v2360 = vadd.f32 %v660, %v2208
          %v2361 = vadd.f32 %v661, %v2211
          %v2362 = vadd.f32 %v662, %v2213
          %v2363 = vadd.f32 %v663, %v2216
          %v2364 = vadd.f32 %v664, %v2218
          %v2365 = vadd.f32 %v665, %v2221
          %v2366 = vadd.f32 %v666, %v2223
          %v2367 = vadd.f32 %v667, %v2226
          %v2368 = vadd.f32 %v668, %v2228
          %v2369 = vadd.f32 %v669, %v2231
          %v2370 = vadd.f32 %v670, %v2233
          %v2371 = vadd.f32 %v671, %v2236
          %v2372 = vadd.f32 %v672, %v2238
          %v2373 = vadd.f32 %v673, %v2241
          %v2374 = vadd.f32 %v674, %v2243
          %v2375 = vadd.f32 %v675, %v2246
          %v2376 = vadd.f32 %v676, %v2248
          %v2377 = vadd.f32 %v677, %v2251
          %v2378 = vadd.f32 %v678, %v2253
          %v2379 = vadd.f32 %v679, %v2256
          %v2380 = vadd.f32 %v680, %v2258
          %v2381 = vadd.f32 %v681, %v2261
          %v2382 = vadd.f32 %v682, %v2263
          %v2383 = vadd.f32 %v683, %v2266
          %v2384 = vadd.f32 %v684, %v2268
          %v2385 = vadd.f32 %v685, %v2271
          %v2386 = vadd.f32 %v686, %v2273
          %v2387 = vadd.f32 %v687, %v2276
          %v2388 = vadd.f32 %v688, %v2278
          %v2389 = vadd.f32 %v689, %v2281
          %v2390 = vadd.f32 %v690, %v2283
          %v2391 = vadd.f32 %v691, %v2286
          %v2392 = vadd.f32 %v692, %v2288
          %v2393 = vadd.f32 %v693, %v2291
          %v2394 = vadd.f32 %v694, %v2293
          %v2395 = vadd.f32 %v695, %v2296
          %v2396 = vadd.f32 %v696, %v2298
          %v2397 = vadd.f32 %v697, %v2301
          %v2398 = vadd.f32 %v698, %v2303
          %v2399 = vadd.f32 %v699, %v2306
          %v2400 = vadd.f32 %v700, %v2308
          %v2401 = vadd.f32 %v701, %v2311
          %v2402 = vadd.f32 %v702, %v2313
          %v2403 = vadd.f32 %v703, %v2316
          %v2404 = vadd.f32 %v704, %v2318
          %v2405 = vadd.f32 %v705, %v2321
          %v2406 = vadd.f32 %v706, %v2323
          %v2407 = vadd.f32 %v707, %v2326
          %v2408 = vadd.f32 %v708, %v2328
          %v2409 = vadd.f32 %v709, %v2331
          %v2410 = vadd.f32 %v710, %v2333
          %v2411 = vadd.f32 %v711, %v2336
          %v2412 = vadd.f32 %v712, %v2338
          %v2413 = vadd.f32 %v713, %v2341
          %v2414 = vadd.f32 %v714, %v2343
          %v2415 = vadd.f32 %v715, %v2346
          %v2416 = vadd.f32 %v716, %v2348
          %v2417 = vadd.f32 %v717, %v2351
          %v2418 = vadd.f32 %v718, %v2353
          %2419 = vst [vmem:[#allocation2] sm:$0xff] %v2355
          %2420 = vst [vmem:[#allocation2 + $0x8] sm:$0xff] %v2356
          %2421 = vst [vmem:[#allocation2 + $0x10] sm:$0xff] %v2357
          %2422 = vst [vmem:[#allocation2 + $0x18] sm:$0xff] %v2358
          %2423 = vst [vmem:[#allocation2 + $0x20] sm:$0xff] %v2359
          %2424 = vst [vmem:[#allocation2 + $0x28] sm:$0xff] %v2360
          %2425 = vst [vmem:[#allocation2 + $0x30] sm:$0xff] %v2361
          %2426 = vst [vmem:[#allocation2 + $0x38] sm:$0xff] %v2362
          %2427 = vst [vmem:[#allocation2 + $0x40] sm:$0xff] %v2363
          %2428 = vst [vmem:[#allocation2 + $0x48] sm:$0xff] %v2364
          %2429 = vst [vmem:[#allocation2 + $0x50] sm:$0xff] %v2365
          %2430 = vst [vmem:[#allocation2 + $0x58] sm:$0xff] %v2366
          %2431 = vst [vmem:[#allocation2 + $0x60] sm:$0xff] %v2367
          %2432 = vst [vmem:[#allocation2 + $0x68] sm:$0xff] %v2368
          %2433 = vst [vmem:[#allocation2 + $0x70] sm:$0xff] %v2369
          %2434 = vst [vmem:[#allocation2 + $0x78] sm:$0xff] %v2370
          %2435 = vst [vmem:[#allocation2 + $0x80] sm:$0xff] %v2371
          %2436 = vst [vmem:[#allocation2 + $0x88] sm:$0xff] %v2372
          %2437 = vst [vmem:[#allocation2 + $0x90] sm:$0xff] %v2373
          %2438 = vst [vmem:[#allocation2 + $0x98] sm:$0xff] %v2374
          %2439 = vst [vmem:[#allocation2 + $0xa0] sm:$0xff] %v2375
          %2440 = vst [vmem:[#allocation2 + $0xa8] sm:$0xff] %v2376
          %2441 = vst [vmem:[#allocation2 + $0xb0] sm:$0xff] %v2377
          %2442 = vst [vmem:[#allocation2 + $0xb8] sm:$0xff] %v2378
          %2443 = vst [vmem:[#allocation2 + $0xc0] sm:$0xff] %v2379
          %2444 = vst [vmem:[#allocation2 + $0xc8] sm:$0xff] %v2380
          %2445 = vst [vmem:[#allocation2 + $0xd0] sm:$0xff] %v2381
          %2446 = vst [vmem:[#allocation2 + $0xd8] sm:$0xff] %v2382
          %2447 = vst [vmem:[#allocation2 + $0xe0] sm:$0xff] %v2383
          %2448 = vst [vmem:[#allocation2 + $0xe8] sm:$0xff] %v2384
          %2449 = vst [vmem:[#allocation2 + $0xf0] sm:$0xff] %v2385
          %2450 = vst [vmem:[#allocation2 + $0xf8] sm:$0xff] %v2386
          %2451 = vst [vmem:[#allocation2 + $0x100] sm:$0xff] %v2387
          %2452 = vst [vmem:[#allocation2 + $0x108] sm:$0xff] %v2388
          %2453 = vst [vmem:[#allocation2 + $0x110] sm:$0xff] %v2389
          %2454 = vst [vmem:[#allocation2 + $0x118] sm:$0xff] %v2390
          %2455 = vst [vmem:[#allocation2 + $0x120] sm:$0xff] %v2391
          %2456 = vst [vmem:[#allocation2 + $0x128] sm:$0xff] %v2392
          %2457 = vst [vmem:[#allocation2 + $0x130] sm:$0xff] %v2393
          %2458 = vst [vmem:[#allocation2 + $0x138] sm:$0xff] %v2394
          %2459 = vst [vmem:[#allocation2 + $0x140] sm:$0xff] %v2395
          %2460 = vst [vmem:[#allocation2 + $0x148] sm:$0xff] %v2396
          %2461 = vst [vmem:[#allocation2 + $0x150] sm:$0xff] %v2397
          %2462 = vst [vmem:[#allocation2 + $0x158] sm:$0xff] %v2398
          %2463 = vst [vmem:[#allocation2 + $0x160] sm:$0xff] %v2399
          %2464 = vst [vmem:[#allocation2 + $0x168] sm:$0xff] %v2400
          %2465 = vst [vmem:[#allocation2 + $0x170] sm:$0xff] %v2401
          %2466 = vst [vmem:[#allocation2 + $0x178] sm:$0xff] %v2402
          %2467 = vst [vmem:[#allocation2 + $0x180] sm:$0xff] %v2403
          %2468 = vst [vmem:[#allocation2 + $0x188] sm:$0xff] %v2404
          %2469 = vst [vmem:[#allocation2 + $0x190] sm:$0xff] %v2405
          %2470 = vst [vmem:[#allocation2 + $0x198] sm:$0xff] %v2406
          %2471 = vst [vmem:[#allocation2 + $0x1a0] sm:$0xff] %v2407
          %2472 = vst [vmem:[#allocation2 + $0x1a8] sm:$0xff] %v2408
          %2473 = vst [vmem:[#allocation2 + $0x1b0] sm:$0xff] %v2409
          %2474 = vst [vmem:[#allocation2 + $0x1b8] sm:$0xff] %v2410
          %2475 = vst [vmem:[#allocation2 + $0x1c0] sm:$0xff] %v2411
          %2476 = vst [vmem:[#allocation2 + $0x1c8] sm:$0xff] %v2412
          %2477 = vst [vmem:[#allocation2 + $0x1d0] sm:$0xff] %v2413
          %2478 = vst [vmem:[#allocation2 + $0x1d8] sm:$0xff] %v2414
          %2479 = vst [vmem:[#allocation2 + $0x1e0] sm:$0xff] %v2415
          %2480 = vst [vmem:[#allocation2 + $0x1e8] sm:$0xff] %v2416
          %2481 = vst [vmem:[#allocation2 + $0x1f0] sm:$0xff] %v2417
          %2482 = vst [vmem:[#allocation2 + $0x1f8] sm:$0xff] %v2418
        $region63: #{gcn_forward.11} parent=50 // pred_fallthru
          _
        %p2483 = scmp.eq.s32.totalorder %s28, 2
        // Predicated region
        $region64: #{gcn_forward.11} parent=50 // pred_check
          %p2484 = pneg %p2483
        $region65: #{gcn_forward.11} parent=50 // pred_check_branch
          %2486 = sbr.rel (%p2484) target = $region67
        $region66: #{gcn_forward.11} parent=50 // pred_region
          %v2487 = vld [vmem:[#allocation2] sm:$0xff]
          %v2488 = vld [vmem:[#allocation2 + $0x8] sm:$0xff]
          %v2489 = vld [vmem:[#allocation2 + $0x10] sm:$0xff]
          %v2490 = vld [vmem:[#allocation2 + $0x18] sm:$0xff]
          %v2491 = vld [vmem:[#allocation2 + $0x20] sm:$0xff]
          %v2492 = vld [vmem:[#allocation2 + $0x28] sm:$0xff]
          %v2493 = vld [vmem:[#allocation2 + $0x30] sm:$0xff]
          %v2494 = vld [vmem:[#allocation2 + $0x38] sm:$0xff]
          %v2495 = vld [vmem:[#allocation2 + $0x40] sm:$0xff]
          %v2496 = vld [vmem:[#allocation2 + $0x48] sm:$0xff]
          %v2497 = vld [vmem:[#allocation2 + $0x50] sm:$0xff]
          %v2498 = vld [vmem:[#allocation2 + $0x58] sm:$0xff]
          %v2499 = vld [vmem:[#allocation2 + $0x60] sm:$0xff]
          %v2500 = vld [vmem:[#allocation2 + $0x68] sm:$0xff]
          %v2501 = vld [vmem:[#allocation2 + $0x70] sm:$0xff]
          %v2502 = vld [vmem:[#allocation2 + $0x78] sm:$0xff]
          %v2503 = vld [vmem:[#allocation2 + $0x80] sm:$0xff]
          %v2504 = vld [vmem:[#allocation2 + $0x88] sm:$0xff]
          %v2505 = vld [vmem:[#allocation2 + $0x90] sm:$0xff]
          %v2506 = vld [vmem:[#allocation2 + $0x98] sm:$0xff]
          %v2507 = vld [vmem:[#allocation2 + $0xa0] sm:$0xff]
          %v2508 = vld [vmem:[#allocation2 + $0xa8] sm:$0xff]
          %v2509 = vld [vmem:[#allocation2 + $0xb0] sm:$0xff]
          %v2510 = vld [vmem:[#allocation2 + $0xb8] sm:$0xff]
          %v2511 = vld [vmem:[#allocation2 + $0xc0] sm:$0xff]
          %v2512 = vld [vmem:[#allocation2 + $0xc8] sm:$0xff]
          %v2513 = vld [vmem:[#allocation2 + $0xd0] sm:$0xff]
          %v2514 = vld [vmem:[#allocation2 + $0xd8] sm:$0xff]
          %v2515 = vld [vmem:[#allocation2 + $0xe0] sm:$0xff]
          %v2516 = vld [vmem:[#allocation2 + $0xe8] sm:$0xff]
          %v2517 = vld [vmem:[#allocation2 + $0xf0] sm:$0xff]
          %v2518 = vld [vmem:[#allocation2 + $0xf8] sm:$0xff]
          %v2519 = vld [vmem:[#allocation2 + $0x100] sm:$0xff]
          %v2520 = vld [vmem:[#allocation2 + $0x108] sm:$0xff]
          %v2521 = vld [vmem:[#allocation2 + $0x110] sm:$0xff]
          %v2522 = vld [vmem:[#allocation2 + $0x118] sm:$0xff]
          %v2523 = vld [vmem:[#allocation2 + $0x120] sm:$0xff]
          %v2524 = vld [vmem:[#allocation2 + $0x128] sm:$0xff]
          %v2525 = vld [vmem:[#allocation2 + $0x130] sm:$0xff]
          %v2526 = vld [vmem:[#allocation2 + $0x138] sm:$0xff]
          %v2527 = vld [vmem:[#allocation2 + $0x140] sm:$0xff]
          %v2528 = vld [vmem:[#allocation2 + $0x148] sm:$0xff]
          %v2529 = vld [vmem:[#allocation2 + $0x150] sm:$0xff]
          %v2530 = vld [vmem:[#allocation2 + $0x158] sm:$0xff]
          %v2531 = vld [vmem:[#allocation2 + $0x160] sm:$0xff]
          %v2532 = vld [vmem:[#allocation2 + $0x168] sm:$0xff]
          %v2533 = vld [vmem:[#allocation2 + $0x170] sm:$0xff]
          %v2534 = vld [vmem:[#allocation2 + $0x178] sm:$0xff]
          %v2535 = vld [vmem:[#allocation2 + $0x180] sm:$0xff]
          %v2536 = vld [vmem:[#allocation2 + $0x188] sm:$0xff]
          %v2537 = vld [vmem:[#allocation2 + $0x190] sm:$0xff]
          %v2538 = vld [vmem:[#allocation2 + $0x198] sm:$0xff]
          %v2539 = vld [vmem:[#allocation2 + $0x1a0] sm:$0xff]
          %v2540 = vld [vmem:[#allocation2 + $0x1a8] sm:$0xff]
          %v2541 = vld [vmem:[#allocation2 + $0x1b0] sm:$0xff]
          %v2542 = vld [vmem:[#allocation2 + $0x1b8] sm:$0xff]
          %v2543 = vld [vmem:[#allocation2 + $0x1c0] sm:$0xff]
          %v2544 = vld [vmem:[#allocation2 + $0x1c8] sm:$0xff]
          %v2545 = vld [vmem:[#allocation2 + $0x1d0] sm:$0xff]
          %v2546 = vld [vmem:[#allocation2 + $0x1d8] sm:$0xff]
          %v2547 = vld [vmem:[#allocation2 + $0x1e0] sm:$0xff]
          %v2548 = vld [vmem:[#allocation2 + $0x1e8] sm:$0xff]
          %v2549 = vld [vmem:[#allocation2 + $0x1f0] sm:$0xff]
          %v2550 = vld [vmem:[#allocation2 + $0x1f8] sm:$0xff]
          %v2551 = vld [vmem:[%s3] sm:$0x1]
          %v2553 = vperm.slane %v2551, 0
          %v2555 = vadd.f32 %v2487, %v2553
          %v2556 = vadd.f32 %v2488, %v2553
          %v2557 = vadd.f32 %v2489, %v2553
          %v2558 = vadd.f32 %v2490, %v2553
          %v2559 = vadd.f32 %v2491, %v2553
          %v2560 = vadd.f32 %v2492, %v2553
          %v2561 = vadd.f32 %v2493, %v2553
          %v2562 = vadd.f32 %v2494, %v2553
          %v2563 = vadd.f32 %v2495, %v2553
          %v2564 = vadd.f32 %v2496, %v2553
          %v2565 = vadd.f32 %v2497, %v2553
          %v2566 = vadd.f32 %v2498, %v2553
          %v2567 = vadd.f32 %v2499, %v2553
          %v2568 = vadd.f32 %v2500, %v2553
          %v2569 = vadd.f32 %v2501, %v2553
          %v2570 = vadd.f32 %v2502, %v2553
          %v2571 = vadd.f32 %v2503, %v2553
          %v2572 = vadd.f32 %v2504, %v2553
          %v2573 = vadd.f32 %v2505, %v2553
          %v2574 = vadd.f32 %v2506, %v2553
          %v2575 = vadd.f32 %v2507, %v2553
          %v2576 = vadd.f32 %v2508, %v2553
          %v2577 = vadd.f32 %v2509, %v2553
          %v2578 = vadd.f32 %v2510, %v2553
          %v2579 = vadd.f32 %v2511, %v2553
          %v2580 = vadd.f32 %v2512, %v2553
          %v2581 = vadd.f32 %v2513, %v2553
          %v2582 = vadd.f32 %v2514, %v2553
          %v2583 = vadd.f32 %v2515, %v2553
          %v2584 = vadd.f32 %v2516, %v2553
          %v2585 = vadd.f32 %v2517, %v2553
          %v2586 = vadd.f32 %v2518, %v2553
          %v2587 = vadd.f32 %v2519, %v2553
          %v2588 = vadd.f32 %v2520, %v2553
          %v2589 = vadd.f32 %v2521, %v2553
          %v2590 = vadd.f32 %v2522, %v2553
          %v2591 = vadd.f32 %v2523, %v2553
          %v2592 = vadd.f32 %v2524, %v2553
          %v2593 = vadd.f32 %v2525, %v2553
          %v2594 = vadd.f32 %v2526, %v2553
          %v2595 = vadd.f32 %v2527, %v2553
          %v2596 = vadd.f32 %v2528, %v2553
          %v2597 = vadd.f32 %v2529, %v2553
          %v2598 = vadd.f32 %v2530, %v2553
          %v2599 = vadd.f32 %v2531, %v2553
          %v2600 = vadd.f32 %v2532, %v2553
          %v2601 = vadd.f32 %v2533, %v2553
          %v2602 = vadd.f32 %v2534, %v2553
          %v2603 = vadd.f32 %v2535, %v2553
          %v2604 = vadd.f32 %v2536, %v2553
          %v2605 = vadd.f32 %v2537, %v2553
          %v2606 = vadd.f32 %v2538, %v2553
          %v2607 = vadd.f32 %v2539, %v2553
          %v2608 = vadd.f32 %v2540, %v2553
          %v2609 = vadd.f32 %v2541, %v2553
          %v2610 = vadd.f32 %v2542, %v2553
          %v2611 = vadd.f32 %v2543, %v2553
          %v2612 = vadd.f32 %v2544, %v2553
          %v2613 = vadd.f32 %v2545, %v2553
          %v2614 = vadd.f32 %v2546, %v2553
          %v2615 = vadd.f32 %v2547, %v2553
          %v2616 = vadd.f32 %v2548, %v2553
          %v2617 = vadd.f32 %v2549, %v2553
          %v2618 = vadd.f32 %v2550, %v2553
          %2619 = vst [vmem:[%s504] sm:$0xff] %v2555
          %2620 = vst [vmem:[%s504 + $0x8] sm:$0xff] %v2556
          %2621 = vst [vmem:[%s504 + $0x10] sm:$0xff] %v2557
          %2622 = vst [vmem:[%s504 + $0x18] sm:$0xff] %v2558
          %2623 = vst [vmem:[%s504 + $0x20] sm:$0xff] %v2559
          %2624 = vst [vmem:[%s504 + $0x28] sm:$0xff] %v2560
          %2625 = vst [vmem:[%s504 + $0x30] sm:$0xff] %v2561
          %2626 = vst [vmem:[%s504 + $0x38] sm:$0xff] %v2562
          %2627 = vst [vmem:[%s504 + $0x40] sm:$0xff] %v2563
          %2628 = vst [vmem:[%s504 + $0x48] sm:$0xff] %v2564
          %2629 = vst [vmem:[%s504 + $0x50] sm:$0xff] %v2565
          %2630 = vst [vmem:[%s504 + $0x58] sm:$0xff] %v2566
          %2631 = vst [vmem:[%s504 + $0x60] sm:$0xff] %v2567
          %2632 = vst [vmem:[%s504 + $0x68] sm:$0xff] %v2568
          %2633 = vst [vmem:[%s504 + $0x70] sm:$0xff] %v2569
          %2634 = vst [vmem:[%s504 + $0x78] sm:$0xff] %v2570
          %2635 = vst [vmem:[%s504 + $0x80] sm:$0xff] %v2571
          %2636 = vst [vmem:[%s504 + $0x88] sm:$0xff] %v2572
          %2637 = vst [vmem:[%s504 + $0x90] sm:$0xff] %v2573
          %2638 = vst [vmem:[%s504 + $0x98] sm:$0xff] %v2574
          %2639 = vst [vmem:[%s504 + $0xa0] sm:$0xff] %v2575
          %2640 = vst [vmem:[%s504 + $0xa8] sm:$0xff] %v2576
          %2641 = vst [vmem:[%s504 + $0xb0] sm:$0xff] %v2577
          %2642 = vst [vmem:[%s504 + $0xb8] sm:$0xff] %v2578
          %2643 = vst [vmem:[%s504 + $0xc0] sm:$0xff] %v2579
          %2644 = vst [vmem:[%s504 + $0xc8] sm:$0xff] %v2580
          %2645 = vst [vmem:[%s504 + $0xd0] sm:$0xff] %v2581
          %2646 = vst [vmem:[%s504 + $0xd8] sm:$0xff] %v2582
          %2647 = vst [vmem:[%s504 + $0xe0] sm:$0xff] %v2583
          %2648 = vst [vmem:[%s504 + $0xe8] sm:$0xff] %v2584
          %2649 = vst [vmem:[%s504 + $0xf0] sm:$0xff] %v2585
          %2650 = vst [vmem:[%s504 + $0xf8] sm:$0xff] %v2586
          %2651 = vst [vmem:[%s504 + $0x100] sm:$0xff] %v2587
          %2652 = vst [vmem:[%s504 + $0x108] sm:$0xff] %v2588
          %2653 = vst [vmem:[%s504 + $0x110] sm:$0xff] %v2589
          %2654 = vst [vmem:[%s504 + $0x118] sm:$0xff] %v2590
          %2655 = vst [vmem:[%s504 + $0x120] sm:$0xff] %v2591
          %2656 = vst [vmem:[%s504 + $0x128] sm:$0xff] %v2592
          %2657 = vst [vmem:[%s504 + $0x130] sm:$0xff] %v2593
          %2658 = vst [vmem:[%s504 + $0x138] sm:$0xff] %v2594
          %2659 = vst [vmem:[%s504 + $0x140] sm:$0xff] %v2595
          %2660 = vst [vmem:[%s504 + $0x148] sm:$0xff] %v2596
          %2661 = vst [vmem:[%s504 + $0x150] sm:$0xff] %v2597
          %2662 = vst [vmem:[%s504 + $0x158] sm:$0xff] %v2598
          %2663 = vst [vmem:[%s504 + $0x160] sm:$0xff] %v2599
          %2664 = vst [vmem:[%s504 + $0x168] sm:$0xff] %v2600
          %2665 = vst [vmem:[%s504 + $0x170] sm:$0xff] %v2601
          %2666 = vst [vmem:[%s504 + $0x178] sm:$0xff] %v2602
          %2667 = vst [vmem:[%s504 + $0x180] sm:$0xff] %v2603
          %2668 = vst [vmem:[%s504 + $0x188] sm:$0xff] %v2604
          %2669 = vst [vmem:[%s504 + $0x190] sm:$0xff] %v2605
          %2670 = vst [vmem:[%s504 + $0x198] sm:$0xff] %v2606
          %2671 = vst [vmem:[%s504 + $0x1a0] sm:$0xff] %v2607
          %2672 = vst [vmem:[%s504 + $0x1a8] sm:$0xff] %v2608
          %2673 = vst [vmem:[%s504 + $0x1b0] sm:$0xff] %v2609
          %2674 = vst [vmem:[%s504 + $0x1b8] sm:$0xff] %v2610
          %2675 = vst [vmem:[%s504 + $0x1c0] sm:$0xff] %v2611
          %2676 = vst [vmem:[%s504 + $0x1c8] sm:$0xff] %v2612
          %2677 = vst [vmem:[%s504 + $0x1d0] sm:$0xff] %v2613
          %2678 = vst [vmem:[%s504 + $0x1d8] sm:$0xff] %v2614
          %2679 = vst [vmem:[%s504 + $0x1e0] sm:$0xff] %v2615
          %2680 = vst [vmem:[%s504 + $0x1e8] sm:$0xff] %v2616
          %2681 = vst [vmem:[%s504 + $0x1f0] sm:$0xff] %v2617
          %2682 = vst [vmem:[%s504 + $0x1f8] sm:$0xff] %v2618
        $region67: #{gcn_forward.11} parent=50 // pred_fallthru
          _
        %s2683 = smul.u32 64, %s27
        %p2684 = scmp.lt.s32.totalorder %s2683, 191
        %s2685 = scalar_select %p2684, %s2683, 191
        %s2686 = smul.addr %s2685, 8
        %s2687 = scalar_lea.vmem %s4, %s2686
        // Predicated region
        $region68: #{gcn_forward.11} parent=50 // pred_check
          %p2688 = pneg %p139
        $region69: #{gcn_forward.11} parent=50 // pred_check_branch
          %2690 = sbr.rel (%p2688) target = $region71
        $region70: #{gcn_forward.11} parent=50 // pred_region
          %s2691 = smul.u32 64, %s27
        $region71: #{gcn_forward.11} parent=50 // pred_fallthru
          _
      $region51: #{gcn_forward.11} parent=5 // pred_fallthru
        _
      %p2692 = scmp.le.s32.totalorder 2, %s18
      // Predicated region
      $region72: #{gcn_forward.11} parent=5 // pred_check
        %p2693 = pneg %p2692
      $region73: #{gcn_forward.11} parent=5 // pred_check_branch
        %2695 = sbr.rel (%p2693) target = $region75
      $region74: #{gcn_forward.11} parent=5 // pred_region
        %s2696 = ssub.s32 %s18, 2
        // Predicated region
        $region76: #{gcn_forward.11} parent=74 // pred_check
          %p2697 = pneg %p145
        $region77: #{gcn_forward.11} parent=74 // pred_check_branch
          %2699 = sbr.rel (%p2697) target = $region79
        $region78: #{gcn_forward.11} parent=74 // pred_region
          %s2700 = smul.u32 64, %s29
          %p2701 = scmp.lt.s32.totalorder %s2700, 191
          %s2702 = scalar_select %p2701, %s2700, 191
          %s2703 = smul.addr %s2702, 8
          %s2704 = scalar_lea.vmem %s4, %s2703
        $region79: #{gcn_forward.11} parent=74 // pred_fallthru
          _
      $region75: #{gcn_forward.11} parent=5 // pred_fallthru
        _
    $region6: #{gcn_forward.11} parent=1 // loop_footer
      %s22 = sadd.s32 1, %s18
    $region7: #{gcn_forward.11} parent=1 // loop_footer_branch
      %17 = sbr.rel target = $region3
    $region8: #{gcn_forward.11} parent=1 // loop_exit
      _

// kernel: gcn_forward.7
$region0: #{gcn_forward.7}
  #allocation0 [shape = 'u32[]', space=smem, size = 0x4, offset = 0x4, fixed_abs, tag = 'smem constant byte address 0x4 - core index']
  #allocation1 [shape = 'u32[72,128]{1,0:T(1,128)}', space=vmem, size = 0x9000, scoped, tag = 'internal scratch']
  #allocation2 [shape = 'f32[512,128]{1,0:T(8,128)}', space=vmem, size = 0x40000, scoped, tag = 'scratch operand']
  #allocation3 [shape = 's32[1]{0}', space=sflag, size = 0x4, scoped, tag = 'scoped memory for gcn_forward.7']
  #allocation4 [shape = 'u8[2048]{0}', space=smem, size = 0x800, scoped, tag = 'prefetched SMEM operand 0']
  %s0 = inlined_call_operand.hbm [shape: s32[3,3], index: 0, kind: input, shape index: {}]
  %s1 = inlined_call_operand.hbm [shape: bf16[1536,1536], index: 1, kind: input, shape index: {}]
  %s2 = inlined_call_operand.vmem [shape: bf16[1536,128], index: 2, kind: input, shape index: {}]
  %s3 = inlined_call_operand.vmem [shape: f32[1,128], index: 3, kind: input, shape index: {}]
  %s4 = inlined_call_operand.vmem [shape: bf16[1536,128], index: 4, kind: output, shape index: {}]
  %s5 = sld [smem:[#allocation0]]
  $region61: #{gcn_forward.7} parent=0
    _
  %s7 = ssub.s32 1, %s5
  %s8 = scalar_select 0, %s7, %s5
  %s10 = sshll.u32 %s0, 4
  %s11 = int_to_ptr.hbm [resolvable:$true] %s10
  %13 = dma.hbm_to_smem %s11, 64, [#allocation4], [#allocation3]
  %15 = dma.done [#allocation3], 64
  %16 = sfence
  $region1: #{gcn_forward.7} parent=0
    #allocation5 [shape = 'u8[1048576]{0}', space=vmem, size = 0x100000, scoped, tag = 'input window, operand 1']
    #allocation6 [shape = 's32[2]{0}', space=sflag, size = 0x8, scoped, tag = 'scoped memory for gcn_forward.7']
    %17 = vsyncpa [#allocation6], 0
    %s18 = scalar_lea.sflag [#allocation6], 1
    %19 = vsyncpa %s18, 0
    loop: start=0, step=1, limit=11
    $region2: #{gcn_forward.7} parent=1 // loop_pre_header
      _
    $region3: #{gcn_forward.7} parent=1 // loop_header
      %s21 = sphi 0, %s25
      %p22 = scmp.ge.s32.totalorder %s21, 11
      %s28 = sphi 0, %s40
      %s29 = sphi 0, %s36
      %s30 = sphi 0, %s28
      %s31 = sphi 0, %s29
      %s32 = sphi 0, %s30
      %s33 = sphi 0, %s31
      %s61 = sphi 0, %s63
      %s64 = sphi 0, %s61
      %s65 = sphi 0, %s64
      %s81 = sphi 0, %s65
      %s85 = sphi 0, %s85
      %s87 = sphi 0, %s85
      %s88 = sphi 0, %s87
      %s102 = sphi 0, %s88
      %s106 = sphi 0, %s106
      %s108 = sphi 0, %s106
      %s109 = sphi 0, %s108
      %s123 = sphi 0, %s109
      %s129 = sphi 0, %s131
      %s132 = sphi 0, %s129
      %s133 = sphi 0, %s132
      %s149 = sphi 0, %s133
    $region4: #{gcn_forward.7} parent=1 // loop_header_branch
      %24 = sbr.rel (%p22) target = $region8
    $region5: #{gcn_forward.7} parent=1 // loop_body
      %s26 = ssub.s32 %s21, 1
      %s27 = ssub.s32 %s21, 2
      %s34 = sadd.s32 1, %s29
      %p35 = scmp.ge.s32.totalorder %s34, 3
      %s36 = scalar_select %p35, 0, %s34
      %s37 = sadd.s32 1, %s28
      %s38 = scalar_select %p35, %s37, %s28
      %p39 = scmp.ge.s32.totalorder %s38, 3
      %s40 = scalar_select %p39, 0, %s38
      %s41 = sshra.s32 %s29, 7
      %s42 = sand.u32 %s29, 127
      %s43 = sadd.s32 %s41, %s28
      %s44 = smul.u32 %s43, 128
      %s45 = sshra.s32 %s29, 7
      %s46 = sand.u32 %s29, 127
      %s47 = sadd.s32 %s44, %s46
      %s48 = sld [smem:[#allocation4 + %s47]]
      %s49 = sshra.s32 %s36, 7
      %s50 = sand.u32 %s36, 127
      %s51 = sadd.s32 %s49, %s40
      %s52 = smul.u32 %s51, 128
      %s53 = sshra.s32 %s36, 7
      %s54 = sand.u32 %s36, 127
      %s55 = sadd.s32 %s52, %s54
      %s56 = sld [smem:[#allocation4 + %s55]]
      %s57 = ssub.s32 %s28, %s40
      %s58 = ssub.s32 %s48, %s56
      %s59 = sor.u32 %s57, %s58
      %p60 = scmp.eq.s32.totalorder %s59, 0
      %s62 = sadd.s32 %s61, 1
      %s63 = scalar_select %p60, %s61, %s62
      %p66 = pneg %p60
      %p67 = scmp.eq.s32.totalorder %s21, 8
      %p68 = por %p66, %p67
      %p69 = scmp.ne.s32.totalorder %s61, %s64
      %p70 = scmp.eq.s32.totalorder %s21, 0
      %p71 = por %p69, %p70
      %p72 = scmp.ne.s32.totalorder %s61, %s64
      %p73 = scmp.eq.s32.totalorder %s26, 8
      %p74 = por %p72, %p73
      %p75 = scmp.ne.s32.totalorder %s64, %s65
      %p76 = scmp.eq.s32.totalorder %s26, 0
      %p77 = por %p75, %p76
      %p78 = scmp.ne.s32.totalorder %s64, %s65
      %p79 = scmp.eq.s32.totalorder %s27, 8
      %p80 = por %p78, %p79
      %p82 = scmp.ne.s32.totalorder %s65, %s81
      %p83 = scmp.eq.s32.totalorder %s27, 0
      %p84 = por %p82, %p83
      %s86 = sadd.s32 %s85, 1
      %p89 = scmp.eq.s32.totalorder %s21, 8
      %p90 = scmp.ne.s32.totalorder %s85, %s87
      %p91 = scmp.eq.s32.totalorder %s21, 0
      %p92 = por %p90, %p91
      %p93 = scmp.ne.s32.totalorder %s85, %s87
      %p94 = scmp.eq.s32.totalorder %s26, 8
      %p95 = por %p93, %p94
      %p96 = scmp.ne.s32.totalorder %s87, %s88
      %p97 = scmp.eq.s32.totalorder %s26, 0
      %p98 = por %p96, %p97
      %p99 = scmp.ne.s32.totalorder %s87, %s88
      %p100 = scmp.eq.s32.totalorder %s27, 8
      %p101 = por %p99, %p100
      %p103 = scmp.ne.s32.totalorder %s88, %s102
      %p104 = scmp.eq.s32.totalorder %s27, 0
      %p105 = por %p103, %p104
      %s107 = sadd.s32 %s106, 1
      %p110 = scmp.eq.s32.totalorder %s21, 8
      %p111 = scmp.ne.s32.totalorder %s106, %s108
      %p112 = scmp.eq.s32.totalorder %s21, 0
      %p113 = por %p111, %p112
      %p114 = scmp.ne.s32.totalorder %s106, %s108
      %p115 = scmp.eq.s32.totalorder %s26, 8
      %p116 = por %p114, %p115
      %p117 = scmp.ne.s32.totalorder %s108, %s109
      %p118 = scmp.eq.s32.totalorder %s26, 0
      %p119 = por %p117, %p118
      %p120 = scmp.ne.s32.totalorder %s108, %s109
      %p121 = scmp.eq.s32.totalorder %s27, 8
      %p122 = por %p120, %p121
      %p124 = scmp.ne.s32.totalorder %s109, %s123
      %p125 = scmp.eq.s32.totalorder %s27, 0
      %p126 = por %p124, %p125
      %s127 = ssub.s32 %s28, %s40
      %p128 = scmp.eq.s32.totalorder %s127, 0
      %s130 = sadd.s32 %s129, 1
      %s131 = scalar_select %p128, %s129, %s130
      %p134 = pneg %p128
      %p135 = scmp.eq.s32.totalorder %s21, 8
      %p136 = por %p134, %p135
      %p137 = scmp.ne.s32.totalorder %s129, %s132
      %p138 = scmp.eq.s32.totalorder %s21, 0
      %p139 = por %p137, %p138
      %p140 = scmp.ne.s32.totalorder %s129, %s132
      %p141 = scmp.eq.s32.totalorder %s26, 8
      %p142 = por %p140, %p141
      %p143 = scmp.ne.s32.totalorder %s132, %s133
      %p144 = scmp.eq.s32.totalorder %s26, 0
      %p145 = por %p143, %p144
      %p146 = scmp.ne.s32.totalorder %s132, %s133
      %p147 = scmp.eq.s32.totalorder %s27, 8
      %p148 = por %p146, %p147
      %p150 = scmp.ne.s32.totalorder %s133, %s149
      %p151 = scmp.eq.s32.totalorder %s27, 0
      %p152 = por %p150, %p151
      %p153 = scmp.le.s32.totalorder 1, %s21
      %p154 = scmp.lt.s32.totalorder %s21, 10
      %p155 = pnand %p153, %p154
      %p156 = pneg %p155
      // Predicated region
      $region9: #{gcn_forward.7} parent=5 // pred_check
        _
      $region10: #{gcn_forward.7} parent=5 // pred_check_branch
        %158 = sbr.rel (%p155) target = $region12
      $region11: #{gcn_forward.7} parent=5 // pred_region
        %s159 = ssub.s32 %s21, 1
        // Predicated region
        $region13: #{gcn_forward.7} parent=11 // pred_check
          %p160 = pneg %p98
        $region14: #{gcn_forward.7} parent=11 // pred_check_branch
          %162 = sbr.rel (%p160) target = $region16
        $region15: #{gcn_forward.7} parent=11 // pred_region
          _
        $region16: #{gcn_forward.7} parent=11 // pred_fallthru
          _
        // Predicated region
        $region17: #{gcn_forward.7} parent=11 // pred_check
          %p163 = pneg %p119
        $region18: #{gcn_forward.7} parent=11 // pred_check_branch
          %165 = sbr.rel (%p163) target = $region20
        $region19: #{gcn_forward.7} parent=11 // pred_region
          _
        $region20: #{gcn_forward.7} parent=11 // pred_fallthru
          _
      $region12: #{gcn_forward.7} parent=5 // pred_fallthru
        _
      %p166 = scmp.lt.s32.totalorder %s21, 9
      // Predicated region
      $region21: #{gcn_forward.7} parent=5 // pred_check
        %p167 = pneg %p166
      $region22: #{gcn_forward.7} parent=5 // pred_check_branch
        %169 = sbr.rel (%p167) target = $region24
      $region23: #{gcn_forward.7} parent=5 // pred_region
        // Predicated region
        $region25: #{gcn_forward.7} parent=23 // pred_check
          %p170 = pneg %p71
        $region26: #{gcn_forward.7} parent=23 // pred_check_branch
          %172 = sbr.rel (%p170) target = $region28
        $region27: #{gcn_forward.7} parent=23 // pred_region
          %s173 = sand.u32 %s61, 1
          %s174 = scalar_lea.sflag [#allocation6], %s173
          %s175 = sand.u32 %s61, 1
          %s176 = smul.addr %s175, 1024
          %s177 = scalar_lea.vmem [#allocation5], %s176
          %s178 = sshra.s32 %s29, 7
          %s179 = sand.u32 %s29, 127
          %s180 = sadd.s32 %s178, %s28
          %s181 = smul.u32 %s180, 128
          %s182 = sshra.s32 %s29, 7
          %s183 = sand.u32 %s29, 127
          %s184 = sadd.s32 %s181, %s183
          %s185 = sld [smem:[#allocation4 + %s184]]
          %s186 = smul.u32 64, %s28
          %s187 = smul.u32 4, %s185
          %189 = vsyncadd %s174, 0
          %s190 = smul.addr %s186, 12
          %s191 = sadd.s32 %s187, %s190
          %s192 = smul.addr %s191, 4
          %s193 = scalar_lea.hbm %s1, %s192
          %s194 = sshll.u32 %s193, 4
          %s195 = int_to_ptr.hbm [resolvable:$true] %s194
          %s196 = sshll.u32 %s177, 4
          %s197 = int_to_ptr.vmem [resolvable:$true] %s196
          %202 = dma.hbm_to_vmem [thread:$0]  %s195, 16384, %s197, %s174, 768, 256, 16
        $region28: #{gcn_forward.7} parent=23 // pred_fallthru
          _
      $region24: #{gcn_forward.7} parent=5 // pred_fallthru
        _
      %p203 = scmp.le.s32.totalorder 1, %s21
      %p204 = scmp.lt.s32.totalorder %s21, 10
      %p205 = pnand %p203, %p204
      %p206 = pneg %p205
      // Predicated region
      $region29: #{gcn_forward.7} parent=5 // pred_check
        _
      $region30: #{gcn_forward.7} parent=5 // pred_check_branch
        %208 = sbr.rel (%p205) target = $region32
      $region31: #{gcn_forward.7} parent=5 // pred_region
        %s209 = ssub.s32 %s21, 1
        %s210 = sand.u32 %s64, 1
        %s211 = scalar_lea.sflag [#allocation6], %s210
        %s212 = sand.u32 %s64, 1
        %s213 = smul.addr %s212, 1024
        %s214 = scalar_lea.vmem [#allocation5], %s213
        // Predicated region
        $region33: #{gcn_forward.7} parent=31 // pred_check
          %p215 = pneg %p77
        $region34: #{gcn_forward.7} parent=31 // pred_check_branch
          %217 = sbr.rel (%p215) target = $region36
        $region35: #{gcn_forward.7} parent=31 // pred_region
          %219 = dma.done %s211, 16384
        $region36: #{gcn_forward.7} parent=31 // pred_fallthru
          _
        %s220 = sand.u32 %s64, 1
        %s221 = scalar_lea.sflag [#allocation6], %s220
        %s222 = sand.u32 %s64, 1
        %s223 = smul.addr %s222, 1024
        %s224 = scalar_lea.vmem [#allocation5], %s223
        %p225 = pneg %p77
        %p226 = pneg %p74
        %p227 = pneg %p98
        %p228 = pneg %p95
        %p229 = pneg %p119
        %p230 = pneg %p116
        %p231 = pneg %p145
        %p232 = pneg %p142
        %s233 = smul.u32 64, %s30
        %p234 = scmp.lt.s32.totalorder %s233, 191
        %s235 = scalar_select %p234, %s233, 191
        %s236 = smul.addr %s235, 4
        %s237 = scalar_lea.vmem %s4, %s236
        %s238 = sshra.s32 %s31, 7
        %s239 = sand.u32 %s31, 127
        %s240 = sadd.s32 %s238, %s30
        %s241 = smul.u32 %s240, 128
        %s242 = sshra.s32 %s31, 7
        %s243 = sand.u32 %s31, 127
        %s244 = sadd.s32 %s241, %s243
        %s245 = sld [smem:[#allocation4 + %s244]]
        %s246 = smul.u32 64, %s30
        %s247 = smul.u32 4, %s245
        %s248 = smul.u32 64, %s30
        %p249 = scmp.lt.s32.totalorder %s248, 191
        %s250 = scalar_select %p249, %s248, 191
        %s251 = smul.addr %s250, 4
        %s252 = scalar_lea.vmem %s4, %s251
        %s253 = smul.u32 64, %s30
        %p254 = scmp.eq.s32.totalorder %s31, 0
        // Predicated region
        $region37: #{gcn_forward.7} parent=31 // pred_check
          %p255 = pneg %p254
        $region38: #{gcn_forward.7} parent=31 // pred_check_branch
          %257 = sbr.rel (%p255) target = $region40
        $region39: #{gcn_forward.7} parent=31 // pred_region
          %258 = vst [vmem:[#allocation2] sm:$0xff] 0.0
          %259 = vst [vmem:[#allocation2 + $0x8] sm:$0xff] 0.0
          %260 = vst [vmem:[#allocation2 + $0x10] sm:$0xff] 0.0
          %261 = vst [vmem:[#allocation2 + $0x18] sm:$0xff] 0.0
          %262 = vst [vmem:[#allocation2 + $0x20] sm:$0xff] 0.0
          %263 = vst [vmem:[#allocation2 + $0x28] sm:$0xff] 0.0
          %264 = vst [vmem:[#allocation2 + $0x30] sm:$0xff] 0.0
          %265 = vst [vmem:[#allocation2 + $0x38] sm:$0xff] 0.0
          %266 = vst [vmem:[#allocation2 + $0x40] sm:$0xff] 0.0
          %267 = vst [vmem:[#allocation2 + $0x48] sm:$0xff] 0.0
          %268 = vst [vmem:[#allocation2 + $0x50] sm:$0xff] 0.0
          %269 = vst [vmem:[#allocation2 + $0x58] sm:$0xff] 0.0
          %270 = vst [vmem:[#allocation2 + $0x60] sm:$0xff] 0.0
          %271 = vst [vmem:[#allocation2 + $0x68] sm:$0xff] 0.0
          %272 = vst [vmem:[#allocation2 + $0x70] sm:$0xff] 0.0
          %273 = vst [vmem:[#allocation2 + $0x78] sm:$0xff] 0.0
          %274 = vst [vmem:[#allocation2 + $0x80] sm:$0xff] 0.0
          %275 = vst [vmem:[#allocation2 + $0x88] sm:$0xff] 0.0
          %276 = vst [vmem:[#allocation2 + $0x90] sm:$0xff] 0.0
          %277 = vst [vmem:[#allocation2 + $0x98] sm:$0xff] 0.0
          %278 = vst [vmem:[#allocation2 + $0xa0] sm:$0xff] 0.0
          %279 = vst [vmem:[#allocation2 + $0xa8] sm:$0xff] 0.0
          %280 = vst [vmem:[#allocation2 + $0xb0] sm:$0xff] 0.0
          %281 = vst [vmem:[#allocation2 + $0xb8] sm:$0xff] 0.0
          %282 = vst [vmem:[#allocation2 + $0xc0] sm:$0xff] 0.0
          %283 = vst [vmem:[#allocation2 + $0xc8] sm:$0xff] 0.0
          %284 = vst [vmem:[#allocation2 + $0xd0] sm:$0xff] 0.0
          %285 = vst [vmem:[#allocation2 + $0xd8] sm:$0xff] 0.0
          %286 = vst [vmem:[#allocation2 + $0xe0] sm:$0xff] 0.0
          %287 = vst [vmem:[#allocation2 + $0xe8] sm:$0xff] 0.0
          %288 = vst [vmem:[#allocation2 + $0xf0] sm:$0xff] 0.0
          %289 = vst [vmem:[#allocation2 + $0xf8] sm:$0xff] 0.0
          %290 = vst [vmem:[#allocation2 + $0x100] sm:$0xff] 0.0
          %291 = vst [vmem:[#allocation2 + $0x108] sm:$0xff] 0.0
          %292 = vst [vmem:[#allocation2 + $0x110] sm:$0xff] 0.0
          %293 = vst [vmem:[#allocation2 + $0x118] sm:$0xff] 0.0
          %294 = vst [vmem:[#allocation2 + $0x120] sm:$0xff] 0.0
          %295 = vst [vmem:[#allocation2 + $0x128] sm:$0xff] 0.0
          %296 = vst [vmem:[#allocation2 + $0x130] sm:$0xff] 0.0
          %297 = vst [vmem:[#allocation2 + $0x138] sm:$0xff] 0.0
          %298 = vst [vmem:[#allocation2 + $0x140] sm:$0xff] 0.0
          %299 = vst [vmem:[#allocation2 + $0x148] sm:$0xff] 0.0
          %300 = vst [vmem:[#allocation2 + $0x150] sm:$0xff] 0.0
          %301 = vst [vmem:[#allocation2 + $0x158] sm:$0xff] 0.0
          %302 = vst [vmem:[#allocation2 + $0x160] sm:$0xff] 0.0
          %303 = vst [vmem:[#allocation2 + $0x168] sm:$0xff] 0.0
          %304 = vst [vmem:[#allocation2 + $0x170] sm:$0xff] 0.0
          %305 = vst [vmem:[#allocation2 + $0x178] sm:$0xff] 0.0
          %306 = vst [vmem:[#allocation2 + $0x180] sm:$0xff] 0.0
          %307 = vst [vmem:[#allocation2 + $0x188] sm:$0xff] 0.0
          %308 = vst [vmem:[#allocation2 + $0x190] sm:$0xff] 0.0
          %309 = vst [vmem:[#allocation2 + $0x198] sm:$0xff] 0.0
          %310 = vst [vmem:[#allocation2 + $0x1a0] sm:$0xff] 0.0
          %311 = vst [vmem:[#allocation2 + $0x1a8] sm:$0xff] 0.0
          %312 = vst [vmem:[#allocation2 + $0x1b0] sm:$0xff] 0.0
          %313 = vst [vmem:[#allocation2 + $0x1b8] sm:$0xff] 0.0
          %314 = vst [vmem:[#allocation2 + $0x1c0] sm:$0xff] 0.0
          %315 = vst [vmem:[#allocation2 + $0x1c8] sm:$0xff] 0.0
          %316 = vst [vmem:[#allocation2 + $0x1d0] sm:$0xff] 0.0
          %317 = vst [vmem:[#allocation2 + $0x1d8] sm:$0xff] 0.0
          %318 = vst [vmem:[#allocation2 + $0x1e0] sm:$0xff] 0.0
          %319 = vst [vmem:[#allocation2 + $0x1e8] sm:$0xff] 0.0
          %320 = vst [vmem:[#allocation2 + $0x1f0] sm:$0xff] 0.0
          %321 = vst [vmem:[#allocation2 + $0x1f8] sm:$0xff] 0.0
        $region40: #{gcn_forward.7} parent=31 // pred_fallthru
          _
        %s322 = sshra.s32 %s31, 7
        %s323 = sand.u32 %s31, 127
        %s324 = sadd.s32 %s322, %s30
        %s325 = smul.u32 %s324, 128
        %s326 = sshra.s32 %s31, 7
        %s327 = sand.u32 %s31, 127
        %s328 = sadd.s32 %s325, %s327
        %s329 = sld [smem:[#allocation4 + %s328]]
        %p330 = scmp.eq.s32.totalorder %s329, %s31
        // Predicated region
        $region41: #{gcn_forward.7} parent=31 // pred_check
          %p331 = pneg %p330
        $region42: #{gcn_forward.7} parent=31 // pred_check_branch
          %333 = sbr.rel (%p331) target = $region44
        $region43: #{gcn_forward.7} parent=31 // pred_region
          %s334 = smul.u32 %s31, 512
          %s335 = sshra.s32 %s334, 3
          %s336 = sand.u32 %s334, 7
          %s337 = smul.addr %s335, 4
          %s338 = scalar_lea.vmem %s2, %s337
          %v339 = vld [vmem:[%s338] sm:$0xf]
          %v340 = vld [vmem:[%s338 + $0x4] sm:$0xf]
          %v341 = vld [vmem:[%s338 + $0x8] sm:$0xf]
          %v342 = vld [vmem:[%s338 + $0xc] sm:$0xf]
          %v343 = vld [vmem:[%s338 + $0x10] sm:$0xf]
          %v344 = vld [vmem:[%s338 + $0x14] sm:$0xf]
          %v345 = vld [vmem:[%s338 + $0x18] sm:$0xf]
          %v346 = vld [vmem:[%s338 + $0x1c] sm:$0xf]
          %v347 = vld [vmem:[%s338 + $0x20] sm:$0xf]
          %v348 = vld [vmem:[%s338 + $0x24] sm:$0xf]
          %v349 = vld [vmem:[%s338 + $0x28] sm:$0xf]
          %v350 = vld [vmem:[%s338 + $0x2c] sm:$0xf]
          %v351 = vld [vmem:[%s338 + $0x30] sm:$0xf]
          %v352 = vld [vmem:[%s338 + $0x34] sm:$0xf]
          %v353 = vld [vmem:[%s338 + $0x38] sm:$0xf]
          %v354 = vld [vmem:[%s338 + $0x3c] sm:$0xf]
          %v355 = vld [vmem:[%s338 + $0x40] sm:$0xf]
          %v356 = vld [vmem:[%s338 + $0x44] sm:$0xf]
          %v357 = vld [vmem:[%s338 + $0x48] sm:$0xf]
          %v358 = vld [vmem:[%s338 + $0x4c] sm:$0xf]
          %v359 = vld [vmem:[%s338 + $0x50] sm:$0xf]
          %v360 = vld [vmem:[%s338 + $0x54] sm:$0xf]
          %v361 = vld [vmem:[%s338 + $0x58] sm:$0xf]
          %v362 = vld [vmem:[%s338 + $0x5c] sm:$0xf]
          %v363 = vld [vmem:[%s338 + $0x60] sm:$0xf]
          %v364 = vld [vmem:[%s338 + $0x64] sm:$0xf]
          %v365 = vld [vmem:[%s338 + $0x68] sm:$0xf]
          %v366 = vld [vmem:[%s338 + $0x6c] sm:$0xf]
          %v367 = vld [vmem:[%s338 + $0x70] sm:$0xf]
          %v368 = vld [vmem:[%s338 + $0x74] sm:$0xf]
          %v369 = vld [vmem:[%s338 + $0x78] sm:$0xf]
          %v370 = vld [vmem:[%s338 + $0x7c] sm:$0xf]
          %v371 = vld [vmem:[%s338 + $0x80] sm:$0xf]
          %v372 = vld [vmem:[%s338 + $0x84] sm:$0xf]
          %v373 = vld [vmem:[%s338 + $0x88] sm:$0xf]
          %v374 = vld [vmem:[%s338 + $0x8c] sm:$0xf]
          %v375 = vld [vmem:[%s338 + $0x90] sm:$0xf]
          %v376 = vld [vmem:[%s338 + $0x94] sm:$0xf]
          %v377 = vld [vmem:[%s338 + $0x98] sm:$0xf]
          %v378 = vld [vmem:[%s338 + $0x9c] sm:$0xf]
          %v379 = vld [vmem:[%s338 + $0xa0] sm:$0xf]
          %v380 = vld [vmem:[%s338 + $0xa4] sm:$0xf]
          %v381 = vld [vmem:[%s338 + $0xa8] sm:$0xf]
          %v382 = vld [vmem:[%s338 + $0xac] sm:$0xf]
          %v383 = vld [vmem:[%s338 + $0xb0] sm:$0xf]
          %v384 = vld [vmem:[%s338 + $0xb4] sm:$0xf]
          %v385 = vld [vmem:[%s338 + $0xb8] sm:$0xf]
          %v386 = vld [vmem:[%s338 + $0xbc] sm:$0xf]
          %v387 = vld [vmem:[%s338 + $0xc0] sm:$0xf]
          %v388 = vld [vmem:[%s338 + $0xc4] sm:$0xf]
          %v389 = vld [vmem:[%s338 + $0xc8] sm:$0xf]
          %v390 = vld [vmem:[%s338 + $0xcc] sm:$0xf]
          %v391 = vld [vmem:[%s338 + $0xd0] sm:$0xf]
          %v392 = vld [vmem:[%s338 + $0xd4] sm:$0xf]
          %v393 = vld [vmem:[%s338 + $0xd8] sm:$0xf]
          %v394 = vld [vmem:[%s338 + $0xdc] sm:$0xf]
          %v395 = vld [vmem:[%s338 + $0xe0] sm:$0xf]
          %v396 = vld [vmem:[%s338 + $0xe4] sm:$0xf]
          %v397 = vld [vmem:[%s338 + $0xe8] sm:$0xf]
          %v398 = vld [vmem:[%s338 + $0xec] sm:$0xf]
          %v399 = vld [vmem:[%s338 + $0xf0] sm:$0xf]
          %v400 = vld [vmem:[%s338 + $0xf4] sm:$0xf]
          %v401 = vld [vmem:[%s338 + $0xf8] sm:$0xf]
          %v402 = vld [vmem:[%s338 + $0xfc] sm:$0xf]
          %v403 = vld [vmem:[#allocation2] sm:$0xff]
          %v404 = vld [vmem:[#allocation2 + $0x8] sm:$0xff]
          %v405 = vld [vmem:[#allocation2 + $0x10] sm:$0xff]
          %v406 = vld [vmem:[#allocation2 + $0x18] sm:$0xff]
          %v407 = vld [vmem:[#allocation2 + $0x20] sm:$0xff]
          %v408 = vld [vmem:[#allocation2 + $0x28] sm:$0xff]
          %v409 = vld [vmem:[#allocation2 + $0x30] sm:$0xff]
          %v410 = vld [vmem:[#allocation2 + $0x38] sm:$0xff]
          %v411 = vld [vmem:[#allocation2 + $0x40] sm:$0xff]
          %v412 = vld [vmem:[#allocation2 + $0x48] sm:$0xff]
          %v413 = vld [vmem:[#allocation2 + $0x50] sm:$0xff]
          %v414 = vld [vmem:[#allocation2 + $0x58] sm:$0xff]
          %v415 = vld [vmem:[#allocation2 + $0x60] sm:$0xff]
          %v416 = vld [vmem:[#allocation2 + $0x68] sm:$0xff]
          %v417 = vld [vmem:[#allocation2 + $0x70] sm:$0xff]
          %v418 = vld [vmem:[#allocation2 + $0x78] sm:$0xff]
          %v419 = vld [vmem:[#allocation2 + $0x80] sm:$0xff]
          %v420 = vld [vmem:[#allocation2 + $0x88] sm:$0xff]
          %v421 = vld [vmem:[#allocation2 + $0x90] sm:$0xff]
          %v422 = vld [vmem:[#allocation2 + $0x98] sm:$0xff]
          %v423 = vld [vmem:[#allocation2 + $0xa0] sm:$0xff]
          %v424 = vld [vmem:[#allocation2 + $0xa8] sm:$0xff]
          %v425 = vld [vmem:[#allocation2 + $0xb0] sm:$0xff]
          %v426 = vld [vmem:[#allocation2 + $0xb8] sm:$0xff]
          %v427 = vld [vmem:[#allocation2 + $0xc0] sm:$0xff]
          %v428 = vld [vmem:[#allocation2 + $0xc8] sm:$0xff]
          %v429 = vld [vmem:[#allocation2 + $0xd0] sm:$0xff]
          %v430 = vld [vmem:[#allocation2 + $0xd8] sm:$0xff]
          %v431 = vld [vmem:[#allocation2 + $0xe0] sm:$0xff]
          %v432 = vld [vmem:[#allocation2 + $0xe8] sm:$0xff]
          %v433 = vld [vmem:[#allocation2 + $0xf0] sm:$0xff]
          %v434 = vld [vmem:[#allocation2 + $0xf8] sm:$0xff]
          %v435 = vld [vmem:[#allocation2 + $0x100] sm:$0xff]
          %v436 = vld [vmem:[#allocation2 + $0x108] sm:$0xff]
          %v437 = vld [vmem:[#allocation2 + $0x110] sm:$0xff]
          %v438 = vld [vmem:[#allocation2 + $0x118] sm:$0xff]
          %v439 = vld [vmem:[#allocation2 + $0x120] sm:$0xff]
          %v440 = vld [vmem:[#allocation2 + $0x128] sm:$0xff]
          %v441 = vld [vmem:[#allocation2 + $0x130] sm:$0xff]
          %v442 = vld [vmem:[#allocation2 + $0x138] sm:$0xff]
          %v443 = vld [vmem:[#allocation2 + $0x140] sm:$0xff]
          %v444 = vld [vmem:[#allocation2 + $0x148] sm:$0xff]
          %v445 = vld [vmem:[#allocation2 + $0x150] sm:$0xff]
          %v446 = vld [vmem:[#allocation2 + $0x158] sm:$0xff]
          %v447 = vld [vmem:[#allocation2 + $0x160] sm:$0xff]
          %v448 = vld [vmem:[#allocation2 + $0x168] sm:$0xff]
          %v449 = vld [vmem:[#allocation2 + $0x170] sm:$0xff]
          %v450 = vld [vmem:[#allocation2 + $0x178] sm:$0xff]
          %v451 = vld [vmem:[#allocation2 + $0x180] sm:$0xff]
          %v452 = vld [vmem:[#allocation2 + $0x188] sm:$0xff]
          %v453 = vld [vmem:[#allocation2 + $0x190] sm:$0xff]
          %v454 = vld [vmem:[#allocation2 + $0x198] sm:$0xff]
          %v455 = vld [vmem:[#allocation2 + $0x1a0] sm:$0xff]
          %v456 = vld [vmem:[#allocation2 + $0x1a8] sm:$0xff]
          %v457 = vld [vmem:[#allocation2 + $0x1b0] sm:$0xff]
          %v458 = vld [vmem:[#allocation2 + $0x1b8] sm:$0xff]
          %v459 = vld [vmem:[#allocation2 + $0x1c0] sm:$0xff]
          %v460 = vld [vmem:[#allocation2 + $0x1c8] sm:$0xff]
          %v461 = vld [vmem:[#allocation2 + $0x1d0] sm:$0xff]
          %v462 = vld [vmem:[#allocation2 + $0x1d8] sm:$0xff]
          %v463 = vld [vmem:[#allocation2 + $0x1e0] sm:$0xff]
          %v464 = vld [vmem:[#allocation2 + $0x1e8] sm:$0xff]
          %v465 = vld [vmem:[#allocation2 + $0x1f0] sm:$0xff]
          %v466 = vld [vmem:[#allocation2 + $0x1f8] sm:$0xff]
          %v467 = vld [vmem:[%s214] sm:$0xff]
          %v468 = vld [vmem:[%s214 + $0x8] sm:$0xff]
          %v469 = vld [vmem:[%s214 + $0x10] sm:$0xff]
          %v470 = vld [vmem:[%s214 + $0x18] sm:$0xff]
          %v471 = vld [vmem:[%s214 + $0x20] sm:$0xff]
          %v472 = vld [vmem:[%s214 + $0x28] sm:$0xff]
          %v473 = vld [vmem:[%s214 + $0x30] sm:$0xff]
          %v474 = vld [vmem:[%s214 + $0x38] sm:$0xff]
          %v475 = vld [vmem:[%s214 + $0x40] sm:$0xff]
          %v476 = vld [vmem:[%s214 + $0x48] sm:$0xff]
          %v477 = vld [vmem:[%s214 + $0x50] sm:$0xff]
          %v478 = vld [vmem:[%s214 + $0x58] sm:$0xff]
          %v479 = vld [vmem:[%s214 + $0x60] sm:$0xff]
          %v480 = vld [vmem:[%s214 + $0x68] sm:$0xff]
          %v481 = vld [vmem:[%s214 + $0x70] sm:$0xff]
          %v482 = vld [vmem:[%s214 + $0x78] sm:$0xff]
          %v483 = vld [vmem:[%s214 + $0x80] sm:$0xff]
          %v484 = vld [vmem:[%s214 + $0x88] sm:$0xff]
          %v485 = vld [vmem:[%s214 + $0x90] sm:$0xff]
          %v486 = vld [vmem:[%s214 + $0x98] sm:$0xff]
          %v487 = vld [vmem:[%s214 + $0xa0] sm:$0xff]
          %v488 = vld [vmem:[%s214 + $0xa8] sm:$0xff]
          %v489 = vld [vmem:[%s214 + $0xb0] sm:$0xff]
          %v490 = vld [vmem:[%s214 + $0xb8] sm:$0xff]
          %v491 = vld [vmem:[%s214 + $0xc0] sm:$0xff]
          %v492 = vld [vmem:[%s214 + $0xc8] sm:$0xff]
          %v493 = vld [vmem:[%s214 + $0xd0] sm:$0xff]
          %v494 = vld [vmem:[%s214 + $0xd8] sm:$0xff]
          %v495 = vld [vmem:[%s214 + $0xe0] sm:$0xff]
          %v496 = vld [vmem:[%s214 + $0xe8] sm:$0xff]
          %v497 = vld [vmem:[%s214 + $0xf0] sm:$0xff]
          %v498 = vld [vmem:[%s214 + $0xf8] sm:$0xff]
          %v499 = vld [vmem:[%s214 + $0x100] sm:$0xff]
          %v500 = vld [vmem:[%s214 + $0x108] sm:$0xff]
          %v501 = vld [vmem:[%s214 + $0x110] sm:$0xff]
          %v502 = vld [vmem:[%s214 + $0x118] sm:$0xff]
          %v503 = vld [vmem:[%s214 + $0x120] sm:$0xff]
          %v504 = vld [vmem:[%s214 + $0x128] sm:$0xff]
          %v505 = vld [vmem:[%s214 + $0x130] sm:$0xff]
          %v506 = vld [vmem:[%s214 + $0x138] sm:$0xff]
          %v507 = vld [vmem:[%s214 + $0x140] sm:$0xff]
          %v508 = vld [vmem:[%s214 + $0x148] sm:$0xff]
          %v509 = vld [vmem:[%s214 + $0x150] sm:$0xff]
          %v510 = vld [vmem:[%s214 + $0x158] sm:$0xff]
          %v511 = vld [vmem:[%s214 + $0x160] sm:$0xff]
          %v512 = vld [vmem:[%s214 + $0x168] sm:$0xff]
          %v513 = vld [vmem:[%s214 + $0x170] sm:$0xff]
          %v514 = vld [vmem:[%s214 + $0x178] sm:$0xff]
          %v515 = vld [vmem:[%s214 + $0x180] sm:$0xff]
          %v516 = vld [vmem:[%s214 + $0x188] sm:$0xff]
          %v517 = vld [vmem:[%s214 + $0x190] sm:$0xff]
          %v518 = vld [vmem:[%s214 + $0x198] sm:$0xff]
          %v519 = vld [vmem:[%s214 + $0x1a0] sm:$0xff]
          %v520 = vld [vmem:[%s214 + $0x1a8] sm:$0xff]
          %v521 = vld [vmem:[%s214 + $0x1b0] sm:$0xff]
          %v522 = vld [vmem:[%s214 + $0x1b8] sm:$0xff]
          %v523 = vld [vmem:[%s214 + $0x1c0] sm:$0xff]
          %v524 = vld [vmem:[%s214 + $0x1c8] sm:$0xff]
          %v525 = vld [vmem:[%s214 + $0x1d0] sm:$0xff]
          %v526 = vld [vmem:[%s214 + $0x1d8] sm:$0xff]
          %v527 = vld [vmem:[%s214 + $0x1e0] sm:$0xff]
          %v528 = vld [vmem:[%s214 + $0x1e8] sm:$0xff]
          %v529 = vld [vmem:[%s214 + $0x1f0] sm:$0xff]
          %v530 = vld [vmem:[%s214 + $0x1f8] sm:$0xff]
          %v531 = vld [vmem:[%s214 + $0x200] sm:$0xff]
          %v532 = vld [vmem:[%s214 + $0x208] sm:$0xff]
          %v533 = vld [vmem:[%s214 + $0x210] sm:$0xff]
          %v534 = vld [vmem:[%s214 + $0x218] sm:$0xff]
          %v535 = vld [vmem:[%s214 + $0x220] sm:$0xff]
          %v536 = vld [vmem:[%s214 + $0x228] sm:$0xff]
          %v537 = vld [vmem:[%s214 + $0x230] sm:$0xff]
          %v538 = vld [vmem:[%s214 + $0x238] sm:$0xff]
          %v539 = vld [vmem:[%s214 + $0x240] sm:$0xff]
          %v540 = vld [vmem:[%s214 + $0x248] sm:$0xff]
          %v541 = vld [vmem:[%s214 + $0x250] sm:$0xff]
          %v542 = vld [vmem:[%s214 + $0x258] sm:$0xff]
          %v543 = vld [vmem:[%s214 + $0x260] sm:$0xff]
          %v544 = vld [vmem:[%s214 + $0x268] sm:$0xff]
          %v545 = vld [vmem:[%s214 + $0x270] sm:$0xff]
          %v546 = vld [vmem:[%s214 + $0x278] sm:$0xff]
          %v547 = vld [vmem:[%s214 + $0x280] sm:$0xff]
          %v548 = vld [vmem:[%s214 + $0x288] sm:$0xff]
          %v549 = vld [vmem:[%s214 + $0x290] sm:$0xff]
          %v550 = vld [vmem:[%s214 + $0x298] sm:$0xff]
          %v551 = vld [vmem:[%s214 + $0x2a0] sm:$0xff]
          %v552 = vld [vmem:[%s214 + $0x2a8] sm:$0xff]
          %v553 = vld [vmem:[%s214 + $0x2b0] sm:$0xff]
          %v554 = vld [vmem:[%s214 + $0x2b8] sm:$0xff]
          %v555 = vld [vmem:[%s214 + $0x2c0] sm:$0xff]
          %v556 = vld [vmem:[%s214 + $0x2c8] sm:$0xff]
          %v557 = vld [vmem:[%s214 + $0x2d0] sm:$0xff]
          %v558 = vld [vmem:[%s214 + $0x2d8] sm:$0xff]
          %v559 = vld [vmem:[%s214 + $0x2e0] sm:$0xff]
          %v560 = vld [vmem:[%s214 + $0x2e8] sm:$0xff]
          %v561 = vld [vmem:[%s214 + $0x2f0] sm:$0xff]
          %v562 = vld [vmem:[%s214 + $0x2f8] sm:$0xff]
          %v563 = vld [vmem:[%s214 + $0x300] sm:$0xff]
          %v564 = vld [vmem:[%s214 + $0x308] sm:$0xff]
          %v565 = vld [vmem:[%s214 + $0x310] sm:$0xff]
          %v566 = vld [vmem:[%s214 + $0x318] sm:$0xff]
          %v567 = vld [vmem:[%s214 + $0x320] sm:$0xff]
          %v568 = vld [vmem:[%s214 + $0x328] sm:$0xff]
          %v569 = vld [vmem:[%s214 + $0x330] sm:$0xff]
          %v570 = vld [vmem:[%s214 + $0x338] sm:$0xff]
          %v571 = vld [vmem:[%s214 + $0x340] sm:$0xff]
          %v572 = vld [vmem:[%s214 + $0x348] sm:$0xff]
          %v573 = vld [vmem:[%s214 + $0x350] sm:$0xff]
          %v574 = vld [vmem:[%s214 + $0x358] sm:$0xff]
          %v575 = vld [vmem:[%s214 + $0x360] sm:$0xff]
          %v576 = vld [vmem:[%s214 + $0x368] sm:$0xff]
          %v577 = vld [vmem:[%s214 + $0x370] sm:$0xff]
          %v578 = vld [vmem:[%s214 + $0x378] sm:$0xff]
          %v579 = vld [vmem:[%s214 + $0x380] sm:$0xff]
          %v580 = vld [vmem:[%s214 + $0x388] sm:$0xff]
          %v581 = vld [vmem:[%s214 + $0x390] sm:$0xff]
          %v582 = vld [vmem:[%s214 + $0x398] sm:$0xff]
          %v583 = vld [vmem:[%s214 + $0x3a0] sm:$0xff]
          %v584 = vld [vmem:[%s214 + $0x3a8] sm:$0xff]
          %v585 = vld [vmem:[%s214 + $0x3b0] sm:$0xff]
          %v586 = vld [vmem:[%s214 + $0x3b8] sm:$0xff]
          %v587 = vld [vmem:[%s214 + $0x3c0] sm:$0xff]
          %v588 = vld [vmem:[%s214 + $0x3c8] sm:$0xff]
          %v589 = vld [vmem:[%s214 + $0x3d0] sm:$0xff]
          %v590 = vld [vmem:[%s214 + $0x3d8] sm:$0xff]
          %v591 = vld [vmem:[%s214 + $0x3e0] sm:$0xff]
          %v592 = vld [vmem:[%s214 + $0x3e8] sm:$0xff]
          %v593 = vld [vmem:[%s214 + $0x3f0] sm:$0xff]
          %v594 = vld [vmem:[%s214 + $0x3f8] sm:$0xff]
          %v723 = vunpack.c.l.b16 %v467
          %v724 = vunpack.c.h.b16 %v467
          %v725 = vunpack.c.l.b16 %v468
          %v726 = vunpack.c.h.b16 %v468
          %v727 = vunpack.c.l.b16 %v469
          %v728 = vunpack.c.h.b16 %v469
          %v729 = vunpack.c.l.b16 %v470
          %v730 = vunpack.c.h.b16 %v470
          %v731 = vunpack.c.l.b16 %v471
          %v732 = vunpack.c.h.b16 %v471
          %v733 = vunpack.c.l.b16 %v472
          %v734 = vunpack.c.h.b16 %v472
          %v735 = vunpack.c.l.b16 %v473
          %v736 = vunpack.c.h.b16 %v473
          %v737 = vunpack.c.l.b16 %v474
          %v738 = vunpack.c.h.b16 %v474
          %v739 = vunpack.c.l.b16 %v475
          %v740 = vunpack.c.h.b16 %v475
          %v741 = vunpack.c.l.b16 %v476
          %v742 = vunpack.c.h.b16 %v476
          %v743 = vunpack.c.l.b16 %v477
          %v744 = vunpack.c.h.b16 %v477
          %v745 = vunpack.c.l.b16 %v478
          %v746 = vunpack.c.h.b16 %v478
          %v747 = vunpack.c.l.b16 %v479
          %v748 = vunpack.c.h.b16 %v479
          %v749 = vunpack.c.l.b16 %v480
          %v750 = vunpack.c.h.b16 %v480
          %v751 = vunpack.c.l.b16 %v481
          %v752 = vunpack.c.h.b16 %v481
          %v753 = vunpack.c.l.b16 %v482
          %v754 = vunpack.c.h.b16 %v482
          %v755 = vunpack.c.l.b16 %v483
          %v756 = vunpack.c.h.b16 %v483
          %v757 = vunpack.c.l.b16 %v484
          %v758 = vunpack.c.h.b16 %v484
          %v759 = vunpack.c.l.b16 %v485
          %v760 = vunpack.c.h.b16 %v485
          %v761 = vunpack.c.l.b16 %v486
          %v762 = vunpack.c.h.b16 %v486
          %v763 = vunpack.c.l.b16 %v487
          %v764 = vunpack.c.h.b16 %v487
          %v765 = vunpack.c.l.b16 %v488
          %v766 = vunpack.c.h.b16 %v488
          %v767 = vunpack.c.l.b16 %v489
          %v768 = vunpack.c.h.b16 %v489
          %v769 = vunpack.c.l.b16 %v490
          %v770 = vunpack.c.h.b16 %v490
          %v771 = vunpack.c.l.b16 %v491
          %v772 = vunpack.c.h.b16 %v491
          %v773 = vunpack.c.l.b16 %v492
          %v774 = vunpack.c.h.b16 %v492
          %v775 = vunpack.c.l.b16 %v493
          %v776 = vunpack.c.h.b16 %v493
          %v777 = vunpack.c.l.b16 %v494
          %v778 = vunpack.c.h.b16 %v494
          %v779 = vunpack.c.l.b16 %v495
          %v780 = vunpack.c.h.b16 %v495
          %v781 = vunpack.c.l.b16 %v496
          %v782 = vunpack.c.h.b16 %v496
          %v783 = vunpack.c.l.b16 %v497
          %v784 = vunpack.c.h.b16 %v497
          %v785 = vunpack.c.l.b16 %v498
          %v786 = vunpack.c.h.b16 %v498
          %v787 = vunpack.c.l.b16 %v499
          %v788 = vunpack.c.h.b16 %v499
          %v789 = vunpack.c.l.b16 %v500
          %v790 = vunpack.c.h.b16 %v500
          %v791 = vunpack.c.l.b16 %v501
          %v792 = vunpack.c.h.b16 %v501
          %v793 = vunpack.c.l.b16 %v502
          %v794 = vunpack.c.h.b16 %v502
          %v795 = vunpack.c.l.b16 %v503
          %v796 = vunpack.c.h.b16 %v503
          %v797 = vunpack.c.l.b16 %v504
          %v798 = vunpack.c.h.b16 %v504
          %v799 = vunpack.c.l.b16 %v505
          %v800 = vunpack.c.h.b16 %v505
          %v801 = vunpack.c.l.b16 %v506
          %v802 = vunpack.c.h.b16 %v506
          %v803 = vunpack.c.l.b16 %v507
          %v804 = vunpack.c.h.b16 %v507
          %v805 = vunpack.c.l.b16 %v508
          %v806 = vunpack.c.h.b16 %v508
          %v807 = vunpack.c.l.b16 %v509
          %v808 = vunpack.c.h.b16 %v509
          %v809 = vunpack.c.l.b16 %v510
          %v810 = vunpack.c.h.b16 %v510
          %v811 = vunpack.c.l.b16 %v511
          %v812 = vunpack.c.h.b16 %v511
          %v813 = vunpack.c.l.b16 %v512
          %v814 = vunpack.c.h.b16 %v512
          %v815 = vunpack.c.l.b16 %v513
          %v816 = vunpack.c.h.b16 %v513
          %v817 = vunpack.c.l.b16 %v514
          %v818 = vunpack.c.h.b16 %v514
          %v819 = vunpack.c.l.b16 %v515
          %v820 = vunpack.c.h.b16 %v515
          %v821 = vunpack.c.l.b16 %v516
          %v822 = vunpack.c.h.b16 %v516
          %v823 = vunpack.c.l.b16 %v517
          %v824 = vunpack.c.h.b16 %v517
          %v825 = vunpack.c.l.b16 %v518
          %v826 = vunpack.c.h.b16 %v518
          %v827 = vunpack.c.l.b16 %v519
          %v828 = vunpack.c.h.b16 %v519
          %v829 = vunpack.c.l.b16 %v520
          %v830 = vunpack.c.h.b16 %v520
          %v831 = vunpack.c.l.b16 %v521
          %v832 = vunpack.c.h.b16 %v521
          %v833 = vunpack.c.l.b16 %v522
          %v834 = vunpack.c.h.b16 %v522
          %v835 = vunpack.c.l.b16 %v523
          %v836 = vunpack.c.h.b16 %v523
          %v837 = vunpack.c.l.b16 %v524
          %v838 = vunpack.c.h.b16 %v524
          %v839 = vunpack.c.l.b16 %v525
          %v840 = vunpack.c.h.b16 %v525
          %v841 = vunpack.c.l.b16 %v526
          %v842 = vunpack.c.h.b16 %v526
          %v843 = vunpack.c.l.b16 %v527
          %v844 = vunpack.c.h.b16 %v527
          %v845 = vunpack.c.l.b16 %v528
          %v846 = vunpack.c.h.b16 %v528
          %v847 = vunpack.c.l.b16 %v529
          %v848 = vunpack.c.h.b16 %v529
          %v849 = vunpack.c.l.b16 %v530
          %v850 = vunpack.c.h.b16 %v530
          %v851 = vunpack.c.l.b16 %v531
          %v852 = vunpack.c.h.b16 %v531
          %v853 = vunpack.c.l.b16 %v532
          %v854 = vunpack.c.h.b16 %v532
          %v855 = vunpack.c.l.b16 %v533
          %v856 = vunpack.c.h.b16 %v533
          %v857 = vunpack.c.l.b16 %v534
          %v858 = vunpack.c.h.b16 %v534
          %v859 = vunpack.c.l.b16 %v535
          %v860 = vunpack.c.h.b16 %v535
          %v861 = vunpack.c.l.b16 %v536
          %v862 = vunpack.c.h.b16 %v536
          %v863 = vunpack.c.l.b16 %v537
          %v864 = vunpack.c.h.b16 %v537
          %v865 = vunpack.c.l.b16 %v538
          %v866 = vunpack.c.h.b16 %v538
          %v867 = vunpack.c.l.b16 %v539
          %v868 = vunpack.c.h.b16 %v539
          %v869 = vunpack.c.l.b16 %v540
          %v870 = vunpack.c.h.b16 %v540
          %v871 = vunpack.c.l.b16 %v541
          %v872 = vunpack.c.h.b16 %v541
          %v873 = vunpack.c.l.b16 %v542
          %v874 = vunpack.c.h.b16 %v542
          %v875 = vunpack.c.l.b16 %v543
          %v876 = vunpack.c.h.b16 %v543
          %v877 = vunpack.c.l.b16 %v544
          %v878 = vunpack.c.h.b16 %v544
          %v879 = vunpack.c.l.b16 %v545
          %v880 = vunpack.c.h.b16 %v545
          %v881 = vunpack.c.l.b16 %v546
          %v882 = vunpack.c.h.b16 %v546
          %v883 = vunpack.c.l.b16 %v547
          %v884 = vunpack.c.h.b16 %v547
          %v885 = vunpack.c.l.b16 %v548
          %v886 = vunpack.c.h.b16 %v548
          %v887 = vunpack.c.l.b16 %v549
          %v888 = vunpack.c.h.b16 %v549
          %v889 = vunpack.c.l.b16 %v550
          %v890 = vunpack.c.h.b16 %v550
          %v891 = vunpack.c.l.b16 %v551
          %v892 = vunpack.c.h.b16 %v551
          %v893 = vunpack.c.l.b16 %v552
          %v894 = vunpack.c.h.b16 %v552
          %v895 = vunpack.c.l.b16 %v553
          %v896 = vunpack.c.h.b16 %v553
          %v897 = vunpack.c.l.b16 %v554
          %v898 = vunpack.c.h.b16 %v554
          %v899 = vunpack.c.l.b16 %v555
          %v900 = vunpack.c.h.b16 %v555
          %v901 = vunpack.c.l.b16 %v556
          %v902 = vunpack.c.h.b16 %v556
          %v903 = vunpack.c.l.b16 %v557
          %v904 = vunpack.c.h.b16 %v557
          %v905 = vunpack.c.l.b16 %v558
          %v906 = vunpack.c.h.b16 %v558
          %v907 = vunpack.c.l.b16 %v559
          %v908 = vunpack.c.h.b16 %v559
          %v909 = vunpack.c.l.b16 %v560
          %v910 = vunpack.c.h.b16 %v560
          %v911 = vunpack.c.l.b16 %v561
          %v912 = vunpack.c.h.b16 %v561
          %v913 = vunpack.c.l.b16 %v562
          %v914 = vunpack.c.h.b16 %v562
          %v915 = vunpack.c.l.b16 %v563
          %v916 = vunpack.c.h.b16 %v563
          %v917 = vunpack.c.l.b16 %v564
          %v918 = vunpack.c.h.b16 %v564
          %v919 = vunpack.c.l.b16 %v565
          %v920 = vunpack.c.h.b16 %v565
          %v921 = vunpack.c.l.b16 %v566
          %v922 = vunpack.c.h.b16 %v566
          %v923 = vunpack.c.l.b16 %v567
          %v924 = vunpack.c.h.b16 %v567
          %v925 = vunpack.c.l.b16 %v568
          %v926 = vunpack.c.h.b16 %v568
          %v927 = vunpack.c.l.b16 %v569
          %v928 = vunpack.c.h.b16 %v569
          %v929 = vunpack.c.l.b16 %v570
          %v930 = vunpack.c.h.b16 %v570
          %v931 = vunpack.c.l.b16 %v571
          %v932 = vunpack.c.h.b16 %v571
          %v933 = vunpack.c.l.b16 %v572
          %v934 = vunpack.c.h.b16 %v572
          %v935 = vunpack.c.l.b16 %v573
          %v936 = vunpack.c.h.b16 %v573
          %v937 = vunpack.c.l.b16 %v574
          %v938 = vunpack.c.h.b16 %v574
          %v939 = vunpack.c.l.b16 %v575
          %v940 = vunpack.c.h.b16 %v575
          %v941 = vunpack.c.l.b16 %v576
          %v942 = vunpack.c.h.b16 %v576
          %v943 = vunpack.c.l.b16 %v577
          %v944 = vunpack.c.h.b16 %v577
          %v945 = vunpack.c.l.b16 %v578
          %v946 = vunpack.c.h.b16 %v578
          %v947 = vunpack.c.l.b16 %v579
          %v948 = vunpack.c.h.b16 %v579
          %v949 = vunpack.c.l.b16 %v580
          %v950 = vunpack.c.h.b16 %v580
          %v951 = vunpack.c.l.b16 %v581
          %v952 = vunpack.c.h.b16 %v581
          %v953 = vunpack.c.l.b16 %v582
          %v954 = vunpack.c.h.b16 %v582
          %v955 = vunpack.c.l.b16 %v583
          %v956 = vunpack.c.h.b16 %v583
          %v957 = vunpack.c.l.b16 %v584
          %v958 = vunpack.c.h.b16 %v584
          %v959 = vunpack.c.l.b16 %v585
          %v960 = vunpack.c.h.b16 %v585
          %v961 = vunpack.c.l.b16 %v586
          %v962 = vunpack.c.h.b16 %v586
          %v963 = vunpack.c.l.b16 %v587
          %v964 = vunpack.c.h.b16 %v587
          %v965 = vunpack.c.l.b16 %v588
          %v966 = vunpack.c.h.b16 %v588
          %v967 = vunpack.c.l.b16 %v589
          %v968 = vunpack.c.h.b16 %v589
          %v969 = vunpack.c.l.b16 %v590
          %v970 = vunpack.c.h.b16 %v590
          %v971 = vunpack.c.l.b16 %v591
          %v972 = vunpack.c.h.b16 %v591
          %v973 = vunpack.c.l.b16 %v592
          %v974 = vunpack.c.h.b16 %v592
          %v975 = vunpack.c.l.b16 %v593
          %v976 = vunpack.c.h.b16 %v593
          %v977 = vunpack.c.l.b16 %v594
          %v978 = vunpack.c.h.b16 %v594
          %v979 = vpack.c.b16 %v727, %v723
          %v980 = vpack.c.b16 %v728, %v724
          %v981 = vpack.c.b16 %v729, %v725
          %v982 = vpack.c.b16 %v730, %v726
          %v983 = vpack.c.b16 %v735, %v731
          %v984 = vpack.c.b16 %v736, %v732
          %v985 = vpack.c.b16 %v737, %v733
          %v986 = vpack.c.b16 %v738, %v734
          %v987 = vpack.c.b16 %v743, %v739
          %v988 = vpack.c.b16 %v744, %v740
          %v989 = vpack.c.b16 %v745, %v741
          %v990 = vpack.c.b16 %v746, %v742
          %v991 = vpack.c.b16 %v751, %v747
          %v992 = vpack.c.b16 %v752, %v748
          %v993 = vpack.c.b16 %v753, %v749
          %v994 = vpack.c.b16 %v754, %v750
          %v995 = vpack.c.b16 %v759, %v755
          %v996 = vpack.c.b16 %v760, %v756
          %v997 = vpack.c.b16 %v761, %v757
          %v998 = vpack.c.b16 %v762, %v758
          %v999 = vpack.c.b16 %v767, %v763
          %v1000 = vpack.c.b16 %v768, %v764
          %v1001 = vpack.c.b16 %v769, %v765
          %v1002 = vpack.c.b16 %v770, %v766
          %v1003 = vpack.c.b16 %v775, %v771
          %v1004 = vpack.c.b16 %v776, %v772
          %v1005 = vpack.c.b16 %v777, %v773
          %v1006 = vpack.c.b16 %v778, %v774
          %v1007 = vpack.c.b16 %v783, %v779
          %v1008 = vpack.c.b16 %v784, %v780
          %v1009 = vpack.c.b16 %v785, %v781
          %v1010 = vpack.c.b16 %v786, %v782
          %v1011 = vpack.c.b16 %v791, %v787
          %v1012 = vpack.c.b16 %v792, %v788
          %v1013 = vpack.c.b16 %v793, %v789
          %v1014 = vpack.c.b16 %v794, %v790
          %v1015 = vpack.c.b16 %v799, %v795
          %v1016 = vpack.c.b16 %v800, %v796
          %v1017 = vpack.c.b16 %v801, %v797
          %v1018 = vpack.c.b16 %v802, %v798
          %v1019 = vpack.c.b16 %v807, %v803
          %v1020 = vpack.c.b16 %v808, %v804
          %v1021 = vpack.c.b16 %v809, %v805
          %v1022 = vpack.c.b16 %v810, %v806
          %v1023 = vpack.c.b16 %v815, %v811
          %v1024 = vpack.c.b16 %v816, %v812
          %v1025 = vpack.c.b16 %v817, %v813
          %v1026 = vpack.c.b16 %v818, %v814
          %v1027 = vpack.c.b16 %v823, %v819
          %v1028 = vpack.c.b16 %v824, %v820
          %v1029 = vpack.c.b16 %v825, %v821
          %v1030 = vpack.c.b16 %v826, %v822
          %v1031 = vpack.c.b16 %v831, %v827
          %v1032 = vpack.c.b16 %v832, %v828
          %v1033 = vpack.c.b16 %v833, %v829
          %v1034 = vpack.c.b16 %v834, %v830
          %v1035 = vpack.c.b16 %v839, %v835
          %v1036 = vpack.c.b16 %v840, %v836
          %v1037 = vpack.c.b16 %v841, %v837
          %v1038 = vpack.c.b16 %v842, %v838
          %v1039 = vpack.c.b16 %v847, %v843
          %v1040 = vpack.c.b16 %v848, %v844
          %v1041 = vpack.c.b16 %v849, %v845
          %v1042 = vpack.c.b16 %v850, %v846
          %v1043 = vpack.c.b16 %v855, %v851
          %v1044 = vpack.c.b16 %v856, %v852
          %v1045 = vpack.c.b16 %v857, %v853
          %v1046 = vpack.c.b16 %v858, %v854
          %v1047 = vpack.c.b16 %v863, %v859
          %v1048 = vpack.c.b16 %v864, %v860
          %v1049 = vpack.c.b16 %v865, %v861
          %v1050 = vpack.c.b16 %v866, %v862
          %v1051 = vpack.c.b16 %v871, %v867
          %v1052 = vpack.c.b16 %v872, %v868
          %v1053 = vpack.c.b16 %v873, %v869
          %v1054 = vpack.c.b16 %v874, %v870
          %v1055 = vpack.c.b16 %v879, %v875
          %v1056 = vpack.c.b16 %v880, %v876
          %v1057 = vpack.c.b16 %v881, %v877
          %v1058 = vpack.c.b16 %v882, %v878
          %v1059 = vpack.c.b16 %v887, %v883
          %v1060 = vpack.c.b16 %v888, %v884
          %v1061 = vpack.c.b16 %v889, %v885
          %v1062 = vpack.c.b16 %v890, %v886
          %v1063 = vpack.c.b16 %v895, %v891
          %v1064 = vpack.c.b16 %v896, %v892
          %v1065 = vpack.c.b16 %v897, %v893
          %v1066 = vpack.c.b16 %v898, %v894
          %v1067 = vpack.c.b16 %v903, %v899
          %v1068 = vpack.c.b16 %v904, %v900
          %v1069 = vpack.c.b16 %v905, %v901
          %v1070 = vpack.c.b16 %v906, %v902
          %v1071 = vpack.c.b16 %v911, %v907
          %v1072 = vpack.c.b16 %v912, %v908
          %v1073 = vpack.c.b16 %v913, %v909
          %v1074 = vpack.c.b16 %v914, %v910
          %v1075 = vpack.c.b16 %v919, %v915
          %v1076 = vpack.c.b16 %v920, %v916
          %v1077 = vpack.c.b16 %v921, %v917
          %v1078 = vpack.c.b16 %v922, %v918
          %v1079 = vpack.c.b16 %v927, %v923
          %v1080 = vpack.c.b16 %v928, %v924
          %v1081 = vpack.c.b16 %v929, %v925
          %v1082 = vpack.c.b16 %v930, %v926
          %v1083 = vpack.c.b16 %v935, %v931
          %v1084 = vpack.c.b16 %v936, %v932
          %v1085 = vpack.c.b16 %v937, %v933
          %v1086 = vpack.c.b16 %v938, %v934
          %v1087 = vpack.c.b16 %v943, %v939
          %v1088 = vpack.c.b16 %v944, %v940
          %v1089 = vpack.c.b16 %v945, %v941
          %v1090 = vpack.c.b16 %v946, %v942
          %v1091 = vpack.c.b16 %v951, %v947
          %v1092 = vpack.c.b16 %v952, %v948
          %v1093 = vpack.c.b16 %v953, %v949
          %v1094 = vpack.c.b16 %v954, %v950
          %v1095 = vpack.c.b16 %v959, %v955
          %v1096 = vpack.c.b16 %v960, %v956
          %v1097 = vpack.c.b16 %v961, %v957
          %v1098 = vpack.c.b16 %v962, %v958
          %v1099 = vpack.c.b16 %v967, %v963
          %v1100 = vpack.c.b16 %v968, %v964
          %v1101 = vpack.c.b16 %v969, %v965
          %v1102 = vpack.c.b16 %v970, %v966
          %v1103 = vpack.c.b16 %v975, %v971
          %v1104 = vpack.c.b16 %v976, %v972
          %v1105 = vpack.c.b16 %v977, %v973
          %v1106 = vpack.c.b16 %v978, %v974
          %v1299 = vunpack.c.l.b16 %v339
          %v1300 = vunpack.c.l.b16 %v340
          %v1301 = vunpack.c.l.b16 %v341
          %v1302 = vunpack.c.l.b16 %v342
          %v1303 = vunpack.c.l.b16 %v343
          %v1304 = vunpack.c.l.b16 %v344
          %v1305 = vunpack.c.l.b16 %v345
          %v1306 = vunpack.c.l.b16 %v346
          %v1307 = vunpack.c.l.b16 %v347
          %v1308 = vunpack.c.l.b16 %v348
          %v1309 = vunpack.c.l.b16 %v349
          %v1310 = vunpack.c.l.b16 %v350
          %v1311 = vunpack.c.l.b16 %v351
          %v1312 = vunpack.c.l.b16 %v352
          %v1313 = vunpack.c.l.b16 %v353
          %v1314 = vunpack.c.l.b16 %v354
          %v1315 = vunpack.c.l.b16 %v355
          %v1316 = vunpack.c.l.b16 %v356
          %v1317 = vunpack.c.l.b16 %v357
          %v1318 = vunpack.c.l.b16 %v358
          %v1319 = vunpack.c.l.b16 %v359
          %v1320 = vunpack.c.l.b16 %v360
          %v1321 = vunpack.c.l.b16 %v361
          %v1322 = vunpack.c.l.b16 %v362
          %v1323 = vunpack.c.l.b16 %v363
          %v1324 = vunpack.c.l.b16 %v364
          %v1325 = vunpack.c.l.b16 %v365
          %v1326 = vunpack.c.l.b16 %v366
          %v1327 = vunpack.c.l.b16 %v367
          %v1328 = vunpack.c.l.b16 %v368
          %v1329 = vunpack.c.l.b16 %v369
          %v1330 = vunpack.c.l.b16 %v370
          %v1331 = vunpack.c.l.b16 %v371
          %v1332 = vunpack.c.l.b16 %v372
          %v1333 = vunpack.c.l.b16 %v373
          %v1334 = vunpack.c.l.b16 %v374
          %v1335 = vunpack.c.l.b16 %v375
          %v1336 = vunpack.c.l.b16 %v376
          %v1337 = vunpack.c.l.b16 %v377
          %v1338 = vunpack.c.l.b16 %v378
          %v1339 = vunpack.c.l.b16 %v379
          %v1340 = vunpack.c.l.b16 %v380
          %v1341 = vunpack.c.l.b16 %v381
          %v1342 = vunpack.c.l.b16 %v382
          %v1343 = vunpack.c.l.b16 %v383
          %v1344 = vunpack.c.l.b16 %v384
          %v1345 = vunpack.c.l.b16 %v385
          %v1346 = vunpack.c.l.b16 %v386
          %v1347 = vunpack.c.l.b16 %v387
          %v1348 = vunpack.c.l.b16 %v388
          %v1349 = vunpack.c.l.b16 %v389
          %v1350 = vunpack.c.l.b16 %v390
          %v1351 = vunpack.c.l.b16 %v391
          %v1352 = vunpack.c.l.b16 %v392
          %v1353 = vunpack.c.l.b16 %v393
          %v1354 = vunpack.c.l.b16 %v394
          %v1355 = vunpack.c.l.b16 %v395
          %v1356 = vunpack.c.l.b16 %v396
          %v1357 = vunpack.c.l.b16 %v397
          %v1358 = vunpack.c.l.b16 %v398
          %v1359 = vunpack.c.l.b16 %v399
          %v1360 = vunpack.c.l.b16 %v400
          %v1361 = vunpack.c.l.b16 %v401
          %v1362 = vunpack.c.l.b16 %v402
          %v1363 = vpack.c.b16 %v1300, %v1299
          %v1364 = vpack.c.b16 %v1302, %v1301
          %v1365 = vpack.c.b16 %v1304, %v1303
          %v1366 = vpack.c.b16 %v1306, %v1305
          %v1367 = vpack.c.b16 %v1308, %v1307
          %v1368 = vpack.c.b16 %v1310, %v1309
          %v1369 = vpack.c.b16 %v1312, %v1311
          %v1370 = vpack.c.b16 %v1314, %v1313
          %v1371 = vpack.c.b16 %v1316, %v1315
          %v1372 = vpack.c.b16 %v1318, %v1317
          %v1373 = vpack.c.b16 %v1320, %v1319
          %v1374 = vpack.c.b16 %v1322, %v1321
          %v1375 = vpack.c.b16 %v1324, %v1323
          %v1376 = vpack.c.b16 %v1326, %v1325
          %v1377 = vpack.c.b16 %v1328, %v1327
          %v1378 = vpack.c.b16 %v1330, %v1329
          %v1379 = vpack.c.b16 %v1332, %v1331
          %v1380 = vpack.c.b16 %v1334, %v1333
          %v1381 = vpack.c.b16 %v1336, %v1335
          %v1382 = vpack.c.b16 %v1338, %v1337
          %v1383 = vpack.c.b16 %v1340, %v1339
          %v1384 = vpack.c.b16 %v1342, %v1341
          %v1385 = vpack.c.b16 %v1344, %v1343
          %v1386 = vpack.c.b16 %v1346, %v1345
          %v1387 = vpack.c.b16 %v1348, %v1347
          %v1388 = vpack.c.b16 %v1350, %v1349
          %v1389 = vpack.c.b16 %v1352, %v1351
          %v1390 = vpack.c.b16 %v1354, %v1353
          %v1391 = vpack.c.b16 %v1356, %v1355
          %v1392 = vpack.c.b16 %v1358, %v1357
          %v1393 = vpack.c.b16 %v1360, %v1359
          %v1394 = vpack.c.b16 %v1362, %v1361
          %1427 = vmatpush.bf16.msra.mxu0 %v1370
          %1428 = vmatpush.bf16.msra.mxu0 %v1369
          %1429 = vmatpush.bf16.msra.mxu0 %v1368
          %1430 = vmatpush.bf16.msra.mxu0 %v1367
          %1431 = vmatpush.bf16.msra.mxu0 %v1366
          %1432 = vmatpush.bf16.msra.mxu0 %v1365
          %1433 = vmatpush.bf16.msra.mxu0 %v1364
          %1434 = vmatpush.bf16.msra.mxu0 %v1363
          %1435 = vmatmul.bf16.gmra.mxu0 %v979
          %v1436 = vpop.f32.mrf.mxu0
          %v1437 = vadd.f32 0.0, %v1436
          %v1438 = vpop.f32.mrf.mxu0
          %v1439 = vadd.f32 0.0, %v1438
          %1440 = vmatmul.bf16.gmra.mxu0 %v983
          %v1441 = vpop.f32.mrf.mxu0
          %v1442 = vadd.f32 0.0, %v1441
          %v1443 = vpop.f32.mrf.mxu0
          %v1444 = vadd.f32 0.0, %v1443
          %1445 = vmatmul.bf16.gmra.mxu0 %v987
          %v1446 = vpop.f32.mrf.mxu0
          %v1447 = vadd.f32 0.0, %v1446
          %v1448 = vpop.f32.mrf.mxu0
          %v1449 = vadd.f32 0.0, %v1448
          %1450 = vmatmul.bf16.gmra.mxu0 %v991
          %v1451 = vpop.f32.mrf.mxu0
          %v1452 = vadd.f32 0.0, %v1451
          %v1453 = vpop.f32.mrf.mxu0
          %v1454 = vadd.f32 0.0, %v1453
          %1455 = vmatmul.bf16.gmra.mxu0 %v995
          %v1456 = vpop.f32.mrf.mxu0
          %v1457 = vadd.f32 0.0, %v1456
          %v1458 = vpop.f32.mrf.mxu0
          %v1459 = vadd.f32 0.0, %v1458
          %1460 = vmatmul.bf16.gmra.mxu0 %v999
          %v1461 = vpop.f32.mrf.mxu0
          %v1462 = vadd.f32 0.0, %v1461
          %v1463 = vpop.f32.mrf.mxu0
          %v1464 = vadd.f32 0.0, %v1463
          %1465 = vmatmul.bf16.gmra.mxu0 %v1003
          %v1466 = vpop.f32.mrf.mxu0
          %v1467 = vadd.f32 0.0, %v1466
          %v1468 = vpop.f32.mrf.mxu0
          %v1469 = vadd.f32 0.0, %v1468
          %1470 = vmatmul.bf16.gmra.mxu0 %v1007
          %v1471 = vpop.f32.mrf.mxu0
          %v1472 = vadd.f32 0.0, %v1471
          %v1473 = vpop.f32.mrf.mxu0
          %v1474 = vadd.f32 0.0, %v1473
          %1475 = vmatmul.bf16.gmra.mxu0 %v1011
          %v1476 = vpop.f32.mrf.mxu0
          %v1477 = vadd.f32 0.0, %v1476
          %v1478 = vpop.f32.mrf.mxu0
          %v1479 = vadd.f32 0.0, %v1478
          %1480 = vmatmul.bf16.gmra.mxu0 %v1015
          %v1481 = vpop.f32.mrf.mxu0
          %v1482 = vadd.f32 0.0, %v1481
          %v1483 = vpop.f32.mrf.mxu0
          %v1484 = vadd.f32 0.0, %v1483
          %1485 = vmatmul.bf16.gmra.mxu0 %v1019
          %v1486 = vpop.f32.mrf.mxu0
          %v1487 = vadd.f32 0.0, %v1486
          %v1488 = vpop.f32.mrf.mxu0
          %v1489 = vadd.f32 0.0, %v1488
          %1490 = vmatmul.bf16.gmra.mxu0 %v1023
          %v1491 = vpop.f32.mrf.mxu0
          %v1492 = vadd.f32 0.0, %v1491
          %v1493 = vpop.f32.mrf.mxu0
          %v1494 = vadd.f32 0.0, %v1493
          %1495 = vmatmul.bf16.gmra.mxu0 %v1027
          %v1496 = vpop.f32.mrf.mxu0
          %v1497 = vadd.f32 0.0, %v1496
          %v1498 = vpop.f32.mrf.mxu0
          %v1499 = vadd.f32 0.0, %v1498
          %1500 = vmatmul.bf16.gmra.mxu0 %v1031
          %v1501 = vpop.f32.mrf.mxu0
          %v1502 = vadd.f32 0.0, %v1501
          %v1503 = vpop.f32.mrf.mxu0
          %v1504 = vadd.f32 0.0, %v1503
          %1505 = vmatmul.bf16.gmra.mxu0 %v1035
          %v1506 = vpop.f32.mrf.mxu0
          %v1507 = vadd.f32 0.0, %v1506
          %v1508 = vpop.f32.mrf.mxu0
          %v1509 = vadd.f32 0.0, %v1508
          %1510 = vmatmul.bf16.gmra.mxu0 %v1039
          %v1511 = vpop.f32.mrf.mxu0
          %v1512 = vadd.f32 0.0, %v1511
          %v1513 = vpop.f32.mrf.mxu0
          %v1514 = vadd.f32 0.0, %v1513
          %1515 = vmatmul.bf16.gmra.mxu0 %v1043
          %v1516 = vpop.f32.mrf.mxu0
          %v1517 = vadd.f32 0.0, %v1516
          %v1518 = vpop.f32.mrf.mxu0
          %v1519 = vadd.f32 0.0, %v1518
          %1520 = vmatmul.bf16.gmra.mxu0 %v1047
          %v1521 = vpop.f32.mrf.mxu0
          %v1522 = vadd.f32 0.0, %v1521
          %v1523 = vpop.f32.mrf.mxu0
          %v1524 = vadd.f32 0.0, %v1523
          %1525 = vmatmul.bf16.gmra.mxu0 %v1051
          %v1526 = vpop.f32.mrf.mxu0
          %v1527 = vadd.f32 0.0, %v1526
          %v1528 = vpop.f32.mrf.mxu0
          %v1529 = vadd.f32 0.0, %v1528
          %1530 = vmatmul.bf16.gmra.mxu0 %v1055
          %v1531 = vpop.f32.mrf.mxu0
          %v1532 = vadd.f32 0.0, %v1531
          %v1533 = vpop.f32.mrf.mxu0
          %v1534 = vadd.f32 0.0, %v1533
          %1535 = vmatmul.bf16.gmra.mxu0 %v1059
          %v1536 = vpop.f32.mrf.mxu0
          %v1537 = vadd.f32 0.0, %v1536
          %v1538 = vpop.f32.mrf.mxu0
          %v1539 = vadd.f32 0.0, %v1538
          %1540 = vmatmul.bf16.gmra.mxu0 %v1063
          %v1541 = vpop.f32.mrf.mxu0
          %v1542 = vadd.f32 0.0, %v1541
          %v1543 = vpop.f32.mrf.mxu0
          %v1544 = vadd.f32 0.0, %v1543
          %1545 = vmatmul.bf16.gmra.mxu0 %v1067
          %v1546 = vpop.f32.mrf.mxu0
          %v1547 = vadd.f32 0.0, %v1546
          %v1548 = vpop.f32.mrf.mxu0
          %v1549 = vadd.f32 0.0, %v1548
          %1550 = vmatmul.bf16.gmra.mxu0 %v1071
          %v1551 = vpop.f32.mrf.mxu0
          %v1552 = vadd.f32 0.0, %v1551
          %v1553 = vpop.f32.mrf.mxu0
          %v1554 = vadd.f32 0.0, %v1553
          %1555 = vmatmul.bf16.gmra.mxu0 %v1075
          %v1556 = vpop.f32.mrf.mxu0
          %v1557 = vadd.f32 0.0, %v1556
          %v1558 = vpop.f32.mrf.mxu0
          %v1559 = vadd.f32 0.0, %v1558
          %1560 = vmatmul.bf16.gmra.mxu0 %v1079
          %v1561 = vpop.f32.mrf.mxu0
          %v1562 = vadd.f32 0.0, %v1561
          %v1563 = vpop.f32.mrf.mxu0
          %v1564 = vadd.f32 0.0, %v1563
          %1565 = vmatmul.bf16.gmra.mxu0 %v1083
          %v1566 = vpop.f32.mrf.mxu0
          %v1567 = vadd.f32 0.0, %v1566
          %v1568 = vpop.f32.mrf.mxu0
          %v1569 = vadd.f32 0.0, %v1568
          %1570 = vmatmul.bf16.gmra.mxu0 %v1087
          %v1571 = vpop.f32.mrf.mxu0
          %v1572 = vadd.f32 0.0, %v1571
          %v1573 = vpop.f32.mrf.mxu0
          %v1574 = vadd.f32 0.0, %v1573
          %1575 = vmatmul.bf16.gmra.mxu0 %v1091
          %v1576 = vpop.f32.mrf.mxu0
          %v1577 = vadd.f32 0.0, %v1576
          %v1578 = vpop.f32.mrf.mxu0
          %v1579 = vadd.f32 0.0, %v1578
          %1580 = vmatmul.bf16.gmra.mxu0 %v1095
          %v1581 = vpop.f32.mrf.mxu0
          %v1582 = vadd.f32 0.0, %v1581
          %v1583 = vpop.f32.mrf.mxu0
          %v1584 = vadd.f32 0.0, %v1583
          %1585 = vmatmul.bf16.gmra.mxu0 %v1099
          %v1586 = vpop.f32.mrf.mxu0
          %v1587 = vadd.f32 0.0, %v1586
          %v1588 = vpop.f32.mrf.mxu0
          %v1589 = vadd.f32 0.0, %v1588
          %1590 = vmatmul.bf16.gmra.mxu0 %v1103
          %v1591 = vpop.f32.mrf.mxu0
          %v1592 = vadd.f32 0.0, %v1591
          %v1593 = vpop.f32.mrf.mxu0
          %v1594 = vadd.f32 0.0, %v1593
          %1595 = vdwg.mxu0
          %1596 = vmatpush.bf16.msra.mxu0 %v1378
          %1597 = vmatpush.bf16.msra.mxu0 %v1377
          %1598 = vmatpush.bf16.msra.mxu0 %v1376
          %1599 = vmatpush.bf16.msra.mxu0 %v1375
          %1600 = vmatpush.bf16.msra.mxu0 %v1374
          %1601 = vmatpush.bf16.msra.mxu0 %v1373
          %1602 = vmatpush.bf16.msra.mxu0 %v1372
          %1603 = vmatpush.bf16.msra.mxu0 %v1371
          %1604 = vmatmul.bf16.gmra.mxu0 %v980
          %v1605 = vpop.f32.mrf.mxu0
          %v1606 = vadd.f32 %v1437, %v1605
          %v1607 = vpop.f32.mrf.mxu0
          %v1608 = vadd.f32 %v1439, %v1607
          %1609 = vmatmul.bf16.gmra.mxu0 %v984
          %v1610 = vpop.f32.mrf.mxu0
          %v1611 = vadd.f32 %v1442, %v1610
          %v1612 = vpop.f32.mrf.mxu0
          %v1613 = vadd.f32 %v1444, %v1612
          %1614 = vmatmul.bf16.gmra.mxu0 %v988
          %v1615 = vpop.f32.mrf.mxu0
          %v1616 = vadd.f32 %v1447, %v1615
          %v1617 = vpop.f32.mrf.mxu0
          %v1618 = vadd.f32 %v1449, %v1617
          %1619 = vmatmul.bf16.gmra.mxu0 %v992
          %v1620 = vpop.f32.mrf.mxu0
          %v1621 = vadd.f32 %v1452, %v1620
          %v1622 = vpop.f32.mrf.mxu0
          %v1623 = vadd.f32 %v1454, %v1622
          %1624 = vmatmul.bf16.gmra.mxu0 %v996
          %v1625 = vpop.f32.mrf.mxu0
          %v1626 = vadd.f32 %v1457, %v1625
          %v1627 = vpop.f32.mrf.mxu0
          %v1628 = vadd.f32 %v1459, %v1627
          %1629 = vmatmul.bf16.gmra.mxu0 %v1000
          %v1630 = vpop.f32.mrf.mxu0
          %v1631 = vadd.f32 %v1462, %v1630
          %v1632 = vpop.f32.mrf.mxu0
          %v1633 = vadd.f32 %v1464, %v1632
          %1634 = vmatmul.bf16.gmra.mxu0 %v1004
          %v1635 = vpop.f32.mrf.mxu0
          %v1636 = vadd.f32 %v1467, %v1635
          %v1637 = vpop.f32.mrf.mxu0
          %v1638 = vadd.f32 %v1469, %v1637
          %1639 = vmatmul.bf16.gmra.mxu0 %v1008
          %v1640 = vpop.f32.mrf.mxu0
          %v1641 = vadd.f32 %v1472, %v1640
          %v1642 = vpop.f32.mrf.mxu0
          %v1643 = vadd.f32 %v1474, %v1642
          %1644 = vmatmul.bf16.gmra.mxu0 %v1012
          %v1645 = vpop.f32.mrf.mxu0
          %v1646 = vadd.f32 %v1477, %v1645
          %v1647 = vpop.f32.mrf.mxu0
          %v1648 = vadd.f32 %v1479, %v1647
          %1649 = vmatmul.bf16.gmra.mxu0 %v1016
          %v1650 = vpop.f32.mrf.mxu0
          %v1651 = vadd.f32 %v1482, %v1650
          %v1652 = vpop.f32.mrf.mxu0
          %v1653 = vadd.f32 %v1484, %v1652
          %1654 = vmatmul.bf16.gmra.mxu0 %v1020
          %v1655 = vpop.f32.mrf.mxu0
          %v1656 = vadd.f32 %v1487, %v1655
          %v1657 = vpop.f32.mrf.mxu0
          %v1658 = vadd.f32 %v1489, %v1657
          %1659 = vmatmul.bf16.gmra.mxu0 %v1024
          %v1660 = vpop.f32.mrf.mxu0
          %v1661 = vadd.f32 %v1492, %v1660
          %v1662 = vpop.f32.mrf.mxu0
          %v1663 = vadd.f32 %v1494, %v1662
          %1664 = vmatmul.bf16.gmra.mxu0 %v1028
          %v1665 = vpop.f32.mrf.mxu0
          %v1666 = vadd.f32 %v1497, %v1665
          %v1667 = vpop.f32.mrf.mxu0
          %v1668 = vadd.f32 %v1499, %v1667
          %1669 = vmatmul.bf16.gmra.mxu0 %v1032
          %v1670 = vpop.f32.mrf.mxu0
          %v1671 = vadd.f32 %v1502, %v1670
          %v1672 = vpop.f32.mrf.mxu0
          %v1673 = vadd.f32 %v1504, %v1672
          %1674 = vmatmul.bf16.gmra.mxu0 %v1036
          %v1675 = vpop.f32.mrf.mxu0
          %v1676 = vadd.f32 %v1507, %v1675
          %v1677 = vpop.f32.mrf.mxu0
          %v1678 = vadd.f32 %v1509, %v1677
          %1679 = vmatmul.bf16.gmra.mxu0 %v1040
          %v1680 = vpop.f32.mrf.mxu0
          %v1681 = vadd.f32 %v1512, %v1680
          %v1682 = vpop.f32.mrf.mxu0
          %v1683 = vadd.f32 %v1514, %v1682
          %1684 = vmatmul.bf16.gmra.mxu0 %v1044
          %v1685 = vpop.f32.mrf.mxu0
          %v1686 = vadd.f32 %v1517, %v1685
          %v1687 = vpop.f32.mrf.mxu0
          %v1688 = vadd.f32 %v1519, %v1687
          %1689 = vmatmul.bf16.gmra.mxu0 %v1048
          %v1690 = vpop.f32.mrf.mxu0
          %v1691 = vadd.f32 %v1522, %v1690
          %v1692 = vpop.f32.mrf.mxu0
          %v1693 = vadd.f32 %v1524, %v1692
          %1694 = vmatmul.bf16.gmra.mxu0 %v1052
          %v1695 = vpop.f32.mrf.mxu0
          %v1696 = vadd.f32 %v1527, %v1695
          %v1697 = vpop.f32.mrf.mxu0
          %v1698 = vadd.f32 %v1529, %v1697
          %1699 = vmatmul.bf16.gmra.mxu0 %v1056
          %v1700 = vpop.f32.mrf.mxu0
          %v1701 = vadd.f32 %v1532, %v1700
          %v1702 = vpop.f32.mrf.mxu0
          %v1703 = vadd.f32 %v1534, %v1702
          %1704 = vmatmul.bf16.gmra.mxu0 %v1060
          %v1705 = vpop.f32.mrf.mxu0
          %v1706 = vadd.f32 %v1537, %v1705
          %v1707 = vpop.f32.mrf.mxu0
          %v1708 = vadd.f32 %v1539, %v1707
          %1709 = vmatmul.bf16.gmra.mxu0 %v1064
          %v1710 = vpop.f32.mrf.mxu0
          %v1711 = vadd.f32 %v1542, %v1710
          %v1712 = vpop.f32.mrf.mxu0
          %v1713 = vadd.f32 %v1544, %v1712
          %1714 = vmatmul.bf16.gmra.mxu0 %v1068
          %v1715 = vpop.f32.mrf.mxu0
          %v1716 = vadd.f32 %v1547, %v1715
          %v1717 = vpop.f32.mrf.mxu0
          %v1718 = vadd.f32 %v1549, %v1717
          %1719 = vmatmul.bf16.gmra.mxu0 %v1072
          %v1720 = vpop.f32.mrf.mxu0
          %v1721 = vadd.f32 %v1552, %v1720
          %v1722 = vpop.f32.mrf.mxu0
          %v1723 = vadd.f32 %v1554, %v1722
          %1724 = vmatmul.bf16.gmra.mxu0 %v1076
          %v1725 = vpop.f32.mrf.mxu0
          %v1726 = vadd.f32 %v1557, %v1725
          %v1727 = vpop.f32.mrf.mxu0
          %v1728 = vadd.f32 %v1559, %v1727
          %1729 = vmatmul.bf16.gmra.mxu0 %v1080
          %v1730 = vpop.f32.mrf.mxu0
          %v1731 = vadd.f32 %v1562, %v1730
          %v1732 = vpop.f32.mrf.mxu0
          %v1733 = vadd.f32 %v1564, %v1732
          %1734 = vmatmul.bf16.gmra.mxu0 %v1084
          %v1735 = vpop.f32.mrf.mxu0
          %v1736 = vadd.f32 %v1567, %v1735
          %v1737 = vpop.f32.mrf.mxu0
          %v1738 = vadd.f32 %v1569, %v1737
          %1739 = vmatmul.bf16.gmra.mxu0 %v1088
          %v1740 = vpop.f32.mrf.mxu0
          %v1741 = vadd.f32 %v1572, %v1740
          %v1742 = vpop.f32.mrf.mxu0
          %v1743 = vadd.f32 %v1574, %v1742
          %1744 = vmatmul.bf16.gmra.mxu0 %v1092
          %v1745 = vpop.f32.mrf.mxu0
          %v1746 = vadd.f32 %v1577, %v1745
          %v1747 = vpop.f32.mrf.mxu0
          %v1748 = vadd.f32 %v1579, %v1747
          %1749 = vmatmul.bf16.gmra.mxu0 %v1096
          %v1750 = vpop.f32.mrf.mxu0
          %v1751 = vadd.f32 %v1582, %v1750
          %v1752 = vpop.f32.mrf.mxu0
          %v1753 = vadd.f32 %v1584, %v1752
          %1754 = vmatmul.bf16.gmra.mxu0 %v1100
          %v1755 = vpop.f32.mrf.mxu0
          %v1756 = vadd.f32 %v1587, %v1755
          %v1757 = vpop.f32.mrf.mxu0
          %v1758 = vadd.f32 %v1589, %v1757
          %1759 = vmatmul.bf16.gmra.mxu0 %v1104
          %v1760 = vpop.f32.mrf.mxu0
          %v1761 = vadd.f32 %v1592, %v1760
          %v1762 = vpop.f32.mrf.mxu0
          %v1763 = vadd.f32 %v1594, %v1762
          %1764 = vdwg.mxu0
          %1765 = vmatpush.bf16.msra.mxu0 %v1386
          %1766 = vmatpush.bf16.msra.mxu0 %v1385
          %1767 = vmatpush.bf16.msra.mxu0 %v1384
          %1768 = vmatpush.bf16.msra.mxu0 %v1383
          %1769 = vmatpush.bf16.msra.mxu0 %v1382
          %1770 = vmatpush.bf16.msra.mxu0 %v1381
          %1771 = vmatpush.bf16.msra.mxu0 %v1380
          %1772 = vmatpush.bf16.msra.mxu0 %v1379
          %1773 = vmatmul.bf16.gmra.mxu0 %v981
          %v1774 = vpop.f32.mrf.mxu0
          %v1775 = vadd.f32 %v1606, %v1774
          %v1776 = vpop.f32.mrf.mxu0
          %v1777 = vadd.f32 %v1608, %v1776
          %1778 = vmatmul.bf16.gmra.mxu0 %v985
          %v1779 = vpop.f32.mrf.mxu0
          %v1780 = vadd.f32 %v1611, %v1779
          %v1781 = vpop.f32.mrf.mxu0
          %v1782 = vadd.f32 %v1613, %v1781
          %1783 = vmatmul.bf16.gmra.mxu0 %v989
          %v1784 = vpop.f32.mrf.mxu0
          %v1785 = vadd.f32 %v1616, %v1784
          %v1786 = vpop.f32.mrf.mxu0
          %v1787 = vadd.f32 %v1618, %v1786
          %1788 = vmatmul.bf16.gmra.mxu0 %v993
          %v1789 = vpop.f32.mrf.mxu0
          %v1790 = vadd.f32 %v1621, %v1789
          %v1791 = vpop.f32.mrf.mxu0
          %v1792 = vadd.f32 %v1623, %v1791
          %1793 = vmatmul.bf16.gmra.mxu0 %v997
          %v1794 = vpop.f32.mrf.mxu0
          %v1795 = vadd.f32 %v1626, %v1794
          %v1796 = vpop.f32.mrf.mxu0
          %v1797 = vadd.f32 %v1628, %v1796
          %1798 = vmatmul.bf16.gmra.mxu0 %v1001
          %v1799 = vpop.f32.mrf.mxu0
          %v1800 = vadd.f32 %v1631, %v1799
          %v1801 = vpop.f32.mrf.mxu0
          %v1802 = vadd.f32 %v1633, %v1801
          %1803 = vmatmul.bf16.gmra.mxu0 %v1005
          %v1804 = vpop.f32.mrf.mxu0
          %v1805 = vadd.f32 %v1636, %v1804
          %v1806 = vpop.f32.mrf.mxu0
          %v1807 = vadd.f32 %v1638, %v1806
          %1808 = vmatmul.bf16.gmra.mxu0 %v1009
          %v1809 = vpop.f32.mrf.mxu0
          %v1810 = vadd.f32 %v1641, %v1809
          %v1811 = vpop.f32.mrf.mxu0
          %v1812 = vadd.f32 %v1643, %v1811
          %1813 = vmatmul.bf16.gmra.mxu0 %v1013
          %v1814 = vpop.f32.mrf.mxu0
          %v1815 = vadd.f32 %v1646, %v1814
          %v1816 = vpop.f32.mrf.mxu0
          %v1817 = vadd.f32 %v1648, %v1816
          %1818 = vmatmul.bf16.gmra.mxu0 %v1017
          %v1819 = vpop.f32.mrf.mxu0
          %v1820 = vadd.f32 %v1651, %v1819
          %v1821 = vpop.f32.mrf.mxu0
          %v1822 = vadd.f32 %v1653, %v1821
          %1823 = vmatmul.bf16.gmra.mxu0 %v1021
          %v1824 = vpop.f32.mrf.mxu0
          %v1825 = vadd.f32 %v1656, %v1824
          %v1826 = vpop.f32.mrf.mxu0
          %v1827 = vadd.f32 %v1658, %v1826
          %1828 = vmatmul.bf16.gmra.mxu0 %v1025
          %v1829 = vpop.f32.mrf.mxu0
          %v1830 = vadd.f32 %v1661, %v1829
          %v1831 = vpop.f32.mrf.mxu0
          %v1832 = vadd.f32 %v1663, %v1831
          %1833 = vmatmul.bf16.gmra.mxu0 %v1029
          %v1834 = vpop.f32.mrf.mxu0
          %v1835 = vadd.f32 %v1666, %v1834
          %v1836 = vpop.f32.mrf.mxu0
          %v1837 = vadd.f32 %v1668, %v1836
          %1838 = vmatmul.bf16.gmra.mxu0 %v1033
          %v1839 = vpop.f32.mrf.mxu0
          %v1840 = vadd.f32 %v1671, %v1839
          %v1841 = vpop.f32.mrf.mxu0
          %v1842 = vadd.f32 %v1673, %v1841
          %1843 = vmatmul.bf16.gmra.mxu0 %v1037
          %v1844 = vpop.f32.mrf.mxu0
          %v1845 = vadd.f32 %v1676, %v1844
          %v1846 = vpop.f32.mrf.mxu0
          %v1847 = vadd.f32 %v1678, %v1846
          %1848 = vmatmul.bf16.gmra.mxu0 %v1041
          %v1849 = vpop.f32.mrf.mxu0
          %v1850 = vadd.f32 %v1681, %v1849
          %v1851 = vpop.f32.mrf.mxu0
          %v1852 = vadd.f32 %v1683, %v1851
          %1853 = vmatmul.bf16.gmra.mxu0 %v1045
          %v1854 = vpop.f32.mrf.mxu0
          %v1855 = vadd.f32 %v1686, %v1854
          %v1856 = vpop.f32.mrf.mxu0
          %v1857 = vadd.f32 %v1688, %v1856
          %1858 = vmatmul.bf16.gmra.mxu0 %v1049
          %v1859 = vpop.f32.mrf.mxu0
          %v1860 = vadd.f32 %v1691, %v1859
          %v1861 = vpop.f32.mrf.mxu0
          %v1862 = vadd.f32 %v1693, %v1861
          %1863 = vmatmul.bf16.gmra.mxu0 %v1053
          %v1864 = vpop.f32.mrf.mxu0
          %v1865 = vadd.f32 %v1696, %v1864
          %v1866 = vpop.f32.mrf.mxu0
          %v1867 = vadd.f32 %v1698, %v1866
          %1868 = vmatmul.bf16.gmra.mxu0 %v1057
          %v1869 = vpop.f32.mrf.mxu0
          %v1870 = vadd.f32 %v1701, %v1869
          %v1871 = vpop.f32.mrf.mxu0
          %v1872 = vadd.f32 %v1703, %v1871
          %1873 = vmatmul.bf16.gmra.mxu0 %v1061
          %v1874 = vpop.f32.mrf.mxu0
          %v1875 = vadd.f32 %v1706, %v1874
          %v1876 = vpop.f32.mrf.mxu0
          %v1877 = vadd.f32 %v1708, %v1876
          %1878 = vmatmul.bf16.gmra.mxu0 %v1065
          %v1879 = vpop.f32.mrf.mxu0
          %v1880 = vadd.f32 %v1711, %v1879
          %v1881 = vpop.f32.mrf.mxu0
          %v1882 = vadd.f32 %v1713, %v1881
          %1883 = vmatmul.bf16.gmra.mxu0 %v1069
          %v1884 = vpop.f32.mrf.mxu0
          %v1885 = vadd.f32 %v1716, %v1884
          %v1886 = vpop.f32.mrf.mxu0
          %v1887 = vadd.f32 %v1718, %v1886
          %1888 = vmatmul.bf16.gmra.mxu0 %v1073
          %v1889 = vpop.f32.mrf.mxu0
          %v1890 = vadd.f32 %v1721, %v1889
          %v1891 = vpop.f32.mrf.mxu0
          %v1892 = vadd.f32 %v1723, %v1891
          %1893 = vmatmul.bf16.gmra.mxu0 %v1077
          %v1894 = vpop.f32.mrf.mxu0
          %v1895 = vadd.f32 %v1726, %v1894
          %v1896 = vpop.f32.mrf.mxu0
          %v1897 = vadd.f32 %v1728, %v1896
          %1898 = vmatmul.bf16.gmra.mxu0 %v1081
          %v1899 = vpop.f32.mrf.mxu0
          %v1900 = vadd.f32 %v1731, %v1899
          %v1901 = vpop.f32.mrf.mxu0
          %v1902 = vadd.f32 %v1733, %v1901
          %1903 = vmatmul.bf16.gmra.mxu0 %v1085
          %v1904 = vpop.f32.mrf.mxu0
          %v1905 = vadd.f32 %v1736, %v1904
          %v1906 = vpop.f32.mrf.mxu0
          %v1907 = vadd.f32 %v1738, %v1906
          %1908 = vmatmul.bf16.gmra.mxu0 %v1089
          %v1909 = vpop.f32.mrf.mxu0
          %v1910 = vadd.f32 %v1741, %v1909
          %v1911 = vpop.f32.mrf.mxu0
          %v1912 = vadd.f32 %v1743, %v1911
          %1913 = vmatmul.bf16.gmra.mxu0 %v1093
          %v1914 = vpop.f32.mrf.mxu0
          %v1915 = vadd.f32 %v1746, %v1914
          %v1916 = vpop.f32.mrf.mxu0
          %v1917 = vadd.f32 %v1748, %v1916
          %1918 = vmatmul.bf16.gmra.mxu0 %v1097
          %v1919 = vpop.f32.mrf.mxu0
          %v1920 = vadd.f32 %v1751, %v1919
          %v1921 = vpop.f32.mrf.mxu0
          %v1922 = vadd.f32 %v1753, %v1921
          %1923 = vmatmul.bf16.gmra.mxu0 %v1101
          %v1924 = vpop.f32.mrf.mxu0
          %v1925 = vadd.f32 %v1756, %v1924
          %v1926 = vpop.f32.mrf.mxu0
          %v1927 = vadd.f32 %v1758, %v1926
          %1928 = vmatmul.bf16.gmra.mxu0 %v1105
          %v1929 = vpop.f32.mrf.mxu0
          %v1930 = vadd.f32 %v1761, %v1929
          %v1931 = vpop.f32.mrf.mxu0
          %v1932 = vadd.f32 %v1763, %v1931
          %1933 = vdwg.mxu0
          %1934 = vmatpush.bf16.msra.mxu0 %v1394
          %1935 = vmatpush.bf16.msra.mxu0 %v1393
          %1936 = vmatpush.bf16.msra.mxu0 %v1392
          %1937 = vmatpush.bf16.msra.mxu0 %v1391
          %1938 = vmatpush.bf16.msra.mxu0 %v1390
          %1939 = vmatpush.bf16.msra.mxu0 %v1389
          %1940 = vmatpush.bf16.msra.mxu0 %v1388
          %1941 = vmatpush.bf16.msra.mxu0 %v1387
          %1942 = vmatmul.bf16.gmra.mxu0 %v982
          %v1943 = vpop.f32.mrf.mxu0
          %v1944 = vadd.f32 %v1775, %v1943
          %v1945 = vpop.f32.mrf.mxu0
          %v1946 = vadd.f32 %v1777, %v1945
          %1947 = vmatmul.bf16.gmra.mxu0 %v986
          %v1948 = vpop.f32.mrf.mxu0
          %v1949 = vadd.f32 %v1780, %v1948
          %v1950 = vpop.f32.mrf.mxu0
          %v1951 = vadd.f32 %v1782, %v1950
          %1952 = vmatmul.bf16.gmra.mxu0 %v990
          %v1953 = vpop.f32.mrf.mxu0
          %v1954 = vadd.f32 %v1785, %v1953
          %v1955 = vpop.f32.mrf.mxu0
          %v1956 = vadd.f32 %v1787, %v1955
          %1957 = vmatmul.bf16.gmra.mxu0 %v994
          %v1958 = vpop.f32.mrf.mxu0
          %v1959 = vadd.f32 %v1790, %v1958
          %v1960 = vpop.f32.mrf.mxu0
          %v1961 = vadd.f32 %v1792, %v1960
          %1962 = vmatmul.bf16.gmra.mxu0 %v998
          %v1963 = vpop.f32.mrf.mxu0
          %v1964 = vadd.f32 %v1795, %v1963
          %v1965 = vpop.f32.mrf.mxu0
          %v1966 = vadd.f32 %v1797, %v1965
          %1967 = vmatmul.bf16.gmra.mxu0 %v1002
          %v1968 = vpop.f32.mrf.mxu0
          %v1969 = vadd.f32 %v1800, %v1968
          %v1970 = vpop.f32.mrf.mxu0
          %v1971 = vadd.f32 %v1802, %v1970
          %1972 = vmatmul.bf16.gmra.mxu0 %v1006
          %v1973 = vpop.f32.mrf.mxu0
          %v1974 = vadd.f32 %v1805, %v1973
          %v1975 = vpop.f32.mrf.mxu0
          %v1976 = vadd.f32 %v1807, %v1975
          %1977 = vmatmul.bf16.gmra.mxu0 %v1010
          %v1978 = vpop.f32.mrf.mxu0
          %v1979 = vadd.f32 %v1810, %v1978
          %v1980 = vpop.f32.mrf.mxu0
          %v1981 = vadd.f32 %v1812, %v1980
          %1982 = vmatmul.bf16.gmra.mxu0 %v1014
          %v1983 = vpop.f32.mrf.mxu0
          %v1984 = vadd.f32 %v1815, %v1983
          %v1985 = vpop.f32.mrf.mxu0
          %v1986 = vadd.f32 %v1817, %v1985
          %1987 = vmatmul.bf16.gmra.mxu0 %v1018
          %v1988 = vpop.f32.mrf.mxu0
          %v1989 = vadd.f32 %v1820, %v1988
          %v1990 = vpop.f32.mrf.mxu0
          %v1991 = vadd.f32 %v1822, %v1990
          %1992 = vmatmul.bf16.gmra.mxu0 %v1022
          %v1993 = vpop.f32.mrf.mxu0
          %v1994 = vadd.f32 %v1825, %v1993
          %v1995 = vpop.f32.mrf.mxu0
          %v1996 = vadd.f32 %v1827, %v1995
          %1997 = vmatmul.bf16.gmra.mxu0 %v1026
          %v1998 = vpop.f32.mrf.mxu0
          %v1999 = vadd.f32 %v1830, %v1998
          %v2000 = vpop.f32.mrf.mxu0
          %v2001 = vadd.f32 %v1832, %v2000
          %2002 = vmatmul.bf16.gmra.mxu0 %v1030
          %v2003 = vpop.f32.mrf.mxu0
          %v2004 = vadd.f32 %v1835, %v2003
          %v2005 = vpop.f32.mrf.mxu0
          %v2006 = vadd.f32 %v1837, %v2005
          %2007 = vmatmul.bf16.gmra.mxu0 %v1034
          %v2008 = vpop.f32.mrf.mxu0
          %v2009 = vadd.f32 %v1840, %v2008
          %v2010 = vpop.f32.mrf.mxu0
          %v2011 = vadd.f32 %v1842, %v2010
          %2012 = vmatmul.bf16.gmra.mxu0 %v1038
          %v2013 = vpop.f32.mrf.mxu0
          %v2014 = vadd.f32 %v1845, %v2013
          %v2015 = vpop.f32.mrf.mxu0
          %v2016 = vadd.f32 %v1847, %v2015
          %2017 = vmatmul.bf16.gmra.mxu0 %v1042
          %v2018 = vpop.f32.mrf.mxu0
          %v2019 = vadd.f32 %v1850, %v2018
          %v2020 = vpop.f32.mrf.mxu0
          %v2021 = vadd.f32 %v1852, %v2020
          %2022 = vmatmul.bf16.gmra.mxu0 %v1046
          %v2023 = vpop.f32.mrf.mxu0
          %v2024 = vadd.f32 %v1855, %v2023
          %v2025 = vpop.f32.mrf.mxu0
          %v2026 = vadd.f32 %v1857, %v2025
          %2027 = vmatmul.bf16.gmra.mxu0 %v1050
          %v2028 = vpop.f32.mrf.mxu0
          %v2029 = vadd.f32 %v1860, %v2028
          %v2030 = vpop.f32.mrf.mxu0
          %v2031 = vadd.f32 %v1862, %v2030
          %2032 = vmatmul.bf16.gmra.mxu0 %v1054
          %v2033 = vpop.f32.mrf.mxu0
          %v2034 = vadd.f32 %v1865, %v2033
          %v2035 = vpop.f32.mrf.mxu0
          %v2036 = vadd.f32 %v1867, %v2035
          %2037 = vmatmul.bf16.gmra.mxu0 %v1058
          %v2038 = vpop.f32.mrf.mxu0
          %v2039 = vadd.f32 %v1870, %v2038
          %v2040 = vpop.f32.mrf.mxu0
          %v2041 = vadd.f32 %v1872, %v2040
          %2042 = vmatmul.bf16.gmra.mxu0 %v1062
          %v2043 = vpop.f32.mrf.mxu0
          %v2044 = vadd.f32 %v1875, %v2043
          %v2045 = vpop.f32.mrf.mxu0
          %v2046 = vadd.f32 %v1877, %v2045
          %2047 = vmatmul.bf16.gmra.mxu0 %v1066
          %v2048 = vpop.f32.mrf.mxu0
          %v2049 = vadd.f32 %v1880, %v2048
          %v2050 = vpop.f32.mrf.mxu0
          %v2051 = vadd.f32 %v1882, %v2050
          %2052 = vmatmul.bf16.gmra.mxu0 %v1070
          %v2053 = vpop.f32.mrf.mxu0
          %v2054 = vadd.f32 %v1885, %v2053
          %v2055 = vpop.f32.mrf.mxu0
          %v2056 = vadd.f32 %v1887, %v2055
          %2057 = vmatmul.bf16.gmra.mxu0 %v1074
          %v2058 = vpop.f32.mrf.mxu0
          %v2059 = vadd.f32 %v1890, %v2058
          %v2060 = vpop.f32.mrf.mxu0
          %v2061 = vadd.f32 %v1892, %v2060
          %2062 = vmatmul.bf16.gmra.mxu0 %v1078
          %v2063 = vpop.f32.mrf.mxu0
          %v2064 = vadd.f32 %v1895, %v2063
          %v2065 = vpop.f32.mrf.mxu0
          %v2066 = vadd.f32 %v1897, %v2065
          %2067 = vmatmul.bf16.gmra.mxu0 %v1082
          %v2068 = vpop.f32.mrf.mxu0
          %v2069 = vadd.f32 %v1900, %v2068
          %v2070 = vpop.f32.mrf.mxu0
          %v2071 = vadd.f32 %v1902, %v2070
          %2072 = vmatmul.bf16.gmra.mxu0 %v1086
          %v2073 = vpop.f32.mrf.mxu0
          %v2074 = vadd.f32 %v1905, %v2073
          %v2075 = vpop.f32.mrf.mxu0
          %v2076 = vadd.f32 %v1907, %v2075
          %2077 = vmatmul.bf16.gmra.mxu0 %v1090
          %v2078 = vpop.f32.mrf.mxu0
          %v2079 = vadd.f32 %v1910, %v2078
          %v2080 = vpop.f32.mrf.mxu0
          %v2081 = vadd.f32 %v1912, %v2080
          %2082 = vmatmul.bf16.gmra.mxu0 %v1094
          %v2083 = vpop.f32.mrf.mxu0
          %v2084 = vadd.f32 %v1915, %v2083
          %v2085 = vpop.f32.mrf.mxu0
          %v2086 = vadd.f32 %v1917, %v2085
          %2087 = vmatmul.bf16.gmra.mxu0 %v1098
          %v2088 = vpop.f32.mrf.mxu0
          %v2089 = vadd.f32 %v1920, %v2088
          %v2090 = vpop.f32.mrf.mxu0
          %v2091 = vadd.f32 %v1922, %v2090
          %2092 = vmatmul.bf16.gmra.mxu0 %v1102
          %v2093 = vpop.f32.mrf.mxu0
          %v2094 = vadd.f32 %v1925, %v2093
          %v2095 = vpop.f32.mrf.mxu0
          %v2096 = vadd.f32 %v1927, %v2095
          %2097 = vmatmul.bf16.gmra.mxu0 %v1106
          %v2098 = vpop.f32.mrf.mxu0
          %v2099 = vadd.f32 %v1930, %v2098
          %v2100 = vpop.f32.mrf.mxu0
          %v2101 = vadd.f32 %v1932, %v2100
          %2102 = vdwg.mxu0
          %v2103 = vadd.f32 %v403, %v1944
          %v2104 = vadd.f32 %v404, %v1946
          %v2105 = vadd.f32 %v405, %v1949
          %v2106 = vadd.f32 %v406, %v1951
          %v2107 = vadd.f32 %v407, %v1954
          %v2108 = vadd.f32 %v408, %v1956
          %v2109 = vadd.f32 %v409, %v1959
          %v2110 = vadd.f32 %v410, %v1961
          %v2111 = vadd.f32 %v411, %v1964
          %v2112 = vadd.f32 %v412, %v1966
          %v2113 = vadd.f32 %v413, %v1969
          %v2114 = vadd.f32 %v414, %v1971
          %v2115 = vadd.f32 %v415, %v1974
          %v2116 = vadd.f32 %v416, %v1976
          %v2117 = vadd.f32 %v417, %v1979
          %v2118 = vadd.f32 %v418, %v1981
          %v2119 = vadd.f32 %v419, %v1984
          %v2120 = vadd.f32 %v420, %v1986
          %v2121 = vadd.f32 %v421, %v1989
          %v2122 = vadd.f32 %v422, %v1991
          %v2123 = vadd.f32 %v423, %v1994
          %v2124 = vadd.f32 %v424, %v1996
          %v2125 = vadd.f32 %v425, %v1999
          %v2126 = vadd.f32 %v426, %v2001
          %v2127 = vadd.f32 %v427, %v2004
          %v2128 = vadd.f32 %v428, %v2006
          %v2129 = vadd.f32 %v429, %v2009
          %v2130 = vadd.f32 %v430, %v2011
          %v2131 = vadd.f32 %v431, %v2014
          %v2132 = vadd.f32 %v432, %v2016
          %v2133 = vadd.f32 %v433, %v2019
          %v2134 = vadd.f32 %v434, %v2021
          %v2135 = vadd.f32 %v435, %v2024
          %v2136 = vadd.f32 %v436, %v2026
          %v2137 = vadd.f32 %v437, %v2029
          %v2138 = vadd.f32 %v438, %v2031
          %v2139 = vadd.f32 %v439, %v2034
          %v2140 = vadd.f32 %v440, %v2036
          %v2141 = vadd.f32 %v441, %v2039
          %v2142 = vadd.f32 %v442, %v2041
          %v2143 = vadd.f32 %v443, %v2044
          %v2144 = vadd.f32 %v444, %v2046
          %v2145 = vadd.f32 %v445, %v2049
          %v2146 = vadd.f32 %v446, %v2051
          %v2147 = vadd.f32 %v447, %v2054
          %v2148 = vadd.f32 %v448, %v2056
          %v2149 = vadd.f32 %v449, %v2059
          %v2150 = vadd.f32 %v450, %v2061
          %v2151 = vadd.f32 %v451, %v2064
          %v2152 = vadd.f32 %v452, %v2066
          %v2153 = vadd.f32 %v453, %v2069
          %v2154 = vadd.f32 %v454, %v2071
          %v2155 = vadd.f32 %v455, %v2074
          %v2156 = vadd.f32 %v456, %v2076
          %v2157 = vadd.f32 %v457, %v2079
          %v2158 = vadd.f32 %v458, %v2081
          %v2159 = vadd.f32 %v459, %v2084
          %v2160 = vadd.f32 %v460, %v2086
          %v2161 = vadd.f32 %v461, %v2089
          %v2162 = vadd.f32 %v462, %v2091
          %v2163 = vadd.f32 %v463, %v2094
          %v2164 = vadd.f32 %v464, %v2096
          %v2165 = vadd.f32 %v465, %v2099
          %v2166 = vadd.f32 %v466, %v2101
          %2167 = vst [vmem:[#allocation2] sm:$0xff] %v2103
          %2168 = vst [vmem:[#allocation2 + $0x8] sm:$0xff] %v2104
          %2169 = vst [vmem:[#allocation2 + $0x10] sm:$0xff] %v2105
          %2170 = vst [vmem:[#allocation2 + $0x18] sm:$0xff] %v2106
          %2171 = vst [vmem:[#allocation2 + $0x20] sm:$0xff] %v2107
          %2172 = vst [vmem:[#allocation2 + $0x28] sm:$0xff] %v2108
          %2173 = vst [vmem:[#allocation2 + $0x30] sm:$0xff] %v2109
          %2174 = vst [vmem:[#allocation2 + $0x38] sm:$0xff] %v2110
          %2175 = vst [vmem:[#allocation2 + $0x40] sm:$0xff] %v2111
          %2176 = vst [vmem:[#allocation2 + $0x48] sm:$0xff] %v2112
          %2177 = vst [vmem:[#allocation2 + $0x50] sm:$0xff] %v2113
          %2178 = vst [vmem:[#allocation2 + $0x58] sm:$0xff] %v2114
          %2179 = vst [vmem:[#allocation2 + $0x60] sm:$0xff] %v2115
          %2180 = vst [vmem:[#allocation2 + $0x68] sm:$0xff] %v2116
          %2181 = vst [vmem:[#allocation2 + $0x70] sm:$0xff] %v2117
          %2182 = vst [vmem:[#allocation2 + $0x78] sm:$0xff] %v2118
          %2183 = vst [vmem:[#allocation2 + $0x80] sm:$0xff] %v2119
          %2184 = vst [vmem:[#allocation2 + $0x88] sm:$0xff] %v2120
          %2185 = vst [vmem:[#allocation2 + $0x90] sm:$0xff] %v2121
          %2186 = vst [vmem:[#allocation2 + $0x98] sm:$0xff] %v2122
          %2187 = vst [vmem:[#allocation2 + $0xa0] sm:$0xff] %v2123
          %2188 = vst [vmem:[#allocation2 + $0xa8] sm:$0xff] %v2124
          %2189 = vst [vmem:[#allocation2 + $0xb0] sm:$0xff] %v2125
          %2190 = vst [vmem:[#allocation2 + $0xb8] sm:$0xff] %v2126
          %2191 = vst [vmem:[#allocation2 + $0xc0] sm:$0xff] %v2127
          %2192 = vst [vmem:[#allocation2 + $0xc8] sm:$0xff] %v2128
          %2193 = vst [vmem:[#allocation2 + $0xd0] sm:$0xff] %v2129
          %2194 = vst [vmem:[#allocation2 + $0xd8] sm:$0xff] %v2130
          %2195 = vst [vmem:[#allocation2 + $0xe0] sm:$0xff] %v2131
          %2196 = vst [vmem:[#allocation2 + $0xe8] sm:$0xff] %v2132
          %2197 = vst [vmem:[#allocation2 + $0xf0] sm:$0xff] %v2133
          %2198 = vst [vmem:[#allocation2 + $0xf8] sm:$0xff] %v2134
          %2199 = vst [vmem:[#allocation2 + $0x100] sm:$0xff] %v2135
          %2200 = vst [vmem:[#allocation2 + $0x108] sm:$0xff] %v2136
          %2201 = vst [vmem:[#allocation2 + $0x110] sm:$0xff] %v2137
          %2202 = vst [vmem:[#allocation2 + $0x118] sm:$0xff] %v2138
          %2203 = vst [vmem:[#allocation2 + $0x120] sm:$0xff] %v2139
          %2204 = vst [vmem:[#allocation2 + $0x128] sm:$0xff] %v2140
          %2205 = vst [vmem:[#allocation2 + $0x130] sm:$0xff] %v2141
          %2206 = vst [vmem:[#allocation2 + $0x138] sm:$0xff] %v2142
          %2207 = vst [vmem:[#allocation2 + $0x140] sm:$0xff] %v2143
          %2208 = vst [vmem:[#allocation2 + $0x148] sm:$0xff] %v2144
          %2209 = vst [vmem:[#allocation2 + $0x150] sm:$0xff] %v2145
          %2210 = vst [vmem:[#allocation2 + $0x158] sm:$0xff] %v2146
          %2211 = vst [vmem:[#allocation2 + $0x160] sm:$0xff] %v2147
          %2212 = vst [vmem:[#allocation2 + $0x168] sm:$0xff] %v2148
          %2213 = vst [vmem:[#allocation2 + $0x170] sm:$0xff] %v2149
          %2214 = vst [vmem:[#allocation2 + $0x178] sm:$0xff] %v2150
          %2215 = vst [vmem:[#allocation2 + $0x180] sm:$0xff] %v2151
          %2216 = vst [vmem:[#allocation2 + $0x188] sm:$0xff] %v2152
          %2217 = vst [vmem:[#allocation2 + $0x190] sm:$0xff] %v2153
          %2218 = vst [vmem:[#allocation2 + $0x198] sm:$0xff] %v2154
          %2219 = vst [vmem:[#allocation2 + $0x1a0] sm:$0xff] %v2155
          %2220 = vst [vmem:[#allocation2 + $0x1a8] sm:$0xff] %v2156
          %2221 = vst [vmem:[#allocation2 + $0x1b0] sm:$0xff] %v2157
          %2222 = vst [vmem:[#allocation2 + $0x1b8] sm:$0xff] %v2158
          %2223 = vst [vmem:[#allocation2 + $0x1c0] sm:$0xff] %v2159
          %2224 = vst [vmem:[#allocation2 + $0x1c8] sm:$0xff] %v2160
          %2225 = vst [vmem:[#allocation2 + $0x1d0] sm:$0xff] %v2161
          %2226 = vst [vmem:[#allocation2 + $0x1d8] sm:$0xff] %v2162
          %2227 = vst [vmem:[#allocation2 + $0x1e0] sm:$0xff] %v2163
          %2228 = vst [vmem:[#allocation2 + $0x1e8] sm:$0xff] %v2164
          %2229 = vst [vmem:[#allocation2 + $0x1f0] sm:$0xff] %v2165
          %2230 = vst [vmem:[#allocation2 + $0x1f8] sm:$0xff] %v2166
        $region44: #{gcn_forward.7} parent=31 // pred_fallthru
          _
        %p2231 = scmp.eq.s32.totalorder %s31, 2
        // Predicated region
        $region45: #{gcn_forward.7} parent=31 // pred_check
          %p2232 = pneg %p2231
        $region46: #{gcn_forward.7} parent=31 // pred_check_branch
          %2234 = sbr.rel (%p2232) target = $region48
        $region47: #{gcn_forward.7} parent=31 // pred_region
          %v2235 = vld [vmem:[#allocation2] sm:$0xff]
          %v2236 = vld [vmem:[#allocation2 + $0x8] sm:$0xff]
          %v2237 = vld [vmem:[#allocation2 + $0x10] sm:$0xff]
          %v2238 = vld [vmem:[#allocation2 + $0x18] sm:$0xff]
          %v2239 = vld [vmem:[#allocation2 + $0x20] sm:$0xff]
          %v2240 = vld [vmem:[#allocation2 + $0x28] sm:$0xff]
          %v2241 = vld [vmem:[#allocation2 + $0x30] sm:$0xff]
          %v2242 = vld [vmem:[#allocation2 + $0x38] sm:$0xff]
          %v2243 = vld [vmem:[#allocation2 + $0x40] sm:$0xff]
          %v2244 = vld [vmem:[#allocation2 + $0x48] sm:$0xff]
          %v2245 = vld [vmem:[#allocation2 + $0x50] sm:$0xff]
          %v2246 = vld [vmem:[#allocation2 + $0x58] sm:$0xff]
          %v2247 = vld [vmem:[#allocation2 + $0x60] sm:$0xff]
          %v2248 = vld [vmem:[#allocation2 + $0x68] sm:$0xff]
          %v2249 = vld [vmem:[#allocation2 + $0x70] sm:$0xff]
          %v2250 = vld [vmem:[#allocation2 + $0x78] sm:$0xff]
          %v2251 = vld [vmem:[#allocation2 + $0x80] sm:$0xff]
          %v2252 = vld [vmem:[#allocation2 + $0x88] sm:$0xff]
          %v2253 = vld [vmem:[#allocation2 + $0x90] sm:$0xff]
          %v2254 = vld [vmem:[#allocation2 + $0x98] sm:$0xff]
          %v2255 = vld [vmem:[#allocation2 + $0xa0] sm:$0xff]
          %v2256 = vld [vmem:[#allocation2 + $0xa8] sm:$0xff]
          %v2257 = vld [vmem:[#allocation2 + $0xb0] sm:$0xff]
          %v2258 = vld [vmem:[#allocation2 + $0xb8] sm:$0xff]
          %v2259 = vld [vmem:[#allocation2 + $0xc0] sm:$0xff]
          %v2260 = vld [vmem:[#allocation2 + $0xc8] sm:$0xff]
          %v2261 = vld [vmem:[#allocation2 + $0xd0] sm:$0xff]
          %v2262 = vld [vmem:[#allocation2 + $0xd8] sm:$0xff]
          %v2263 = vld [vmem:[#allocation2 + $0xe0] sm:$0xff]
          %v2264 = vld [vmem:[#allocation2 + $0xe8] sm:$0xff]
          %v2265 = vld [vmem:[#allocation2 + $0xf0] sm:$0xff]
          %v2266 = vld [vmem:[#allocation2 + $0xf8] sm:$0xff]
          %v2267 = vld [vmem:[#allocation2 + $0x100] sm:$0xff]
          %v2268 = vld [vmem:[#allocation2 + $0x108] sm:$0xff]
          %v2269 = vld [vmem:[#allocation2 + $0x110] sm:$0xff]
          %v2270 = vld [vmem:[#allocation2 + $0x118] sm:$0xff]
          %v2271 = vld [vmem:[#allocation2 + $0x120] sm:$0xff]
          %v2272 = vld [vmem:[#allocation2 + $0x128] sm:$0xff]
          %v2273 = vld [vmem:[#allocation2 + $0x130] sm:$0xff]
          %v2274 = vld [vmem:[#allocation2 + $0x138] sm:$0xff]
          %v2275 = vld [vmem:[#allocation2 + $0x140] sm:$0xff]
          %v2276 = vld [vmem:[#allocation2 + $0x148] sm:$0xff]
          %v2277 = vld [vmem:[#allocation2 + $0x150] sm:$0xff]
          %v2278 = vld [vmem:[#allocation2 + $0x158] sm:$0xff]
          %v2279 = vld [vmem:[#allocation2 + $0x160] sm:$0xff]
          %v2280 = vld [vmem:[#allocation2 + $0x168] sm:$0xff]
          %v2281 = vld [vmem:[#allocation2 + $0x170] sm:$0xff]
          %v2282 = vld [vmem:[#allocation2 + $0x178] sm:$0xff]
          %v2283 = vld [vmem:[#allocation2 + $0x180] sm:$0xff]
          %v2284 = vld [vmem:[#allocation2 + $0x188] sm:$0xff]
          %v2285 = vld [vmem:[#allocation2 + $0x190] sm:$0xff]
          %v2286 = vld [vmem:[#allocation2 + $0x198] sm:$0xff]
          %v2287 = vld [vmem:[#allocation2 + $0x1a0] sm:$0xff]
          %v2288 = vld [vmem:[#allocation2 + $0x1a8] sm:$0xff]
          %v2289 = vld [vmem:[#allocation2 + $0x1b0] sm:$0xff]
          %v2290 = vld [vmem:[#allocation2 + $0x1b8] sm:$0xff]
          %v2291 = vld [vmem:[#allocation2 + $0x1c0] sm:$0xff]
          %v2292 = vld [vmem:[#allocation2 + $0x1c8] sm:$0xff]
          %v2293 = vld [vmem:[#allocation2 + $0x1d0] sm:$0xff]
          %v2294 = vld [vmem:[#allocation2 + $0x1d8] sm:$0xff]
          %v2295 = vld [vmem:[#allocation2 + $0x1e0] sm:$0xff]
          %v2296 = vld [vmem:[#allocation2 + $0x1e8] sm:$0xff]
          %v2297 = vld [vmem:[#allocation2 + $0x1f0] sm:$0xff]
          %v2298 = vld [vmem:[#allocation2 + $0x1f8] sm:$0xff]
          %v2299 = vld [vmem:[%s3] sm:$0x1]
          %v2301 = vperm.slane %v2299, 0
          %v2303 = vadd.f32 %v2235, %v2301
          %v2304 = vadd.f32 %v2236, %v2301
          %v2305 = vadd.f32 %v2237, %v2301
          %v2306 = vadd.f32 %v2238, %v2301
          %v2307 = vadd.f32 %v2239, %v2301
          %v2308 = vadd.f32 %v2240, %v2301
          %v2309 = vadd.f32 %v2241, %v2301
          %v2310 = vadd.f32 %v2242, %v2301
          %v2311 = vadd.f32 %v2243, %v2301
          %v2312 = vadd.f32 %v2244, %v2301
          %v2313 = vadd.f32 %v2245, %v2301
          %v2314 = vadd.f32 %v2246, %v2301
          %v2315 = vadd.f32 %v2247, %v2301
          %v2316 = vadd.f32 %v2248, %v2301
          %v2317 = vadd.f32 %v2249, %v2301
          %v2318 = vadd.f32 %v2250, %v2301
          %v2319 = vadd.f32 %v2251, %v2301
          %v2320 = vadd.f32 %v2252, %v2301
          %v2321 = vadd.f32 %v2253, %v2301
          %v2322 = vadd.f32 %v2254, %v2301
          %v2323 = vadd.f32 %v2255, %v2301
          %v2324 = vadd.f32 %v2256, %v2301
          %v2325 = vadd.f32 %v2257, %v2301
          %v2326 = vadd.f32 %v2258, %v2301
          %v2327 = vadd.f32 %v2259, %v2301
          %v2328 = vadd.f32 %v2260, %v2301
          %v2329 = vadd.f32 %v2261, %v2301
          %v2330 = vadd.f32 %v2262, %v2301
          %v2331 = vadd.f32 %v2263, %v2301
          %v2332 = vadd.f32 %v2264, %v2301
          %v2333 = vadd.f32 %v2265, %v2301
          %v2334 = vadd.f32 %v2266, %v2301
          %v2335 = vadd.f32 %v2267, %v2301
          %v2336 = vadd.f32 %v2268, %v2301
          %v2337 = vadd.f32 %v2269, %v2301
          %v2338 = vadd.f32 %v2270, %v2301
          %v2339 = vadd.f32 %v2271, %v2301
          %v2340 = vadd.f32 %v2272, %v2301
          %v2341 = vadd.f32 %v2273, %v2301
          %v2342 = vadd.f32 %v2274, %v2301
          %v2343 = vadd.f32 %v2275, %v2301
          %v2344 = vadd.f32 %v2276, %v2301
          %v2345 = vadd.f32 %v2277, %v2301
          %v2346 = vadd.f32 %v2278, %v2301
          %v2347 = vadd.f32 %v2279, %v2301
          %v2348 = vadd.f32 %v2280, %v2301
          %v2349 = vadd.f32 %v2281, %v2301
          %v2350 = vadd.f32 %v2282, %v2301
          %v2351 = vadd.f32 %v2283, %v2301
          %v2352 = vadd.f32 %v2284, %v2301
          %v2353 = vadd.f32 %v2285, %v2301
          %v2354 = vadd.f32 %v2286, %v2301
          %v2355 = vadd.f32 %v2287, %v2301
          %v2356 = vadd.f32 %v2288, %v2301
          %v2357 = vadd.f32 %v2289, %v2301
          %v2358 = vadd.f32 %v2290, %v2301
          %v2359 = vadd.f32 %v2291, %v2301
          %v2360 = vadd.f32 %v2292, %v2301
          %v2361 = vadd.f32 %v2293, %v2301
          %v2362 = vadd.f32 %v2294, %v2301
          %v2363 = vadd.f32 %v2295, %v2301
          %v2364 = vadd.f32 %v2296, %v2301
          %v2365 = vadd.f32 %v2297, %v2301
          %v2366 = vadd.f32 %v2298, %v2301
          %v2367 = vmax.f32 %v2303, 0.0
          %v2368 = vmax.f32 %v2304, 0.0
          %v2369 = vmax.f32 %v2305, 0.0
          %v2370 = vmax.f32 %v2306, 0.0
          %v2371 = vmax.f32 %v2307, 0.0
          %v2372 = vmax.f32 %v2308, 0.0
          %v2373 = vmax.f32 %v2309, 0.0
          %v2374 = vmax.f32 %v2310, 0.0
          %v2375 = vmax.f32 %v2311, 0.0
          %v2376 = vmax.f32 %v2312, 0.0
          %v2377 = vmax.f32 %v2313, 0.0
          %v2378 = vmax.f32 %v2314, 0.0
          %v2379 = vmax.f32 %v2315, 0.0
          %v2380 = vmax.f32 %v2316, 0.0
          %v2381 = vmax.f32 %v2317, 0.0
          %v2382 = vmax.f32 %v2318, 0.0
          %v2383 = vmax.f32 %v2319, 0.0
          %v2384 = vmax.f32 %v2320, 0.0
          %v2385 = vmax.f32 %v2321, 0.0
          %v2386 = vmax.f32 %v2322, 0.0
          %v2387 = vmax.f32 %v2323, 0.0
          %v2388 = vmax.f32 %v2324, 0.0
          %v2389 = vmax.f32 %v2325, 0.0
          %v2390 = vmax.f32 %v2326, 0.0
          %v2391 = vmax.f32 %v2327, 0.0
          %v2392 = vmax.f32 %v2328, 0.0
          %v2393 = vmax.f32 %v2329, 0.0
          %v2394 = vmax.f32 %v2330, 0.0
          %v2395 = vmax.f32 %v2331, 0.0
          %v2396 = vmax.f32 %v2332, 0.0
          %v2397 = vmax.f32 %v2333, 0.0
          %v2398 = vmax.f32 %v2334, 0.0
          %v2399 = vmax.f32 %v2335, 0.0
          %v2400 = vmax.f32 %v2336, 0.0
          %v2401 = vmax.f32 %v2337, 0.0
          %v2402 = vmax.f32 %v2338, 0.0
          %v2403 = vmax.f32 %v2339, 0.0
          %v2404 = vmax.f32 %v2340, 0.0
          %v2405 = vmax.f32 %v2341, 0.0
          %v2406 = vmax.f32 %v2342, 0.0
          %v2407 = vmax.f32 %v2343, 0.0
          %v2408 = vmax.f32 %v2344, 0.0
          %v2409 = vmax.f32 %v2345, 0.0
          %v2410 = vmax.f32 %v2346, 0.0
          %v2411 = vmax.f32 %v2347, 0.0
          %v2412 = vmax.f32 %v2348, 0.0
          %v2413 = vmax.f32 %v2349, 0.0
          %v2414 = vmax.f32 %v2350, 0.0
          %v2415 = vmax.f32 %v2351, 0.0
          %v2416 = vmax.f32 %v2352, 0.0
          %v2417 = vmax.f32 %v2353, 0.0
          %v2418 = vmax.f32 %v2354, 0.0
          %v2419 = vmax.f32 %v2355, 0.0
          %v2420 = vmax.f32 %v2356, 0.0
          %v2421 = vmax.f32 %v2357, 0.0
          %v2422 = vmax.f32 %v2358, 0.0
          %v2423 = vmax.f32 %v2359, 0.0
          %v2424 = vmax.f32 %v2360, 0.0
          %v2425 = vmax.f32 %v2361, 0.0
          %v2426 = vmax.f32 %v2362, 0.0
          %v2427 = vmax.f32 %v2363, 0.0
          %v2428 = vmax.f32 %v2364, 0.0
          %v2429 = vmax.f32 %v2365, 0.0
          %v2430 = vmax.f32 %v2366, 0.0
          %v2431 = vpack.c.bf16 %v2367, %v2367
          %v2432 = vpack.c.bf16 %v2368, %v2368
          %v2433 = vpack.c.bf16 %v2369, %v2369
          %v2434 = vpack.c.bf16 %v2370, %v2370
          %v2435 = vpack.c.bf16 %v2371, %v2371
          %v2436 = vpack.c.bf16 %v2372, %v2372
          %v2437 = vpack.c.bf16 %v2373, %v2373
          %v2438 = vpack.c.bf16 %v2374, %v2374
          %v2439 = vpack.c.bf16 %v2375, %v2375
          %v2440 = vpack.c.bf16 %v2376, %v2376
          %v2441 = vpack.c.bf16 %v2377, %v2377
          %v2442 = vpack.c.bf16 %v2378, %v2378
          %v2443 = vpack.c.bf16 %v2379, %v2379
          %v2444 = vpack.c.bf16 %v2380, %v2380
          %v2445 = vpack.c.bf16 %v2381, %v2381
          %v2446 = vpack.c.bf16 %v2382, %v2382
          %v2447 = vpack.c.bf16 %v2383, %v2383
          %v2448 = vpack.c.bf16 %v2384, %v2384
          %v2449 = vpack.c.bf16 %v2385, %v2385
          %v2450 = vpack.c.bf16 %v2386, %v2386
          %v2451 = vpack.c.bf16 %v2387, %v2387
          %v2452 = vpack.c.bf16 %v2388, %v2388
          %v2453 = vpack.c.bf16 %v2389, %v2389
          %v2454 = vpack.c.bf16 %v2390, %v2390
          %v2455 = vpack.c.bf16 %v2391, %v2391
          %v2456 = vpack.c.bf16 %v2392, %v2392
          %v2457 = vpack.c.bf16 %v2393, %v2393
          %v2458 = vpack.c.bf16 %v2394, %v2394
          %v2459 = vpack.c.bf16 %v2395, %v2395
          %v2460 = vpack.c.bf16 %v2396, %v2396
          %v2461 = vpack.c.bf16 %v2397, %v2397
          %v2462 = vpack.c.bf16 %v2398, %v2398
          %v2463 = vpack.c.bf16 %v2399, %v2399
          %v2464 = vpack.c.bf16 %v2400, %v2400
          %v2465 = vpack.c.bf16 %v2401, %v2401
          %v2466 = vpack.c.bf16 %v2402, %v2402
          %v2467 = vpack.c.bf16 %v2403, %v2403
          %v2468 = vpack.c.bf16 %v2404, %v2404
          %v2469 = vpack.c.bf16 %v2405, %v2405
          %v2470 = vpack.c.bf16 %v2406, %v2406
          %v2471 = vpack.c.bf16 %v2407, %v2407
          %v2472 = vpack.c.bf16 %v2408, %v2408
          %v2473 = vpack.c.bf16 %v2409, %v2409
          %v2474 = vpack.c.bf16 %v2410, %v2410
          %v2475 = vpack.c.bf16 %v2411, %v2411
          %v2476 = vpack.c.bf16 %v2412, %v2412
          %v2477 = vpack.c.bf16 %v2413, %v2413
          %v2478 = vpack.c.bf16 %v2414, %v2414
          %v2479 = vpack.c.bf16 %v2415, %v2415
          %v2480 = vpack.c.bf16 %v2416, %v2416
          %v2481 = vpack.c.bf16 %v2417, %v2417
          %v2482 = vpack.c.bf16 %v2418, %v2418
          %v2483 = vpack.c.bf16 %v2419, %v2419
          %v2484 = vpack.c.bf16 %v2420, %v2420
          %v2485 = vpack.c.bf16 %v2421, %v2421
          %v2486 = vpack.c.bf16 %v2422, %v2422
          %v2487 = vpack.c.bf16 %v2423, %v2423
          %v2488 = vpack.c.bf16 %v2424, %v2424
          %v2489 = vpack.c.bf16 %v2425, %v2425
          %v2490 = vpack.c.bf16 %v2426, %v2426
          %v2491 = vpack.c.bf16 %v2427, %v2427
          %v2492 = vpack.c.bf16 %v2428, %v2428
          %v2493 = vpack.c.bf16 %v2429, %v2429
          %v2494 = vpack.c.bf16 %v2430, %v2430
          %2495 = vst [vmem:[%s252] sm:$0xf] %v2431
          %2496 = vst [vmem:[%s252 + $0x4] sm:$0xf] %v2432
          %2497 = vst [vmem:[%s252 + $0x8] sm:$0xf] %v2433
          %2498 = vst [vmem:[%s252 + $0xc] sm:$0xf] %v2434
          %2499 = vst [vmem:[%s252 + $0x10] sm:$0xf] %v2435
          %2500 = vst [vmem:[%s252 + $0x14] sm:$0xf] %v2436
          %2501 = vst [vmem:[%s252 + $0x18] sm:$0xf] %v2437
          %2502 = vst [vmem:[%s252 + $0x1c] sm:$0xf] %v2438
          %2503 = vst [vmem:[%s252 + $0x20] sm:$0xf] %v2439
          %2504 = vst [vmem:[%s252 + $0x24] sm:$0xf] %v2440
          %2505 = vst [vmem:[%s252 + $0x28] sm:$0xf] %v2441
          %2506 = vst [vmem:[%s252 + $0x2c] sm:$0xf] %v2442
          %2507 = vst [vmem:[%s252 + $0x30] sm:$0xf] %v2443
          %2508 = vst [vmem:[%s252 + $0x34] sm:$0xf] %v2444
          %2509 = vst [vmem:[%s252 + $0x38] sm:$0xf] %v2445
          %2510 = vst [vmem:[%s252 + $0x3c] sm:$0xf] %v2446
          %2511 = vst [vmem:[%s252 + $0x40] sm:$0xf] %v2447
          %2512 = vst [vmem:[%s252 + $0x44] sm:$0xf] %v2448
          %2513 = vst [vmem:[%s252 + $0x48] sm:$0xf] %v2449
          %2514 = vst [vmem:[%s252 + $0x4c] sm:$0xf] %v2450
          %2515 = vst [vmem:[%s252 + $0x50] sm:$0xf] %v2451
          %2516 = vst [vmem:[%s252 + $0x54] sm:$0xf] %v2452
          %2517 = vst [vmem:[%s252 + $0x58] sm:$0xf] %v2453
          %2518 = vst [vmem:[%s252 + $0x5c] sm:$0xf] %v2454
          %2519 = vst [vmem:[%s252 + $0x60] sm:$0xf] %v2455
          %2520 = vst [vmem:[%s252 + $0x64] sm:$0xf] %v2456
          %2521 = vst [vmem:[%s252 + $0x68] sm:$0xf] %v2457
          %2522 = vst [vmem:[%s252 + $0x6c] sm:$0xf] %v2458
          %2523 = vst [vmem:[%s252 + $0x70] sm:$0xf] %v2459
          %2524 = vst [vmem:[%s252 + $0x74] sm:$0xf] %v2460
          %2525 = vst [vmem:[%s252 + $0x78] sm:$0xf] %v2461
          %2526 = vst [vmem:[%s252 + $0x7c] sm:$0xf] %v2462
          %2527 = vst [vmem:[%s252 + $0x80] sm:$0xf] %v2463
          %2528 = vst [vmem:[%s252 + $0x84] sm:$0xf] %v2464
          %2529 = vst [vmem:[%s252 + $0x88] sm:$0xf] %v2465
          %2530 = vst [vmem:[%s252 + $0x8c] sm:$0xf] %v2466
          %2531 = vst [vmem:[%s252 + $0x90] sm:$0xf] %v2467
          %2532 = vst [vmem:[%s252 + $0x94] sm:$0xf] %v2468
          %2533 = vst [vmem:[%s252 + $0x98] sm:$0xf] %v2469
          %2534 = vst [vmem:[%s252 + $0x9c] sm:$0xf] %v2470
          %2535 = vst [vmem:[%s252 + $0xa0] sm:$0xf] %v2471
          %2536 = vst [vmem:[%s252 + $0xa4] sm:$0xf] %v2472
          %2537 = vst [vmem:[%s252 + $0xa8] sm:$0xf] %v2473
          %2538 = vst [vmem:[%s252 + $0xac] sm:$0xf] %v2474
          %2539 = vst [vmem:[%s252 + $0xb0] sm:$0xf] %v2475
          %2540 = vst [vmem:[%s252 + $0xb4] sm:$0xf] %v2476
          %2541 = vst [vmem:[%s252 + $0xb8] sm:$0xf] %v2477
          %2542 = vst [vmem:[%s252 + $0xbc] sm:$0xf] %v2478
          %2543 = vst [vmem:[%s252 + $0xc0] sm:$0xf] %v2479
          %2544 = vst [vmem:[%s252 + $0xc4] sm:$0xf] %v2480
          %2545 = vst [vmem:[%s252 + $0xc8] sm:$0xf] %v2481
          %2546 = vst [vmem:[%s252 + $0xcc] sm:$0xf] %v2482
          %2547 = vst [vmem:[%s252 + $0xd0] sm:$0xf] %v2483
          %2548 = vst [vmem:[%s252 + $0xd4] sm:$0xf] %v2484
          %2549 = vst [vmem:[%s252 + $0xd8] sm:$0xf] %v2485
          %2550 = vst [vmem:[%s252 + $0xdc] sm:$0xf] %v2486
          %2551 = vst [vmem:[%s252 + $0xe0] sm:$0xf] %v2487
          %2552 = vst [vmem:[%s252 + $0xe4] sm:$0xf] %v2488
          %2553 = vst [vmem:[%s252 + $0xe8] sm:$0xf] %v2489
          %2554 = vst [vmem:[%s252 + $0xec] sm:$0xf] %v2490
          %2555 = vst [vmem:[%s252 + $0xf0] sm:$0xf] %v2491
          %2556 = vst [vmem:[%s252 + $0xf4] sm:$0xf] %v2492
          %2557 = vst [vmem:[%s252 + $0xf8] sm:$0xf] %v2493
          %2558 = vst [vmem:[%s252 + $0xfc] sm:$0xf] %v2494
        $region48: #{gcn_forward.7} parent=31 // pred_fallthru
          _
        %s2559 = smul.u32 64, %s30
        %p2560 = scmp.lt.s32.totalorder %s2559, 191
        %s2561 = scalar_select %p2560, %s2559, 191
        %s2562 = smul.addr %s2561, 4
        %s2563 = scalar_lea.vmem %s4, %s2562
        // Predicated region
        $region49: #{gcn_forward.7} parent=31 // pred_check
          %p2564 = pneg %p142
        $region50: #{gcn_forward.7} parent=31 // pred_check_branch
          %2566 = sbr.rel (%p2564) target = $region52
        $region51: #{gcn_forward.7} parent=31 // pred_region
          %s2567 = smul.u32 64, %s30
        $region52: #{gcn_forward.7} parent=31 // pred_fallthru
          _
      $region32: #{gcn_forward.7} parent=5 // pred_fallthru
        _
      %p2568 = scmp.le.s32.totalorder 2, %s21
      // Predicated region
      $region53: #{gcn_forward.7} parent=5 // pred_check
        %p2569 = pneg %p2568
      $region54: #{gcn_forward.7} parent=5 // pred_check_branch
        %2571 = sbr.rel (%p2569) target = $region56
      $region55: #{gcn_forward.7} parent=5 // pred_region
        %s2572 = ssub.s32 %s21, 2
        // Predicated region
        $region57: #{gcn_forward.7} parent=55 // pred_check
          %p2573 = pneg %p148
        $region58: #{gcn_forward.7} parent=55 // pred_check_branch
          %2575 = sbr.rel (%p2573) target = $region60
        $region59: #{gcn_forward.7} parent=55 // pred_region
          %s2576 = smul.u32 64, %s32
          %p2577 = scmp.lt.s32.totalorder %s2576, 191
          %s2578 = scalar_select %p2577, %s2576, 191
          %s2579 = smul.addr %s2578, 4
          %s2580 = scalar_lea.vmem %s4, %s2579
        $region60: #{gcn_forward.7} parent=55 // pred_fallthru
          _
      $region56: #{gcn_forward.7} parent=5 // pred_fallthru
        _
    $region6: #{gcn_forward.7} parent=1 // loop_footer
      %s25 = sadd.s32 1, %s21
    $region7: #{gcn_forward.7} parent=1 // loop_footer_branch
      %20 = sbr.rel target = $region3
    $region8: #{gcn_forward.7} parent=1 // loop_exit
      _
    %2581 = vsyncpa [#allocation6], 1
    %s2582 = scalar_lea.sflag [#allocation6], 1
    %2583 = vsyncpa %s2582, 1

// kernel: gcn_forward.9
$region0: #{gcn_forward.9}
  #allocation0 [shape = 'u32[]', space=smem, size = 0x4, offset = 0x4, fixed_abs, tag = 'smem constant byte address 0x4 - core index']
  #allocation1 [shape = 'u32[72,128]{1,0:T(1,128)}', space=vmem, size = 0x9000, scoped, tag = 'internal scratch']
  #allocation2 [shape = 'f32[512,128]{1,0:T(8,128)}', space=vmem, size = 0x40000, scoped, tag = 'scratch operand']
  #allocation3 [shape = 's32[1]{0}', space=sflag, size = 0x4, scoped, tag = 'scoped memory for gcn_forward.9']
  #allocation4 [shape = 'u8[2048]{0}', space=smem, size = 0x800, scoped, tag = 'prefetched SMEM operand 0']
  %s0 = inlined_call_operand.vmem [shape: s32[3,3], index: 0, kind: input, shape index: {}]
  %s1 = inlined_call_operand.vmem [shape: bf16[1536,1536], index: 1, kind: input, shape index: {}]
  %s2 = inlined_call_operand.vmem [shape: bf16[1536,128], index: 2, kind: input, shape index: {}]
  %s3 = inlined_call_operand.vmem [shape: f32[1,128], index: 3, kind: input, shape index: {}]
  %s4 = inlined_call_operand.vmem [shape: bf16[1536,128], index: 4, kind: output, shape index: {}]
  %s5 = sld [smem:[#allocation0]]
  $region80: #{gcn_forward.9} parent=0
    _
  %s7 = ssub.s32 1, %s5
  %s8 = scalar_select 0, %s7, %s5
  %s10 = sshll.u32 %s0, 4
  %s11 = int_to_ptr.vmem [resolvable:$true] %s10
  %13 = dma.vmem_to_smem %s11, 64, [#allocation4], [#allocation3]
  %15 = dma.done [#allocation3], 64
  %16 = sfence
  $region1: #{gcn_forward.9} parent=0
    #allocation5 [shape = 'u8[1048576]{0}', space=vmem, size = 0x100000, scoped, tag = 'input window, operand 1']
    loop: start=0, step=1, limit=11
    $region2: #{gcn_forward.9} parent=1 // loop_pre_header
      _
    $region3: #{gcn_forward.9} parent=1 // loop_header
      %s18 = sphi 0, %s22
      %p19 = scmp.ge.s32.totalorder %s18, 11
      %s25 = sphi 0, %s37
      %s26 = sphi 0, %s33
      %s27 = sphi 0, %s25
      %s28 = sphi 0, %s26
      %s29 = sphi 0, %s27
      %s30 = sphi 0, %s28
      %s58 = sphi 0, %s60
      %s61 = sphi 0, %s58
      %s62 = sphi 0, %s61
      %s78 = sphi 0, %s62
      %s82 = sphi 0, %s82
      %s84 = sphi 0, %s82
      %s85 = sphi 0, %s84
      %s99 = sphi 0, %s85
      %s103 = sphi 0, %s103
      %s105 = sphi 0, %s103
      %s106 = sphi 0, %s105
      %s120 = sphi 0, %s106
      %s126 = sphi 0, %s128
      %s129 = sphi 0, %s126
      %s130 = sphi 0, %s129
      %s146 = sphi 0, %s130
    $region4: #{gcn_forward.9} parent=1 // loop_header_branch
      %21 = sbr.rel (%p19) target = $region8
    $region5: #{gcn_forward.9} parent=1 // loop_body
      %s23 = ssub.s32 %s18, 1
      %s24 = ssub.s32 %s18, 2
      %s31 = sadd.s32 1, %s26
      %p32 = scmp.ge.s32.totalorder %s31, 3
      %s33 = scalar_select %p32, 0, %s31
      %s34 = sadd.s32 1, %s25
      %s35 = scalar_select %p32, %s34, %s25
      %p36 = scmp.ge.s32.totalorder %s35, 3
      %s37 = scalar_select %p36, 0, %s35
      %s38 = sshra.s32 %s26, 7
      %s39 = sand.u32 %s26, 127
      %s40 = sadd.s32 %s38, %s25
      %s41 = smul.u32 %s40, 128
      %s42 = sshra.s32 %s26, 7
      %s43 = sand.u32 %s26, 127
      %s44 = sadd.s32 %s41, %s43
      %s45 = sld [smem:[#allocation4 + %s44]]
      %s46 = sshra.s32 %s33, 7
      %s47 = sand.u32 %s33, 127
      %s48 = sadd.s32 %s46, %s37
      %s49 = smul.u32 %s48, 128
      %s50 = sshra.s32 %s33, 7
      %s51 = sand.u32 %s33, 127
      %s52 = sadd.s32 %s49, %s51
      %s53 = sld [smem:[#allocation4 + %s52]]
      %s54 = ssub.s32 %s25, %s37
      %s55 = ssub.s32 %s45, %s53
      %s56 = sor.u32 %s54, %s55
      %p57 = scmp.eq.s32.totalorder %s56, 0
      %s59 = sadd.s32 %s58, 1
      %s60 = scalar_select %p57, %s58, %s59
      %p63 = pneg %p57
      %p64 = scmp.eq.s32.totalorder %s18, 8
      %p65 = por %p63, %p64
      %p66 = scmp.ne.s32.totalorder %s58, %s61
      %p67 = scmp.eq.s32.totalorder %s18, 0
      %p68 = por %p66, %p67
      %p69 = scmp.ne.s32.totalorder %s58, %s61
      %p70 = scmp.eq.s32.totalorder %s23, 8
      %p71 = por %p69, %p70
      %p72 = scmp.ne.s32.totalorder %s61, %s62
      %p73 = scmp.eq.s32.totalorder %s23, 0
      %p74 = por %p72, %p73
      %p75 = scmp.ne.s32.totalorder %s61, %s62
      %p76 = scmp.eq.s32.totalorder %s24, 8
      %p77 = por %p75, %p76
      %p79 = scmp.ne.s32.totalorder %s62, %s78
      %p80 = scmp.eq.s32.totalorder %s24, 0
      %p81 = por %p79, %p80
      %s83 = sadd.s32 %s82, 1
      %p86 = scmp.eq.s32.totalorder %s18, 8
      %p87 = scmp.ne.s32.totalorder %s82, %s84
      %p88 = scmp.eq.s32.totalorder %s18, 0
      %p89 = por %p87, %p88
      %p90 = scmp.ne.s32.totalorder %s82, %s84
      %p91 = scmp.eq.s32.totalorder %s23, 8
      %p92 = por %p90, %p91
      %p93 = scmp.ne.s32.totalorder %s84, %s85
      %p94 = scmp.eq.s32.totalorder %s23, 0
      %p95 = por %p93, %p94
      %p96 = scmp.ne.s32.totalorder %s84, %s85
      %p97 = scmp.eq.s32.totalorder %s24, 8
      %p98 = por %p96, %p97
      %p100 = scmp.ne.s32.totalorder %s85, %s99
      %p101 = scmp.eq.s32.totalorder %s24, 0
      %p102 = por %p100, %p101
      %s104 = sadd.s32 %s103, 1
      %p107 = scmp.eq.s32.totalorder %s18, 8
      %p108 = scmp.ne.s32.totalorder %s103, %s105
      %p109 = scmp.eq.s32.totalorder %s18, 0
      %p110 = por %p108, %p109
      %p111 = scmp.ne.s32.totalorder %s103, %s105
      %p112 = scmp.eq.s32.totalorder %s23, 8
      %p113 = por %p111, %p112
      %p114 = scmp.ne.s32.totalorder %s105, %s106
      %p115 = scmp.eq.s32.totalorder %s23, 0
      %p116 = por %p114, %p115
      %p117 = scmp.ne.s32.totalorder %s105, %s106
      %p118 = scmp.eq.s32.totalorder %s24, 8
      %p119 = por %p117, %p118
      %p121 = scmp.ne.s32.totalorder %s106, %s120
      %p122 = scmp.eq.s32.totalorder %s24, 0
      %p123 = por %p121, %p122
      %s124 = ssub.s32 %s25, %s37
      %p125 = scmp.eq.s32.totalorder %s124, 0
      %s127 = sadd.s32 %s126, 1
      %s128 = scalar_select %p125, %s126, %s127
      %p131 = pneg %p125
      %p132 = scmp.eq.s32.totalorder %s18, 8
      %p133 = por %p131, %p132
      %p134 = scmp.ne.s32.totalorder %s126, %s129
      %p135 = scmp.eq.s32.totalorder %s18, 0
      %p136 = por %p134, %p135
      %p137 = scmp.ne.s32.totalorder %s126, %s129
      %p138 = scmp.eq.s32.totalorder %s23, 8
      %p139 = por %p137, %p138
      %p140 = scmp.ne.s32.totalorder %s129, %s130
      %p141 = scmp.eq.s32.totalorder %s23, 0
      %p142 = por %p140, %p141
      %p143 = scmp.ne.s32.totalorder %s129, %s130
      %p144 = scmp.eq.s32.totalorder %s24, 8
      %p145 = por %p143, %p144
      %p147 = scmp.ne.s32.totalorder %s130, %s146
      %p148 = scmp.eq.s32.totalorder %s24, 0
      %p149 = por %p147, %p148
      %p150 = scmp.le.s32.totalorder 1, %s18
      %p151 = scmp.lt.s32.totalorder %s18, 10
      %p152 = pnand %p150, %p151
      %p153 = pneg %p152
      // Predicated region
      $region9: #{gcn_forward.9} parent=5 // pred_check
        _
      $region10: #{gcn_forward.9} parent=5 // pred_check_branch
        %155 = sbr.rel (%p152) target = $region12
      $region11: #{gcn_forward.9} parent=5 // pred_region
        %s156 = ssub.s32 %s18, 1
        // Predicated region
        $region13: #{gcn_forward.9} parent=11 // pred_check
          %p157 = pneg %p95
        $region14: #{gcn_forward.9} parent=11 // pred_check_branch
          %159 = sbr.rel (%p157) target = $region16
        $region15: #{gcn_forward.9} parent=11 // pred_region
          _
        $region16: #{gcn_forward.9} parent=11 // pred_fallthru
          _
        // Predicated region
        $region17: #{gcn_forward.9} parent=11 // pred_check
          %p160 = pneg %p116
        $region18: #{gcn_forward.9} parent=11 // pred_check_branch
          %162 = sbr.rel (%p160) target = $region20
        $region19: #{gcn_forward.9} parent=11 // pred_region
          _
        $region20: #{gcn_forward.9} parent=11 // pred_fallthru
          _
      $region12: #{gcn_forward.9} parent=5 // pred_fallthru
        _
      %p163 = scmp.lt.s32.totalorder %s18, 9
      // Predicated region
      $region21: #{gcn_forward.9} parent=5 // pred_check
        %p164 = pneg %p163
      $region22: #{gcn_forward.9} parent=5 // pred_check_branch
        %166 = sbr.rel (%p164) target = $region24
      $region23: #{gcn_forward.9} parent=5 // pred_region
        // Predicated region
        $region25: #{gcn_forward.9} parent=23 // pred_check
          %p167 = pneg %p68
        $region26: #{gcn_forward.9} parent=23 // pred_check_branch
          %169 = sbr.rel (%p167) target = $region28
        $region27: #{gcn_forward.9} parent=23 // pred_region
          %s170 = sand.u32 %s58, 1
          %s171 = sand.u32 %s58, 1
          %s172 = smul.addr %s171, 1024
          %s173 = scalar_lea.vmem [#allocation5], %s172
          %s174 = sshra.s32 %s26, 7
          %s175 = sand.u32 %s26, 127
          %s176 = sadd.s32 %s174, %s25
          %s177 = smul.u32 %s176, 128
          %s178 = sshra.s32 %s26, 7
          %s179 = sand.u32 %s26, 127
          %s180 = sadd.s32 %s177, %s179
          %s181 = sld [smem:[#allocation4 + %s180]]
          %s182 = smul.u32 64, %s25
          %s183 = smul.u32 4, %s181
          %s184 = smul.addr %s182, 12
          %s185 = sadd.s32 %s183, %s184
          %s186 = smul.addr %s185, 4
          %s187 = scalar_lea.vmem %s1, %s186
          // Predicated region
          $region29: #{gcn_forward.9} parent=27 // pred_check
            _
          $region30: #{gcn_forward.9} parent=27 // pred_check_branch
            %189 = sbr.rel (0) target = $region32
          $region31: #{gcn_forward.9} parent=27 // pred_region
            // Predicated region
            $region33: #{gcn_forward.9} parent=31 // pred_check
              _
            $region34: #{gcn_forward.9} parent=31 // pred_check_branch
              %191 = sbr.rel (0) target = $region36
            $region35: #{gcn_forward.9} parent=31 // pred_region
              loop: start=0, step=1, limit=1
              $region37: #{gcn_forward.9} parent=35 // loop_pre_header
                _
              $region38: #{gcn_forward.9} parent=35 // loop_header
                %s193 = sphi 0, %s197
                %p194 = scmp.ge.s32.totalorder %s193, 1
                %s198 = sphi %s187, %s187
                %s199 = sphi %s173, %s173
              $region39: #{gcn_forward.9} parent=35 // loop_header_branch
                %196 = sbr.rel (%p194) target = $region43
              $region40: #{gcn_forward.9} parent=35 // loop_body
                %v200 = vld [vmem:[%s198] sm:$0xff]
                %201 = vst [vmem:[%s199] sm:$0xff] %v200
                %v202 = vld [vmem:[%s198 + $0x8] sm:$0xff]
                %203 = vst [vmem:[%s199 + $0x8] sm:$0xff] %v202
                %v204 = vld [vmem:[%s198 + $0x30] sm:$0xff]
                %205 = vst [vmem:[%s199 + $0x10] sm:$0xff] %v204
                %v206 = vld [vmem:[%s198 + $0x38] sm:$0xff]
                %207 = vst [vmem:[%s199 + $0x18] sm:$0xff] %v206
                %v208 = vld [vmem:[%s198 + $0x60] sm:$0xff]
                %209 = vst [vmem:[%s199 + $0x20] sm:$0xff] %v208
                %v210 = vld [vmem:[%s198 + $0x68] sm:$0xff]
                %211 = vst [vmem:[%s199 + $0x28] sm:$0xff] %v210
                %v212 = vld [vmem:[%s198 + $0x90] sm:$0xff]
                %213 = vst [vmem:[%s199 + $0x30] sm:$0xff] %v212
                %v214 = vld [vmem:[%s198 + $0x98] sm:$0xff]
                %215 = vst [vmem:[%s199 + $0x38] sm:$0xff] %v214
                %v216 = vld [vmem:[%s198 + $0xc0] sm:$0xff]
                %217 = vst [vmem:[%s199 + $0x40] sm:$0xff] %v216
                %v218 = vld [vmem:[%s198 + $0xc8] sm:$0xff]
                %219 = vst [vmem:[%s199 + $0x48] sm:$0xff] %v218
                %v220 = vld [vmem:[%s198 + $0xf0] sm:$0xff]
                %221 = vst [vmem:[%s199 + $0x50] sm:$0xff] %v220
                %v222 = vld [vmem:[%s198 + $0xf8] sm:$0xff]
                %223 = vst [vmem:[%s199 + $0x58] sm:$0xff] %v222
                %v224 = vld [vmem:[%s198 + $0x120] sm:$0xff]
                %225 = vst [vmem:[%s199 + $0x60] sm:$0xff] %v224
                %v226 = vld [vmem:[%s198 + $0x128] sm:$0xff]
                %227 = vst [vmem:[%s199 + $0x68] sm:$0xff] %v226
                %v228 = vld [vmem:[%s198 + $0x150] sm:$0xff]
                %229 = vst [vmem:[%s199 + $0x70] sm:$0xff] %v228
                %v230 = vld [vmem:[%s198 + $0x158] sm:$0xff]
                %231 = vst [vmem:[%s199 + $0x78] sm:$0xff] %v230
                %v232 = vld [vmem:[%s198 + $0x180] sm:$0xff]
                %233 = vst [vmem:[%s199 + $0x80] sm:$0xff] %v232
                %v234 = vld [vmem:[%s198 + $0x188] sm:$0xff]
                %235 = vst [vmem:[%s199 + $0x88] sm:$0xff] %v234
                %v236 = vld [vmem:[%s198 + $0x1b0] sm:$0xff]
                %237 = vst [vmem:[%s199 + $0x90] sm:$0xff] %v236
                %v238 = vld [vmem:[%s198 + $0x1b8] sm:$0xff]
                %239 = vst [vmem:[%s199 + $0x98] sm:$0xff] %v238
                %v240 = vld [vmem:[%s198 + $0x1e0] sm:$0xff]
                %241 = vst [vmem:[%s199 + $0xa0] sm:$0xff] %v240
                %v242 = vld [vmem:[%s198 + $0x1e8] sm:$0xff]
                %243 = vst [vmem:[%s199 + $0xa8] sm:$0xff] %v242
                %v244 = vld [vmem:[%s198 + $0x210] sm:$0xff]
                %245 = vst [vmem:[%s199 + $0xb0] sm:$0xff] %v244
                %v246 = vld [vmem:[%s198 + $0x218] sm:$0xff]
                %247 = vst [vmem:[%s199 + $0xb8] sm:$0xff] %v246
                %v248 = vld [vmem:[%s198 + $0x240] sm:$0xff]
                %249 = vst [vmem:[%s199 + $0xc0] sm:$0xff] %v248
                %v250 = vld [vmem:[%s198 + $0x248] sm:$0xff]
                %251 = vst [vmem:[%s199 + $0xc8] sm:$0xff] %v250
                %v252 = vld [vmem:[%s198 + $0x270] sm:$0xff]
                %253 = vst [vmem:[%s199 + $0xd0] sm:$0xff] %v252
                %v254 = vld [vmem:[%s198 + $0x278] sm:$0xff]
                %255 = vst [vmem:[%s199 + $0xd8] sm:$0xff] %v254
                %v256 = vld [vmem:[%s198 + $0x2a0] sm:$0xff]
                %257 = vst [vmem:[%s199 + $0xe0] sm:$0xff] %v256
                %v258 = vld [vmem:[%s198 + $0x2a8] sm:$0xff]
                %259 = vst [vmem:[%s199 + $0xe8] sm:$0xff] %v258
                %v260 = vld [vmem:[%s198 + $0x2d0] sm:$0xff]
                %261 = vst [vmem:[%s199 + $0xf0] sm:$0xff] %v260
                %v262 = vld [vmem:[%s198 + $0x2d8] sm:$0xff]
                %263 = vst [vmem:[%s199 + $0xf8] sm:$0xff] %v262
                %v264 = vld [vmem:[%s198 + $0x300] sm:$0xff]
                %265 = vst [vmem:[%s199 + $0x100] sm:$0xff] %v264
                %v266 = vld [vmem:[%s198 + $0x308] sm:$0xff]
                %267 = vst [vmem:[%s199 + $0x108] sm:$0xff] %v266
                %v268 = vld [vmem:[%s198 + $0x330] sm:$0xff]
                %269 = vst [vmem:[%s199 + $0x110] sm:$0xff] %v268
                %v270 = vld [vmem:[%s198 + $0x338] sm:$0xff]
                %271 = vst [vmem:[%s199 + $0x118] sm:$0xff] %v270
                %v272 = vld [vmem:[%s198 + $0x360] sm:$0xff]
                %273 = vst [vmem:[%s199 + $0x120] sm:$0xff] %v272
                %v274 = vld [vmem:[%s198 + $0x368] sm:$0xff]
                %275 = vst [vmem:[%s199 + $0x128] sm:$0xff] %v274
                %v276 = vld [vmem:[%s198 + $0x390] sm:$0xff]
                %277 = vst [vmem:[%s199 + $0x130] sm:$0xff] %v276
                %v278 = vld [vmem:[%s198 + $0x398] sm:$0xff]
                %279 = vst [vmem:[%s199 + $0x138] sm:$0xff] %v278
                %v280 = vld [vmem:[%s198 + $0x3c0] sm:$0xff]
                %281 = vst [vmem:[%s199 + $0x140] sm:$0xff] %v280
                %v282 = vld [vmem:[%s198 + $0x3c8] sm:$0xff]
                %283 = vst [vmem:[%s199 + $0x148] sm:$0xff] %v282
                %v284 = vld [vmem:[%s198 + $0x3f0] sm:$0xff]
                %285 = vst [vmem:[%s199 + $0x150] sm:$0xff] %v284
                %v286 = vld [vmem:[%s198 + $0x3f8] sm:$0xff]
                %287 = vst [vmem:[%s199 + $0x158] sm:$0xff] %v286
                %v288 = vld [vmem:[%s198 + $0x420] sm:$0xff]
                %289 = vst [vmem:[%s199 + $0x160] sm:$0xff] %v288
                %v290 = vld [vmem:[%s198 + $0x428] sm:$0xff]
                %291 = vst [vmem:[%s199 + $0x168] sm:$0xff] %v290
                %v292 = vld [vmem:[%s198 + $0x450] sm:$0xff]
                %293 = vst [vmem:[%s199 + $0x170] sm:$0xff] %v292
                %v294 = vld [vmem:[%s198 + $0x458] sm:$0xff]
                %295 = vst [vmem:[%s199 + $0x178] sm:$0xff] %v294
                %v296 = vld [vmem:[%s198 + $0x480] sm:$0xff]
                %297 = vst [vmem:[%s199 + $0x180] sm:$0xff] %v296
                %v298 = vld [vmem:[%s198 + $0x488] sm:$0xff]
                %299 = vst [vmem:[%s199 + $0x188] sm:$0xff] %v298
                %v300 = vld [vmem:[%s198 + $0x4b0] sm:$0xff]
                %301 = vst [vmem:[%s199 + $0x190] sm:$0xff] %v300
                %v302 = vld [vmem:[%s198 + $0x4b8] sm:$0xff]
                %303 = vst [vmem:[%s199 + $0x198] sm:$0xff] %v302
                %v304 = vld [vmem:[%s198 + $0x4e0] sm:$0xff]
                %305 = vst [vmem:[%s199 + $0x1a0] sm:$0xff] %v304
                %v306 = vld [vmem:[%s198 + $0x4e8] sm:$0xff]
                %307 = vst [vmem:[%s199 + $0x1a8] sm:$0xff] %v306
                %v308 = vld [vmem:[%s198 + $0x510] sm:$0xff]
                %309 = vst [vmem:[%s199 + $0x1b0] sm:$0xff] %v308
                %v310 = vld [vmem:[%s198 + $0x518] sm:$0xff]
                %311 = vst [vmem:[%s199 + $0x1b8] sm:$0xff] %v310
                %v312 = vld [vmem:[%s198 + $0x540] sm:$0xff]
                %313 = vst [vmem:[%s199 + $0x1c0] sm:$0xff] %v312
                %v314 = vld [vmem:[%s198 + $0x548] sm:$0xff]
                %315 = vst [vmem:[%s199 + $0x1c8] sm:$0xff] %v314
                %v316 = vld [vmem:[%s198 + $0x570] sm:$0xff]
                %317 = vst [vmem:[%s199 + $0x1d0] sm:$0xff] %v316
                %v318 = vld [vmem:[%s198 + $0x578] sm:$0xff]
                %319 = vst [vmem:[%s199 + $0x1d8] sm:$0xff] %v318
                %v320 = vld [vmem:[%s198 + $0x5a0] sm:$0xff]
                %321 = vst [vmem:[%s199 + $0x1e0] sm:$0xff] %v320
                %v322 = vld [vmem:[%s198 + $0x5a8] sm:$0xff]
                %323 = vst [vmem:[%s199 + $0x1e8] sm:$0xff] %v322
                %v324 = vld [vmem:[%s198 + $0x5d0] sm:$0xff]
                %325 = vst [vmem:[%s199 + $0x1f0] sm:$0xff] %v324
                %v326 = vld [vmem:[%s198 + $0x5d8] sm:$0xff]
                %327 = vst [vmem:[%s199 + $0x1f8] sm:$0xff] %v326
                %v328 = vld [vmem:[%s198 + $0x600] sm:$0xff]
                %329 = vst [vmem:[%s199 + $0x200] sm:$0xff] %v328
                %v330 = vld [vmem:[%s198 + $0x608] sm:$0xff]
                %331 = vst [vmem:[%s199 + $0x208] sm:$0xff] %v330
                %v332 = vld [vmem:[%s198 + $0x630] sm:$0xff]
                %333 = vst [vmem:[%s199 + $0x210] sm:$0xff] %v332
                %v334 = vld [vmem:[%s198 + $0x638] sm:$0xff]
                %335 = vst [vmem:[%s199 + $0x218] sm:$0xff] %v334
                %v336 = vld [vmem:[%s198 + $0x660] sm:$0xff]
                %337 = vst [vmem:[%s199 + $0x220] sm:$0xff] %v336
                %v338 = vld [vmem:[%s198 + $0x668] sm:$0xff]
                %339 = vst [vmem:[%s199 + $0x228] sm:$0xff] %v338
                %v340 = vld [vmem:[%s198 + $0x690] sm:$0xff]
                %341 = vst [vmem:[%s199 + $0x230] sm:$0xff] %v340
                %v342 = vld [vmem:[%s198 + $0x698] sm:$0xff]
                %343 = vst [vmem:[%s199 + $0x238] sm:$0xff] %v342
                %v344 = vld [vmem:[%s198 + $0x6c0] sm:$0xff]
                %345 = vst [vmem:[%s199 + $0x240] sm:$0xff] %v344
                %v346 = vld [vmem:[%s198 + $0x6c8] sm:$0xff]
                %347 = vst [vmem:[%s199 + $0x248] sm:$0xff] %v346
                %v348 = vld [vmem:[%s198 + $0x6f0] sm:$0xff]
                %349 = vst [vmem:[%s199 + $0x250] sm:$0xff] %v348
                %v350 = vld [vmem:[%s198 + $0x6f8] sm:$0xff]
                %351 = vst [vmem:[%s199 + $0x258] sm:$0xff] %v350
                %v352 = vld [vmem:[%s198 + $0x720] sm:$0xff]
                %353 = vst [vmem:[%s199 + $0x260] sm:$0xff] %v352
                %v354 = vld [vmem:[%s198 + $0x728] sm:$0xff]
                %355 = vst [vmem:[%s199 + $0x268] sm:$0xff] %v354
                %v356 = vld [vmem:[%s198 + $0x750] sm:$0xff]
                %357 = vst [vmem:[%s199 + $0x270] sm:$0xff] %v356
                %v358 = vld [vmem:[%s198 + $0x758] sm:$0xff]
                %359 = vst [vmem:[%s199 + $0x278] sm:$0xff] %v358
                %v360 = vld [vmem:[%s198 + $0x780] sm:$0xff]
                %361 = vst [vmem:[%s199 + $0x280] sm:$0xff] %v360
                %v362 = vld [vmem:[%s198 + $0x788] sm:$0xff]
                %363 = vst [vmem:[%s199 + $0x288] sm:$0xff] %v362
                %v364 = vld [vmem:[%s198 + $0x7b0] sm:$0xff]
                %365 = vst [vmem:[%s199 + $0x290] sm:$0xff] %v364
                %v366 = vld [vmem:[%s198 + $0x7b8] sm:$0xff]
                %367 = vst [vmem:[%s199 + $0x298] sm:$0xff] %v366
                %v368 = vld [vmem:[%s198 + $0x7e0] sm:$0xff]
                %369 = vst [vmem:[%s199 + $0x2a0] sm:$0xff] %v368
                %v370 = vld [vmem:[%s198 + $0x7e8] sm:$0xff]
                %371 = vst [vmem:[%s199 + $0x2a8] sm:$0xff] %v370
                %v372 = vld [vmem:[%s198 + $0x810] sm:$0xff]
                %373 = vst [vmem:[%s199 + $0x2b0] sm:$0xff] %v372
                %v374 = vld [vmem:[%s198 + $0x818] sm:$0xff]
                %375 = vst [vmem:[%s199 + $0x2b8] sm:$0xff] %v374
                %v376 = vld [vmem:[%s198 + $0x840] sm:$0xff]
                %377 = vst [vmem:[%s199 + $0x2c0] sm:$0xff] %v376
                %v378 = vld [vmem:[%s198 + $0x848] sm:$0xff]
                %379 = vst [vmem:[%s199 + $0x2c8] sm:$0xff] %v378
                %v380 = vld [vmem:[%s198 + $0x870] sm:$0xff]
                %381 = vst [vmem:[%s199 + $0x2d0] sm:$0xff] %v380
                %v382 = vld [vmem:[%s198 + $0x878] sm:$0xff]
                %383 = vst [vmem:[%s199 + $0x2d8] sm:$0xff] %v382
                %v384 = vld [vmem:[%s198 + $0x8a0] sm:$0xff]
                %385 = vst [vmem:[%s199 + $0x2e0] sm:$0xff] %v384
                %v386 = vld [vmem:[%s198 + $0x8a8] sm:$0xff]
                %387 = vst [vmem:[%s199 + $0x2e8] sm:$0xff] %v386
                %v388 = vld [vmem:[%s198 + $0x8d0] sm:$0xff]
                %389 = vst [vmem:[%s199 + $0x2f0] sm:$0xff] %v388
                %v390 = vld [vmem:[%s198 + $0x8d8] sm:$0xff]
                %391 = vst [vmem:[%s199 + $0x2f8] sm:$0xff] %v390
                %v392 = vld [vmem:[%s198 + $0x900] sm:$0xff]
                %393 = vst [vmem:[%s199 + $0x300] sm:$0xff] %v392
                %v394 = vld [vmem:[%s198 + $0x908] sm:$0xff]
                %395 = vst [vmem:[%s199 + $0x308] sm:$0xff] %v394
                %v396 = vld [vmem:[%s198 + $0x930] sm:$0xff]
                %397 = vst [vmem:[%s199 + $0x310] sm:$0xff] %v396
                %v398 = vld [vmem:[%s198 + $0x938] sm:$0xff]
                %399 = vst [vmem:[%s199 + $0x318] sm:$0xff] %v398
                %v400 = vld [vmem:[%s198 + $0x960] sm:$0xff]
                %401 = vst [vmem:[%s199 + $0x320] sm:$0xff] %v400
                %v402 = vld [vmem:[%s198 + $0x968] sm:$0xff]
                %403 = vst [vmem:[%s199 + $0x328] sm:$0xff] %v402
                %v404 = vld [vmem:[%s198 + $0x990] sm:$0xff]
                %405 = vst [vmem:[%s199 + $0x330] sm:$0xff] %v404
                %v406 = vld [vmem:[%s198 + $0x998] sm:$0xff]
                %407 = vst [vmem:[%s199 + $0x338] sm:$0xff] %v406
                %v408 = vld [vmem:[%s198 + $0x9c0] sm:$0xff]
                %409 = vst [vmem:[%s199 + $0x340] sm:$0xff] %v408
                %v410 = vld [vmem:[%s198 + $0x9c8] sm:$0xff]
                %411 = vst [vmem:[%s199 + $0x348] sm:$0xff] %v410
                %v412 = vld [vmem:[%s198 + $0x9f0] sm:$0xff]
                %413 = vst [vmem:[%s199 + $0x350] sm:$0xff] %v412
                %v414 = vld [vmem:[%s198 + $0x9f8] sm:$0xff]
                %415 = vst [vmem:[%s199 + $0x358] sm:$0xff] %v414
                %v416 = vld [vmem:[%s198 + $0xa20] sm:$0xff]
                %417 = vst [vmem:[%s199 + $0x360] sm:$0xff] %v416
                %v418 = vld [vmem:[%s198 + $0xa28] sm:$0xff]
                %419 = vst [vmem:[%s199 + $0x368] sm:$0xff] %v418
                %v420 = vld [vmem:[%s198 + $0xa50] sm:$0xff]
                %421 = vst [vmem:[%s199 + $0x370] sm:$0xff] %v420
                %v422 = vld [vmem:[%s198 + $0xa58] sm:$0xff]
                %423 = vst [vmem:[%s199 + $0x378] sm:$0xff] %v422
                %v424 = vld [vmem:[%s198 + $0xa80] sm:$0xff]
                %425 = vst [vmem:[%s199 + $0x380] sm:$0xff] %v424
                %v426 = vld [vmem:[%s198 + $0xa88] sm:$0xff]
                %427 = vst [vmem:[%s199 + $0x388] sm:$0xff] %v426
                %v428 = vld [vmem:[%s198 + $0xab0] sm:$0xff]
                %429 = vst [vmem:[%s199 + $0x390] sm:$0xff] %v428
                %v430 = vld [vmem:[%s198 + $0xab8] sm:$0xff]
                %431 = vst [vmem:[%s199 + $0x398] sm:$0xff] %v430
                %v432 = vld [vmem:[%s198 + $0xae0] sm:$0xff]
                %433 = vst [vmem:[%s199 + $0x3a0] sm:$0xff] %v432
                %v434 = vld [vmem:[%s198 + $0xae8] sm:$0xff]
                %435 = vst [vmem:[%s199 + $0x3a8] sm:$0xff] %v434
                %v436 = vld [vmem:[%s198 + $0xb10] sm:$0xff]
                %437 = vst [vmem:[%s199 + $0x3b0] sm:$0xff] %v436
                %v438 = vld [vmem:[%s198 + $0xb18] sm:$0xff]
                %439 = vst [vmem:[%s199 + $0x3b8] sm:$0xff] %v438
                %v440 = vld [vmem:[%s198 + $0xb40] sm:$0xff]
                %441 = vst [vmem:[%s199 + $0x3c0] sm:$0xff] %v440
                %v442 = vld [vmem:[%s198 + $0xb48] sm:$0xff]
                %443 = vst [vmem:[%s199 + $0x3c8] sm:$0xff] %v442
                %v444 = vld [vmem:[%s198 + $0xb70] sm:$0xff]
                %445 = vst [vmem:[%s199 + $0x3d0] sm:$0xff] %v444
                %v446 = vld [vmem:[%s198 + $0xb78] sm:$0xff]
                %447 = vst [vmem:[%s199 + $0x3d8] sm:$0xff] %v446
                %v448 = vld [vmem:[%s198 + $0xba0] sm:$0xff]
                %449 = vst [vmem:[%s199 + $0x3e0] sm:$0xff] %v448
                %v450 = vld [vmem:[%s198 + $0xba8] sm:$0xff]
                %451 = vst [vmem:[%s199 + $0x3e8] sm:$0xff] %v450
                %v452 = vld [vmem:[%s198 + $0xbd0] sm:$0xff]
                %453 = vst [vmem:[%s199 + $0x3f0] sm:$0xff] %v452
                %v454 = vld [vmem:[%s198 + $0xbd8] sm:$0xff]
                %455 = vst [vmem:[%s199 + $0x3f8] sm:$0xff] %v454
              $region41: #{gcn_forward.9} parent=35 // loop_footer
                %s197 = sadd.s32 1, %s193
              $region42: #{gcn_forward.9} parent=35 // loop_footer_branch
                %192 = sbr.rel target = $region38
              $region43: #{gcn_forward.9} parent=35 // loop_exit
                _
            $region36: #{gcn_forward.9} parent=31 // pred_fallthru
              _
            // Predicated region
            $region44: #{gcn_forward.9} parent=31 // pred_check
              _
            $region45: #{gcn_forward.9} parent=31 // pred_check_branch
              %457 = sbr.rel target = $region47
            $region46: #{gcn_forward.9} parent=31 // pred_region
              _
            $region47: #{gcn_forward.9} parent=31 // pred_fallthru
              _
          $region32: #{gcn_forward.9} parent=27 // pred_fallthru
            _
          %458 = vnop
        $region28: #{gcn_forward.9} parent=23 // pred_fallthru
          _
      $region24: #{gcn_forward.9} parent=5 // pred_fallthru
        _
      %p459 = scmp.le.s32.totalorder 1, %s18
      %p460 = scmp.lt.s32.totalorder %s18, 10
      %p461 = pnand %p459, %p460
      %p462 = pneg %p461
      // Predicated region
      $region48: #{gcn_forward.9} parent=5 // pred_check
        _
      $region49: #{gcn_forward.9} parent=5 // pred_check_branch
        %464 = sbr.rel (%p461) target = $region51
      $region50: #{gcn_forward.9} parent=5 // pred_region
        %s465 = ssub.s32 %s18, 1
        %s466 = sand.u32 %s61, 1
        %s467 = sand.u32 %s61, 1
        %s468 = smul.addr %s467, 1024
        %s469 = scalar_lea.vmem [#allocation5], %s468
        // Predicated region
        $region52: #{gcn_forward.9} parent=50 // pred_check
          %p470 = pneg %p74
        $region53: #{gcn_forward.9} parent=50 // pred_check_branch
          %472 = sbr.rel (%p470) target = $region55
        $region54: #{gcn_forward.9} parent=50 // pred_region
          _
        $region55: #{gcn_forward.9} parent=50 // pred_fallthru
          _
        %s473 = sand.u32 %s61, 1
        %s474 = sand.u32 %s61, 1
        %s475 = smul.addr %s474, 1024
        %s476 = scalar_lea.vmem [#allocation5], %s475
        %p477 = pneg %p74
        %p478 = pneg %p71
        %p479 = pneg %p95
        %p480 = pneg %p92
        %p481 = pneg %p116
        %p482 = pneg %p113
        %p483 = pneg %p142
        %p484 = pneg %p139
        %s485 = smul.u32 64, %s27
        %p486 = scmp.lt.s32.totalorder %s485, 191
        %s487 = scalar_select %p486, %s485, 191
        %s488 = smul.addr %s487, 4
        %s489 = scalar_lea.vmem %s4, %s488
        %s490 = sshra.s32 %s28, 7
        %s491 = sand.u32 %s28, 127
        %s492 = sadd.s32 %s490, %s27
        %s493 = smul.u32 %s492, 128
        %s494 = sshra.s32 %s28, 7
        %s495 = sand.u32 %s28, 127
        %s496 = sadd.s32 %s493, %s495
        %s497 = sld [smem:[#allocation4 + %s496]]
        %s498 = smul.u32 64, %s27
        %s499 = smul.u32 4, %s497
        %s500 = smul.u32 64, %s27
        %p501 = scmp.lt.s32.totalorder %s500, 191
        %s502 = scalar_select %p501, %s500, 191
        %s503 = smul.addr %s502, 4
        %s504 = scalar_lea.vmem %s4, %s503
        %s505 = smul.u32 64, %s27
        %p506 = scmp.eq.s32.totalorder %s28, 0
        // Predicated region
        $region56: #{gcn_forward.9} parent=50 // pred_check
          %p507 = pneg %p506
        $region57: #{gcn_forward.9} parent=50 // pred_check_branch
          %509 = sbr.rel (%p507) target = $region59
        $region58: #{gcn_forward.9} parent=50 // pred_region
          %510 = vst [vmem:[#allocation2] sm:$0xff] 0.0
          %511 = vst [vmem:[#allocation2 + $0x8] sm:$0xff] 0.0
          %512 = vst [vmem:[#allocation2 + $0x10] sm:$0xff] 0.0
          %513 = vst [vmem:[#allocation2 + $0x18] sm:$0xff] 0.0
          %514 = vst [vmem:[#allocation2 + $0x20] sm:$0xff] 0.0
          %515 = vst [vmem:[#allocation2 + $0x28] sm:$0xff] 0.0
          %516 = vst [vmem:[#allocation2 + $0x30] sm:$0xff] 0.0
          %517 = vst [vmem:[#allocation2 + $0x38] sm:$0xff] 0.0
          %518 = vst [vmem:[#allocation2 + $0x40] sm:$0xff] 0.0
          %519 = vst [vmem:[#allocation2 + $0x48] sm:$0xff] 0.0
          %520 = vst [vmem:[#allocation2 + $0x50] sm:$0xff] 0.0
          %521 = vst [vmem:[#allocation2 + $0x58] sm:$0xff] 0.0
          %522 = vst [vmem:[#allocation2 + $0x60] sm:$0xff] 0.0
          %523 = vst [vmem:[#allocation2 + $0x68] sm:$0xff] 0.0
          %524 = vst [vmem:[#allocation2 + $0x70] sm:$0xff] 0.0
          %525 = vst [vmem:[#allocation2 + $0x78] sm:$0xff] 0.0
          %526 = vst [vmem:[#allocation2 + $0x80] sm:$0xff] 0.0
          %527 = vst [vmem:[#allocation2 + $0x88] sm:$0xff] 0.0
          %528 = vst [vmem:[#allocation2 + $0x90] sm:$0xff] 0.0
          %529 = vst [vmem:[#allocation2 + $0x98] sm:$0xff] 0.0
          %530 = vst [vmem:[#allocation2 + $0xa0] sm:$0xff] 0.0
          %531 = vst [vmem:[#allocation2 + $0xa8] sm:$0xff] 0.0
          %532 = vst [vmem:[#allocation2 + $0xb0] sm:$0xff] 0.0
          %533 = vst [vmem:[#allocation2 + $0xb8] sm:$0xff] 0.0
          %534 = vst [vmem:[#allocation2 + $0xc0] sm:$0xff] 0.0
          %535 = vst [vmem:[#allocation2 + $0xc8] sm:$0xff] 0.0
          %536 = vst [vmem:[#allocation2 + $0xd0] sm:$0xff] 0.0
          %537 = vst [vmem:[#allocation2 + $0xd8] sm:$0xff] 0.0
          %538 = vst [vmem:[#allocation2 + $0xe0] sm:$0xff] 0.0
          %539 = vst [vmem:[#allocation2 + $0xe8] sm:$0xff] 0.0
          %540 = vst [vmem:[#allocation2 + $0xf0] sm:$0xff] 0.0
          %541 = vst [vmem:[#allocation2 + $0xf8] sm:$0xff] 0.0
          %542 = vst [vmem:[#allocation2 + $0x100] sm:$0xff] 0.0
          %543 = vst [vmem:[#allocation2 + $0x108] sm:$0xff] 0.0
          %544 = vst [vmem:[#allocation2 + $0x110] sm:$0xff] 0.0
          %545 = vst [vmem:[#allocation2 + $0x118] sm:$0xff] 0.0
          %546 = vst [vmem:[#allocation2 + $0x120] sm:$0xff] 0.0
          %547 = vst [vmem:[#allocation2 + $0x128] sm:$0xff] 0.0
          %548 = vst [vmem:[#allocation2 + $0x130] sm:$0xff] 0.0
          %549 = vst [vmem:[#allocation2 + $0x138] sm:$0xff] 0.0
          %550 = vst [vmem:[#allocation2 + $0x140] sm:$0xff] 0.0
          %551 = vst [vmem:[#allocation2 + $0x148] sm:$0xff] 0.0
          %552 = vst [vmem:[#allocation2 + $0x150] sm:$0xff] 0.0
          %553 = vst [vmem:[#allocation2 + $0x158] sm:$0xff] 0.0
          %554 = vst [vmem:[#allocation2 + $0x160] sm:$0xff] 0.0
          %555 = vst [vmem:[#allocation2 + $0x168] sm:$0xff] 0.0
          %556 = vst [vmem:[#allocation2 + $0x170] sm:$0xff] 0.0
          %557 = vst [vmem:[#allocation2 + $0x178] sm:$0xff] 0.0
          %558 = vst [vmem:[#allocation2 + $0x180] sm:$0xff] 0.0
          %559 = vst [vmem:[#allocation2 + $0x188] sm:$0xff] 0.0
          %560 = vst [vmem:[#allocation2 + $0x190] sm:$0xff] 0.0
          %561 = vst [vmem:[#allocation2 + $0x198] sm:$0xff] 0.0
          %562 = vst [vmem:[#allocation2 + $0x1a0] sm:$0xff] 0.0
          %563 = vst [vmem:[#allocation2 + $0x1a8] sm:$0xff] 0.0
          %564 = vst [vmem:[#allocation2 + $0x1b0] sm:$0xff] 0.0
          %565 = vst [vmem:[#allocation2 + $0x1b8] sm:$0xff] 0.0
          %566 = vst [vmem:[#allocation2 + $0x1c0] sm:$0xff] 0.0
          %567 = vst [vmem:[#allocation2 + $0x1c8] sm:$0xff] 0.0
          %568 = vst [vmem:[#allocation2 + $0x1d0] sm:$0xff] 0.0
          %569 = vst [vmem:[#allocation2 + $0x1d8] sm:$0xff] 0.0
          %570 = vst [vmem:[#allocation2 + $0x1e0] sm:$0xff] 0.0
          %571 = vst [vmem:[#allocation2 + $0x1e8] sm:$0xff] 0.0
          %572 = vst [vmem:[#allocation2 + $0x1f0] sm:$0xff] 0.0
          %573 = vst [vmem:[#allocation2 + $0x1f8] sm:$0xff] 0.0
        $region59: #{gcn_forward.9} parent=50 // pred_fallthru
          _
        %s574 = sshra.s32 %s28, 7
        %s575 = sand.u32 %s28, 127
        %s576 = sadd.s32 %s574, %s27
        %s577 = smul.u32 %s576, 128
        %s578 = sshra.s32 %s28, 7
        %s579 = sand.u32 %s28, 127
        %s580 = sadd.s32 %s577, %s579
        %s581 = sld [smem:[#allocation4 + %s580]]
        %p582 = scmp.eq.s32.totalorder %s581, %s28
        // Predicated region
        $region60: #{gcn_forward.9} parent=50 // pred_check
          %p583 = pneg %p582
        $region61: #{gcn_forward.9} parent=50 // pred_check_branch
          %585 = sbr.rel (%p583) target = $region63
        $region62: #{gcn_forward.9} parent=50 // pred_region
          %s586 = smul.u32 %s28, 512
          %s587 = sshra.s32 %s586, 3
          %s588 = sand.u32 %s586, 7
          %s589 = smul.addr %s587, 4
          %s590 = scalar_lea.vmem %s2, %s589
          %v591 = vld [vmem:[%s590] sm:$0xf]
          %v592 = vld [vmem:[%s590 + $0x4] sm:$0xf]
          %v593 = vld [vmem:[%s590 + $0x8] sm:$0xf]
          %v594 = vld [vmem:[%s590 + $0xc] sm:$0xf]
          %v595 = vld [vmem:[%s590 + $0x10] sm:$0xf]
          %v596 = vld [vmem:[%s590 + $0x14] sm:$0xf]
          %v597 = vld [vmem:[%s590 + $0x18] sm:$0xf]
          %v598 = vld [vmem:[%s590 + $0x1c] sm:$0xf]
          %v599 = vld [vmem:[%s590 + $0x20] sm:$0xf]
          %v600 = vld [vmem:[%s590 + $0x24] sm:$0xf]
          %v601 = vld [vmem:[%s590 + $0x28] sm:$0xf]
          %v602 = vld [vmem:[%s590 + $0x2c] sm:$0xf]
          %v603 = vld [vmem:[%s590 + $0x30] sm:$0xf]
          %v604 = vld [vmem:[%s590 + $0x34] sm:$0xf]
          %v605 = vld [vmem:[%s590 + $0x38] sm:$0xf]
          %v606 = vld [vmem:[%s590 + $0x3c] sm:$0xf]
          %v607 = vld [vmem:[%s590 + $0x40] sm:$0xf]
          %v608 = vld [vmem:[%s590 + $0x44] sm:$0xf]
          %v609 = vld [vmem:[%s590 + $0x48] sm:$0xf]
          %v610 = vld [vmem:[%s590 + $0x4c] sm:$0xf]
          %v611 = vld [vmem:[%s590 + $0x50] sm:$0xf]
          %v612 = vld [vmem:[%s590 + $0x54] sm:$0xf]
          %v613 = vld [vmem:[%s590 + $0x58] sm:$0xf]
          %v614 = vld [vmem:[%s590 + $0x5c] sm:$0xf]
          %v615 = vld [vmem:[%s590 + $0x60] sm:$0xf]
          %v616 = vld [vmem:[%s590 + $0x64] sm:$0xf]
          %v617 = vld [vmem:[%s590 + $0x68] sm:$0xf]
          %v618 = vld [vmem:[%s590 + $0x6c] sm:$0xf]
          %v619 = vld [vmem:[%s590 + $0x70] sm:$0xf]
          %v620 = vld [vmem:[%s590 + $0x74] sm:$0xf]
          %v621 = vld [vmem:[%s590 + $0x78] sm:$0xf]
          %v622 = vld [vmem:[%s590 + $0x7c] sm:$0xf]
          %v623 = vld [vmem:[%s590 + $0x80] sm:$0xf]
          %v624 = vld [vmem:[%s590 + $0x84] sm:$0xf]
          %v625 = vld [vmem:[%s590 + $0x88] sm:$0xf]
          %v626 = vld [vmem:[%s590 + $0x8c] sm:$0xf]
          %v627 = vld [vmem:[%s590 + $0x90] sm:$0xf]
          %v628 = vld [vmem:[%s590 + $0x94] sm:$0xf]
          %v629 = vld [vmem:[%s590 + $0x98] sm:$0xf]
          %v630 = vld [vmem:[%s590 + $0x9c] sm:$0xf]
          %v631 = vld [vmem:[%s590 + $0xa0] sm:$0xf]
          %v632 = vld [vmem:[%s590 + $0xa4] sm:$0xf]
          %v633 = vld [vmem:[%s590 + $0xa8] sm:$0xf]
          %v634 = vld [vmem:[%s590 + $0xac] sm:$0xf]
          %v635 = vld [vmem:[%s590 + $0xb0] sm:$0xf]
          %v636 = vld [vmem:[%s590 + $0xb4] sm:$0xf]
          %v637 = vld [vmem:[%s590 + $0xb8] sm:$0xf]
          %v638 = vld [vmem:[%s590 + $0xbc] sm:$0xf]
          %v639 = vld [vmem:[%s590 + $0xc0] sm:$0xf]
          %v640 = vld [vmem:[%s590 + $0xc4] sm:$0xf]
          %v641 = vld [vmem:[%s590 + $0xc8] sm:$0xf]
          %v642 = vld [vmem:[%s590 + $0xcc] sm:$0xf]
          %v643 = vld [vmem:[%s590 + $0xd0] sm:$0xf]
          %v644 = vld [vmem:[%s590 + $0xd4] sm:$0xf]
          %v645 = vld [vmem:[%s590 + $0xd8] sm:$0xf]
          %v646 = vld [vmem:[%s590 + $0xdc] sm:$0xf]
          %v647 = vld [vmem:[%s590 + $0xe0] sm:$0xf]
          %v648 = vld [vmem:[%s590 + $0xe4] sm:$0xf]
          %v649 = vld [vmem:[%s590 + $0xe8] sm:$0xf]
          %v650 = vld [vmem:[%s590 + $0xec] sm:$0xf]
          %v651 = vld [vmem:[%s590 + $0xf0] sm:$0xf]
          %v652 = vld [vmem:[%s590 + $0xf4] sm:$0xf]
          %v653 = vld [vmem:[%s590 + $0xf8] sm:$0xf]
          %v654 = vld [vmem:[%s590 + $0xfc] sm:$0xf]
          %v655 = vld [vmem:[#allocation2] sm:$0xff]
          %v656 = vld [vmem:[#allocation2 + $0x8] sm:$0xff]
          %v657 = vld [vmem:[#allocation2 + $0x10] sm:$0xff]
          %v658 = vld [vmem:[#allocation2 + $0x18] sm:$0xff]
          %v659 = vld [vmem:[#allocation2 + $0x20] sm:$0xff]
          %v660 = vld [vmem:[#allocation2 + $0x28] sm:$0xff]
          %v661 = vld [vmem:[#allocation2 + $0x30] sm:$0xff]
          %v662 = vld [vmem:[#allocation2 + $0x38] sm:$0xff]
          %v663 = vld [vmem:[#allocation2 + $0x40] sm:$0xff]
          %v664 = vld [vmem:[#allocation2 + $0x48] sm:$0xff]
          %v665 = vld [vmem:[#allocation2 + $0x50] sm:$0xff]
          %v666 = vld [vmem:[#allocation2 + $0x58] sm:$0xff]
          %v667 = vld [vmem:[#allocation2 + $0x60] sm:$0xff]
          %v668 = vld [vmem:[#allocation2 + $0x68] sm:$0xff]
          %v669 = vld [vmem:[#allocation2 + $0x70] sm:$0xff]
          %v670 = vld [vmem:[#allocation2 + $0x78] sm:$0xff]
          %v671 = vld [vmem:[#allocation2 + $0x80] sm:$0xff]
          %v672 = vld [vmem:[#allocation2 + $0x88] sm:$0xff]
          %v673 = vld [vmem:[#allocation2 + $0x90] sm:$0xff]
          %v674 = vld [vmem:[#allocation2 + $0x98] sm:$0xff]
          %v675 = vld [vmem:[#allocation2 + $0xa0] sm:$0xff]
          %v676 = vld [vmem:[#allocation2 + $0xa8] sm:$0xff]
          %v677 = vld [vmem:[#allocation2 + $0xb0] sm:$0xff]
          %v678 = vld [vmem:[#allocation2 + $0xb8] sm:$0xff]
          %v679 = vld [vmem:[#allocation2 + $0xc0] sm:$0xff]
          %v680 = vld [vmem:[#allocation2 + $0xc8] sm:$0xff]
          %v681 = vld [vmem:[#allocation2 + $0xd0] sm:$0xff]
          %v682 = vld [vmem:[#allocation2 + $0xd8] sm:$0xff]
          %v683 = vld [vmem:[#allocation2 + $0xe0] sm:$0xff]
          %v684 = vld [vmem:[#allocation2 + $0xe8] sm:$0xff]
          %v685 = vld [vmem:[#allocation2 + $0xf0] sm:$0xff]
          %v686 = vld [vmem:[#allocation2 + $0xf8] sm:$0xff]
          %v687 = vld [vmem:[#allocation2 + $0x100] sm:$0xff]
          %v688 = vld [vmem:[#allocation2 + $0x108] sm:$0xff]
          %v689 = vld [vmem:[#allocation2 + $0x110] sm:$0xff]
          %v690 = vld [vmem:[#allocation2 + $0x118] sm:$0xff]
          %v691 = vld [vmem:[#allocation2 + $0x120] sm:$0xff]
          %v692 = vld [vmem:[#allocation2 + $0x128] sm:$0xff]
          %v693 = vld [vmem:[#allocation2 + $0x130] sm:$0xff]
          %v694 = vld [vmem:[#allocation2 + $0x138] sm:$0xff]
          %v695 = vld [vmem:[#allocation2 + $0x140] sm:$0xff]
          %v696 = vld [vmem:[#allocation2 + $0x148] sm:$0xff]
          %v697 = vld [vmem:[#allocation2 + $0x150] sm:$0xff]
          %v698 = vld [vmem:[#allocation2 + $0x158] sm:$0xff]
          %v699 = vld [vmem:[#allocation2 + $0x160] sm:$0xff]
          %v700 = vld [vmem:[#allocation2 + $0x168] sm:$0xff]
          %v701 = vld [vmem:[#allocation2 + $0x170] sm:$0xff]
          %v702 = vld [vmem:[#allocation2 + $0x178] sm:$0xff]
          %v703 = vld [vmem:[#allocation2 + $0x180] sm:$0xff]
          %v704 = vld [vmem:[#allocation2 + $0x188] sm:$0xff]
          %v705 = vld [vmem:[#allocation2 + $0x190] sm:$0xff]
          %v706 = vld [vmem:[#allocation2 + $0x198] sm:$0xff]
          %v707 = vld [vmem:[#allocation2 + $0x1a0] sm:$0xff]
          %v708 = vld [vmem:[#allocation2 + $0x1a8] sm:$0xff]
          %v709 = vld [vmem:[#allocation2 + $0x1b0] sm:$0xff]
          %v710 = vld [vmem:[#allocation2 + $0x1b8] sm:$0xff]
          %v711 = vld [vmem:[#allocation2 + $0x1c0] sm:$0xff]
          %v712 = vld [vmem:[#allocation2 + $0x1c8] sm:$0xff]
          %v713 = vld [vmem:[#allocation2 + $0x1d0] sm:$0xff]
          %v714 = vld [vmem:[#allocation2 + $0x1d8] sm:$0xff]
          %v715 = vld [vmem:[#allocation2 + $0x1e0] sm:$0xff]
          %v716 = vld [vmem:[#allocation2 + $0x1e8] sm:$0xff]
          %v717 = vld [vmem:[#allocation2 + $0x1f0] sm:$0xff]
          %v718 = vld [vmem:[#allocation2 + $0x1f8] sm:$0xff]
          %v719 = vld [vmem:[%s469] sm:$0xff]
          %v720 = vld [vmem:[%s469 + $0x8] sm:$0xff]
          %v721 = vld [vmem:[%s469 + $0x10] sm:$0xff]
          %v722 = vld [vmem:[%s469 + $0x18] sm:$0xff]
          %v723 = vld [vmem:[%s469 + $0x20] sm:$0xff]
          %v724 = vld [vmem:[%s469 + $0x28] sm:$0xff]
          %v725 = vld [vmem:[%s469 + $0x30] sm:$0xff]
          %v726 = vld [vmem:[%s469 + $0x38] sm:$0xff]
          %v727 = vld [vmem:[%s469 + $0x40] sm:$0xff]
          %v728 = vld [vmem:[%s469 + $0x48] sm:$0xff]
          %v729 = vld [vmem:[%s469 + $0x50] sm:$0xff]
          %v730 = vld [vmem:[%s469 + $0x58] sm:$0xff]
          %v731 = vld [vmem:[%s469 + $0x60] sm:$0xff]
          %v732 = vld [vmem:[%s469 + $0x68] sm:$0xff]
          %v733 = vld [vmem:[%s469 + $0x70] sm:$0xff]
          %v734 = vld [vmem:[%s469 + $0x78] sm:$0xff]
          %v735 = vld [vmem:[%s469 + $0x80] sm:$0xff]
          %v736 = vld [vmem:[%s469 + $0x88] sm:$0xff]
          %v737 = vld [vmem:[%s469 + $0x90] sm:$0xff]
          %v738 = vld [vmem:[%s469 + $0x98] sm:$0xff]
          %v739 = vld [vmem:[%s469 + $0xa0] sm:$0xff]
          %v740 = vld [vmem:[%s469 + $0xa8] sm:$0xff]
          %v741 = vld [vmem:[%s469 + $0xb0] sm:$0xff]
          %v742 = vld [vmem:[%s469 + $0xb8] sm:$0xff]
          %v743 = vld [vmem:[%s469 + $0xc0] sm:$0xff]
          %v744 = vld [vmem:[%s469 + $0xc8] sm:$0xff]
          %v745 = vld [vmem:[%s469 + $0xd0] sm:$0xff]
          %v746 = vld [vmem:[%s469 + $0xd8] sm:$0xff]
          %v747 = vld [vmem:[%s469 + $0xe0] sm:$0xff]
          %v748 = vld [vmem:[%s469 + $0xe8] sm:$0xff]
          %v749 = vld [vmem:[%s469 + $0xf0] sm:$0xff]
          %v750 = vld [vmem:[%s469 + $0xf8] sm:$0xff]
          %v751 = vld [vmem:[%s469 + $0x100] sm:$0xff]
          %v752 = vld [vmem:[%s469 + $0x108] sm:$0xff]
          %v753 = vld [vmem:[%s469 + $0x110] sm:$0xff]
          %v754 = vld [vmem:[%s469 + $0x118] sm:$0xff]
          %v755 = vld [vmem:[%s469 + $0x120] sm:$0xff]
          %v756 = vld [vmem:[%s469 + $0x128] sm:$0xff]
          %v757 = vld [vmem:[%s469 + $0x130] sm:$0xff]
          %v758 = vld [vmem:[%s469 + $0x138] sm:$0xff]
          %v759 = vld [vmem:[%s469 + $0x140] sm:$0xff]
          %v760 = vld [vmem:[%s469 + $0x148] sm:$0xff]
          %v761 = vld [vmem:[%s469 + $0x150] sm:$0xff]
          %v762 = vld [vmem:[%s469 + $0x158] sm:$0xff]
          %v763 = vld [vmem:[%s469 + $0x160] sm:$0xff]
          %v764 = vld [vmem:[%s469 + $0x168] sm:$0xff]
          %v765 = vld [vmem:[%s469 + $0x170] sm:$0xff]
          %v766 = vld [vmem:[%s469 + $0x178] sm:$0xff]
          %v767 = vld [vmem:[%s469 + $0x180] sm:$0xff]
          %v768 = vld [vmem:[%s469 + $0x188] sm:$0xff]
          %v769 = vld [vmem:[%s469 + $0x190] sm:$0xff]
          %v770 = vld [vmem:[%s469 + $0x198] sm:$0xff]
          %v771 = vld [vmem:[%s469 + $0x1a0] sm:$0xff]
          %v772 = vld [vmem:[%s469 + $0x1a8] sm:$0xff]
          %v773 = vld [vmem:[%s469 + $0x1b0] sm:$0xff]
          %v774 = vld [vmem:[%s469 + $0x1b8] sm:$0xff]
          %v775 = vld [vmem:[%s469 + $0x1c0] sm:$0xff]
          %v776 = vld [vmem:[%s469 + $0x1c8] sm:$0xff]
          %v777 = vld [vmem:[%s469 + $0x1d0] sm:$0xff]
          %v778 = vld [vmem:[%s469 + $0x1d8] sm:$0xff]
          %v779 = vld [vmem:[%s469 + $0x1e0] sm:$0xff]
          %v780 = vld [vmem:[%s469 + $0x1e8] sm:$0xff]
          %v781 = vld [vmem:[%s469 + $0x1f0] sm:$0xff]
          %v782 = vld [vmem:[%s469 + $0x1f8] sm:$0xff]
          %v783 = vld [vmem:[%s469 + $0x200] sm:$0xff]
          %v784 = vld [vmem:[%s469 + $0x208] sm:$0xff]
          %v785 = vld [vmem:[%s469 + $0x210] sm:$0xff]
          %v786 = vld [vmem:[%s469 + $0x218] sm:$0xff]
          %v787 = vld [vmem:[%s469 + $0x220] sm:$0xff]
          %v788 = vld [vmem:[%s469 + $0x228] sm:$0xff]
          %v789 = vld [vmem:[%s469 + $0x230] sm:$0xff]
          %v790 = vld [vmem:[%s469 + $0x238] sm:$0xff]
          %v791 = vld [vmem:[%s469 + $0x240] sm:$0xff]
          %v792 = vld [vmem:[%s469 + $0x248] sm:$0xff]
          %v793 = vld [vmem:[%s469 + $0x250] sm:$0xff]
          %v794 = vld [vmem:[%s469 + $0x258] sm:$0xff]
          %v795 = vld [vmem:[%s469 + $0x260] sm:$0xff]
          %v796 = vld [vmem:[%s469 + $0x268] sm:$0xff]
          %v797 = vld [vmem:[%s469 + $0x270] sm:$0xff]
          %v798 = vld [vmem:[%s469 + $0x278] sm:$0xff]
          %v799 = vld [vmem:[%s469 + $0x280] sm:$0xff]
          %v800 = vld [vmem:[%s469 + $0x288] sm:$0xff]
          %v801 = vld [vmem:[%s469 + $0x290] sm:$0xff]
          %v802 = vld [vmem:[%s469 + $0x298] sm:$0xff]
          %v803 = vld [vmem:[%s469 + $0x2a0] sm:$0xff]
          %v804 = vld [vmem:[%s469 + $0x2a8] sm:$0xff]
          %v805 = vld [vmem:[%s469 + $0x2b0] sm:$0xff]
          %v806 = vld [vmem:[%s469 + $0x2b8] sm:$0xff]
          %v807 = vld [vmem:[%s469 + $0x2c0] sm:$0xff]
          %v808 = vld [vmem:[%s469 + $0x2c8] sm:$0xff]
          %v809 = vld [vmem:[%s469 + $0x2d0] sm:$0xff]
          %v810 = vld [vmem:[%s469 + $0x2d8] sm:$0xff]
          %v811 = vld [vmem:[%s469 + $0x2e0] sm:$0xff]
          %v812 = vld [vmem:[%s469 + $0x2e8] sm:$0xff]
          %v813 = vld [vmem:[%s469 + $0x2f0] sm:$0xff]
          %v814 = vld [vmem:[%s469 + $0x2f8] sm:$0xff]
          %v815 = vld [vmem:[%s469 + $0x300] sm:$0xff]
          %v816 = vld [vmem:[%s469 + $0x308] sm:$0xff]
          %v817 = vld [vmem:[%s469 + $0x310] sm:$0xff]
          %v818 = vld [vmem:[%s469 + $0x318] sm:$0xff]
          %v819 = vld [vmem:[%s469 + $0x320] sm:$0xff]
          %v820 = vld [vmem:[%s469 + $0x328] sm:$0xff]
          %v821 = vld [vmem:[%s469 + $0x330] sm:$0xff]
          %v822 = vld [vmem:[%s469 + $0x338] sm:$0xff]
          %v823 = vld [vmem:[%s469 + $0x340] sm:$0xff]
          %v824 = vld [vmem:[%s469 + $0x348] sm:$0xff]
          %v825 = vld [vmem:[%s469 + $0x350] sm:$0xff]
          %v826 = vld [vmem:[%s469 + $0x358] sm:$0xff]
          %v827 = vld [vmem:[%s469 + $0x360] sm:$0xff]
          %v828 = vld [vmem:[%s469 + $0x368] sm:$0xff]
          %v829 = vld [vmem:[%s469 + $0x370] sm:$0xff]
          %v830 = vld [vmem:[%s469 + $0x378] sm:$0xff]
          %v831 = vld [vmem:[%s469 + $0x380] sm:$0xff]
          %v832 = vld [vmem:[%s469 + $0x388] sm:$0xff]
          %v833 = vld [vmem:[%s469 + $0x390] sm:$0xff]
          %v834 = vld [vmem:[%s469 + $0x398] sm:$0xff]
          %v835 = vld [vmem:[%s469 + $0x3a0] sm:$0xff]
          %v836 = vld [vmem:[%s469 + $0x3a8] sm:$0xff]
          %v837 = vld [vmem:[%s469 + $0x3b0] sm:$0xff]
          %v838 = vld [vmem:[%s469 + $0x3b8] sm:$0xff]
          %v839 = vld [vmem:[%s469 + $0x3c0] sm:$0xff]
          %v840 = vld [vmem:[%s469 + $0x3c8] sm:$0xff]
          %v841 = vld [vmem:[%s469 + $0x3d0] sm:$0xff]
          %v842 = vld [vmem:[%s469 + $0x3d8] sm:$0xff]
          %v843 = vld [vmem:[%s469 + $0x3e0] sm:$0xff]
          %v844 = vld [vmem:[%s469 + $0x3e8] sm:$0xff]
          %v845 = vld [vmem:[%s469 + $0x3f0] sm:$0xff]
          %v846 = vld [vmem:[%s469 + $0x3f8] sm:$0xff]
          %v975 = vunpack.c.l.b16 %v719
          %v976 = vunpack.c.h.b16 %v719
          %v977 = vunpack.c.l.b16 %v720
          %v978 = vunpack.c.h.b16 %v720
          %v979 = vunpack.c.l.b16 %v721
          %v980 = vunpack.c.h.b16 %v721
          %v981 = vunpack.c.l.b16 %v722
          %v982 = vunpack.c.h.b16 %v722
          %v983 = vunpack.c.l.b16 %v723
          %v984 = vunpack.c.h.b16 %v723
          %v985 = vunpack.c.l.b16 %v724
          %v986 = vunpack.c.h.b16 %v724
          %v987 = vunpack.c.l.b16 %v725
          %v988 = vunpack.c.h.b16 %v725
          %v989 = vunpack.c.l.b16 %v726
          %v990 = vunpack.c.h.b16 %v726
          %v991 = vunpack.c.l.b16 %v727
          %v992 = vunpack.c.h.b16 %v727
          %v993 = vunpack.c.l.b16 %v728
          %v994 = vunpack.c.h.b16 %v728
          %v995 = vunpack.c.l.b16 %v729
          %v996 = vunpack.c.h.b16 %v729
          %v997 = vunpack.c.l.b16 %v730
          %v998 = vunpack.c.h.b16 %v730
          %v999 = vunpack.c.l.b16 %v731
          %v1000 = vunpack.c.h.b16 %v731
          %v1001 = vunpack.c.l.b16 %v732
          %v1002 = vunpack.c.h.b16 %v732
          %v1003 = vunpack.c.l.b16 %v733
          %v1004 = vunpack.c.h.b16 %v733
          %v1005 = vunpack.c.l.b16 %v734
          %v1006 = vunpack.c.h.b16 %v734
          %v1007 = vunpack.c.l.b16 %v735
          %v1008 = vunpack.c.h.b16 %v735
          %v1009 = vunpack.c.l.b16 %v736
          %v1010 = vunpack.c.h.b16 %v736
          %v1011 = vunpack.c.l.b16 %v737
          %v1012 = vunpack.c.h.b16 %v737
          %v1013 = vunpack.c.l.b16 %v738
          %v1014 = vunpack.c.h.b16 %v738
          %v1015 = vunpack.c.l.b16 %v739
          %v1016 = vunpack.c.h.b16 %v739
          %v1017 = vunpack.c.l.b16 %v740
          %v1018 = vunpack.c.h.b16 %v740
          %v1019 = vunpack.c.l.b16 %v741
          %v1020 = vunpack.c.h.b16 %v741
          %v1021 = vunpack.c.l.b16 %v742
          %v1022 = vunpack.c.h.b16 %v742
          %v1023 = vunpack.c.l.b16 %v743
          %v1024 = vunpack.c.h.b16 %v743
          %v1025 = vunpack.c.l.b16 %v744
          %v1026 = vunpack.c.h.b16 %v744
          %v1027 = vunpack.c.l.b16 %v745
          %v1028 = vunpack.c.h.b16 %v745
          %v1029 = vunpack.c.l.b16 %v746
          %v1030 = vunpack.c.h.b16 %v746
          %v1031 = vunpack.c.l.b16 %v747
          %v1032 = vunpack.c.h.b16 %v747
          %v1033 = vunpack.c.l.b16 %v748
          %v1034 = vunpack.c.h.b16 %v748
          %v1035 = vunpack.c.l.b16 %v749
          %v1036 = vunpack.c.h.b16 %v749
          %v1037 = vunpack.c.l.b16 %v750
          %v1038 = vunpack.c.h.b16 %v750
          %v1039 = vunpack.c.l.b16 %v751
          %v1040 = vunpack.c.h.b16 %v751
          %v1041 = vunpack.c.l.b16 %v752
          %v1042 = vunpack.c.h.b16 %v752
          %v1043 = vunpack.c.l.b16 %v753
          %v1044 = vunpack.c.h.b16 %v753
          %v1045 = vunpack.c.l.b16 %v754
          %v1046 = vunpack.c.h.b16 %v754
          %v1047 = vunpack.c.l.b16 %v755
          %v1048 = vunpack.c.h.b16 %v755
          %v1049 = vunpack.c.l.b16 %v756
          %v1050 = vunpack.c.h.b16 %v756
          %v1051 = vunpack.c.l.b16 %v757
          %v1052 = vunpack.c.h.b16 %v757
          %v1053 = vunpack.c.l.b16 %v758
          %v1054 = vunpack.c.h.b16 %v758
          %v1055 = vunpack.c.l.b16 %v759
          %v1056 = vunpack.c.h.b16 %v759
          %v1057 = vunpack.c.l.b16 %v760
          %v1058 = vunpack.c.h.b16 %v760
          %v1059 = vunpack.c.l.b16 %v761
          %v1060 = vunpack.c.h.b16 %v761
          %v1061 = vunpack.c.l.b16 %v762
          %v1062 = vunpack.c.h.b16 %v762
          %v1063 = vunpack.c.l.b16 %v763
          %v1064 = vunpack.c.h.b16 %v763
          %v1065 = vunpack.c.l.b16 %v764
          %v1066 = vunpack.c.h.b16 %v764
          %v1067 = vunpack.c.l.b16 %v765
          %v1068 = vunpack.c.h.b16 %v765
          %v1069 = vunpack.c.l.b16 %v766
          %v1070 = vunpack.c.h.b16 %v766
          %v1071 = vunpack.c.l.b16 %v767
          %v1072 = vunpack.c.h.b16 %v767
          %v1073 = vunpack.c.l.b16 %v768
          %v1074 = vunpack.c.h.b16 %v768
          %v1075 = vunpack.c.l.b16 %v769
          %v1076 = vunpack.c.h.b16 %v769
          %v1077 = vunpack.c.l.b16 %v770
          %v1078 = vunpack.c.h.b16 %v770
          %v1079 = vunpack.c.l.b16 %v771
          %v1080 = vunpack.c.h.b16 %v771
          %v1081 = vunpack.c.l.b16 %v772
          %v1082 = vunpack.c.h.b16 %v772
          %v1083 = vunpack.c.l.b16 %v773
          %v1084 = vunpack.c.h.b16 %v773
          %v1085 = vunpack.c.l.b16 %v774
          %v1086 = vunpack.c.h.b16 %v774
          %v1087 = vunpack.c.l.b16 %v775
          %v1088 = vunpack.c.h.b16 %v775
          %v1089 = vunpack.c.l.b16 %v776
          %v1090 = vunpack.c.h.b16 %v776
          %v1091 = vunpack.c.l.b16 %v777
          %v1092 = vunpack.c.h.b16 %v777
          %v1093 = vunpack.c.l.b16 %v778
          %v1094 = vunpack.c.h.b16 %v778
          %v1095 = vunpack.c.l.b16 %v779
          %v1096 = vunpack.c.h.b16 %v779
          %v1097 = vunpack.c.l.b16 %v780
          %v1098 = vunpack.c.h.b16 %v780
          %v1099 = vunpack.c.l.b16 %v781
          %v1100 = vunpack.c.h.b16 %v781
          %v1101 = vunpack.c.l.b16 %v782
          %v1102 = vunpack.c.h.b16 %v782
          %v1103 = vunpack.c.l.b16 %v783
          %v1104 = vunpack.c.h.b16 %v783
          %v1105 = vunpack.c.l.b16 %v784
          %v1106 = vunpack.c.h.b16 %v784
          %v1107 = vunpack.c.l.b16 %v785
          %v1108 = vunpack.c.h.b16 %v785
          %v1109 = vunpack.c.l.b16 %v786
          %v1110 = vunpack.c.h.b16 %v786
          %v1111 = vunpack.c.l.b16 %v787
          %v1112 = vunpack.c.h.b16 %v787
          %v1113 = vunpack.c.l.b16 %v788
          %v1114 = vunpack.c.h.b16 %v788
          %v1115 = vunpack.c.l.b16 %v789
          %v1116 = vunpack.c.h.b16 %v789
          %v1117 = vunpack.c.l.b16 %v790
          %v1118 = vunpack.c.h.b16 %v790
          %v1119 = vunpack.c.l.b16 %v791
          %v1120 = vunpack.c.h.b16 %v791
          %v1121 = vunpack.c.l.b16 %v792
          %v1122 = vunpack.c.h.b16 %v792
          %v1123 = vunpack.c.l.b16 %v793
          %v1124 = vunpack.c.h.b16 %v793
          %v1125 = vunpack.c.l.b16 %v794
          %v1126 = vunpack.c.h.b16 %v794
          %v1127 = vunpack.c.l.b16 %v795
          %v1128 = vunpack.c.h.b16 %v795
          %v1129 = vunpack.c.l.b16 %v796
          %v1130 = vunpack.c.h.b16 %v796
          %v1131 = vunpack.c.l.b16 %v797
          %v1132 = vunpack.c.h.b16 %v797
          %v1133 = vunpack.c.l.b16 %v798
          %v1134 = vunpack.c.h.b16 %v798
          %v1135 = vunpack.c.l.b16 %v799
          %v1136 = vunpack.c.h.b16 %v799
          %v1137 = vunpack.c.l.b16 %v800
          %v1138 = vunpack.c.h.b16 %v800
          %v1139 = vunpack.c.l.b16 %v801
          %v1140 = vunpack.c.h.b16 %v801
          %v1141 = vunpack.c.l.b16 %v802
          %v1142 = vunpack.c.h.b16 %v802
          %v1143 = vunpack.c.l.b16 %v803
          %v1144 = vunpack.c.h.b16 %v803
          %v1145 = vunpack.c.l.b16 %v804
          %v1146 = vunpack.c.h.b16 %v804
          %v1147 = vunpack.c.l.b16 %v805
          %v1148 = vunpack.c.h.b16 %v805
          %v1149 = vunpack.c.l.b16 %v806
          %v1150 = vunpack.c.h.b16 %v806
          %v1151 = vunpack.c.l.b16 %v807
          %v1152 = vunpack.c.h.b16 %v807
          %v1153 = vunpack.c.l.b16 %v808
          %v1154 = vunpack.c.h.b16 %v808
          %v1155 = vunpack.c.l.b16 %v809
          %v1156 = vunpack.c.h.b16 %v809
          %v1157 = vunpack.c.l.b16 %v810
          %v1158 = vunpack.c.h.b16 %v810
          %v1159 = vunpack.c.l.b16 %v811
          %v1160 = vunpack.c.h.b16 %v811
          %v1161 = vunpack.c.l.b16 %v812
          %v1162 = vunpack.c.h.b16 %v812
          %v1163 = vunpack.c.l.b16 %v813
          %v1164 = vunpack.c.h.b16 %v813
          %v1165 = vunpack.c.l.b16 %v814
          %v1166 = vunpack.c.h.b16 %v814
          %v1167 = vunpack.c.l.b16 %v815
          %v1168 = vunpack.c.h.b16 %v815
          %v1169 = vunpack.c.l.b16 %v816
          %v1170 = vunpack.c.h.b16 %v816
          %v1171 = vunpack.c.l.b16 %v817
          %v1172 = vunpack.c.h.b16 %v817
          %v1173 = vunpack.c.l.b16 %v818
          %v1174 = vunpack.c.h.b16 %v818
          %v1175 = vunpack.c.l.b16 %v819
          %v1176 = vunpack.c.h.b16 %v819
          %v1177 = vunpack.c.l.b16 %v820
          %v1178 = vunpack.c.h.b16 %v820
          %v1179 = vunpack.c.l.b16 %v821
          %v1180 = vunpack.c.h.b16 %v821
          %v1181 = vunpack.c.l.b16 %v822
          %v1182 = vunpack.c.h.b16 %v822
          %v1183 = vunpack.c.l.b16 %v823
          %v1184 = vunpack.c.h.b16 %v823
          %v1185 = vunpack.c.l.b16 %v824
          %v1186 = vunpack.c.h.b16 %v824
          %v1187 = vunpack.c.l.b16 %v825
          %v1188 = vunpack.c.h.b16 %v825
          %v1189 = vunpack.c.l.b16 %v826
          %v1190 = vunpack.c.h.b16 %v826
          %v1191 = vunpack.c.l.b16 %v827
          %v1192 = vunpack.c.h.b16 %v827
          %v1193 = vunpack.c.l.b16 %v828
          %v1194 = vunpack.c.h.b16 %v828
          %v1195 = vunpack.c.l.b16 %v829
          %v1196 = vunpack.c.h.b16 %v829
          %v1197 = vunpack.c.l.b16 %v830
          %v1198 = vunpack.c.h.b16 %v830
          %v1199 = vunpack.c.l.b16 %v831
          %v1200 = vunpack.c.h.b16 %v831
          %v1201 = vunpack.c.l.b16 %v832
          %v1202 = vunpack.c.h.b16 %v832
          %v1203 = vunpack.c.l.b16 %v833
          %v1204 = vunpack.c.h.b16 %v833
          %v1205 = vunpack.c.l.b16 %v834
          %v1206 = vunpack.c.h.b16 %v834
          %v1207 = vunpack.c.l.b16 %v835
          %v1208 = vunpack.c.h.b16 %v835
          %v1209 = vunpack.c.l.b16 %v836
          %v1210 = vunpack.c.h.b16 %v836
          %v1211 = vunpack.c.l.b16 %v837
          %v1212 = vunpack.c.h.b16 %v837
          %v1213 = vunpack.c.l.b16 %v838
          %v1214 = vunpack.c.h.b16 %v838
          %v1215 = vunpack.c.l.b16 %v839
          %v1216 = vunpack.c.h.b16 %v839
          %v1217 = vunpack.c.l.b16 %v840
          %v1218 = vunpack.c.h.b16 %v840
          %v1219 = vunpack.c.l.b16 %v841
          %v1220 = vunpack.c.h.b16 %v841
          %v1221 = vunpack.c.l.b16 %v842
          %v1222 = vunpack.c.h.b16 %v842
          %v1223 = vunpack.c.l.b16 %v843
          %v1224 = vunpack.c.h.b16 %v843
          %v1225 = vunpack.c.l.b16 %v844
          %v1226 = vunpack.c.h.b16 %v844
          %v1227 = vunpack.c.l.b16 %v845
          %v1228 = vunpack.c.h.b16 %v845
          %v1229 = vunpack.c.l.b16 %v846
          %v1230 = vunpack.c.h.b16 %v846
          %v1231 = vpack.c.b16 %v979, %v975
          %v1232 = vpack.c.b16 %v980, %v976
          %v1233 = vpack.c.b16 %v981, %v977
          %v1234 = vpack.c.b16 %v982, %v978
          %v1235 = vpack.c.b16 %v987, %v983
          %v1236 = vpack.c.b16 %v988, %v984
          %v1237 = vpack.c.b16 %v989, %v985
          %v1238 = vpack.c.b16 %v990, %v986
          %v1239 = vpack.c.b16 %v995, %v991
          %v1240 = vpack.c.b16 %v996, %v992
          %v1241 = vpack.c.b16 %v997, %v993
          %v1242 = vpack.c.b16 %v998, %v994
          %v1243 = vpack.c.b16 %v1003, %v999
          %v1244 = vpack.c.b16 %v1004, %v1000
          %v1245 = vpack.c.b16 %v1005, %v1001
          %v1246 = vpack.c.b16 %v1006, %v1002
          %v1247 = vpack.c.b16 %v1011, %v1007
          %v1248 = vpack.c.b16 %v1012, %v1008
          %v1249 = vpack.c.b16 %v1013, %v1009
          %v1250 = vpack.c.b16 %v1014, %v1010
          %v1251 = vpack.c.b16 %v1019, %v1015
          %v1252 = vpack.c.b16 %v1020, %v1016
          %v1253 = vpack.c.b16 %v1021, %v1017
          %v1254 = vpack.c.b16 %v1022, %v1018
          %v1255 = vpack.c.b16 %v1027, %v1023
          %v1256 = vpack.c.b16 %v1028, %v1024
          %v1257 = vpack.c.b16 %v1029, %v1025
          %v1258 = vpack.c.b16 %v1030, %v1026
          %v1259 = vpack.c.b16 %v1035, %v1031
          %v1260 = vpack.c.b16 %v1036, %v1032
          %v1261 = vpack.c.b16 %v1037, %v1033
          %v1262 = vpack.c.b16 %v1038, %v1034
          %v1263 = vpack.c.b16 %v1043, %v1039
          %v1264 = vpack.c.b16 %v1044, %v1040
          %v1265 = vpack.c.b16 %v1045, %v1041
          %v1266 = vpack.c.b16 %v1046, %v1042
          %v1267 = vpack.c.b16 %v1051, %v1047
          %v1268 = vpack.c.b16 %v1052, %v1048
          %v1269 = vpack.c.b16 %v1053, %v1049
          %v1270 = vpack.c.b16 %v1054, %v1050
          %v1271 = vpack.c.b16 %v1059, %v1055
          %v1272 = vpack.c.b16 %v1060, %v1056
          %v1273 = vpack.c.b16 %v1061, %v1057
          %v1274 = vpack.c.b16 %v1062, %v1058
          %v1275 = vpack.c.b16 %v1067, %v1063
          %v1276 = vpack.c.b16 %v1068, %v1064
          %v1277 = vpack.c.b16 %v1069, %v1065
          %v1278 = vpack.c.b16 %v1070, %v1066
          %v1279 = vpack.c.b16 %v1075, %v1071
          %v1280 = vpack.c.b16 %v1076, %v1072
          %v1281 = vpack.c.b16 %v1077, %v1073
          %v1282 = vpack.c.b16 %v1078, %v1074
          %v1283 = vpack.c.b16 %v1083, %v1079
          %v1284 = vpack.c.b16 %v1084, %v1080
          %v1285 = vpack.c.b16 %v1085, %v1081
          %v1286 = vpack.c.b16 %v1086, %v1082
          %v1287 = vpack.c.b16 %v1091, %v1087
          %v1288 = vpack.c.b16 %v1092, %v1088
          %v1289 = vpack.c.b16 %v1093, %v1089
          %v1290 = vpack.c.b16 %v1094, %v1090
          %v1291 = vpack.c.b16 %v1099, %v1095
          %v1292 = vpack.c.b16 %v1100, %v1096
          %v1293 = vpack.c.b16 %v1101, %v1097
          %v1294 = vpack.c.b16 %v1102, %v1098
          %v1295 = vpack.c.b16 %v1107, %v1103
          %v1296 = vpack.c.b16 %v1108, %v1104
          %v1297 = vpack.c.b16 %v1109, %v1105
          %v1298 = vpack.c.b16 %v1110, %v1106
          %v1299 = vpack.c.b16 %v1115, %v1111
          %v1300 = vpack.c.b16 %v1116, %v1112
          %v1301 = vpack.c.b16 %v1117, %v1113
          %v1302 = vpack.c.b16 %v1118, %v1114
          %v1303 = vpack.c.b16 %v1123, %v1119
          %v1304 = vpack.c.b16 %v1124, %v1120
          %v1305 = vpack.c.b16 %v1125, %v1121
          %v1306 = vpack.c.b16 %v1126, %v1122
          %v1307 = vpack.c.b16 %v1131, %v1127
          %v1308 = vpack.c.b16 %v1132, %v1128
          %v1309 = vpack.c.b16 %v1133, %v1129
          %v1310 = vpack.c.b16 %v1134, %v1130
          %v1311 = vpack.c.b16 %v1139, %v1135
          %v1312 = vpack.c.b16 %v1140, %v1136
          %v1313 = vpack.c.b16 %v1141, %v1137
          %v1314 = vpack.c.b16 %v1142, %v1138
          %v1315 = vpack.c.b16 %v1147, %v1143
          %v1316 = vpack.c.b16 %v1148, %v1144
          %v1317 = vpack.c.b16 %v1149, %v1145
          %v1318 = vpack.c.b16 %v1150, %v1146
          %v1319 = vpack.c.b16 %v1155, %v1151
          %v1320 = vpack.c.b16 %v1156, %v1152
          %v1321 = vpack.c.b16 %v1157, %v1153
          %v1322 = vpack.c.b16 %v1158, %v1154
          %v1323 = vpack.c.b16 %v1163, %v1159
          %v1324 = vpack.c.b16 %v1164, %v1160
          %v1325 = vpack.c.b16 %v1165, %v1161
          %v1326 = vpack.c.b16 %v1166, %v1162
          %v1327 = vpack.c.b16 %v1171, %v1167
          %v1328 = vpack.c.b16 %v1172, %v1168
          %v1329 = vpack.c.b16 %v1173, %v1169
          %v1330 = vpack.c.b16 %v1174, %v1170
          %v1331 = vpack.c.b16 %v1179, %v1175
          %v1332 = vpack.c.b16 %v1180, %v1176
          %v1333 = vpack.c.b16 %v1181, %v1177
          %v1334 = vpack.c.b16 %v1182, %v1178
          %v1335 = vpack.c.b16 %v1187, %v1183
          %v1336 = vpack.c.b16 %v1188, %v1184
          %v1337 = vpack.c.b16 %v1189, %v1185
          %v1338 = vpack.c.b16 %v1190, %v1186
          %v1339 = vpack.c.b16 %v1195, %v1191
          %v1340 = vpack.c.b16 %v1196, %v1192
          %v1341 = vpack.c.b16 %v1197, %v1193
          %v1342 = vpack.c.b16 %v1198, %v1194
          %v1343 = vpack.c.b16 %v1203, %v1199
          %v1344 = vpack.c.b16 %v1204, %v1200
          %v1345 = vpack.c.b16 %v1205, %v1201
          %v1346 = vpack.c.b16 %v1206, %v1202
          %v1347 = vpack.c.b16 %v1211, %v1207
          %v1348 = vpack.c.b16 %v1212, %v1208
          %v1349 = vpack.c.b16 %v1213, %v1209
          %v1350 = vpack.c.b16 %v1214, %v1210
          %v1351 = vpack.c.b16 %v1219, %v1215
          %v1352 = vpack.c.b16 %v1220, %v1216
          %v1353 = vpack.c.b16 %v1221, %v1217
          %v1354 = vpack.c.b16 %v1222, %v1218
          %v1355 = vpack.c.b16 %v1227, %v1223
          %v1356 = vpack.c.b16 %v1228, %v1224
          %v1357 = vpack.c.b16 %v1229, %v1225
          %v1358 = vpack.c.b16 %v1230, %v1226
          %v1551 = vunpack.c.l.b16 %v591
          %v1552 = vunpack.c.l.b16 %v592
          %v1553 = vunpack.c.l.b16 %v593
          %v1554 = vunpack.c.l.b16 %v594
          %v1555 = vunpack.c.l.b16 %v595
          %v1556 = vunpack.c.l.b16 %v596
          %v1557 = vunpack.c.l.b16 %v597
          %v1558 = vunpack.c.l.b16 %v598
          %v1559 = vunpack.c.l.b16 %v599
          %v1560 = vunpack.c.l.b16 %v600
          %v1561 = vunpack.c.l.b16 %v601
          %v1562 = vunpack.c.l.b16 %v602
          %v1563 = vunpack.c.l.b16 %v603
          %v1564 = vunpack.c.l.b16 %v604
          %v1565 = vunpack.c.l.b16 %v605
          %v1566 = vunpack.c.l.b16 %v606
          %v1567 = vunpack.c.l.b16 %v607
          %v1568 = vunpack.c.l.b16 %v608
          %v1569 = vunpack.c.l.b16 %v609
          %v1570 = vunpack.c.l.b16 %v610
          %v1571 = vunpack.c.l.b16 %v611
          %v1572 = vunpack.c.l.b16 %v612
          %v1573 = vunpack.c.l.b16 %v613
          %v1574 = vunpack.c.l.b16 %v614
          %v1575 = vunpack.c.l.b16 %v615
          %v1576 = vunpack.c.l.b16 %v616
          %v1577 = vunpack.c.l.b16 %v617
          %v1578 = vunpack.c.l.b16 %v618
          %v1579 = vunpack.c.l.b16 %v619
          %v1580 = vunpack.c.l.b16 %v620
          %v1581 = vunpack.c.l.b16 %v621
          %v1582 = vunpack.c.l.b16 %v622
          %v1583 = vunpack.c.l.b16 %v623
          %v1584 = vunpack.c.l.b16 %v624
          %v1585 = vunpack.c.l.b16 %v625
          %v1586 = vunpack.c.l.b16 %v626
          %v1587 = vunpack.c.l.b16 %v627
          %v1588 = vunpack.c.l.b16 %v628
          %v1589 = vunpack.c.l.b16 %v629
          %v1590 = vunpack.c.l.b16 %v630
          %v1591 = vunpack.c.l.b16 %v631
          %v1592 = vunpack.c.l.b16 %v632
          %v1593 = vunpack.c.l.b16 %v633
          %v1594 = vunpack.c.l.b16 %v634
          %v1595 = vunpack.c.l.b16 %v635
          %v1596 = vunpack.c.l.b16 %v636
          %v1597 = vunpack.c.l.b16 %v637
          %v1598 = vunpack.c.l.b16 %v638
          %v1599 = vunpack.c.l.b16 %v639
          %v1600 = vunpack.c.l.b16 %v640
          %v1601 = vunpack.c.l.b16 %v641
          %v1602 = vunpack.c.l.b16 %v642
          %v1603 = vunpack.c.l.b16 %v643
          %v1604 = vunpack.c.l.b16 %v644
          %v1605 = vunpack.c.l.b16 %v645
          %v1606 = vunpack.c.l.b16 %v646
          %v1607 = vunpack.c.l.b16 %v647
          %v1608 = vunpack.c.l.b16 %v648
          %v1609 = vunpack.c.l.b16 %v649
          %v1610 = vunpack.c.l.b16 %v650
          %v1611 = vunpack.c.l.b16 %v651
          %v1612 = vunpack.c.l.b16 %v652
          %v1613 = vunpack.c.l.b16 %v653
          %v1614 = vunpack.c.l.b16 %v654
          %v1615 = vpack.c.b16 %v1552, %v1551
          %v1616 = vpack.c.b16 %v1554, %v1553
          %v1617 = vpack.c.b16 %v1556, %v1555
          %v1618 = vpack.c.b16 %v1558, %v1557
          %v1619 = vpack.c.b16 %v1560, %v1559
          %v1620 = vpack.c.b16 %v1562, %v1561
          %v1621 = vpack.c.b16 %v1564, %v1563
          %v1622 = vpack.c.b16 %v1566, %v1565
          %v1623 = vpack.c.b16 %v1568, %v1567
          %v1624 = vpack.c.b16 %v1570, %v1569
          %v1625 = vpack.c.b16 %v1572, %v1571
          %v1626 = vpack.c.b16 %v1574, %v1573
          %v1627 = vpack.c.b16 %v1576, %v1575
          %v1628 = vpack.c.b16 %v1578, %v1577
          %v1629 = vpack.c.b16 %v1580, %v1579
          %v1630 = vpack.c.b16 %v1582, %v1581
          %v1631 = vpack.c.b16 %v1584, %v1583
          %v1632 = vpack.c.b16 %v1586, %v1585
          %v1633 = vpack.c.b16 %v1588, %v1587
          %v1634 = vpack.c.b16 %v1590, %v1589
          %v1635 = vpack.c.b16 %v1592, %v1591
          %v1636 = vpack.c.b16 %v1594, %v1593
          %v1637 = vpack.c.b16 %v1596, %v1595
          %v1638 = vpack.c.b16 %v1598, %v1597
          %v1639 = vpack.c.b16 %v1600, %v1599
          %v1640 = vpack.c.b16 %v1602, %v1601
          %v1641 = vpack.c.b16 %v1604, %v1603
          %v1642 = vpack.c.b16 %v1606, %v1605
          %v1643 = vpack.c.b16 %v1608, %v1607
          %v1644 = vpack.c.b16 %v1610, %v1609
          %v1645 = vpack.c.b16 %v1612, %v1611
          %v1646 = vpack.c.b16 %v1614, %v1613
          %1679 = vmatpush.bf16.msra.mxu0 %v1622
          %1680 = vmatpush.bf16.msra.mxu0 %v1621
          %1681 = vmatpush.bf16.msra.mxu0 %v1620
          %1682 = vmatpush.bf16.msra.mxu0 %v1619
          %1683 = vmatpush.bf16.msra.mxu0 %v1618
          %1684 = vmatpush.bf16.msra.mxu0 %v1617
          %1685 = vmatpush.bf16.msra.mxu0 %v1616
          %1686 = vmatpush.bf16.msra.mxu0 %v1615
          %1687 = vmatmul.bf16.gmra.mxu0 %v1231
          %v1688 = vpop.f32.mrf.mxu0
          %v1689 = vadd.f32 0.0, %v1688
          %v1690 = vpop.f32.mrf.mxu0
          %v1691 = vadd.f32 0.0, %v1690
          %1692 = vmatmul.bf16.gmra.mxu0 %v1235
          %v1693 = vpop.f32.mrf.mxu0
          %v1694 = vadd.f32 0.0, %v1693
          %v1695 = vpop.f32.mrf.mxu0
          %v1696 = vadd.f32 0.0, %v1695
          %1697 = vmatmul.bf16.gmra.mxu0 %v1239
          %v1698 = vpop.f32.mrf.mxu0
          %v1699 = vadd.f32 0.0, %v1698
          %v1700 = vpop.f32.mrf.mxu0
          %v1701 = vadd.f32 0.0, %v1700
          %1702 = vmatmul.bf16.gmra.mxu0 %v1243
          %v1703 = vpop.f32.mrf.mxu0
          %v1704 = vadd.f32 0.0, %v1703
          %v1705 = vpop.f32.mrf.mxu0
          %v1706 = vadd.f32 0.0, %v1705
          %1707 = vmatmul.bf16.gmra.mxu0 %v1247
          %v1708 = vpop.f32.mrf.mxu0
          %v1709 = vadd.f32 0.0, %v1708
          %v1710 = vpop.f32.mrf.mxu0
          %v1711 = vadd.f32 0.0, %v1710
          %1712 = vmatmul.bf16.gmra.mxu0 %v1251
          %v1713 = vpop.f32.mrf.mxu0
          %v1714 = vadd.f32 0.0, %v1713
          %v1715 = vpop.f32.mrf.mxu0
          %v1716 = vadd.f32 0.0, %v1715
          %1717 = vmatmul.bf16.gmra.mxu0 %v1255
          %v1718 = vpop.f32.mrf.mxu0
          %v1719 = vadd.f32 0.0, %v1718
          %v1720 = vpop.f32.mrf.mxu0
          %v1721 = vadd.f32 0.0, %v1720
          %1722 = vmatmul.bf16.gmra.mxu0 %v1259
          %v1723 = vpop.f32.mrf.mxu0
          %v1724 = vadd.f32 0.0, %v1723
          %v1725 = vpop.f32.mrf.mxu0
          %v1726 = vadd.f32 0.0, %v1725
          %1727 = vmatmul.bf16.gmra.mxu0 %v1263
          %v1728 = vpop.f32.mrf.mxu0
          %v1729 = vadd.f32 0.0, %v1728
          %v1730 = vpop.f32.mrf.mxu0
          %v1731 = vadd.f32 0.0, %v1730
          %1732 = vmatmul.bf16.gmra.mxu0 %v1267
          %v1733 = vpop.f32.mrf.mxu0
          %v1734 = vadd.f32 0.0, %v1733
          %v1735 = vpop.f32.mrf.mxu0
          %v1736 = vadd.f32 0.0, %v1735
          %1737 = vmatmul.bf16.gmra.mxu0 %v1271
          %v1738 = vpop.f32.mrf.mxu0
          %v1739 = vadd.f32 0.0, %v1738
          %v1740 = vpop.f32.mrf.mxu0
          %v1741 = vadd.f32 0.0, %v1740
          %1742 = vmatmul.bf16.gmra.mxu0 %v1275
          %v1743 = vpop.f32.mrf.mxu0
          %v1744 = vadd.f32 0.0, %v1743
          %v1745 = vpop.f32.mrf.mxu0
          %v1746 = vadd.f32 0.0, %v1745
          %1747 = vmatmul.bf16.gmra.mxu0 %v1279
          %v1748 = vpop.f32.mrf.mxu0
          %v1749 = vadd.f32 0.0, %v1748
          %v1750 = vpop.f32.mrf.mxu0
          %v1751 = vadd.f32 0.0, %v1750
          %1752 = vmatmul.bf16.gmra.mxu0 %v1283
          %v1753 = vpop.f32.mrf.mxu0
          %v1754 = vadd.f32 0.0, %v1753
          %v1755 = vpop.f32.mrf.mxu0
          %v1756 = vadd.f32 0.0, %v1755
          %1757 = vmatmul.bf16.gmra.mxu0 %v1287
          %v1758 = vpop.f32.mrf.mxu0
          %v1759 = vadd.f32 0.0, %v1758
          %v1760 = vpop.f32.mrf.mxu0
          %v1761 = vadd.f32 0.0, %v1760
          %1762 = vmatmul.bf16.gmra.mxu0 %v1291
          %v1763 = vpop.f32.mrf.mxu0
          %v1764 = vadd.f32 0.0, %v1763
          %v1765 = vpop.f32.mrf.mxu0
          %v1766 = vadd.f32 0.0, %v1765
          %1767 = vmatmul.bf16.gmra.mxu0 %v1295
          %v1768 = vpop.f32.mrf.mxu0
          %v1769 = vadd.f32 0.0, %v1768
          %v1770 = vpop.f32.mrf.mxu0
          %v1771 = vadd.f32 0.0, %v1770
          %1772 = vmatmul.bf16.gmra.mxu0 %v1299
          %v1773 = vpop.f32.mrf.mxu0
          %v1774 = vadd.f32 0.0, %v1773
          %v1775 = vpop.f32.mrf.mxu0
          %v1776 = vadd.f32 0.0, %v1775
          %1777 = vmatmul.bf16.gmra.mxu0 %v1303
          %v1778 = vpop.f32.mrf.mxu0
          %v1779 = vadd.f32 0.0, %v1778
          %v1780 = vpop.f32.mrf.mxu0
          %v1781 = vadd.f32 0.0, %v1780
          %1782 = vmatmul.bf16.gmra.mxu0 %v1307
          %v1783 = vpop.f32.mrf.mxu0
          %v1784 = vadd.f32 0.0, %v1783
          %v1785 = vpop.f32.mrf.mxu0
          %v1786 = vadd.f32 0.0, %v1785
          %1787 = vmatmul.bf16.gmra.mxu0 %v1311
          %v1788 = vpop.f32.mrf.mxu0
          %v1789 = vadd.f32 0.0, %v1788
          %v1790 = vpop.f32.mrf.mxu0
          %v1791 = vadd.f32 0.0, %v1790
          %1792 = vmatmul.bf16.gmra.mxu0 %v1315
          %v1793 = vpop.f32.mrf.mxu0
          %v1794 = vadd.f32 0.0, %v1793
          %v1795 = vpop.f32.mrf.mxu0
          %v1796 = vadd.f32 0.0, %v1795
          %1797 = vmatmul.bf16.gmra.mxu0 %v1319
          %v1798 = vpop.f32.mrf.mxu0
          %v1799 = vadd.f32 0.0, %v1798
          %v1800 = vpop.f32.mrf.mxu0
          %v1801 = vadd.f32 0.0, %v1800
          %1802 = vmatmul.bf16.gmra.mxu0 %v1323
          %v1803 = vpop.f32.mrf.mxu0
          %v1804 = vadd.f32 0.0, %v1803
          %v1805 = vpop.f32.mrf.mxu0
          %v1806 = vadd.f32 0.0, %v1805
          %1807 = vmatmul.bf16.gmra.mxu0 %v1327
          %v1808 = vpop.f32.mrf.mxu0
          %v1809 = vadd.f32 0.0, %v1808
          %v1810 = vpop.f32.mrf.mxu0
          %v1811 = vadd.f32 0.0, %v1810
          %1812 = vmatmul.bf16.gmra.mxu0 %v1331
          %v1813 = vpop.f32.mrf.mxu0
          %v1814 = vadd.f32 0.0, %v1813
          %v1815 = vpop.f32.mrf.mxu0
          %v1816 = vadd.f32 0.0, %v1815
          %1817 = vmatmul.bf16.gmra.mxu0 %v1335
          %v1818 = vpop.f32.mrf.mxu0
          %v1819 = vadd.f32 0.0, %v1818
          %v1820 = vpop.f32.mrf.mxu0
          %v1821 = vadd.f32 0.0, %v1820
          %1822 = vmatmul.bf16.gmra.mxu0 %v1339
          %v1823 = vpop.f32.mrf.mxu0
          %v1824 = vadd.f32 0.0, %v1823
          %v1825 = vpop.f32.mrf.mxu0
          %v1826 = vadd.f32 0.0, %v1825
          %1827 = vmatmul.bf16.gmra.mxu0 %v1343
          %v1828 = vpop.f32.mrf.mxu0
          %v1829 = vadd.f32 0.0, %v1828
          %v1830 = vpop.f32.mrf.mxu0
          %v1831 = vadd.f32 0.0, %v1830
          %1832 = vmatmul.bf16.gmra.mxu0 %v1347
          %v1833 = vpop.f32.mrf.mxu0
          %v1834 = vadd.f32 0.0, %v1833
          %v1835 = vpop.f32.mrf.mxu0
          %v1836 = vadd.f32 0.0, %v1835
          %1837 = vmatmul.bf16.gmra.mxu0 %v1351
          %v1838 = vpop.f32.mrf.mxu0
          %v1839 = vadd.f32 0.0, %v1838
          %v1840 = vpop.f32.mrf.mxu0
          %v1841 = vadd.f32 0.0, %v1840
          %1842 = vmatmul.bf16.gmra.mxu0 %v1355
          %v1843 = vpop.f32.mrf.mxu0
          %v1844 = vadd.f32 0.0, %v1843
          %v1845 = vpop.f32.mrf.mxu0
          %v1846 = vadd.f32 0.0, %v1845
          %1847 = vdwg.mxu0
          %1848 = vmatpush.bf16.msra.mxu0 %v1630
          %1849 = vmatpush.bf16.msra.mxu0 %v1629
          %1850 = vmatpush.bf16.msra.mxu0 %v1628
          %1851 = vmatpush.bf16.msra.mxu0 %v1627
          %1852 = vmatpush.bf16.msra.mxu0 %v1626
          %1853 = vmatpush.bf16.msra.mxu0 %v1625
          %1854 = vmatpush.bf16.msra.mxu0 %v1624
          %1855 = vmatpush.bf16.msra.mxu0 %v1623
          %1856 = vmatmul.bf16.gmra.mxu0 %v1232
          %v1857 = vpop.f32.mrf.mxu0
          %v1858 = vadd.f32 %v1689, %v1857
          %v1859 = vpop.f32.mrf.mxu0
          %v1860 = vadd.f32 %v1691, %v1859
          %1861 = vmatmul.bf16.gmra.mxu0 %v1236
          %v1862 = vpop.f32.mrf.mxu0
          %v1863 = vadd.f32 %v1694, %v1862
          %v1864 = vpop.f32.mrf.mxu0
          %v1865 = vadd.f32 %v1696, %v1864
          %1866 = vmatmul.bf16.gmra.mxu0 %v1240
          %v1867 = vpop.f32.mrf.mxu0
          %v1868 = vadd.f32 %v1699, %v1867
          %v1869 = vpop.f32.mrf.mxu0
          %v1870 = vadd.f32 %v1701, %v1869
          %1871 = vmatmul.bf16.gmra.mxu0 %v1244
          %v1872 = vpop.f32.mrf.mxu0
          %v1873 = vadd.f32 %v1704, %v1872
          %v1874 = vpop.f32.mrf.mxu0
          %v1875 = vadd.f32 %v1706, %v1874
          %1876 = vmatmul.bf16.gmra.mxu0 %v1248
          %v1877 = vpop.f32.mrf.mxu0
          %v1878 = vadd.f32 %v1709, %v1877
          %v1879 = vpop.f32.mrf.mxu0
          %v1880 = vadd.f32 %v1711, %v1879
          %1881 = vmatmul.bf16.gmra.mxu0 %v1252
          %v1882 = vpop.f32.mrf.mxu0
          %v1883 = vadd.f32 %v1714, %v1882
          %v1884 = vpop.f32.mrf.mxu0
          %v1885 = vadd.f32 %v1716, %v1884
          %1886 = vmatmul.bf16.gmra.mxu0 %v1256
          %v1887 = vpop.f32.mrf.mxu0
          %v1888 = vadd.f32 %v1719, %v1887
          %v1889 = vpop.f32.mrf.mxu0
          %v1890 = vadd.f32 %v1721, %v1889
          %1891 = vmatmul.bf16.gmra.mxu0 %v1260
          %v1892 = vpop.f32.mrf.mxu0
          %v1893 = vadd.f32 %v1724, %v1892
          %v1894 = vpop.f32.mrf.mxu0
          %v1895 = vadd.f32 %v1726, %v1894
          %1896 = vmatmul.bf16.gmra.mxu0 %v1264
          %v1897 = vpop.f32.mrf.mxu0
          %v1898 = vadd.f32 %v1729, %v1897
          %v1899 = vpop.f32.mrf.mxu0
          %v1900 = vadd.f32 %v1731, %v1899
          %1901 = vmatmul.bf16.gmra.mxu0 %v1268
          %v1902 = vpop.f32.mrf.mxu0
          %v1903 = vadd.f32 %v1734, %v1902
          %v1904 = vpop.f32.mrf.mxu0
          %v1905 = vadd.f32 %v1736, %v1904
          %1906 = vmatmul.bf16.gmra.mxu0 %v1272
          %v1907 = vpop.f32.mrf.mxu0
          %v1908 = vadd.f32 %v1739, %v1907
          %v1909 = vpop.f32.mrf.mxu0
          %v1910 = vadd.f32 %v1741, %v1909
          %1911 = vmatmul.bf16.gmra.mxu0 %v1276
          %v1912 = vpop.f32.mrf.mxu0
          %v1913 = vadd.f32 %v1744, %v1912
          %v1914 = vpop.f32.mrf.mxu0
          %v1915 = vadd.f32 %v1746, %v1914
          %1916 = vmatmul.bf16.gmra.mxu0 %v1280
          %v1917 = vpop.f32.mrf.mxu0
          %v1918 = vadd.f32 %v1749, %v1917
          %v1919 = vpop.f32.mrf.mxu0
          %v1920 = vadd.f32 %v1751, %v1919
          %1921 = vmatmul.bf16.gmra.mxu0 %v1284
          %v1922 = vpop.f32.mrf.mxu0
          %v1923 = vadd.f32 %v1754, %v1922
          %v1924 = vpop.f32.mrf.mxu0
          %v1925 = vadd.f32 %v1756, %v1924
          %1926 = vmatmul.bf16.gmra.mxu0 %v1288
          %v1927 = vpop.f32.mrf.mxu0
          %v1928 = vadd.f32 %v1759, %v1927
          %v1929 = vpop.f32.mrf.mxu0
          %v1930 = vadd.f32 %v1761, %v1929
          %1931 = vmatmul.bf16.gmra.mxu0 %v1292
          %v1932 = vpop.f32.mrf.mxu0
          %v1933 = vadd.f32 %v1764, %v1932
          %v1934 = vpop.f32.mrf.mxu0
          %v1935 = vadd.f32 %v1766, %v1934
          %1936 = vmatmul.bf16.gmra.mxu0 %v1296
          %v1937 = vpop.f32.mrf.mxu0
          %v1938 = vadd.f32 %v1769, %v1937
          %v1939 = vpop.f32.mrf.mxu0
          %v1940 = vadd.f32 %v1771, %v1939
          %1941 = vmatmul.bf16.gmra.mxu0 %v1300
          %v1942 = vpop.f32.mrf.mxu0
          %v1943 = vadd.f32 %v1774, %v1942
          %v1944 = vpop.f32.mrf.mxu0
          %v1945 = vadd.f32 %v1776, %v1944
          %1946 = vmatmul.bf16.gmra.mxu0 %v1304
          %v1947 = vpop.f32.mrf.mxu0
          %v1948 = vadd.f32 %v1779, %v1947
          %v1949 = vpop.f32.mrf.mxu0
          %v1950 = vadd.f32 %v1781, %v1949
          %1951 = vmatmul.bf16.gmra.mxu0 %v1308
          %v1952 = vpop.f32.mrf.mxu0
          %v1953 = vadd.f32 %v1784, %v1952
          %v1954 = vpop.f32.mrf.mxu0
          %v1955 = vadd.f32 %v1786, %v1954
          %1956 = vmatmul.bf16.gmra.mxu0 %v1312
          %v1957 = vpop.f32.mrf.mxu0
          %v1958 = vadd.f32 %v1789, %v1957
          %v1959 = vpop.f32.mrf.mxu0
          %v1960 = vadd.f32 %v1791, %v1959
          %1961 = vmatmul.bf16.gmra.mxu0 %v1316
          %v1962 = vpop.f32.mrf.mxu0
          %v1963 = vadd.f32 %v1794, %v1962
          %v1964 = vpop.f32.mrf.mxu0
          %v1965 = vadd.f32 %v1796, %v1964
          %1966 = vmatmul.bf16.gmra.mxu0 %v1320
          %v1967 = vpop.f32.mrf.mxu0
          %v1968 = vadd.f32 %v1799, %v1967
          %v1969 = vpop.f32.mrf.mxu0
          %v1970 = vadd.f32 %v1801, %v1969
          %1971 = vmatmul.bf16.gmra.mxu0 %v1324
          %v1972 = vpop.f32.mrf.mxu0
          %v1973 = vadd.f32 %v1804, %v1972
          %v1974 = vpop.f32.mrf.mxu0
          %v1975 = vadd.f32 %v1806, %v1974
          %1976 = vmatmul.bf16.gmra.mxu0 %v1328
          %v1977 = vpop.f32.mrf.mxu0
          %v1978 = vadd.f32 %v1809, %v1977
          %v1979 = vpop.f32.mrf.mxu0
          %v1980 = vadd.f32 %v1811, %v1979
          %1981 = vmatmul.bf16.gmra.mxu0 %v1332
          %v1982 = vpop.f32.mrf.mxu0
          %v1983 = vadd.f32 %v1814, %v1982
          %v1984 = vpop.f32.mrf.mxu0
          %v1985 = vadd.f32 %v1816, %v1984
          %1986 = vmatmul.bf16.gmra.mxu0 %v1336
          %v1987 = vpop.f32.mrf.mxu0
          %v1988 = vadd.f32 %v1819, %v1987
          %v1989 = vpop.f32.mrf.mxu0
          %v1990 = vadd.f32 %v1821, %v1989
          %1991 = vmatmul.bf16.gmra.mxu0 %v1340
          %v1992 = vpop.f32.mrf.mxu0
          %v1993 = vadd.f32 %v1824, %v1992
          %v1994 = vpop.f32.mrf.mxu0
          %v1995 = vadd.f32 %v1826, %v1994
          %1996 = vmatmul.bf16.gmra.mxu0 %v1344
          %v1997 = vpop.f32.mrf.mxu0
          %v1998 = vadd.f32 %v1829, %v1997
          %v1999 = vpop.f32.mrf.mxu0
          %v2000 = vadd.f32 %v1831, %v1999
          %2001 = vmatmul.bf16.gmra.mxu0 %v1348
          %v2002 = vpop.f32.mrf.mxu0
          %v2003 = vadd.f32 %v1834, %v2002
          %v2004 = vpop.f32.mrf.mxu0
          %v2005 = vadd.f32 %v1836, %v2004
          %2006 = vmatmul.bf16.gmra.mxu0 %v1352
          %v2007 = vpop.f32.mrf.mxu0
          %v2008 = vadd.f32 %v1839, %v2007
          %v2009 = vpop.f32.mrf.mxu0
          %v2010 = vadd.f32 %v1841, %v2009
          %2011 = vmatmul.bf16.gmra.mxu0 %v1356
          %v2012 = vpop.f32.mrf.mxu0
          %v2013 = vadd.f32 %v1844, %v2012
          %v2014 = vpop.f32.mrf.mxu0
          %v2015 = vadd.f32 %v1846, %v2014
          %2016 = vdwg.mxu0
          %2017 = vmatpush.bf16.msra.mxu0 %v1638
          %2018 = vmatpush.bf16.msra.mxu0 %v1637
          %2019 = vmatpush.bf16.msra.mxu0 %v1636
          %2020 = vmatpush.bf16.msra.mxu0 %v1635
          %2021 = vmatpush.bf16.msra.mxu0 %v1634
          %2022 = vmatpush.bf16.msra.mxu0 %v1633
          %2023 = vmatpush.bf16.msra.mxu0 %v1632
          %2024 = vmatpush.bf16.msra.mxu0 %v1631
          %2025 = vmatmul.bf16.gmra.mxu0 %v1233
          %v2026 = vpop.f32.mrf.mxu0
          %v2027 = vadd.f32 %v1858, %v2026
          %v2028 = vpop.f32.mrf.mxu0
          %v2029 = vadd.f32 %v1860, %v2028
          %2030 = vmatmul.bf16.gmra.mxu0 %v1237
          %v2031 = vpop.f32.mrf.mxu0
          %v2032 = vadd.f32 %v1863, %v2031
          %v2033 = vpop.f32.mrf.mxu0
          %v2034 = vadd.f32 %v1865, %v2033
          %2035 = vmatmul.bf16.gmra.mxu0 %v1241
          %v2036 = vpop.f32.mrf.mxu0
          %v2037 = vadd.f32 %v1868, %v2036
          %v2038 = vpop.f32.mrf.mxu0
          %v2039 = vadd.f32 %v1870, %v2038
          %2040 = vmatmul.bf16.gmra.mxu0 %v1245
          %v2041 = vpop.f32.mrf.mxu0
          %v2042 = vadd.f32 %v1873, %v2041
          %v2043 = vpop.f32.mrf.mxu0
          %v2044 = vadd.f32 %v1875, %v2043
          %2045 = vmatmul.bf16.gmra.mxu0 %v1249
          %v2046 = vpop.f32.mrf.mxu0
          %v2047 = vadd.f32 %v1878, %v2046
          %v2048 = vpop.f32.mrf.mxu0
          %v2049 = vadd.f32 %v1880, %v2048
          %2050 = vmatmul.bf16.gmra.mxu0 %v1253
          %v2051 = vpop.f32.mrf.mxu0
          %v2052 = vadd.f32 %v1883, %v2051
          %v2053 = vpop.f32.mrf.mxu0
          %v2054 = vadd.f32 %v1885, %v2053
          %2055 = vmatmul.bf16.gmra.mxu0 %v1257
          %v2056 = vpop.f32.mrf.mxu0
          %v2057 = vadd.f32 %v1888, %v2056
          %v2058 = vpop.f32.mrf.mxu0
          %v2059 = vadd.f32 %v1890, %v2058
          %2060 = vmatmul.bf16.gmra.mxu0 %v1261
          %v2061 = vpop.f32.mrf.mxu0
          %v2062 = vadd.f32 %v1893, %v2061
          %v2063 = vpop.f32.mrf.mxu0
          %v2064 = vadd.f32 %v1895, %v2063
          %2065 = vmatmul.bf16.gmra.mxu0 %v1265
          %v2066 = vpop.f32.mrf.mxu0
          %v2067 = vadd.f32 %v1898, %v2066
          %v2068 = vpop.f32.mrf.mxu0
          %v2069 = vadd.f32 %v1900, %v2068
          %2070 = vmatmul.bf16.gmra.mxu0 %v1269
          %v2071 = vpop.f32.mrf.mxu0
          %v2072 = vadd.f32 %v1903, %v2071
          %v2073 = vpop.f32.mrf.mxu0
          %v2074 = vadd.f32 %v1905, %v2073
          %2075 = vmatmul.bf16.gmra.mxu0 %v1273
          %v2076 = vpop.f32.mrf.mxu0
          %v2077 = vadd.f32 %v1908, %v2076
          %v2078 = vpop.f32.mrf.mxu0
          %v2079 = vadd.f32 %v1910, %v2078
          %2080 = vmatmul.bf16.gmra.mxu0 %v1277
          %v2081 = vpop.f32.mrf.mxu0
          %v2082 = vadd.f32 %v1913, %v2081
          %v2083 = vpop.f32.mrf.mxu0
          %v2084 = vadd.f32 %v1915, %v2083
          %2085 = vmatmul.bf16.gmra.mxu0 %v1281
          %v2086 = vpop.f32.mrf.mxu0
          %v2087 = vadd.f32 %v1918, %v2086
          %v2088 = vpop.f32.mrf.mxu0
          %v2089 = vadd.f32 %v1920, %v2088
          %2090 = vmatmul.bf16.gmra.mxu0 %v1285
          %v2091 = vpop.f32.mrf.mxu0
          %v2092 = vadd.f32 %v1923, %v2091
          %v2093 = vpop.f32.mrf.mxu0
          %v2094 = vadd.f32 %v1925, %v2093
          %2095 = vmatmul.bf16.gmra.mxu0 %v1289
          %v2096 = vpop.f32.mrf.mxu0
          %v2097 = vadd.f32 %v1928, %v2096
          %v2098 = vpop.f32.mrf.mxu0
          %v2099 = vadd.f32 %v1930, %v2098
          %2100 = vmatmul.bf16.gmra.mxu0 %v1293
          %v2101 = vpop.f32.mrf.mxu0
          %v2102 = vadd.f32 %v1933, %v2101
          %v2103 = vpop.f32.mrf.mxu0
          %v2104 = vadd.f32 %v1935, %v2103
          %2105 = vmatmul.bf16.gmra.mxu0 %v1297
          %v2106 = vpop.f32.mrf.mxu0
          %v2107 = vadd.f32 %v1938, %v2106
          %v2108 = vpop.f32.mrf.mxu0
          %v2109 = vadd.f32 %v1940, %v2108
          %2110 = vmatmul.bf16.gmra.mxu0 %v1301
          %v2111 = vpop.f32.mrf.mxu0
          %v2112 = vadd.f32 %v1943, %v2111
          %v2113 = vpop.f32.mrf.mxu0
          %v2114 = vadd.f32 %v1945, %v2113
          %2115 = vmatmul.bf16.gmra.mxu0 %v1305
          %v2116 = vpop.f32.mrf.mxu0
          %v2117 = vadd.f32 %v1948, %v2116
          %v2118 = vpop.f32.mrf.mxu0
          %v2119 = vadd.f32 %v1950, %v2118
          %2120 = vmatmul.bf16.gmra.mxu0 %v1309
          %v2121 = vpop.f32.mrf.mxu0
          %v2122 = vadd.f32 %v1953, %v2121
          %v2123 = vpop.f32.mrf.mxu0
          %v2124 = vadd.f32 %v1955, %v2123
          %2125 = vmatmul.bf16.gmra.mxu0 %v1313
          %v2126 = vpop.f32.mrf.mxu0
          %v2127 = vadd.f32 %v1958, %v2126
          %v2128 = vpop.f32.mrf.mxu0
          %v2129 = vadd.f32 %v1960, %v2128
          %2130 = vmatmul.bf16.gmra.mxu0 %v1317
          %v2131 = vpop.f32.mrf.mxu0
          %v2132 = vadd.f32 %v1963, %v2131
          %v2133 = vpop.f32.mrf.mxu0
          %v2134 = vadd.f32 %v1965, %v2133
          %2135 = vmatmul.bf16.gmra.mxu0 %v1321
          %v2136 = vpop.f32.mrf.mxu0
          %v2137 = vadd.f32 %v1968, %v2136
          %v2138 = vpop.f32.mrf.mxu0
          %v2139 = vadd.f32 %v1970, %v2138
          %2140 = vmatmul.bf16.gmra.mxu0 %v1325
          %v2141 = vpop.f32.mrf.mxu0
          %v2142 = vadd.f32 %v1973, %v2141
          %v2143 = vpop.f32.mrf.mxu0
          %v2144 = vadd.f32 %v1975, %v2143
          %2145 = vmatmul.bf16.gmra.mxu0 %v1329
          %v2146 = vpop.f32.mrf.mxu0
          %v2147 = vadd.f32 %v1978, %v2146
          %v2148 = vpop.f32.mrf.mxu0
          %v2149 = vadd.f32 %v1980, %v2148
          %2150 = vmatmul.bf16.gmra.mxu0 %v1333
          %v2151 = vpop.f32.mrf.mxu0
          %v2152 = vadd.f32 %v1983, %v2151
          %v2153 = vpop.f32.mrf.mxu0
          %v2154 = vadd.f32 %v1985, %v2153
          %2155 = vmatmul.bf16.gmra.mxu0 %v1337
          %v2156 = vpop.f32.mrf.mxu0
          %v2157 = vadd.f32 %v1988, %v2156
          %v2158 = vpop.f32.mrf.mxu0
          %v2159 = vadd.f32 %v1990, %v2158
          %2160 = vmatmul.bf16.gmra.mxu0 %v1341
          %v2161 = vpop.f32.mrf.mxu0
          %v2162 = vadd.f32 %v1993, %v2161
          %v2163 = vpop.f32.mrf.mxu0
          %v2164 = vadd.f32 %v1995, %v2163
          %2165 = vmatmul.bf16.gmra.mxu0 %v1345
          %v2166 = vpop.f32.mrf.mxu0
          %v2167 = vadd.f32 %v1998, %v2166
          %v2168 = vpop.f32.mrf.mxu0
          %v2169 = vadd.f32 %v2000, %v2168
          %2170 = vmatmul.bf16.gmra.mxu0 %v1349
          %v2171 = vpop.f32.mrf.mxu0
          %v2172 = vadd.f32 %v2003, %v2171
          %v2173 = vpop.f32.mrf.mxu0
          %v2174 = vadd.f32 %v2005, %v2173
          %2175 = vmatmul.bf16.gmra.mxu0 %v1353
          %v2176 = vpop.f32.mrf.mxu0
          %v2177 = vadd.f32 %v2008, %v2176
          %v2178 = vpop.f32.mrf.mxu0
          %v2179 = vadd.f32 %v2010, %v2178
          %2180 = vmatmul.bf16.gmra.mxu0 %v1357
          %v2181 = vpop.f32.mrf.mxu0
          %v2182 = vadd.f32 %v2013, %v2181
          %v2183 = vpop.f32.mrf.mxu0
          %v2184 = vadd.f32 %v2015, %v2183
          %2185 = vdwg.mxu0
          %2186 = vmatpush.bf16.msra.mxu0 %v1646
          %2187 = vmatpush.bf16.msra.mxu0 %v1645
          %2188 = vmatpush.bf16.msra.mxu0 %v1644
          %2189 = vmatpush.bf16.msra.mxu0 %v1643
          %2190 = vmatpush.bf16.msra.mxu0 %v1642
          %2191 = vmatpush.bf16.msra.mxu0 %v1641
          %2192 = vmatpush.bf16.msra.mxu0 %v1640
          %2193 = vmatpush.bf16.msra.mxu0 %v1639
          %2194 = vmatmul.bf16.gmra.mxu0 %v1234
          %v2195 = vpop.f32.mrf.mxu0
          %v2196 = vadd.f32 %v2027, %v2195
          %v2197 = vpop.f32.mrf.mxu0
          %v2198 = vadd.f32 %v2029, %v2197
          %2199 = vmatmul.bf16.gmra.mxu0 %v1238
          %v2200 = vpop.f32.mrf.mxu0
          %v2201 = vadd.f32 %v2032, %v2200
          %v2202 = vpop.f32.mrf.mxu0
          %v2203 = vadd.f32 %v2034, %v2202
          %2204 = vmatmul.bf16.gmra.mxu0 %v1242
          %v2205 = vpop.f32.mrf.mxu0
          %v2206 = vadd.f32 %v2037, %v2205
          %v2207 = vpop.f32.mrf.mxu0
          %v2208 = vadd.f32 %v2039, %v2207
          %2209 = vmatmul.bf16.gmra.mxu0 %v1246
          %v2210 = vpop.f32.mrf.mxu0
          %v2211 = vadd.f32 %v2042, %v2210
          %v2212 = vpop.f32.mrf.mxu0
          %v2213 = vadd.f32 %v2044, %v2212
          %2214 = vmatmul.bf16.gmra.mxu0 %v1250
          %v2215 = vpop.f32.mrf.mxu0
          %v2216 = vadd.f32 %v2047, %v2215
          %v2217 = vpop.f32.mrf.mxu0
          %v2218 = vadd.f32 %v2049, %v2217
          %2219 = vmatmul.bf16.gmra.mxu0 %v1254
          %v2220 = vpop.f32.mrf.mxu0
          %v2221 = vadd.f32 %v2052, %v2220
          %v2222 = vpop.f32.mrf.mxu0
          %v2223 = vadd.f32 %v2054, %v2222
          %2224 = vmatmul.bf16.gmra.mxu0 %v1258
          %v2225 = vpop.f32.mrf.mxu0
          %v2226 = vadd.f32 %v2057, %v2225
          %v2227 = vpop.f32.mrf.mxu0
          %v2228 = vadd.f32 %v2059, %v2227
          %2229 = vmatmul.bf16.gmra.mxu0 %v1262
          %v2230 = vpop.f32.mrf.mxu0
          %v2231 = vadd.f32 %v2062, %v2230
          %v2232 = vpop.f32.mrf.mxu0
          %v2233 = vadd.f32 %v2064, %v2232
          %2234 = vmatmul.bf16.gmra.mxu0 %v1266
          %v2235 = vpop.f32.mrf.mxu0
          %v2236 = vadd.f32 %v2067, %v2235
          %v2237 = vpop.f32.mrf.mxu0
          %v2238 = vadd.f32 %v2069, %v2237
          %2239 = vmatmul.bf16.gmra.mxu0 %v1270
          %v2240 = vpop.f32.mrf.mxu0
          %v2241 = vadd.f32 %v2072, %v2240
          %v2242 = vpop.f32.mrf.mxu0
          %v2243 = vadd.f32 %v2074, %v2242
          %2244 = vmatmul.bf16.gmra.mxu0 %v1274
          %v2245 = vpop.f32.mrf.mxu0
          %v2246 = vadd.f32 %v2077, %v2245
          %v2247 = vpop.f32.mrf.mxu0
          %v2248 = vadd.f32 %v2079, %v2247
          %2249 = vmatmul.bf16.gmra.mxu0 %v1278
          %v2250 = vpop.f32.mrf.mxu0
          %v2251 = vadd.f32 %v2082, %v2250
          %v2252 = vpop.f32.mrf.mxu0
          %v2253 = vadd.f32 %v2084, %v2252
          %2254 = vmatmul.bf16.gmra.mxu0 %v1282
          %v2255 = vpop.f32.mrf.mxu0
          %v2256 = vadd.f32 %v2087, %v2255
          %v2257 = vpop.f32.mrf.mxu0
          %v2258 = vadd.f32 %v2089, %v2257
          %2259 = vmatmul.bf16.gmra.mxu0 %v1286
          %v2260 = vpop.f32.mrf.mxu0
          %v2261 = vadd.f32 %v2092, %v2260
          %v2262 = vpop.f32.mrf.mxu0
          %v2263 = vadd.f32 %v2094, %v2262
          %2264 = vmatmul.bf16.gmra.mxu0 %v1290
          %v2265 = vpop.f32.mrf.mxu0
          %v2266 = vadd.f32 %v2097, %v2265
          %v2267 = vpop.f32.mrf.mxu0
          %v2268 = vadd.f32 %v2099, %v2267
          %2269 = vmatmul.bf16.gmra.mxu0 %v1294
          %v2270 = vpop.f32.mrf.mxu0
          %v2271 = vadd.f32 %v2102, %v2270
          %v2272 = vpop.f32.mrf.mxu0
          %v2273 = vadd.f32 %v2104, %v2272
          %2274 = vmatmul.bf16.gmra.mxu0 %v1298
          %v2275 = vpop.f32.mrf.mxu0
          %v2276 = vadd.f32 %v2107, %v2275
          %v2277 = vpop.f32.mrf.mxu0
          %v2278 = vadd.f32 %v2109, %v2277
          %2279 = vmatmul.bf16.gmra.mxu0 %v1302
          %v2280 = vpop.f32.mrf.mxu0
          %v2281 = vadd.f32 %v2112, %v2280
          %v2282 = vpop.f32.mrf.mxu0
          %v2283 = vadd.f32 %v2114, %v2282
          %2284 = vmatmul.bf16.gmra.mxu0 %v1306
          %v2285 = vpop.f32.mrf.mxu0
          %v2286 = vadd.f32 %v2117, %v2285
          %v2287 = vpop.f32.mrf.mxu0
          %v2288 = vadd.f32 %v2119, %v2287
          %2289 = vmatmul.bf16.gmra.mxu0 %v1310
          %v2290 = vpop.f32.mrf.mxu0
          %v2291 = vadd.f32 %v2122, %v2290
          %v2292 = vpop.f32.mrf.mxu0
          %v2293 = vadd.f32 %v2124, %v2292
          %2294 = vmatmul.bf16.gmra.mxu0 %v1314
          %v2295 = vpop.f32.mrf.mxu0
          %v2296 = vadd.f32 %v2127, %v2295
          %v2297 = vpop.f32.mrf.mxu0
          %v2298 = vadd.f32 %v2129, %v2297
          %2299 = vmatmul.bf16.gmra.mxu0 %v1318
          %v2300 = vpop.f32.mrf.mxu0
          %v2301 = vadd.f32 %v2132, %v2300
          %v2302 = vpop.f32.mrf.mxu0
          %v2303 = vadd.f32 %v2134, %v2302
          %2304 = vmatmul.bf16.gmra.mxu0 %v1322
          %v2305 = vpop.f32.mrf.mxu0
          %v2306 = vadd.f32 %v2137, %v2305
          %v2307 = vpop.f32.mrf.mxu0
          %v2308 = vadd.f32 %v2139, %v2307
          %2309 = vmatmul.bf16.gmra.mxu0 %v1326
          %v2310 = vpop.f32.mrf.mxu0
          %v2311 = vadd.f32 %v2142, %v2310
          %v2312 = vpop.f32.mrf.mxu0
          %v2313 = vadd.f32 %v2144, %v2312
          %2314 = vmatmul.bf16.gmra.mxu0 %v1330
          %v2315 = vpop.f32.mrf.mxu0
          %v2316 = vadd.f32 %v2147, %v2315
          %v2317 = vpop.f32.mrf.mxu0
          %v2318 = vadd.f32 %v2149, %v2317
          %2319 = vmatmul.bf16.gmra.mxu0 %v1334
          %v2320 = vpop.f32.mrf.mxu0
          %v2321 = vadd.f32 %v2152, %v2320
          %v2322 = vpop.f32.mrf.mxu0
          %v2323 = vadd.f32 %v2154, %v2322
          %2324 = vmatmul.bf16.gmra.mxu0 %v1338
          %v2325 = vpop.f32.mrf.mxu0
          %v2326 = vadd.f32 %v2157, %v2325
          %v2327 = vpop.f32.mrf.mxu0
          %v2328 = vadd.f32 %v2159, %v2327
          %2329 = vmatmul.bf16.gmra.mxu0 %v1342
          %v2330 = vpop.f32.mrf.mxu0
          %v2331 = vadd.f32 %v2162, %v2330
          %v2332 = vpop.f32.mrf.mxu0
          %v2333 = vadd.f32 %v2164, %v2332
          %2334 = vmatmul.bf16.gmra.mxu0 %v1346
          %v2335 = vpop.f32.mrf.mxu0
          %v2336 = vadd.f32 %v2167, %v2335
          %v2337 = vpop.f32.mrf.mxu0
          %v2338 = vadd.f32 %v2169, %v2337
          %2339 = vmatmul.bf16.gmra.mxu0 %v1350
          %v2340 = vpop.f32.mrf.mxu0
          %v2341 = vadd.f32 %v2172, %v2340
          %v2342 = vpop.f32.mrf.mxu0
          %v2343 = vadd.f32 %v2174, %v2342
          %2344 = vmatmul.bf16.gmra.mxu0 %v1354
          %v2345 = vpop.f32.mrf.mxu0
          %v2346 = vadd.f32 %v2177, %v2345
          %v2347 = vpop.f32.mrf.mxu0
          %v2348 = vadd.f32 %v2179, %v2347
          %2349 = vmatmul.bf16.gmra.mxu0 %v1358
          %v2350 = vpop.f32.mrf.mxu0
          %v2351 = vadd.f32 %v2182, %v2350
          %v2352 = vpop.f32.mrf.mxu0
          %v2353 = vadd.f32 %v2184, %v2352
          %2354 = vdwg.mxu0
          %v2355 = vadd.f32 %v655, %v2196
          %v2356 = vadd.f32 %v656, %v2198
          %v2357 = vadd.f32 %v657, %v2201
          %v2358 = vadd.f32 %v658, %v2203
          %v2359 = vadd.f32 %v659, %v2206
          %v2360 = vadd.f32 %v660, %v2208
          %v2361 = vadd.f32 %v661, %v2211
          %v2362 = vadd.f32 %v662, %v2213
          %v2363 = vadd.f32 %v663, %v2216
          %v2364 = vadd.f32 %v664, %v2218
          %v2365 = vadd.f32 %v665, %v2221
          %v2366 = vadd.f32 %v666, %v2223
          %v2367 = vadd.f32 %v667, %v2226
          %v2368 = vadd.f32 %v668, %v2228
          %v2369 = vadd.f32 %v669, %v2231
          %v2370 = vadd.f32 %v670, %v2233
          %v2371 = vadd.f32 %v671, %v2236
          %v2372 = vadd.f32 %v672, %v2238
          %v2373 = vadd.f32 %v673, %v2241
          %v2374 = vadd.f32 %v674, %v2243
          %v2375 = vadd.f32 %v675, %v2246
          %v2376 = vadd.f32 %v676, %v2248
          %v2377 = vadd.f32 %v677, %v2251
          %v2378 = vadd.f32 %v678, %v2253
          %v2379 = vadd.f32 %v679, %v2256
          %v2380 = vadd.f32 %v680, %v2258
          %v2381 = vadd.f32 %v681, %v2261
          %v2382 = vadd.f32 %v682, %v2263
          %v2383 = vadd.f32 %v683, %v2266
          %v2384 = vadd.f32 %v684, %v2268
          %v2385 = vadd.f32 %v685, %v2271
          %v2386 = vadd.f32 %v686, %v2273
          %v2387 = vadd.f32 %v687, %v2276
          %v2388 = vadd.f32 %v688, %v2278
          %v2389 = vadd.f32 %v689, %v2281
          %v2390 = vadd.f32 %v690, %v2283
          %v2391 = vadd.f32 %v691, %v2286
          %v2392 = vadd.f32 %v692, %v2288
          %v2393 = vadd.f32 %v693, %v2291
          %v2394 = vadd.f32 %v694, %v2293
          %v2395 = vadd.f32 %v695, %v2296
          %v2396 = vadd.f32 %v696, %v2298
          %v2397 = vadd.f32 %v697, %v2301
          %v2398 = vadd.f32 %v698, %v2303
          %v2399 = vadd.f32 %v699, %v2306
          %v2400 = vadd.f32 %v700, %v2308
          %v2401 = vadd.f32 %v701, %v2311
          %v2402 = vadd.f32 %v702, %v2313
          %v2403 = vadd.f32 %v703, %v2316
          %v2404 = vadd.f32 %v704, %v2318
          %v2405 = vadd.f32 %v705, %v2321
          %v2406 = vadd.f32 %v706, %v2323
          %v2407 = vadd.f32 %v707, %v2326
          %v2408 = vadd.f32 %v708, %v2328
          %v2409 = vadd.f32 %v709, %v2331
          %v2410 = vadd.f32 %v710, %v2333
          %v2411 = vadd.f32 %v711, %v2336
          %v2412 = vadd.f32 %v712, %v2338
          %v2413 = vadd.f32 %v713, %v2341
          %v2414 = vadd.f32 %v714, %v2343
          %v2415 = vadd.f32 %v715, %v2346
          %v2416 = vadd.f32 %v716, %v2348
          %v2417 = vadd.f32 %v717, %v2351
          %v2418 = vadd.f32 %v718, %v2353
          %2419 = vst [vmem:[#allocation2] sm:$0xff] %v2355
          %2420 = vst [vmem:[#allocation2 + $0x8] sm:$0xff] %v2356
          %2421 = vst [vmem:[#allocation2 + $0x10] sm:$0xff] %v2357
          %2422 = vst [vmem:[#allocation2 + $0x18] sm:$0xff] %v2358
          %2423 = vst [vmem:[#allocation2 + $0x20] sm:$0xff] %v2359
          %2424 = vst [vmem:[#allocation2 + $0x28] sm:$0xff] %v2360
          %2425 = vst [vmem:[#allocation2 + $0x30] sm:$0xff] %v2361
          %2426 = vst [vmem:[#allocation2 + $0x38] sm:$0xff] %v2362
          %2427 = vst [vmem:[#allocation2 + $0x40] sm:$0xff] %v2363
          %2428 = vst [vmem:[#allocation2 + $0x48] sm:$0xff] %v2364
          %2429 = vst [vmem:[#allocation2 + $0x50] sm:$0xff] %v2365
          %2430 = vst [vmem:[#allocation2 + $0x58] sm:$0xff] %v2366
          %2431 = vst [vmem:[#allocation2 + $0x60] sm:$0xff] %v2367
          %2432 = vst [vmem:[#allocation2 + $0x68] sm:$0xff] %v2368
          %2433 = vst [vmem:[#allocation2 + $0x70] sm:$0xff] %v2369
          %2434 = vst [vmem:[#allocation2 + $0x78] sm:$0xff] %v2370
          %2435 = vst [vmem:[#allocation2 + $0x80] sm:$0xff] %v2371
          %2436 = vst [vmem:[#allocation2 + $0x88] sm:$0xff] %v2372
          %2437 = vst [vmem:[#allocation2 + $0x90] sm:$0xff] %v2373
          %2438 = vst [vmem:[#allocation2 + $0x98] sm:$0xff] %v2374
          %2439 = vst [vmem:[#allocation2 + $0xa0] sm:$0xff] %v2375
          %2440 = vst [vmem:[#allocation2 + $0xa8] sm:$0xff] %v2376
          %2441 = vst [vmem:[#allocation2 + $0xb0] sm:$0xff] %v2377
          %2442 = vst [vmem:[#allocation2 + $0xb8] sm:$0xff] %v2378
          %2443 = vst [vmem:[#allocation2 + $0xc0] sm:$0xff] %v2379
          %2444 = vst [vmem:[#allocation2 + $0xc8] sm:$0xff] %v2380
          %2445 = vst [vmem:[#allocation2 + $0xd0] sm:$0xff] %v2381
          %2446 = vst [vmem:[#allocation2 + $0xd8] sm:$0xff] %v2382
          %2447 = vst [vmem:[#allocation2 + $0xe0] sm:$0xff] %v2383
          %2448 = vst [vmem:[#allocation2 + $0xe8] sm:$0xff] %v2384
          %2449 = vst [vmem:[#allocation2 + $0xf0] sm:$0xff] %v2385
          %2450 = vst [vmem:[#allocation2 + $0xf8] sm:$0xff] %v2386
          %2451 = vst [vmem:[#allocation2 + $0x100] sm:$0xff] %v2387
          %2452 = vst [vmem:[#allocation2 + $0x108] sm:$0xff] %v2388
          %2453 = vst [vmem:[#allocation2 + $0x110] sm:$0xff] %v2389
          %2454 = vst [vmem:[#allocation2 + $0x118] sm:$0xff] %v2390
          %2455 = vst [vmem:[#allocation2 + $0x120] sm:$0xff] %v2391
          %2456 = vst [vmem:[#allocation2 + $0x128] sm:$0xff] %v2392
          %2457 = vst [vmem:[#allocation2 + $0x130] sm:$0xff] %v2393
          %2458 = vst [vmem:[#allocation2 + $0x138] sm:$0xff] %v2394
          %2459 = vst [vmem:[#allocation2 + $0x140] sm:$0xff] %v2395
          %2460 = vst [vmem:[#allocation2 + $0x148] sm:$0xff] %v2396
          %2461 = vst [vmem:[#allocation2 + $0x150] sm:$0xff] %v2397
          %2462 = vst [vmem:[#allocation2 + $0x158] sm:$0xff] %v2398
          %2463 = vst [vmem:[#allocation2 + $0x160] sm:$0xff] %v2399
          %2464 = vst [vmem:[#allocation2 + $0x168] sm:$0xff] %v2400
          %2465 = vst [vmem:[#allocation2 + $0x170] sm:$0xff] %v2401
          %2466 = vst [vmem:[#allocation2 + $0x178] sm:$0xff] %v2402
          %2467 = vst [vmem:[#allocation2 + $0x180] sm:$0xff] %v2403
          %2468 = vst [vmem:[#allocation2 + $0x188] sm:$0xff] %v2404
          %2469 = vst [vmem:[#allocation2 + $0x190] sm:$0xff] %v2405
          %2470 = vst [vmem:[#allocation2 + $0x198] sm:$0xff] %v2406
          %2471 = vst [vmem:[#allocation2 + $0x1a0] sm:$0xff] %v2407
          %2472 = vst [vmem:[#allocation2 + $0x1a8] sm:$0xff] %v2408
          %2473 = vst [vmem:[#allocation2 + $0x1b0] sm:$0xff] %v2409
          %2474 = vst [vmem:[#allocation2 + $0x1b8] sm:$0xff] %v2410
          %2475 = vst [vmem:[#allocation2 + $0x1c0] sm:$0xff] %v2411
          %2476 = vst [vmem:[#allocation2 + $0x1c8] sm:$0xff] %v2412
          %2477 = vst [vmem:[#allocation2 + $0x1d0] sm:$0xff] %v2413
          %2478 = vst [vmem:[#allocation2 + $0x1d8] sm:$0xff] %v2414
          %2479 = vst [vmem:[#allocation2 + $0x1e0] sm:$0xff] %v2415
          %2480 = vst [vmem:[#allocation2 + $0x1e8] sm:$0xff] %v2416
          %2481 = vst [vmem:[#allocation2 + $0x1f0] sm:$0xff] %v2417
          %2482 = vst [vmem:[#allocation2 + $0x1f8] sm:$0xff] %v2418
        $region63: #{gcn_forward.9} parent=50 // pred_fallthru
          _
        %p2483 = scmp.eq.s32.totalorder %s28, 2
        // Predicated region
        $region64: #{gcn_forward.9} parent=50 // pred_check
          %p2484 = pneg %p2483
        $region65: #{gcn_forward.9} parent=50 // pred_check_branch
          %2486 = sbr.rel (%p2484) target = $region67
        $region66: #{gcn_forward.9} parent=50 // pred_region
          %v2487 = vld [vmem:[#allocation2] sm:$0xff]
          %v2488 = vld [vmem:[#allocation2 + $0x8] sm:$0xff]
          %v2489 = vld [vmem:[#allocation2 + $0x10] sm:$0xff]
          %v2490 = vld [vmem:[#allocation2 + $0x18] sm:$0xff]
          %v2491 = vld [vmem:[#allocation2 + $0x20] sm:$0xff]
          %v2492 = vld [vmem:[#allocation2 + $0x28] sm:$0xff]
          %v2493 = vld [vmem:[#allocation2 + $0x30] sm:$0xff]
          %v2494 = vld [vmem:[#allocation2 + $0x38] sm:$0xff]
          %v2495 = vld [vmem:[#allocation2 + $0x40] sm:$0xff]
          %v2496 = vld [vmem:[#allocation2 + $0x48] sm:$0xff]
          %v2497 = vld [vmem:[#allocation2 + $0x50] sm:$0xff]
          %v2498 = vld [vmem:[#allocation2 + $0x58] sm:$0xff]
          %v2499 = vld [vmem:[#allocation2 + $0x60] sm:$0xff]
          %v2500 = vld [vmem:[#allocation2 + $0x68] sm:$0xff]
          %v2501 = vld [vmem:[#allocation2 + $0x70] sm:$0xff]
          %v2502 = vld [vmem:[#allocation2 + $0x78] sm:$0xff]
          %v2503 = vld [vmem:[#allocation2 + $0x80] sm:$0xff]
          %v2504 = vld [vmem:[#allocation2 + $0x88] sm:$0xff]
          %v2505 = vld [vmem:[#allocation2 + $0x90] sm:$0xff]
          %v2506 = vld [vmem:[#allocation2 + $0x98] sm:$0xff]
          %v2507 = vld [vmem:[#allocation2 + $0xa0] sm:$0xff]
          %v2508 = vld [vmem:[#allocation2 + $0xa8] sm:$0xff]
          %v2509 = vld [vmem:[#allocation2 + $0xb0] sm:$0xff]
          %v2510 = vld [vmem:[#allocation2 + $0xb8] sm:$0xff]
          %v2511 = vld [vmem:[#allocation2 + $0xc0] sm:$0xff]
          %v2512 = vld [vmem:[#allocation2 + $0xc8] sm:$0xff]
          %v2513 = vld [vmem:[#allocation2 + $0xd0] sm:$0xff]
          %v2514 = vld [vmem:[#allocation2 + $0xd8] sm:$0xff]
          %v2515 = vld [vmem:[#allocation2 + $0xe0] sm:$0xff]
          %v2516 = vld [vmem:[#allocation2 + $0xe8] sm:$0xff]
          %v2517 = vld [vmem:[#allocation2 + $0xf0] sm:$0xff]
          %v2518 = vld [vmem:[#allocation2 + $0xf8] sm:$0xff]
          %v2519 = vld [vmem:[#allocation2 + $0x100] sm:$0xff]
          %v2520 = vld [vmem:[#allocation2 + $0x108] sm:$0xff]
          %v2521 = vld [vmem:[#allocation2 + $0x110] sm:$0xff]
          %v2522 = vld [vmem:[#allocation2 + $0x118] sm:$0xff]
          %v2523 = vld [vmem:[#allocation2 + $0x120] sm:$0xff]
          %v2524 = vld [vmem:[#allocation2 + $0x128] sm:$0xff]
          %v2525 = vld [vmem:[#allocation2 + $0x130] sm:$0xff]
          %v2526 = vld [vmem:[#allocation2 + $0x138] sm:$0xff]
          %v2527 = vld [vmem:[#allocation2 + $0x140] sm:$0xff]
          %v2528 = vld [vmem:[#allocation2 + $0x148] sm:$0xff]
          %v2529 = vld [vmem:[#allocation2 + $0x150] sm:$0xff]
          %v2530 = vld [vmem:[#allocation2 + $0x158] sm:$0xff]
          %v2531 = vld [vmem:[#allocation2 + $0x160] sm:$0xff]
          %v2532 = vld [vmem:[#allocation2 + $0x168] sm:$0xff]
          %v2533 = vld [vmem:[#allocation2 + $0x170] sm:$0xff]
          %v2534 = vld [vmem:[#allocation2 + $0x178] sm:$0xff]
          %v2535 = vld [vmem:[#allocation2 + $0x180] sm:$0xff]
          %v2536 = vld [vmem:[#allocation2 + $0x188] sm:$0xff]
          %v2537 = vld [vmem:[#allocation2 + $0x190] sm:$0xff]
          %v2538 = vld [vmem:[#allocation2 + $0x198] sm:$0xff]
          %v2539 = vld [vmem:[#allocation2 + $0x1a0] sm:$0xff]
          %v2540 = vld [vmem:[#allocation2 + $0x1a8] sm:$0xff]
          %v2541 = vld [vmem:[#allocation2 + $0x1b0] sm:$0xff]
          %v2542 = vld [vmem:[#allocation2 + $0x1b8] sm:$0xff]
          %v2543 = vld [vmem:[#allocation2 + $0x1c0] sm:$0xff]
          %v2544 = vld [vmem:[#allocation2 + $0x1c8] sm:$0xff]
          %v2545 = vld [vmem:[#allocation2 + $0x1d0] sm:$0xff]
          %v2546 = vld [vmem:[#allocation2 + $0x1d8] sm:$0xff]
          %v2547 = vld [vmem:[#allocation2 + $0x1e0] sm:$0xff]
          %v2548 = vld [vmem:[#allocation2 + $0x1e8] sm:$0xff]
          %v2549 = vld [vmem:[#allocation2 + $0x1f0] sm:$0xff]
          %v2550 = vld [vmem:[#allocation2 + $0x1f8] sm:$0xff]
          %v2551 = vld [vmem:[%s3] sm:$0x1]
          %v2553 = vperm.slane %v2551, 0
          %v2555 = vadd.f32 %v2487, %v2553
          %v2556 = vadd.f32 %v2488, %v2553
          %v2557 = vadd.f32 %v2489, %v2553
          %v2558 = vadd.f32 %v2490, %v2553
          %v2559 = vadd.f32 %v2491, %v2553
          %v2560 = vadd.f32 %v2492, %v2553
          %v2561 = vadd.f32 %v2493, %v2553
          %v2562 = vadd.f32 %v2494, %v2553
          %v2563 = vadd.f32 %v2495, %v2553
          %v2564 = vadd.f32 %v2496, %v2553
          %v2565 = vadd.f32 %v2497, %v2553
          %v2566 = vadd.f32 %v2498, %v2553
          %v2567 = vadd.f32 %v2499, %v2553
          %v2568 = vadd.f32 %v2500, %v2553
          %v2569 = vadd.f32 %v2501, %v2553
          %v2570 = vadd.f32 %v2502, %v2553
          %v2571 = vadd.f32 %v2503, %v2553
          %v2572 = vadd.f32 %v2504, %v2553
          %v2573 = vadd.f32 %v2505, %v2553
          %v2574 = vadd.f32 %v2506, %v2553
          %v2575 = vadd.f32 %v2507, %v2553
          %v2576 = vadd.f32 %v2508, %v2553
          %v2577 = vadd.f32 %v2509, %v2553
          %v2578 = vadd.f32 %v2510, %v2553
          %v2579 = vadd.f32 %v2511, %v2553
          %v2580 = vadd.f32 %v2512, %v2553
          %v2581 = vadd.f32 %v2513, %v2553
          %v2582 = vadd.f32 %v2514, %v2553
          %v2583 = vadd.f32 %v2515, %v2553
          %v2584 = vadd.f32 %v2516, %v2553
          %v2585 = vadd.f32 %v2517, %v2553
          %v2586 = vadd.f32 %v2518, %v2553
          %v2587 = vadd.f32 %v2519, %v2553
          %v2588 = vadd.f32 %v2520, %v2553
          %v2589 = vadd.f32 %v2521, %v2553
          %v2590 = vadd.f32 %v2522, %v2553
          %v2591 = vadd.f32 %v2523, %v2553
          %v2592 = vadd.f32 %v2524, %v2553
          %v2593 = vadd.f32 %v2525, %v2553
          %v2594 = vadd.f32 %v2526, %v2553
          %v2595 = vadd.f32 %v2527, %v2553
          %v2596 = vadd.f32 %v2528, %v2553
          %v2597 = vadd.f32 %v2529, %v2553
          %v2598 = vadd.f32 %v2530, %v2553
          %v2599 = vadd.f32 %v2531, %v2553
          %v2600 = vadd.f32 %v2532, %v2553
          %v2601 = vadd.f32 %v2533, %v2553
          %v2602 = vadd.f32 %v2534, %v2553
          %v2603 = vadd.f32 %v2535, %v2553
          %v2604 = vadd.f32 %v2536, %v2553
          %v2605 = vadd.f32 %v2537, %v2553
          %v2606 = vadd.f32 %v2538, %v2553
          %v2607 = vadd.f32 %v2539, %v2553
          %v2608 = vadd.f32 %v2540, %v2553
          %v2609 = vadd.f32 %v2541, %v2553
          %v2610 = vadd.f32 %v2542, %v2553
          %v2611 = vadd.f32 %v2543, %v2553
          %v2612 = vadd.f32 %v2544, %v2553
          %v2613 = vadd.f32 %v2545, %v2553
          %v2614 = vadd.f32 %v2546, %v2553
          %v2615 = vadd.f32 %v2547, %v2553
          %v2616 = vadd.f32 %v2548, %v2553
          %v2617 = vadd.f32 %v2549, %v2553
          %v2618 = vadd.f32 %v2550, %v2553
          %v2619 = vpack.c.bf16 %v2555, %v2555
          %v2620 = vpack.c.bf16 %v2556, %v2556
          %v2621 = vpack.c.bf16 %v2557, %v2557
          %v2622 = vpack.c.bf16 %v2558, %v2558
          %v2623 = vpack.c.bf16 %v2559, %v2559
          %v2624 = vpack.c.bf16 %v2560, %v2560
          %v2625 = vpack.c.bf16 %v2561, %v2561
          %v2626 = vpack.c.bf16 %v2562, %v2562
          %v2627 = vpack.c.bf16 %v2563, %v2563
          %v2628 = vpack.c.bf16 %v2564, %v2564
          %v2629 = vpack.c.bf16 %v2565, %v2565
          %v2630 = vpack.c.bf16 %v2566, %v2566
          %v2631 = vpack.c.bf16 %v2567, %v2567
          %v2632 = vpack.c.bf16 %v2568, %v2568
          %v2633 = vpack.c.bf16 %v2569, %v2569
          %v2634 = vpack.c.bf16 %v2570, %v2570
          %v2635 = vpack.c.bf16 %v2571, %v2571
          %v2636 = vpack.c.bf16 %v2572, %v2572
          %v2637 = vpack.c.bf16 %v2573, %v2573
          %v2638 = vpack.c.bf16 %v2574, %v2574
          %v2639 = vpack.c.bf16 %v2575, %v2575
          %v2640 = vpack.c.bf16 %v2576, %v2576
          %v2641 = vpack.c.bf16 %v2577, %v2577
          %v2642 = vpack.c.bf16 %v2578, %v2578
          %v2643 = vpack.c.bf16 %v2579, %v2579
          %v2644 = vpack.c.bf16 %v2580, %v2580
          %v2645 = vpack.c.bf16 %v2581, %v2581
          %v2646 = vpack.c.bf16 %v2582, %v2582
          %v2647 = vpack.c.bf16 %v2583, %v2583
          %v2648 = vpack.c.bf16 %v2584, %v2584
          %v2649 = vpack.c.bf16 %v2585, %v2585
          %v2650 = vpack.c.bf16 %v2586, %v2586
          %v2651 = vpack.c.bf16 %v2587, %v2587
          %v2652 = vpack.c.bf16 %v2588, %v2588
          %v2653 = vpack.c.bf16 %v2589, %v2589
          %v2654 = vpack.c.bf16 %v2590, %v2590
          %v2655 = vpack.c.bf16 %v2591, %v2591
          %v2656 = vpack.c.bf16 %v2592, %v2592
          %v2657 = vpack.c.bf16 %v2593, %v2593
          %v2658 = vpack.c.bf16 %v2594, %v2594
          %v2659 = vpack.c.bf16 %v2595, %v2595
          %v2660 = vpack.c.bf16 %v2596, %v2596
          %v2661 = vpack.c.bf16 %v2597, %v2597
          %v2662 = vpack.c.bf16 %v2598, %v2598
          %v2663 = vpack.c.bf16 %v2599, %v2599
          %v2664 = vpack.c.bf16 %v2600, %v2600
          %v2665 = vpack.c.bf16 %v2601, %v2601
          %v2666 = vpack.c.bf16 %v2602, %v2602
          %v2667 = vpack.c.bf16 %v2603, %v2603
          %v2668 = vpack.c.bf16 %v2604, %v2604
          %v2669 = vpack.c.bf16 %v2605, %v2605
          %v2670 = vpack.c.bf16 %v2606, %v2606
          %v2671 = vpack.c.bf16 %v2607, %v2607
          %v2672 = vpack.c.bf16 %v2608, %v2608
          %v2673 = vpack.c.bf16 %v2609, %v2609
          %v2674 = vpack.c.bf16 %v2610, %v2610
          %v2675 = vpack.c.bf16 %v2611, %v2611
          %v2676 = vpack.c.bf16 %v2612, %v2612
          %v2677 = vpack.c.bf16 %v2613, %v2613
          %v2678 = vpack.c.bf16 %v2614, %v2614
          %v2679 = vpack.c.bf16 %v2615, %v2615
          %v2680 = vpack.c.bf16 %v2616, %v2616
          %v2681 = vpack.c.bf16 %v2617, %v2617
          %v2682 = vpack.c.bf16 %v2618, %v2618
          %2683 = vst [vmem:[%s504] sm:$0xf] %v2619
          %2684 = vst [vmem:[%s504 + $0x4] sm:$0xf] %v2620
          %2685 = vst [vmem:[%s504 + $0x8] sm:$0xf] %v2621
          %2686 = vst [vmem:[%s504 + $0xc] sm:$0xf] %v2622
          %2687 = vst [vmem:[%s504 + $0x10] sm:$0xf] %v2623
          %2688 = vst [vmem:[%s504 + $0x14] sm:$0xf] %v2624
          %2689 = vst [vmem:[%s504 + $0x18] sm:$0xf] %v2625
          %2690 = vst [vmem:[%s504 + $0x1c] sm:$0xf] %v2626
          %2691 = vst [vmem:[%s504 + $0x20] sm:$0xf] %v2627
          %2692 = vst [vmem:[%s504 + $0x24] sm:$0xf] %v2628
          %2693 = vst [vmem:[%s504 + $0x28] sm:$0xf] %v2629
          %2694 = vst [vmem:[%s504 + $0x2c] sm:$0xf] %v2630
          %2695 = vst [vmem:[%s504 + $0x30] sm:$0xf] %v2631
          %2696 = vst [vmem:[%s504 + $0x34] sm:$0xf] %v2632
          %2697 = vst [vmem:[%s504 + $0x38] sm:$0xf] %v2633
          %2698 = vst [vmem:[%s504 + $0x3c] sm:$0xf] %v2634
          %2699 = vst [vmem:[%s504 + $0x40] sm:$0xf] %v2635
          %2700 = vst [vmem:[%s504 + $0x44] sm:$0xf] %v2636
          %2701 = vst [vmem:[%s504 + $0x48] sm:$0xf] %v2637
          %2702 = vst [vmem:[%s504 + $0x4c] sm:$0xf] %v2638
          %2703 = vst [vmem:[%s504 + $0x50] sm:$0xf] %v2639
          %2704 = vst [vmem:[%s504 + $0x54] sm:$0xf] %v2640
          %2705 = vst [vmem:[%s504 + $0x58] sm:$0xf] %v2641
          %2706 = vst [vmem:[%s504 + $0x5c] sm:$0xf] %v2642
          %2707 = vst [vmem:[%s504 + $0x60] sm:$0xf] %v2643
          %2708 = vst [vmem:[%s504 + $0x64] sm:$0xf] %v2644
          %2709 = vst [vmem:[%s504 + $0x68] sm:$0xf] %v2645
          %2710 = vst [vmem:[%s504 + $0x6c] sm:$0xf] %v2646
          %2711 = vst [vmem:[%s504 + $0x70] sm:$0xf] %v2647
          %2712 = vst [vmem:[%s504 + $0x74] sm:$0xf] %v2648
          %2713 = vst [vmem:[%s504 + $0x78] sm:$0xf] %v2649
          %2714 = vst [vmem:[%s504 + $0x7c] sm:$0xf] %v2650
          %2715 = vst [vmem:[%s504 + $0x80] sm:$0xf] %v2651
          %2716 = vst [vmem:[%s504 + $0x84] sm:$0xf] %v2652
          %2717 = vst [vmem:[%s504 + $0x88] sm:$0xf] %v2653
          %2718 = vst [vmem:[%s504 + $0x8c] sm:$0xf] %v2654
          %2719 = vst [vmem:[%s504 + $0x90] sm:$0xf] %v2655
          %2720 = vst [vmem:[%s504 + $0x94] sm:$0xf] %v2656
          %2721 = vst [vmem:[%s504 + $0x98] sm:$0xf] %v2657
          %2722 = vst [vmem:[%s504 + $0x9c] sm:$0xf] %v2658
          %2723 = vst [vmem:[%s504 + $0xa0] sm:$0xf] %v2659
          %2724 = vst [vmem:[%s504 + $0xa4] sm:$0xf] %v2660
          %2725 = vst [vmem:[%s504 + $0xa8] sm:$0xf] %v2661
          %2726 = vst [vmem:[%s504 + $0xac] sm:$0xf] %v2662
          %2727 = vst [vmem:[%s504 + $0xb0] sm:$0xf] %v2663
          %2728 = vst [vmem:[%s504 + $0xb4] sm:$0xf] %v2664
          %2729 = vst [vmem:[%s504 + $0xb8] sm:$0xf] %v2665
          %2730 = vst [vmem:[%s504 + $0xbc] sm:$0xf] %v2666
          %2731 = vst [vmem:[%s504 + $0xc0] sm:$0xf] %v2667
          %2732 = vst [vmem:[%s504 + $0xc4] sm:$0xf] %v2668
          %2733 = vst [vmem:[%s504 + $0xc8] sm:$0xf] %v2669
          %2734 = vst [vmem:[%s504 + $0xcc] sm:$0xf] %v2670
          %2735 = vst [vmem:[%s504 + $0xd0] sm:$0xf] %v2671
          %2736 = vst [vmem:[%s504 + $0xd4] sm:$0xf] %v2672
          %2737 = vst [vmem:[%s504 + $0xd8] sm:$0xf] %v2673
          %2738 = vst [vmem:[%s504 + $0xdc] sm:$0xf] %v2674
          %2739 = vst [vmem:[%s504 + $0xe0] sm:$0xf] %v2675
          %2740 = vst [vmem:[%s504 + $0xe4] sm:$0xf] %v2676
          %2741 = vst [vmem:[%s504 + $0xe8] sm:$0xf] %v2677
          %2742 = vst [vmem:[%s504 + $0xec] sm:$0xf] %v2678
          %2743 = vst [vmem:[%s504 + $0xf0] sm:$0xf] %v2679
          %2744 = vst [vmem:[%s504 + $0xf4] sm:$0xf] %v2680
          %2745 = vst [vmem:[%s504 + $0xf8] sm:$0xf] %v2681
          %2746 = vst [vmem:[%s504 + $0xfc] sm:$0xf] %v2682
        $region67: #{gcn_forward.9} parent=50 // pred_fallthru
          _
        %s2747 = smul.u32 64, %s27
        %p2748 = scmp.lt.s32.totalorder %s2747, 191
        %s2749 = scalar_select %p2748, %s2747, 191
        %s2750 = smul.addr %s2749, 4
        %s2751 = scalar_lea.vmem %s4, %s2750
        // Predicated region
        $region68: #{gcn_forward.9} parent=50 // pred_check
          %p2752 = pneg %p139
        $region69: #{gcn_forward.9} parent=50 // pred_check_branch
          %2754 = sbr.rel (%p2752) target = $region71
        $region70: #{gcn_forward.9} parent=50 // pred_region
          %s2755 = smul.u32 64, %s27
        $region71: #{gcn_forward.9} parent=50 // pred_fallthru
          _
      $region51: #{gcn_forward.9} parent=5 // pred_fallthru
        _
      %p2756 = scmp.le.s32.totalorder 2, %s18
      // Predicated region
      $region72: #{gcn_forward.9} parent=5 // pred_check
        %p2757 = pneg %p2756
      $region73: #{gcn_forward.9} parent=5 // pred_check_branch
        %2759 = sbr.rel (%p2757) target = $region75
      $region74: #{gcn_forward.9} parent=5 // pred_region
        %s2760 = ssub.s32 %s18, 2
        // Predicated region
        $region76: #{gcn_forward.9} parent=74 // pred_check
          %p2761 = pneg %p145
        $region77: #{gcn_forward.9} parent=74 // pred_check_branch
          %2763 = sbr.rel (%p2761) target = $region79
        $region78: #{gcn_forward.9} parent=74 // pred_region
          %s2764 = smul.u32 64, %s29
          %p2765 = scmp.lt.s32.totalorder %s2764, 191
          %s2766 = scalar_select %p2765, %s2764, 191
          %s2767 = smul.addr %s2766, 4
          %s2768 = scalar_lea.vmem %s4, %s2767
        $region79: #{gcn_forward.9} parent=74 // pred_fallthru
          _
      $region75: #{gcn_forward.9} parent=5 // pred_fallthru
        _
    $region6: #{gcn_forward.9} parent=1 // loop_footer
      %s22 = sadd.s32 1, %s18
    $region7: #{gcn_forward.9} parent=1 // loop_footer_branch
      %17 = sbr.rel target = $region3
    $region8: #{gcn_forward.9} parent=1 // loop_exit
      _

</llo_original>
